<compile_context>
chip_gen: v5e
topology: v5e:2x2
jax: 0.10.0
libtpu: 0.0.40
codegen_flags: <defaults>
</compile_context>

<pallas_src>
import functools

import jax
import jax.numpy as jnp
from jax import lax
from jax.experimental import pallas as pl
from jax.experimental.pallas import tpu as pltpu


def _round_up(x, m):
    return (x + m - 1) // m * m


# --------------------------------------------------------------------------
# Pallas kernel
# --------------------------------------------------------------------------
def _make_kernel(num_layers, seq_len, hidden_p):
    Hp = hidden_p
    T = seq_len
    unroll = True if T <= 16 else 4

    def kernel(*refs):
        # ---- unpack refs (order fixed by the wrapper) ----
        x_ref = refs[0]
        idx = 1
        lstm = []
        for _ in range(num_layers):
            lstm.append((refs[idx], refs[idx + 1], refs[idx + 2]))
            idx += 3
        wa1_ref, ba1_ref, wa2_ref, ba2_ref = refs[idx:idx + 4]
        idx += 4
        fw1_ref, fb1_ref, fw2_ref, fb2_ref = refs[idx:idx + 4]
        idx += 4
        out_ref = refs[idx]
        seq_ref, xg_ref = refs[idx + 1], refs[idx + 2]

        tb = out_ref.shape[0]                      # batch rows in this tile

        # ---------------- stacked LSTM ----------------
        for layer, (wih_ref, whh_ref, b_ref) in enumerate(lstm):
            if layer == 0:
                inp = x_ref[...]                   # (T*tb, I) bf16 (host cast)
            else:
                # TODO(synk): training-mode inter-layer dropout is stochastic;
                # eval mode => identity (implemented here).
                inp = seq_ref[...]                 # (T*tb, Hp) bf16, pad lanes 0

            # Hoisted input projection: one big-M MXU matmul for all timesteps,
            # combined bias folded in; stored bf16 (f32 accumulation).
            xg_ref[...] = (
                jnp.dot(inp, wih_ref[...], preferred_element_type=jnp.float32)
                + b_ref[...]).astype(jnp.bfloat16)           # (T*tb, 4Hp)

            def step(t, carry):
                h, c = carry
                row = pl.multiple_of(t * tb, tb)
                # W_hh read inside the step (not held live across the loop).
                hh = jnp.dot(h.astype(jnp.bfloat16), whh_ref[...],
                             preferred_element_type=jnp.float32)
                gates = xg_ref[pl.ds(row, tb), :].astype(jnp.float32) + hh
                # Full-lane gate slices (Hp is a multiple of 128).
                i_g = jax.nn.sigmoid(gates[:, 0:Hp])
                f_g = jax.nn.sigmoid(gates[:, Hp:2 * Hp])
                g_g = jnp.tanh(gates[:, 2 * Hp:3 * Hp])
                o_g = jax.nn.sigmoid(gates[:, 3 * Hp:4 * Hp])
                c = f_g * c + i_g * g_g
                h = o_g * jnp.tanh(c)
                seq_ref[pl.ds(row, tb), :] = h.astype(jnp.bfloat16)
                return (h, c)

            h0 = jnp.zeros((tb, Hp), jnp.float32)
            c0 = jnp.zeros((tb, Hp), jnp.float32)
            lax.fori_loop(0, T, step, (h0, c0), unroll=unroll)

        # ---------------- attention ----------------
        # One (T*tb, Hp) x (Hp, Hp) MXU matmul, then lane-dense softmax over
        # time via reshape-based reductions on full-lane (T, tb, *) tiles.
        seq_bf = seq_ref[...]                                    # (T*tb, Hp) bf16
        a = jnp.tanh(
            jnp.dot(seq_bf, wa1_ref[...], preferred_element_type=jnp.float32)
            + ba1_ref[...])                                      # (T*tb, Hp) f32
        a3 = a.reshape(T, tb, Hp)
        s3 = (jnp.sum(a3 * wa2_ref[...], axis=-1, keepdims=True)
              + ba2_ref[...])                                    # (T, tb, 1)
        m = jnp.max(s3, axis=0, keepdims=True)                   # (1, tb, 1)
        e = jnp.exp(s3 - m)                                      # (T, tb, 1)
        den = jnp.sum(e, axis=0)                                 # (tb, 1)
        seq3 = seq_bf.astype(jnp.float32).reshape(T, tb, Hp)
        num = jnp.sum(e * seq3, axis=0)                          # (tb, Hp)
        context = num * pl.reciprocal(den, approx=True)          # (tb, Hp)

        # -------- head: Linear (BN folded on host) -> ReLU -> Dropout(id) -> Linear
        z = jnp.dot(context.astype(jnp.bfloat16), fw1_ref[...],
                    preferred_element_type=jnp.float32) + fb1_ref[...]
        z = jnp.maximum(z, 0.0)
        y = jnp.dot(z.astype(jnp.bfloat16), fw2_ref[...],
                    preferred_element_type=jnp.float32) + fb2_ref[...]
        out_ref[...] = y.astype(out_ref.dtype)

    return kernel


# --------------------------------------------------------------------------
# Host-side helpers
# --------------------------------------------------------------------------
def _pad_gate_cols(w, H, Hp):
    """(rows, 4H) -> (rows, 4Hp); each PyTorch gate block zero-padded to Hp."""
    if Hp == H:
        return w
    parts = []
    for k in range(4):
        g = w[..., k * H:(k + 1) * H]
        parts.append(jnp.pad(g, [(0, 0)] * (w.ndim - 1) + [(0, Hp - H)]))
    return jnp.concatenate(parts, axis=-1)


def _choose_batch_tile(Bp, per_row_bytes, fixed_bytes, budget_bytes):
    """Largest tb (multiple of 16, divides Bp) that fits the VMEM budget;
    prefer >= 2 tiles (v7x two-TensorCore sharding) when each stays >= 128."""
    cands = [t for t in range(16, Bp + 1, 16) if Bp % t == 0]
    fits = [t for t in cands if fixed_bytes + t * per_row_bytes <= budget_bytes]
    if not fits:
        fits = [16]
    tb = max(fits)
    if Bp // tb < 2:
        two = [t for t in fits if Bp // t >= 2 and t >= 128]
        if two:
            tb = max(two)
    return tb


# --------------------------------------------------------------------------
# Wrapper
# --------------------------------------------------------------------------
@functools.partial(jax.jit,
                   static_argnames=("num_layers", "hidden_size", "output_size"))
def lstm_trader_forward(x, flat_params, *, num_layers, hidden_size, output_size):
    bn_eps = 1e-5
    B, T, I = x.shape
    H, O = hidden_size, output_size
    Hh = H // 2
    Hp = _round_up(H, 128)
    Hhp = _round_up(Hh, 128)
    flat = list(flat_params)

    # ---- host-side prep: fold BatchNorm (eval) into fc1 ----
    (fw1, fb1, gamma, beta, mu, var, fw2, fb2) = flat[-8:]
    scale = gamma * lax.rsqrt(var + bn_eps)                   # (1, Hh)
    fw1_f = fw1 * scale                                       # (H, Hh)
    fb1_f = (fb1 - mu) * scale + beta                         # (1, Hh)

    # ---- pad H -> Hp (and Hh -> Hhp): padded lanes stay exactly zero ----
    kparams = []
    idx = 0
    for layer in range(num_layers):
        wih, whh, b = flat[idx:idx + 3]
        idx += 3
        wih_p = _pad_gate_cols(wih, H, Hp)
        if layer > 0:
            wih_p = jnp.pad(wih_p, ((0, Hp - H), (0, 0)))     # padded input rows
        whh_p = jnp.pad(_pad_gate_cols(whh, H, Hp), ((0, Hp - H), (0, 0)))
        b_p = _pad_gate_cols(b, H, Hp)
        kparams += [wih_p.astype(jnp.bfloat16), whh_p.astype(jnp.bfloat16), b_p]
    wa1, ba1, wa2, ba2 = flat[idx:idx + 4]
    idx += 4
    kparams += [jnp.pad(wa1, ((0, Hp - H), (0, Hp - H))).astype(jnp.bfloat16),
                jnp.pad(ba1, ((0, 0), (0, Hp - H))),
                jnp.pad(wa2, ((0, 0), (0, Hp - H))),          # (1, Hp), PyTorch layout
                ba2]
    kparams += [jnp.pad(fw1_f, ((0, Hp - H), (0, Hhp - Hh))).astype(jnp.bfloat16),
                jnp.pad(fb1_f, ((0, 0), (0, Hhp - Hh))),
                jnp.pad(fw2, ((0, Hhp - Hh), (0, 0))).astype(jnp.bfloat16),
                fb2]

    # ---- batch padding + generation-aware batch-tile choice ----
    Bp = _round_up(B, 16)
    weight_bytes = sum(int(p.size) * p.dtype.itemsize for p in kparams)
    # per-batch-row VMEM: x tile (bf16, double-buffered) + bf16 scratch + out
    per_row = 2 * T * I * 2 + T * (4 * Hp + Hp) * 2 + 2 * O * 4
    fixed = 2 * weight_bytes + (1 << 20)
    try:
        vmem_cap = int(getattr(pltpu.get_tpu_info(), "vmem_capacity_bytes",
                               64 << 20))
    except Exception:
        vmem_cap = 64 << 20                                    # safe v7x-ish floor
    budget = int(0.55 * vmem_cap)
    tb = _choose_batch_tile(Bp, per_row, fixed, budget)
    nb = Bp // tb
    vmem_limit = int(min(vmem_cap,
                         max(32 << 20, int(1.4 * (fixed + tb * per_row)))))

    # ---- reorder x into time-major contiguous slabs; cast to bf16 on host ----
    if Bp != B:
        x = jnp.pad(x, ((0, Bp - B), (0, 0), (0, 0)))
    xr = (x.astype(jnp.bfloat16)
           .reshape(nb, tb, T, I)
           .transpose(0, 2, 1, 3)
           .reshape(nb, T * tb, I))

    kernel = _make_kernel(num_layers, T, Hp)

    # rough cost hint for the XLA scheduler
    flops = 0
    in_dim = I
    for _ in range(num_layers):
        flops += 2 * T * Bp * (in_dim + Hp) * 4 * Hp
        in_dim = Hp
    flops += 2 * T * Bp * Hp * Hp + 2 * T * Bp * Hp            # attention
    flops += 2 * Bp * Hp * Hhp + 2 * Bp * Hhp * O              # head
    transcendentals = num_layers * T * Bp * 5 * Hp + T * Bp * (Hp + 1)
    bytes_accessed = int(xr.size) * 2 + Bp * O * 4 + weight_bytes

    in_specs = [pl.BlockSpec((None, T * tb, I), lambda i: (i, 0, 0))]
    in_specs += [pl.BlockSpec(p.shape, lambda i: (0, 0)) for p in kparams]

    out = pl.pallas_call(
        kernel,
        out_shape=jax.ShapeDtypeStruct((Bp, O), jnp.float32),
        grid=(nb,),
        in_specs=in_specs,
        out_specs=pl.BlockSpec((tb, O), lambda i: (i, 0)),
        scratch_shapes=[pltpu.VMEM((T * tb, Hp), jnp.bfloat16),       # hidden seq
                        pltpu.VMEM((T * tb, 4 * Hp), jnp.bfloat16)],  # x-proj gates
        compiler_params=pltpu.CompilerParams(
            dimension_semantics=("parallel",),
            vmem_limit_bytes=vmem_limit),
        cost_estimate=pl.CostEstimate(flops=flops,
                                      transcendentals=transcendentals,
                                      bytes_accessed=bytes_accessed),
    )(xr, *kparams)
    return out[:B]


# --------------------------------------------------------------------------
# Deterministic parameter construction (PyTorch-default-style uniform init)
# --------------------------------------------------------------------------
def build_params(key, input_size, hidden_size, num_layers, output_size):
    H = hidden_size
    Hh = H // 2

    def unif(k, shape, scale):
        return jax.random.uniform(k, shape, jnp.float32, -scale, scale)

    ks = iter(jax.random.split(key, 4 * num_layers + 16))
    s = H ** -0.5
    flat = []
    for layer in range(num_layers):
        in_dim = input_size if layer == 0 else H
        w_ih = unif(next(ks), (4 * H, in_dim), s)
        w_hh = unif(next(ks), (4 * H, H), s)
        b_ih = unif(next(ks), (4 * H,), s)
        b_hh = unif(next(ks), (4 * H,), s)
        flat += [w_ih.T, w_hh.T, (b_ih + b_hh)[None, :]]

    # attention: Linear(H,H) -> Tanh -> Linear(H,1) -> Softmax(dim=1)
    wa1 = unif(next(ks), (H, H), s)
    ba1 = unif(next(ks), (H,), s)
    wa2 = unif(next(ks), (1, H), s)          # kept in PyTorch (out,in) layout
    ba2 = unif(next(ks), (1,), s)
    flat += [wa1.T, ba1[None, :], wa2, ba2[None, :]]

    # fc: Linear(H,H/2) -> BN1d(H/2) -> ReLU -> Dropout -> Linear(H/2,O)
    fw1 = unif(next(ks), (Hh, H), s)
    fb1 = unif(next(ks), (Hh,), s)
    gamma = 1.0 + unif(next(ks), (1, Hh), 0.1)     # non-trivial BN stats to
    beta = unif(next(ks), (1, Hh), 0.1)            # exercise the host folding
    r_mean = unif(next(ks), (1, Hh), 0.1)
    r_var = 1.0 + unif(next(ks), (1, Hh), 0.1)
    s2 = Hh ** -0.5
    fw2 = unif(next(ks), (output_size, Hh), s2)
    fb2 = unif(next(ks), (output_size,), s2)
    flat += [fw1.T, fb1[None, :], gamma, beta, r_mean, r_var,
             fw2.T, fb2[None, :]]
    return tuple(flat)


# --------------------------------------------------------------------------
# Pure-JAX reference (same math, same param layout) for a sanity check
# --------------------------------------------------------------------------
def reference_forward(x, flat, num_layers, hidden_size, bn_eps=1e-5):
    hp = lax.Precision.HIGHEST
    H = hidden_size
    B, T, _ = x.shape
    idx = 0
    seq = x.astype(jnp.float32)
    for _ in range(num_layers):
        wih, whh, b = flat[idx], flat[idx + 1], flat[idx + 2]
        idx += 3
        h = jnp.zeros((B, H), jnp.float32)
        c = jnp.zeros((B, H), jnp.float32)
        outs = []
        for t in range(T):
            gates = (jnp.dot(seq[:, t, :], wih, precision=hp)
                     + jnp.dot(h, whh, precision=hp) + b)
            i_g = jax.nn.sigmoid(gates[:, 0:H])
            f_g = jax.nn.sigmoid(gates[:, H:2 * H])
            g_g = jnp.tanh(gates[:, 2 * H:3 * H])
            o_g = jax.nn.sigmoid(gates[:, 3 * H:4 * H])
            c = f_g * c + i_g * g_g
            h = o_g * jnp.tanh(c)
            outs.append(h)
        seq = jnp.stack(outs, axis=1)                       # (B, T, H)
    wa1, ba1, wa2, ba2 = flat[idx:idx + 4]
    idx += 4
    a = jnp.tanh(jnp.einsum("bth,hk->btk", seq, wa1, precision=hp) + ba1)
    sc = jnp.einsum("bth,oh->bto", a, wa2, precision=hp) + ba2   # (B, T, 1)
    w = jax.nn.softmax(sc, axis=1)
    context = jnp.sum(w * seq, axis=1)                           # (B, H)
    fw1, fb1, gamma, beta, mu, var, fw2, fb2 = flat[idx:idx + 8]
    z = jnp.dot(context, fw1, precision=hp) + fb1
    z = (z - mu) * lax.rsqrt(var + bn_eps) * gamma + beta
    z = jnp.maximum(z, 0.0)
    return jnp.dot(z, fw2, precision=hp) + fb2


# --------------------------------------------------------------------------
if __name__ == "__main__":
    B, T = 8, 8
    input_size, hidden_size, num_layers, output_size = 8, 32, 2, 3

    key = jax.random.PRNGKey(0)
    kx, kp = jax.random.split(key)
    x = jax.random.normal(kx, (B, T, input_size), jnp.float32)
    flat = build_params(kp, input_size, hidden_size, num_layers, output_size)

    out = lstm_trader_forward(x, flat,
                              num_layers=num_layers,
                              hidden_size=hidden_size,
                              output_size=output_size)
    out = jax.block_until_ready(out)

    ref = reference_forward(x, flat, num_layers, hidden_size)
    # Kernel uses bf16 MXU operands + bf16 scratch with f32 accumulation;
    # reference uses HIGHEST precision f32, so compare at a loose tolerance.
    if not bool(jnp.allclose(out, ref, atol=4e-2, rtol=4e-2)):
        raise AssertionError("Pallas kernel disagrees with JAX reference")

    print("KERNEL_OK")
</pallas_src>

<mosaic_0001>
module attributes {stable_mosaic.version = 11 : i64} {
  func.func @kernel(%arg0: i32, %arg1: memref<1x128x8xbf16, #tpu.memory_space<vmem>>, %arg2: memref<8x512xbf16, #tpu.memory_space<vmem>>, %arg3: memref<128x512xbf16, #tpu.memory_space<vmem>>, %arg4: memref<1x512xf32, #tpu.memory_space<vmem>>, %arg5: memref<128x512xbf16, #tpu.memory_space<vmem>>, %arg6: memref<128x512xbf16, #tpu.memory_space<vmem>>, %arg7: memref<1x512xf32, #tpu.memory_space<vmem>>, %arg8: memref<128x128xbf16, #tpu.memory_space<vmem>>, %arg9: memref<1x128xf32, #tpu.memory_space<vmem>>, %arg10: memref<1x128xf32, #tpu.memory_space<vmem>>, %arg11: memref<1x1xf32, #tpu.memory_space<vmem>>, %arg12: memref<128x128xbf16, #tpu.memory_space<vmem>>, %arg13: memref<1x128xf32, #tpu.memory_space<vmem>>, %arg14: memref<128x3xbf16, #tpu.memory_space<vmem>>, %arg15: memref<1x3xf32, #tpu.memory_space<vmem>>, %arg16: memref<16x3xf32, #tpu.memory_space<vmem>>, %arg17: memref<128x128xbf16, #tpu.memory_space<vmem>>, %arg18: memref<128x512xbf16, #tpu.memory_space<vmem>>) attributes {dimension_semantics = [#tpu.dimension_semantics<parallel>], iteration_bounds = array<i64: 1>, scalar_prefetch = 0 : i64, scratch_operands = 2 : i64, tpu.core_type = #tpu.core_type<tc>, window_params = [{transform_indices = @transform_0, window_bounds = array<i64: 1, 128, 8>}, {pipeline_mode = #tpu.pipeline_mode<synchronous>, transform_indices = @transform_1, window_bounds = array<i64: 8, 512>}, {pipeline_mode = #tpu.pipeline_mode<synchronous>, transform_indices = @transform_2, window_bounds = array<i64: 128, 512>}, {pipeline_mode = #tpu.pipeline_mode<synchronous>, transform_indices = @transform_3, window_bounds = array<i64: 1, 512>}, {pipeline_mode = #tpu.pipeline_mode<synchronous>, transform_indices = @transform_4, window_bounds = array<i64: 128, 512>}, {pipeline_mode = #tpu.pipeline_mode<synchronous>, transform_indices = @transform_5, window_bounds = array<i64: 128, 512>}, {pipeline_mode = #tpu.pipeline_mode<synchronous>, transform_indices = @transform_6, window_bounds = array<i64: 1, 512>}, {pipeline_mode = #tpu.pipeline_mode<synchronous>, transform_indices = @transform_7, window_bounds = array<i64: 128, 128>}, {pipeline_mode = #tpu.pipeline_mode<synchronous>, transform_indices = @transform_8, window_bounds = array<i64: 1, 128>}, {pipeline_mode = #tpu.pipeline_mode<synchronous>, transform_indices = @transform_9, window_bounds = array<i64: 1, 128>}, {pipeline_mode = #tpu.pipeline_mode<synchronous>, transform_indices = @transform_10, window_bounds = array<i64: 1, 1>}, {pipeline_mode = #tpu.pipeline_mode<synchronous>, transform_indices = @transform_11, window_bounds = array<i64: 128, 128>}, {pipeline_mode = #tpu.pipeline_mode<synchronous>, transform_indices = @transform_12, window_bounds = array<i64: 1, 128>}, {pipeline_mode = #tpu.pipeline_mode<synchronous>, transform_indices = @transform_13, window_bounds = array<i64: 128, 3>}, {pipeline_mode = #tpu.pipeline_mode<synchronous>, transform_indices = @transform_14, window_bounds = array<i64: 1, 3>}, {transform_indices = @transform_15, window_bounds = array<i64: 16, 3>}]} {
    %c0 = arith.constant 0 : index
    %c0_0 = arith.constant 0 : index
    %c0_1 = arith.constant 0 : index
    %0 = vector.load %arg1[%c0, %c0_0, %c0_1] : memref<1x128x8xbf16, #tpu.memory_space<vmem>>, vector<1x128x8xbf16>
    %1 = vector.shape_cast %0 : vector<1x128x8xbf16> to vector<128x8xbf16>
    %c0_2 = arith.constant 0 : index
    %c0_3 = arith.constant 0 : index
    %2 = vector.load %arg2[%c0_2, %c0_3] : memref<8x512xbf16, #tpu.memory_space<vmem>>, vector<8x512xbf16>
    %cst = arith.constant dense<0.000000e+00> : vector<128x512xf32>
    %3 = tpu.matmul %1, %2, %cst {dimension_numbers = #tpu.dot_dimension_numbers<[1], [0], [0], [1], [0, 0, 1, 1], [], []>} : vector<128x8xbf16>, vector<8x512xbf16>, vector<128x512xf32> -> vector<128x512xf32>
    %c0_4 = arith.constant 0 : index
    %c0_5 = arith.constant 0 : index
    %4 = vector.load %arg4[%c0_4, %c0_5] : memref<1x512xf32, #tpu.memory_space<vmem>>, vector<1x512xf32>
    %5 = vector.broadcast %4 : vector<1x512xf32> to vector<128x512xf32>
    %6 = arith.addf %3, %5 : vector<128x512xf32>
    %7 = arith.truncf %6 : vector<128x512xf32> to vector<128x512xbf16>
    %c0_6 = arith.constant 0 : index
    %c0_7 = arith.constant 0 : index
    %8 = vector.load %arg18[%c0_6, %c0_7] : memref<128x512xbf16, #tpu.memory_space<vmem>>, vector<128x512xbf16>
    tpu.vector_store %arg18[%c0_6, %c0_7], %7 {strides = array<i32>} : memref<128x512xbf16, #tpu.memory_space<vmem>>, vector<128x512xbf16>,
    %cst_8 = arith.constant 0.000000e+00 : f32
    %9 = vector.broadcast %cst_8 : f32 to vector<16x128xf32>
    %cst_9 = arith.constant 0.000000e+00 : f32
    %10 = vector.broadcast %cst_9 : f32 to vector<16x128xf32>
    %c0_i32 = arith.constant 0 : i32
    %c16_i32 = arith.constant 16 : i32
    %11 = arith.muli %c0_i32, %c16_i32 : i32
    %12 = tpu.assume_multiple %11, 16 : i32
    %13 = arith.truncf %9 : vector<16x128xf32> to vector<16x128xbf16>
    %c0_10 = arith.constant 0 : index
    %c0_11 = arith.constant 0 : index
    %14 = vector.load %arg3[%c0_10, %c0_11] : memref<128x512xbf16, #tpu.memory_space<vmem>>, vector<128x512xbf16>
    %cst_12 = arith.constant dense<0.000000e+00> : vector<16x512xf32>
    %15 = tpu.matmul %13, %14, %cst_12 {dimension_numbers = #tpu.dot_dimension_numbers<[1], [0], [0], [1], [0, 0, 1, 1], [], []>} : vector<16x128xbf16>, vector<128x512xbf16>, vector<16x512xf32> -> vector<16x512xf32>
    %16 = arith.index_cast %12 : i32 to index
    %c0_13 = arith.constant 0 : index
    %17 = vector.load %arg18[%16, %c0_13] : memref<128x512xbf16, #tpu.memory_space<vmem>>, vector<16x512xbf16>
    %18 = arith.extf %17 : vector<16x512xbf16> to vector<16x512xf32>
    %19 = arith.addf %18, %15 : vector<16x512xf32>
    %20 = vector.extract_strided_slice %19 {offsets = [0, 0], sizes = [16, 128], strides = [1, 1]} : vector<16x512xf32> to vector<16x128xf32>
    %21 = arith.negf %20 : vector<16x128xf32>
    %22 = math.exp %21 : vector<16x128xf32>
    %cst_14 = arith.constant 1.000000e+00 : f32
    %23 = vector.broadcast %cst_14 : f32 to vector<16x128xf32>
    %24 = arith.addf %23, %22 : vector<16x128xf32>
    %25 = arith.divf %23, %24 : vector<16x128xf32>
    %26 = vector.extract_strided_slice %19 {offsets = [0, 128], sizes = [16, 128], strides = [1, 1]} : vector<16x512xf32> to vector<16x128xf32>
    %27 = arith.negf %26 : vector<16x128xf32>
    %28 = math.exp %27 : vector<16x128xf32>
    %cst_15 = arith.constant 1.000000e+00 : f32
    %29 = vector.broadcast %cst_15 : f32 to vector<16x128xf32>
    %30 = arith.addf %29, %28 : vector<16x128xf32>
    %31 = arith.divf %29, %30 : vector<16x128xf32>
    %32 = vector.extract_strided_slice %19 {offsets = [0, 256], sizes = [16, 128], strides = [1, 1]} : vector<16x512xf32> to vector<16x128xf32>
    %33 = math.tanh %32 : vector<16x128xf32>
    %34 = vector.extract_strided_slice %19 {offsets = [0, 384], sizes = [16, 128], strides = [1, 1]} : vector<16x512xf32> to vector<16x128xf32>
    %35 = arith.negf %34 : vector<16x128xf32>
    %36 = math.exp %35 : vector<16x128xf32>
    %cst_16 = arith.constant 1.000000e+00 : f32
    %37 = vector.broadcast %cst_16 : f32 to vector<16x128xf32>
    %38 = arith.addf %37, %36 : vector<16x128xf32>
    %39 = arith.divf %37, %38 : vector<16x128xf32>
    %40 = arith.mulf %31, %10 : vector<16x128xf32>
    %41 = arith.mulf %25, %33 : vector<16x128xf32>
    %42 = arith.addf %40, %41 : vector<16x128xf32>
    %43 = math.tanh %42 : vector<16x128xf32>
    %44 = arith.mulf %39, %43 : vector<16x128xf32>
    %45 = arith.truncf %44 : vector<16x128xf32> to vector<16x128xbf16>
    %46 = arith.index_cast %12 : i32 to index
    %c0_17 = arith.constant 0 : index
    %47 = vector.load %arg17[%46, %c0_17] : memref<128x128xbf16, #tpu.memory_space<vmem>>, vector<16x128xbf16>
    tpu.vector_store %arg17[%46, %c0_17], %45 {strides = array<i32>} : memref<128x128xbf16, #tpu.memory_space<vmem>>, vector<16x128xbf16>,
    %c1_i32 = arith.constant 1 : i32
    %c16_i32_18 = arith.constant 16 : i32
    %48 = arith.muli %c1_i32, %c16_i32_18 : i32
    %49 = tpu.assume_multiple %48, 16 : i32
    %50 = arith.truncf %44 : vector<16x128xf32> to vector<16x128xbf16>
    %c0_19 = arith.constant 0 : index
    %c0_20 = arith.constant 0 : index
    %51 = vector.load %arg3[%c0_19, %c0_20] : memref<128x512xbf16, #tpu.memory_space<vmem>>, vector<128x512xbf16>
    %cst_21 = arith.constant dense<0.000000e+00> : vector<16x512xf32>
    %52 = tpu.matmul %50, %51, %cst_21 {dimension_numbers = #tpu.dot_dimension_numbers<[1], [0], [0], [1], [0, 0, 1, 1], [], []>} : vector<16x128xbf16>, vector<128x512xbf16>, vector<16x512xf32> -> vector<16x512xf32>
    %53 = arith.index_cast %49 : i32 to index
    %c0_22 = arith.constant 0 : index
    %54 = vector.load %arg18[%53, %c0_22] : memref<128x512xbf16, #tpu.memory_space<vmem>>, vector<16x512xbf16>
    %55 = arith.extf %54 : vector<16x512xbf16> to vector<16x512xf32>
    %56 = arith.addf %55, %52 : vector<16x512xf32>
    %57 = vector.extract_strided_slice %56 {offsets = [0, 0], sizes = [16, 128], strides = [1, 1]} : vector<16x512xf32> to vector<16x128xf32>
    %58 = arith.negf %57 : vector<16x128xf32>
    %59 = math.exp %58 : vector<16x128xf32>
    %cst_23 = arith.constant 1.000000e+00 : f32
    %60 = vector.broadcast %cst_23 : f32 to vector<16x128xf32>
    %61 = arith.addf %60, %59 : vector<16x128xf32>
    %62 = arith.divf %60, %61 : vector<16x128xf32>
    %63 = vector.extract_strided_slice %56 {offsets = [0, 128], sizes = [16, 128], strides = [1, 1]} : vector<16x512xf32> to vector<16x128xf32>
    %64 = arith.negf %63 : vector<16x128xf32>
    %65 = math.exp %64 : vector<16x128xf32>
    %cst_24 = arith.constant 1.000000e+00 : f32
    %66 = vector.broadcast %cst_24 : f32 to vector<16x128xf32>
    %67 = arith.addf %66, %65 : vector<16x128xf32>
    %68 = arith.divf %66, %67 : vector<16x128xf32>
    %69 = vector.extract_strided_slice %56 {offsets = [0, 256], sizes = [16, 128], strides = [1, 1]} : vector<16x512xf32> to vector<16x128xf32>
    %70 = math.tanh %69 : vector<16x128xf32>
    %71 = vector.extract_strided_slice %56 {offsets = [0, 384], sizes = [16, 128], strides = [1, 1]} : vector<16x512xf32> to vector<16x128xf32>
    %72 = arith.negf %71 : vector<16x128xf32>
    %73 = math.exp %72 : vector<16x128xf32>
    %cst_25 = arith.constant 1.000000e+00 : f32
    %74 = vector.broadcast %cst_25 : f32 to vector<16x128xf32>
    %75 = arith.addf %74, %73 : vector<16x128xf32>
    %76 = arith.divf %74, %75 : vector<16x128xf32>
    %77 = arith.mulf %68, %42 : vector<16x128xf32>
    %78 = arith.mulf %62, %70 : vector<16x128xf32>
    %79 = arith.addf %77, %78 : vector<16x128xf32>
    %80 = math.tanh %79 : vector<16x128xf32>
    %81 = arith.mulf %76, %80 : vector<16x128xf32>
    %82 = arith.truncf %81 : vector<16x128xf32> to vector<16x128xbf16>
    %83 = arith.index_cast %49 : i32 to index
    %c0_26 = arith.constant 0 : index
    %84 = vector.load %arg17[%83, %c0_26] : memref<128x128xbf16, #tpu.memory_space<vmem>>, vector<16x128xbf16>
    tpu.vector_store %arg17[%83, %c0_26], %82 {strides = array<i32>} : memref<128x128xbf16, #tpu.memory_space<vmem>>, vector<16x128xbf16>,
    %c2_i32 = arith.constant 2 : i32
    %c16_i32_27 = arith.constant 16 : i32
    %85 = arith.muli %c2_i32, %c16_i32_27 : i32
    %86 = tpu.assume_multiple %85, 16 : i32
    %87 = arith.truncf %81 : vector<16x128xf32> to vector<16x128xbf16>
    %c0_28 = arith.constant 0 : index
    %c0_29 = arith.constant 0 : index
    %88 = vector.load %arg3[%c0_28, %c0_29] : memref<128x512xbf16, #tpu.memory_space<vmem>>, vector<128x512xbf16>
    %cst_30 = arith.constant dense<0.000000e+00> : vector<16x512xf32>
    %89 = tpu.matmul %87, %88, %cst_30 {dimension_numbers = #tpu.dot_dimension_numbers<[1], [0], [0], [1], [0, 0, 1, 1], [], []>} : vector<16x128xbf16>, vector<128x512xbf16>, vector<16x512xf32> -> vector<16x512xf32>
    %90 = arith.index_cast %86 : i32 to index
    %c0_31 = arith.constant 0 : index
    %91 = vector.load %arg18[%90, %c0_31] : memref<128x512xbf16, #tpu.memory_space<vmem>>, vector<16x512xbf16>
    %92 = arith.extf %91 : vector<16x512xbf16> to vector<16x512xf32>
    %93 = arith.addf %92, %89 : vector<16x512xf32>
    %94 = vector.extract_strided_slice %93 {offsets = [0, 0], sizes = [16, 128], strides = [1, 1]} : vector<16x512xf32> to vector<16x128xf32>
    %95 = arith.negf %94 : vector<16x128xf32>
    %96 = math.exp %95 : vector<16x128xf32>
    %cst_32 = arith.constant 1.000000e+00 : f32
    %97 = vector.broadcast %cst_32 : f32 to vector<16x128xf32>
    %98 = arith.addf %97, %96 : vector<16x128xf32>
    %99 = arith.divf %97, %98 : vector<16x128xf32>
    %100 = vector.extract_strided_slice %93 {offsets = [0, 128], sizes = [16, 128], strides = [1, 1]} : vector<16x512xf32> to vector<16x128xf32>
    %101 = arith.negf %100 : vector<16x128xf32>
    %102 = math.exp %101 : vector<16x128xf32>
    %cst_33 = arith.constant 1.000000e+00 : f32
    %103 = vector.broadcast %cst_33 : f32 to vector<16x128xf32>
    %104 = arith.addf %103, %102 : vector<16x128xf32>
    %105 = arith.divf %103, %104 : vector<16x128xf32>
    %106 = vector.extract_strided_slice %93 {offsets = [0, 256], sizes = [16, 128], strides = [1, 1]} : vector<16x512xf32> to vector<16x128xf32>
    %107 = math.tanh %106 : vector<16x128xf32>
    %108 = vector.extract_strided_slice %93 {offsets = [0, 384], sizes = [16, 128], strides = [1, 1]} : vector<16x512xf32> to vector<16x128xf32>
    %109 = arith.negf %108 : vector<16x128xf32>
    %110 = math.exp %109 : vector<16x128xf32>
    %cst_34 = arith.constant 1.000000e+00 : f32
    %111 = vector.broadcast %cst_34 : f32 to vector<16x128xf32>
    %112 = arith.addf %111, %110 : vector<16x128xf32>
    %113 = arith.divf %111, %112 : vector<16x128xf32>
    %114 = arith.mulf %105, %79 : vector<16x128xf32>
    %115 = arith.mulf %99, %107 : vector<16x128xf32>
    %116 = arith.addf %114, %115 : vector<16x128xf32>
    %117 = math.tanh %116 : vector<16x128xf32>
    %118 = arith.mulf %113, %117 : vector<16x128xf32>
    %119 = arith.truncf %118 : vector<16x128xf32> to vector<16x128xbf16>
    %120 = arith.index_cast %86 : i32 to index
    %c0_35 = arith.constant 0 : index
    %121 = vector.load %arg17[%120, %c0_35] : memref<128x128xbf16, #tpu.memory_space<vmem>>, vector<16x128xbf16>
    tpu.vector_store %arg17[%120, %c0_35], %119 {strides = array<i32>} : memref<128x128xbf16, #tpu.memory_space<vmem>>, vector<16x128xbf16>,
    %c3_i32 = arith.constant 3 : i32
    %c16_i32_36 = arith.constant 16 : i32
    %122 = arith.muli %c3_i32, %c16_i32_36 : i32
    %123 = tpu.assume_multiple %122, 16 : i32
    %124 = arith.truncf %118 : vector<16x128xf32> to vector<16x128xbf16>
    %c0_37 = arith.constant 0 : index
    %c0_38 = arith.constant 0 : index
    %125 = vector.load %arg3[%c0_37, %c0_38] : memref<128x512xbf16, #tpu.memory_space<vmem>>, vector<128x512xbf16>
    %cst_39 = arith.constant dense<0.000000e+00> : vector<16x512xf32>
    %126 = tpu.matmul %124, %125, %cst_39 {dimension_numbers = #tpu.dot_dimension_numbers<[1], [0], [0], [1], [0, 0, 1, 1], [], []>} : vector<16x128xbf16>, vector<128x512xbf16>, vector<16x512xf32> -> vector<16x512xf32>
    %127 = arith.index_cast %123 : i32 to index
    %c0_40 = arith.constant 0 : index
    %128 = vector.load %arg18[%127, %c0_40] : memref<128x512xbf16, #tpu.memory_space<vmem>>, vector<16x512xbf16>
    %129 = arith.extf %128 : vector<16x512xbf16> to vector<16x512xf32>
    %130 = arith.addf %129, %126 : vector<16x512xf32>
    %131 = vector.extract_strided_slice %130 {offsets = [0, 0], sizes = [16, 128], strides = [1, 1]} : vector<16x512xf32> to vector<16x128xf32>
    %132 = arith.negf %131 : vector<16x128xf32>
    %133 = math.exp %132 : vector<16x128xf32>
    %cst_41 = arith.constant 1.000000e+00 : f32
    %134 = vector.broadcast %cst_41 : f32 to vector<16x128xf32>
    %135 = arith.addf %134, %133 : vector<16x128xf32>
    %136 = arith.divf %134, %135 : vector<16x128xf32>
    %137 = vector.extract_strided_slice %130 {offsets = [0, 128], sizes = [16, 128], strides = [1, 1]} : vector<16x512xf32> to vector<16x128xf32>
    %138 = arith.negf %137 : vector<16x128xf32>
    %139 = math.exp %138 : vector<16x128xf32>
    %cst_42 = arith.constant 1.000000e+00 : f32
    %140 = vector.broadcast %cst_42 : f32 to vector<16x128xf32>
    %141 = arith.addf %140, %139 : vector<16x128xf32>
    %142 = arith.divf %140, %141 : vector<16x128xf32>
    %143 = vector.extract_strided_slice %130 {offsets = [0, 256], sizes = [16, 128], strides = [1, 1]} : vector<16x512xf32> to vector<16x128xf32>
    %144 = math.tanh %143 : vector<16x128xf32>
    %145 = vector.extract_strided_slice %130 {offsets = [0, 384], sizes = [16, 128], strides = [1, 1]} : vector<16x512xf32> to vector<16x128xf32>
    %146 = arith.negf %145 : vector<16x128xf32>
    %147 = math.exp %146 : vector<16x128xf32>
    %cst_43 = arith.constant 1.000000e+00 : f32
    %148 = vector.broadcast %cst_43 : f32 to vector<16x128xf32>
    %149 = arith.addf %148, %147 : vector<16x128xf32>
    %150 = arith.divf %148, %149 : vector<16x128xf32>
    %151 = arith.mulf %142, %116 : vector<16x128xf32>
    %152 = arith.mulf %136, %144 : vector<16x128xf32>
    %153 = arith.addf %151, %152 : vector<16x128xf32>
    %154 = math.tanh %153 : vector<16x128xf32>
    %155 = arith.mulf %150, %154 : vector<16x128xf32>
    %156 = arith.truncf %155 : vector<16x128xf32> to vector<16x128xbf16>
    %157 = arith.index_cast %123 : i32 to index
    %c0_44 = arith.constant 0 : index
    %158 = vector.load %arg17[%157, %c0_44] : memref<128x128xbf16, #tpu.memory_space<vmem>>, vector<16x128xbf16>
    tpu.vector_store %arg17[%157, %c0_44], %156 {strides = array<i32>} : memref<128x128xbf16, #tpu.memory_space<vmem>>, vector<16x128xbf16>,
    %c4_i32 = arith.constant 4 : i32
    %c16_i32_45 = arith.constant 16 : i32
    %159 = arith.muli %c4_i32, %c16_i32_45 : i32
    %160 = tpu.assume_multiple %159, 16 : i32
    %161 = arith.truncf %155 : vector<16x128xf32> to vector<16x128xbf16>
    %c0_46 = arith.constant 0 : index
    %c0_47 = arith.constant 0 : index
    %162 = vector.load %arg3[%c0_46, %c0_47] : memref<128x512xbf16, #tpu.memory_space<vmem>>, vector<128x512xbf16>
    %cst_48 = arith.constant dense<0.000000e+00> : vector<16x512xf32>
    %163 = tpu.matmul %161, %162, %cst_48 {dimension_numbers = #tpu.dot_dimension_numbers<[1], [0], [0], [1], [0, 0, 1, 1], [], []>} : vector<16x128xbf16>, vector<128x512xbf16>, vector<16x512xf32> -> vector<16x512xf32>
    %164 = arith.index_cast %160 : i32 to index
    %c0_49 = arith.constant 0 : index
    %165 = vector.load %arg18[%164, %c0_49] : memref<128x512xbf16, #tpu.memory_space<vmem>>, vector<16x512xbf16>
    %166 = arith.extf %165 : vector<16x512xbf16> to vector<16x512xf32>
    %167 = arith.addf %166, %163 : vector<16x512xf32>
    %168 = vector.extract_strided_slice %167 {offsets = [0, 0], sizes = [16, 128], strides = [1, 1]} : vector<16x512xf32> to vector<16x128xf32>
    %169 = arith.negf %168 : vector<16x128xf32>
    %170 = math.exp %169 : vector<16x128xf32>
    %cst_50 = arith.constant 1.000000e+00 : f32
    %171 = vector.broadcast %cst_50 : f32 to vector<16x128xf32>
    %172 = arith.addf %171, %170 : vector<16x128xf32>
    %173 = arith.divf %171, %172 : vector<16x128xf32>
    %174 = vector.extract_strided_slice %167 {offsets = [0, 128], sizes = [16, 128], strides = [1, 1]} : vector<16x512xf32> to vector<16x128xf32>
    %175 = arith.negf %174 : vector<16x128xf32>
    %176 = math.exp %175 : vector<16x128xf32>
    %cst_51 = arith.constant 1.000000e+00 : f32
    %177 = vector.broadcast %cst_51 : f32 to vector<16x128xf32>
    %178 = arith.addf %177, %176 : vector<16x128xf32>
    %179 = arith.divf %177, %178 : vector<16x128xf32>
    %180 = vector.extract_strided_slice %167 {offsets = [0, 256], sizes = [16, 128], strides = [1, 1]} : vector<16x512xf32> to vector<16x128xf32>
    %181 = math.tanh %180 : vector<16x128xf32>
    %182 = vector.extract_strided_slice %167 {offsets = [0, 384], sizes = [16, 128], strides = [1, 1]} : vector<16x512xf32> to vector<16x128xf32>
    %183 = arith.negf %182 : vector<16x128xf32>
    %184 = math.exp %183 : vector<16x128xf32>
    %cst_52 = arith.constant 1.000000e+00 : f32
    %185 = vector.broadcast %cst_52 : f32 to vector<16x128xf32>
    %186 = arith.addf %185, %184 : vector<16x128xf32>
    %187 = arith.divf %185, %186 : vector<16x128xf32>
    %188 = arith.mulf %179, %153 : vector<16x128xf32>
    %189 = arith.mulf %173, %181 : vector<16x128xf32>
    %190 = arith.addf %188, %189 : vector<16x128xf32>
    %191 = math.tanh %190 : vector<16x128xf32>
    %192 = arith.mulf %187, %191 : vector<16x128xf32>
    %193 = arith.truncf %192 : vector<16x128xf32> to vector<16x128xbf16>
    %194 = arith.index_cast %160 : i32 to index
    %c0_53 = arith.constant 0 : index
    %195 = vector.load %arg17[%194, %c0_53] : memref<128x128xbf16, #tpu.memory_space<vmem>>, vector<16x128xbf16>
    tpu.vector_store %arg17[%194, %c0_53], %193 {strides = array<i32>} : memref<128x128xbf16, #tpu.memory_space<vmem>>, vector<16x128xbf16>,
    %c5_i32 = arith.constant 5 : i32
    %c16_i32_54 = arith.constant 16 : i32
    %196 = arith.muli %c5_i32, %c16_i32_54 : i32
    %197 = tpu.assume_multiple %196, 16 : i32
    %198 = arith.truncf %192 : vector<16x128xf32> to vector<16x128xbf16>
    %c0_55 = arith.constant 0 : index
    %c0_56 = arith.constant 0 : index
    %199 = vector.load %arg3[%c0_55, %c0_56] : memref<128x512xbf16, #tpu.memory_space<vmem>>, vector<128x512xbf16>
    %cst_57 = arith.constant dense<0.000000e+00> : vector<16x512xf32>
    %200 = tpu.matmul %198, %199, %cst_57 {dimension_numbers = #tpu.dot_dimension_numbers<[1], [0], [0], [1], [0, 0, 1, 1], [], []>} : vector<16x128xbf16>, vector<128x512xbf16>, vector<16x512xf32> -> vector<16x512xf32>
    %201 = arith.index_cast %197 : i32 to index
    %c0_58 = arith.constant 0 : index
    %202 = vector.load %arg18[%201, %c0_58] : memref<128x512xbf16, #tpu.memory_space<vmem>>, vector<16x512xbf16>
    %203 = arith.extf %202 : vector<16x512xbf16> to vector<16x512xf32>
    %204 = arith.addf %203, %200 : vector<16x512xf32>
    %205 = vector.extract_strided_slice %204 {offsets = [0, 0], sizes = [16, 128], strides = [1, 1]} : vector<16x512xf32> to vector<16x128xf32>
    %206 = arith.negf %205 : vector<16x128xf32>
    %207 = math.exp %206 : vector<16x128xf32>
    %cst_59 = arith.constant 1.000000e+00 : f32
    %208 = vector.broadcast %cst_59 : f32 to vector<16x128xf32>
    %209 = arith.addf %208, %207 : vector<16x128xf32>
    %210 = arith.divf %208, %209 : vector<16x128xf32>
    %211 = vector.extract_strided_slice %204 {offsets = [0, 128], sizes = [16, 128], strides = [1, 1]} : vector<16x512xf32> to vector<16x128xf32>
    %212 = arith.negf %211 : vector<16x128xf32>
    %213 = math.exp %212 : vector<16x128xf32>
    %cst_60 = arith.constant 1.000000e+00 : f32
    %214 = vector.broadcast %cst_60 : f32 to vector<16x128xf32>
    %215 = arith.addf %214, %213 : vector<16x128xf32>
    %216 = arith.divf %214, %215 : vector<16x128xf32>
    %217 = vector.extract_strided_slice %204 {offsets = [0, 256], sizes = [16, 128], strides = [1, 1]} : vector<16x512xf32> to vector<16x128xf32>
    %218 = math.tanh %217 : vector<16x128xf32>
    %219 = vector.extract_strided_slice %204 {offsets = [0, 384], sizes = [16, 128], strides = [1, 1]} : vector<16x512xf32> to vector<16x128xf32>
    %220 = arith.negf %219 : vector<16x128xf32>
    %221 = math.exp %220 : vector<16x128xf32>
    %cst_61 = arith.constant 1.000000e+00 : f32
    %222 = vector.broadcast %cst_61 : f32 to vector<16x128xf32>
    %223 = arith.addf %222, %221 : vector<16x128xf32>
    %224 = arith.divf %222, %223 : vector<16x128xf32>
    %225 = arith.mulf %216, %190 : vector<16x128xf32>
    %226 = arith.mulf %210, %218 : vector<16x128xf32>
    %227 = arith.addf %225, %226 : vector<16x128xf32>
    %228 = math.tanh %227 : vector<16x128xf32>
    %229 = arith.mulf %224, %228 : vector<16x128xf32>
    %230 = arith.truncf %229 : vector<16x128xf32> to vector<16x128xbf16>
    %231 = arith.index_cast %197 : i32 to index
    %c0_62 = arith.constant 0 : index
    %232 = vector.load %arg17[%231, %c0_62] : memref<128x128xbf16, #tpu.memory_space<vmem>>, vector<16x128xbf16>
    tpu.vector_store %arg17[%231, %c0_62], %230 {strides = array<i32>} : memref<128x128xbf16, #tpu.memory_space<vmem>>, vector<16x128xbf16>,
    %c6_i32 = arith.constant 6 : i32
    %c16_i32_63 = arith.constant 16 : i32
    %233 = arith.muli %c6_i32, %c16_i32_63 : i32
    %234 = tpu.assume_multiple %233, 16 : i32
    %235 = arith.truncf %229 : vector<16x128xf32> to vector<16x128xbf16>
    %c0_64 = arith.constant 0 : index
    %c0_65 = arith.constant 0 : index
    %236 = vector.load %arg3[%c0_64, %c0_65] : memref<128x512xbf16, #tpu.memory_space<vmem>>, vector<128x512xbf16>
    %cst_66 = arith.constant dense<0.000000e+00> : vector<16x512xf32>
    %237 = tpu.matmul %235, %236, %cst_66 {dimension_numbers = #tpu.dot_dimension_numbers<[1], [0], [0], [1], [0, 0, 1, 1], [], []>} : vector<16x128xbf16>, vector<128x512xbf16>, vector<16x512xf32> -> vector<16x512xf32>
    %238 = arith.index_cast %234 : i32 to index
    %c0_67 = arith.constant 0 : index
    %239 = vector.load %arg18[%238, %c0_67] : memref<128x512xbf16, #tpu.memory_space<vmem>>, vector<16x512xbf16>
    %240 = arith.extf %239 : vector<16x512xbf16> to vector<16x512xf32>
    %241 = arith.addf %240, %237 : vector<16x512xf32>
    %242 = vector.extract_strided_slice %241 {offsets = [0, 0], sizes = [16, 128], strides = [1, 1]} : vector<16x512xf32> to vector<16x128xf32>
    %243 = arith.negf %242 : vector<16x128xf32>
    %244 = math.exp %243 : vector<16x128xf32>
    %cst_68 = arith.constant 1.000000e+00 : f32
    %245 = vector.broadcast %cst_68 : f32 to vector<16x128xf32>
    %246 = arith.addf %245, %244 : vector<16x128xf32>
    %247 = arith.divf %245, %246 : vector<16x128xf32>
    %248 = vector.extract_strided_slice %241 {offsets = [0, 128], sizes = [16, 128], strides = [1, 1]} : vector<16x512xf32> to vector<16x128xf32>
    %249 = arith.negf %248 : vector<16x128xf32>
    %250 = math.exp %249 : vector<16x128xf32>
    %cst_69 = arith.constant 1.000000e+00 : f32
    %251 = vector.broadcast %cst_69 : f32 to vector<16x128xf32>
    %252 = arith.addf %251, %250 : vector<16x128xf32>
    %253 = arith.divf %251, %252 : vector<16x128xf32>
    %254 = vector.extract_strided_slice %241 {offsets = [0, 256], sizes = [16, 128], strides = [1, 1]} : vector<16x512xf32> to vector<16x128xf32>
    %255 = math.tanh %254 : vector<16x128xf32>
    %256 = vector.extract_strided_slice %241 {offsets = [0, 384], sizes = [16, 128], strides = [1, 1]} : vector<16x512xf32> to vector<16x128xf32>
    %257 = arith.negf %256 : vector<16x128xf32>
    %258 = math.exp %257 : vector<16x128xf32>
    %cst_70 = arith.constant 1.000000e+00 : f32
    %259 = vector.broadcast %cst_70 : f32 to vector<16x128xf32>
    %260 = arith.addf %259, %258 : vector<16x128xf32>
    %261 = arith.divf %259, %260 : vector<16x128xf32>
    %262 = arith.mulf %253, %227 : vector<16x128xf32>
    %263 = arith.mulf %247, %255 : vector<16x128xf32>
    %264 = arith.addf %262, %263 : vector<16x128xf32>
    %265 = math.tanh %264 : vector<16x128xf32>
    %266 = arith.mulf %261, %265 : vector<16x128xf32>
    %267 = arith.truncf %266 : vector<16x128xf32> to vector<16x128xbf16>
    %268 = arith.index_cast %234 : i32 to index
    %c0_71 = arith.constant 0 : index
    %269 = vector.load %arg17[%268, %c0_71] : memref<128x128xbf16, #tpu.memory_space<vmem>>, vector<16x128xbf16>
    tpu.vector_store %arg17[%268, %c0_71], %267 {strides = array<i32>} : memref<128x128xbf16, #tpu.memory_space<vmem>>, vector<16x128xbf16>,
    %c7_i32 = arith.constant 7 : i32
    %c16_i32_72 = arith.constant 16 : i32
    %270 = arith.muli %c7_i32, %c16_i32_72 : i32
    %271 = tpu.assume_multiple %270, 16 : i32
    %272 = arith.truncf %266 : vector<16x128xf32> to vector<16x128xbf16>
    %c0_73 = arith.constant 0 : index
    %c0_74 = arith.constant 0 : index
    %273 = vector.load %arg3[%c0_73, %c0_74] : memref<128x512xbf16, #tpu.memory_space<vmem>>, vector<128x512xbf16>
    %cst_75 = arith.constant dense<0.000000e+00> : vector<16x512xf32>
    %274 = tpu.matmul %272, %273, %cst_75 {dimension_numbers = #tpu.dot_dimension_numbers<[1], [0], [0], [1], [0, 0, 1, 1], [], []>} : vector<16x128xbf16>, vector<128x512xbf16>, vector<16x512xf32> -> vector<16x512xf32>
    %275 = arith.index_cast %271 : i32 to index
    %c0_76 = arith.constant 0 : index
    %276 = vector.load %arg18[%275, %c0_76] : memref<128x512xbf16, #tpu.memory_space<vmem>>, vector<16x512xbf16>
    %277 = arith.extf %276 : vector<16x512xbf16> to vector<16x512xf32>
    %278 = arith.addf %277, %274 : vector<16x512xf32>
    %279 = vector.extract_strided_slice %278 {offsets = [0, 0], sizes = [16, 128], strides = [1, 1]} : vector<16x512xf32> to vector<16x128xf32>
    %280 = arith.negf %279 : vector<16x128xf32>
    %281 = math.exp %280 : vector<16x128xf32>
    %cst_77 = arith.constant 1.000000e+00 : f32
    %282 = vector.broadcast %cst_77 : f32 to vector<16x128xf32>
    %283 = arith.addf %282, %281 : vector<16x128xf32>
    %284 = arith.divf %282, %283 : vector<16x128xf32>
    %285 = vector.extract_strided_slice %278 {offsets = [0, 128], sizes = [16, 128], strides = [1, 1]} : vector<16x512xf32> to vector<16x128xf32>
    %286 = arith.negf %285 : vector<16x128xf32>
    %287 = math.exp %286 : vector<16x128xf32>
    %cst_78 = arith.constant 1.000000e+00 : f32
    %288 = vector.broadcast %cst_78 : f32 to vector<16x128xf32>
    %289 = arith.addf %288, %287 : vector<16x128xf32>
    %290 = arith.divf %288, %289 : vector<16x128xf32>
    %291 = vector.extract_strided_slice %278 {offsets = [0, 256], sizes = [16, 128], strides = [1, 1]} : vector<16x512xf32> to vector<16x128xf32>
    %292 = math.tanh %291 : vector<16x128xf32>
    %293 = vector.extract_strided_slice %278 {offsets = [0, 384], sizes = [16, 128], strides = [1, 1]} : vector<16x512xf32> to vector<16x128xf32>
    %294 = arith.negf %293 : vector<16x128xf32>
    %295 = math.exp %294 : vector<16x128xf32>
    %cst_79 = arith.constant 1.000000e+00 : f32
    %296 = vector.broadcast %cst_79 : f32 to vector<16x128xf32>
    %297 = arith.addf %296, %295 : vector<16x128xf32>
    %298 = arith.divf %296, %297 : vector<16x128xf32>
    %299 = arith.mulf %290, %264 : vector<16x128xf32>
    %300 = arith.mulf %284, %292 : vector<16x128xf32>
    %301 = arith.addf %299, %300 : vector<16x128xf32>
    %302 = math.tanh %301 : vector<16x128xf32>
    %303 = arith.mulf %298, %302 : vector<16x128xf32>
    %304 = arith.truncf %303 : vector<16x128xf32> to vector<16x128xbf16>
    %305 = arith.index_cast %271 : i32 to index
    %c0_80 = arith.constant 0 : index
    %306 = vector.load %arg17[%305, %c0_80] : memref<128x128xbf16, #tpu.memory_space<vmem>>, vector<16x128xbf16>
    tpu.vector_store %arg17[%305, %c0_80], %304 {strides = array<i32>} : memref<128x128xbf16, #tpu.memory_space<vmem>>, vector<16x128xbf16>,
    %c8_i32 = arith.constant 8 : i32
    %c0_81 = arith.constant 0 : index
    %c0_82 = arith.constant 0 : index
    %307 = vector.load %arg17[%c0_81, %c0_82] : memref<128x128xbf16, #tpu.memory_space<vmem>>, vector<128x128xbf16>
    %c0_83 = arith.constant 0 : index
    %c0_84 = arith.constant 0 : index
    %308 = vector.load %arg5[%c0_83, %c0_84] : memref<128x512xbf16, #tpu.memory_space<vmem>>, vector<128x512xbf16>
    %cst_85 = arith.constant dense<0.000000e+00> : vector<128x512xf32>
    %309 = tpu.matmul %307, %308, %cst_85 {dimension_numbers = #tpu.dot_dimension_numbers<[1], [0], [0], [1], [0, 0, 1, 1], [], []>} : vector<128x128xbf16>, vector<128x512xbf16>, vector<128x512xf32> -> vector<128x512xf32>
    %c0_86 = arith.constant 0 : index
    %c0_87 = arith.constant 0 : index
    %310 = vector.load %arg7[%c0_86, %c0_87] : memref<1x512xf32, #tpu.memory_space<vmem>>, vector<1x512xf32>
    %311 = vector.broadcast %310 : vector<1x512xf32> to vector<128x512xf32>
    %312 = arith.addf %309, %311 : vector<128x512xf32>
    %313 = arith.truncf %312 : vector<128x512xf32> to vector<128x512xbf16>
    %c0_88 = arith.constant 0 : index
    %c0_89 = arith.constant 0 : index
    %314 = vector.load %arg18[%c0_88, %c0_89] : memref<128x512xbf16, #tpu.memory_space<vmem>>, vector<128x512xbf16>
    tpu.vector_store %arg18[%c0_88, %c0_89], %313 {strides = array<i32>} : memref<128x512xbf16, #tpu.memory_space<vmem>>, vector<128x512xbf16>,
    %cst_90 = arith.constant 0.000000e+00 : f32
    %315 = vector.broadcast %cst_90 : f32 to vector<16x128xf32>
    %cst_91 = arith.constant 0.000000e+00 : f32
    %316 = vector.broadcast %cst_91 : f32 to vector<16x128xf32>
    %c0_i32_92 = arith.constant 0 : i32
    %c16_i32_93 = arith.constant 16 : i32
    %317 = arith.muli %c0_i32_92, %c16_i32_93 : i32
    %318 = tpu.assume_multiple %317, 16 : i32
    %319 = arith.truncf %315 : vector<16x128xf32> to vector<16x128xbf16>
    %c0_94 = arith.constant 0 : index
    %c0_95 = arith.constant 0 : index
    %320 = vector.load %arg6[%c0_94, %c0_95] : memref<128x512xbf16, #tpu.memory_space<vmem>>, vector<128x512xbf16>
    %cst_96 = arith.constant dense<0.000000e+00> : vector<16x512xf32>
    %321 = tpu.matmul %319, %320, %cst_96 {dimension_numbers = #tpu.dot_dimension_numbers<[1], [0], [0], [1], [0, 0, 1, 1], [], []>} : vector<16x128xbf16>, vector<128x512xbf16>, vector<16x512xf32> -> vector<16x512xf32>
    %322 = arith.index_cast %318 : i32 to index
    %c0_97 = arith.constant 0 : index
    %323 = vector.load %arg18[%322, %c0_97] : memref<128x512xbf16, #tpu.memory_space<vmem>>, vector<16x512xbf16>
    %324 = arith.extf %323 : vector<16x512xbf16> to vector<16x512xf32>
    %325 = arith.addf %324, %321 : vector<16x512xf32>
    %326 = vector.extract_strided_slice %325 {offsets = [0, 0], sizes = [16, 128], strides = [1, 1]} : vector<16x512xf32> to vector<16x128xf32>
    %327 = arith.negf %326 : vector<16x128xf32>
    %328 = math.exp %327 : vector<16x128xf32>
    %cst_98 = arith.constant 1.000000e+00 : f32
    %329 = vector.broadcast %cst_98 : f32 to vector<16x128xf32>
    %330 = arith.addf %329, %328 : vector<16x128xf32>
    %331 = arith.divf %329, %330 : vector<16x128xf32>
    %332 = vector.extract_strided_slice %325 {offsets = [0, 128], sizes = [16, 128], strides = [1, 1]} : vector<16x512xf32> to vector<16x128xf32>
    %333 = arith.negf %332 : vector<16x128xf32>
    %334 = math.exp %333 : vector<16x128xf32>
    %cst_99 = arith.constant 1.000000e+00 : f32
    %335 = vector.broadcast %cst_99 : f32 to vector<16x128xf32>
    %336 = arith.addf %335, %334 : vector<16x128xf32>
    %337 = arith.divf %335, %336 : vector<16x128xf32>
    %338 = vector.extract_strided_slice %325 {offsets = [0, 256], sizes = [16, 128], strides = [1, 1]} : vector<16x512xf32> to vector<16x128xf32>
    %339 = math.tanh %338 : vector<16x128xf32>
    %340 = vector.extract_strided_slice %325 {offsets = [0, 384], sizes = [16, 128], strides = [1, 1]} : vector<16x512xf32> to vector<16x128xf32>
    %341 = arith.negf %340 : vector<16x128xf32>
    %342 = math.exp %341 : vector<16x128xf32>
    %cst_100 = arith.constant 1.000000e+00 : f32
    %343 = vector.broadcast %cst_100 : f32 to vector<16x128xf32>
    %344 = arith.addf %343, %342 : vector<16x128xf32>
    %345 = arith.divf %343, %344 : vector<16x128xf32>
    %346 = arith.mulf %337, %316 : vector<16x128xf32>
    %347 = arith.mulf %331, %339 : vector<16x128xf32>
    %348 = arith.addf %346, %347 : vector<16x128xf32>
    %349 = math.tanh %348 : vector<16x128xf32>
    %350 = arith.mulf %345, %349 : vector<16x128xf32>
    %351 = arith.truncf %350 : vector<16x128xf32> to vector<16x128xbf16>
    %352 = arith.index_cast %318 : i32 to index
    %c0_101 = arith.constant 0 : index
    %353 = vector.load %arg17[%352, %c0_101] : memref<128x128xbf16, #tpu.memory_space<vmem>>, vector<16x128xbf16>
    tpu.vector_store %arg17[%352, %c0_101], %351 {strides = array<i32>} : memref<128x128xbf16, #tpu.memory_space<vmem>>, vector<16x128xbf16>,
    %c1_i32_102 = arith.constant 1 : i32
    %c16_i32_103 = arith.constant 16 : i32
    %354 = arith.muli %c1_i32_102, %c16_i32_103 : i32
    %355 = tpu.assume_multiple %354, 16 : i32
    %356 = arith.truncf %350 : vector<16x128xf32> to vector<16x128xbf16>
    %c0_104 = arith.constant 0 : index
    %c0_105 = arith.constant 0 : index
    %357 = vector.load %arg6[%c0_104, %c0_105] : memref<128x512xbf16, #tpu.memory_space<vmem>>, vector<128x512xbf16>
    %cst_106 = arith.constant dense<0.000000e+00> : vector<16x512xf32>
    %358 = tpu.matmul %356, %357, %cst_106 {dimension_numbers = #tpu.dot_dimension_numbers<[1], [0], [0], [1], [0, 0, 1, 1], [], []>} : vector<16x128xbf16>, vector<128x512xbf16>, vector<16x512xf32> -> vector<16x512xf32>
    %359 = arith.index_cast %355 : i32 to index
    %c0_107 = arith.constant 0 : index
    %360 = vector.load %arg18[%359, %c0_107] : memref<128x512xbf16, #tpu.memory_space<vmem>>, vector<16x512xbf16>
    %361 = arith.extf %360 : vector<16x512xbf16> to vector<16x512xf32>
    %362 = arith.addf %361, %358 : vector<16x512xf32>
    %363 = vector.extract_strided_slice %362 {offsets = [0, 0], sizes = [16, 128], strides = [1, 1]} : vector<16x512xf32> to vector<16x128xf32>
    %364 = arith.negf %363 : vector<16x128xf32>
    %365 = math.exp %364 : vector<16x128xf32>
    %cst_108 = arith.constant 1.000000e+00 : f32
    %366 = vector.broadcast %cst_108 : f32 to vector<16x128xf32>
    %367 = arith.addf %366, %365 : vector<16x128xf32>
    %368 = arith.divf %366, %367 : vector<16x128xf32>
    %369 = vector.extract_strided_slice %362 {offsets = [0, 128], sizes = [16, 128], strides = [1, 1]} : vector<16x512xf32> to vector<16x128xf32>
    %370 = arith.negf %369 : vector<16x128xf32>
    %371 = math.exp %370 : vector<16x128xf32>
    %cst_109 = arith.constant 1.000000e+00 : f32
    %372 = vector.broadcast %cst_109 : f32 to vector<16x128xf32>
    %373 = arith.addf %372, %371 : vector<16x128xf32>
    %374 = arith.divf %372, %373 : vector<16x128xf32>
    %375 = vector.extract_strided_slice %362 {offsets = [0, 256], sizes = [16, 128], strides = [1, 1]} : vector<16x512xf32> to vector<16x128xf32>
    %376 = math.tanh %375 : vector<16x128xf32>
    %377 = vector.extract_strided_slice %362 {offsets = [0, 384], sizes = [16, 128], strides = [1, 1]} : vector<16x512xf32> to vector<16x128xf32>
    %378 = arith.negf %377 : vector<16x128xf32>
    %379 = math.exp %378 : vector<16x128xf32>
    %cst_110 = arith.constant 1.000000e+00 : f32
    %380 = vector.broadcast %cst_110 : f32 to vector<16x128xf32>
    %381 = arith.addf %380, %379 : vector<16x128xf32>
    %382 = arith.divf %380, %381 : vector<16x128xf32>
    %383 = arith.mulf %374, %348 : vector<16x128xf32>
    %384 = arith.mulf %368, %376 : vector<16x128xf32>
    %385 = arith.addf %383, %384 : vector<16x128xf32>
    %386 = math.tanh %385 : vector<16x128xf32>
    %387 = arith.mulf %382, %386 : vector<16x128xf32>
    %388 = arith.truncf %387 : vector<16x128xf32> to vector<16x128xbf16>
    %389 = arith.index_cast %355 : i32 to index
    %c0_111 = arith.constant 0 : index
    %390 = vector.load %arg17[%389, %c0_111] : memref<128x128xbf16, #tpu.memory_space<vmem>>, vector<16x128xbf16>
    tpu.vector_store %arg17[%389, %c0_111], %388 {strides = array<i32>} : memref<128x128xbf16, #tpu.memory_space<vmem>>, vector<16x128xbf16>,
    %c2_i32_112 = arith.constant 2 : i32
    %c16_i32_113 = arith.constant 16 : i32
    %391 = arith.muli %c2_i32_112, %c16_i32_113 : i32
    %392 = tpu.assume_multiple %391, 16 : i32
    %393 = arith.truncf %387 : vector<16x128xf32> to vector<16x128xbf16>
    %c0_114 = arith.constant 0 : index
    %c0_115 = arith.constant 0 : index
    %394 = vector.load %arg6[%c0_114, %c0_115] : memref<128x512xbf16, #tpu.memory_space<vmem>>, vector<128x512xbf16>
    %cst_116 = arith.constant dense<0.000000e+00> : vector<16x512xf32>
    %395 = tpu.matmul %393, %394, %cst_116 {dimension_numbers = #tpu.dot_dimension_numbers<[1], [0], [0], [1], [0, 0, 1, 1], [], []>} : vector<16x128xbf16>, vector<128x512xbf16>, vector<16x512xf32> -> vector<16x512xf32>
    %396 = arith.index_cast %392 : i32 to index
    %c0_117 = arith.constant 0 : index
    %397 = vector.load %arg18[%396, %c0_117] : memref<128x512xbf16, #tpu.memory_space<vmem>>, vector<16x512xbf16>
    %398 = arith.extf %397 : vector<16x512xbf16> to vector<16x512xf32>
    %399 = arith.addf %398, %395 : vector<16x512xf32>
    %400 = vector.extract_strided_slice %399 {offsets = [0, 0], sizes = [16, 128], strides = [1, 1]} : vector<16x512xf32> to vector<16x128xf32>
    %401 = arith.negf %400 : vector<16x128xf32>
    %402 = math.exp %401 : vector<16x128xf32>
    %cst_118 = arith.constant 1.000000e+00 : f32
    %403 = vector.broadcast %cst_118 : f32 to vector<16x128xf32>
    %404 = arith.addf %403, %402 : vector<16x128xf32>
    %405 = arith.divf %403, %404 : vector<16x128xf32>
    %406 = vector.extract_strided_slice %399 {offsets = [0, 128], sizes = [16, 128], strides = [1, 1]} : vector<16x512xf32> to vector<16x128xf32>
    %407 = arith.negf %406 : vector<16x128xf32>
    %408 = math.exp %407 : vector<16x128xf32>
    %cst_119 = arith.constant 1.000000e+00 : f32
    %409 = vector.broadcast %cst_119 : f32 to vector<16x128xf32>
    %410 = arith.addf %409, %408 : vector<16x128xf32>
    %411 = arith.divf %409, %410 : vector<16x128xf32>
    %412 = vector.extract_strided_slice %399 {offsets = [0, 256], sizes = [16, 128], strides = [1, 1]} : vector<16x512xf32> to vector<16x128xf32>
    %413 = math.tanh %412 : vector<16x128xf32>
    %414 = vector.extract_strided_slice %399 {offsets = [0, 384], sizes = [16, 128], strides = [1, 1]} : vector<16x512xf32> to vector<16x128xf32>
    %415 = arith.negf %414 : vector<16x128xf32>
    %416 = math.exp %415 : vector<16x128xf32>
    %cst_120 = arith.constant 1.000000e+00 : f32
    %417 = vector.broadcast %cst_120 : f32 to vector<16x128xf32>
    %418 = arith.addf %417, %416 : vector<16x128xf32>
    %419 = arith.divf %417, %418 : vector<16x128xf32>
    %420 = arith.mulf %411, %385 : vector<16x128xf32>
    %421 = arith.mulf %405, %413 : vector<16x128xf32>
    %422 = arith.addf %420, %421 : vector<16x128xf32>
    %423 = math.tanh %422 : vector<16x128xf32>
    %424 = arith.mulf %419, %423 : vector<16x128xf32>
    %425 = arith.truncf %424 : vector<16x128xf32> to vector<16x128xbf16>
    %426 = arith.index_cast %392 : i32 to index
    %c0_121 = arith.constant 0 : index
    %427 = vector.load %arg17[%426, %c0_121] : memref<128x128xbf16, #tpu.memory_space<vmem>>, vector<16x128xbf16>
    tpu.vector_store %arg17[%426, %c0_121], %425 {strides = array<i32>} : memref<128x128xbf16, #tpu.memory_space<vmem>>, vector<16x128xbf16>,
    %c3_i32_122 = arith.constant 3 : i32
    %c16_i32_123 = arith.constant 16 : i32
    %428 = arith.muli %c3_i32_122, %c16_i32_123 : i32
    %429 = tpu.assume_multiple %428, 16 : i32
    %430 = arith.truncf %424 : vector<16x128xf32> to vector<16x128xbf16>
    %c0_124 = arith.constant 0 : index
    %c0_125 = arith.constant 0 : index
    %431 = vector.load %arg6[%c0_124, %c0_125] : memref<128x512xbf16, #tpu.memory_space<vmem>>, vector<128x512xbf16>
    %cst_126 = arith.constant dense<0.000000e+00> : vector<16x512xf32>
    %432 = tpu.matmul %430, %431, %cst_126 {dimension_numbers = #tpu.dot_dimension_numbers<[1], [0], [0], [1], [0, 0, 1, 1], [], []>} : vector<16x128xbf16>, vector<128x512xbf16>, vector<16x512xf32> -> vector<16x512xf32>
    %433 = arith.index_cast %429 : i32 to index
    %c0_127 = arith.constant 0 : index
    %434 = vector.load %arg18[%433, %c0_127] : memref<128x512xbf16, #tpu.memory_space<vmem>>, vector<16x512xbf16>
    %435 = arith.extf %434 : vector<16x512xbf16> to vector<16x512xf32>
    %436 = arith.addf %435, %432 : vector<16x512xf32>
    %437 = vector.extract_strided_slice %436 {offsets = [0, 0], sizes = [16, 128], strides = [1, 1]} : vector<16x512xf32> to vector<16x128xf32>
    %438 = arith.negf %437 : vector<16x128xf32>
    %439 = math.exp %438 : vector<16x128xf32>
    %cst_128 = arith.constant 1.000000e+00 : f32
    %440 = vector.broadcast %cst_128 : f32 to vector<16x128xf32>
    %441 = arith.addf %440, %439 : vector<16x128xf32>
    %442 = arith.divf %440, %441 : vector<16x128xf32>
    %443 = vector.extract_strided_slice %436 {offsets = [0, 128], sizes = [16, 128], strides = [1, 1]} : vector<16x512xf32> to vector<16x128xf32>
    %444 = arith.negf %443 : vector<16x128xf32>
    %445 = math.exp %444 : vector<16x128xf32>
    %cst_129 = arith.constant 1.000000e+00 : f32
    %446 = vector.broadcast %cst_129 : f32 to vector<16x128xf32>
    %447 = arith.addf %446, %445 : vector<16x128xf32>
    %448 = arith.divf %446, %447 : vector<16x128xf32>
    %449 = vector.extract_strided_slice %436 {offsets = [0, 256], sizes = [16, 128], strides = [1, 1]} : vector<16x512xf32> to vector<16x128xf32>
    %450 = math.tanh %449 : vector<16x128xf32>
    %451 = vector.extract_strided_slice %436 {offsets = [0, 384], sizes = [16, 128], strides = [1, 1]} : vector<16x512xf32> to vector<16x128xf32>
    %452 = arith.negf %451 : vector<16x128xf32>
    %453 = math.exp %452 : vector<16x128xf32>
    %cst_130 = arith.constant 1.000000e+00 : f32
    %454 = vector.broadcast %cst_130 : f32 to vector<16x128xf32>
    %455 = arith.addf %454, %453 : vector<16x128xf32>
    %456 = arith.divf %454, %455 : vector<16x128xf32>
    %457 = arith.mulf %448, %422 : vector<16x128xf32>
    %458 = arith.mulf %442, %450 : vector<16x128xf32>
    %459 = arith.addf %457, %458 : vector<16x128xf32>
    %460 = math.tanh %459 : vector<16x128xf32>
    %461 = arith.mulf %456, %460 : vector<16x128xf32>
    %462 = arith.truncf %461 : vector<16x128xf32> to vector<16x128xbf16>
    %463 = arith.index_cast %429 : i32 to index
    %c0_131 = arith.constant 0 : index
    %464 = vector.load %arg17[%463, %c0_131] : memref<128x128xbf16, #tpu.memory_space<vmem>>, vector<16x128xbf16>
    tpu.vector_store %arg17[%463, %c0_131], %462 {strides = array<i32>} : memref<128x128xbf16, #tpu.memory_space<vmem>>, vector<16x128xbf16>,
    %c4_i32_132 = arith.constant 4 : i32
    %c16_i32_133 = arith.constant 16 : i32
    %465 = arith.muli %c4_i32_132, %c16_i32_133 : i32
    %466 = tpu.assume_multiple %465, 16 : i32
    %467 = arith.truncf %461 : vector<16x128xf32> to vector<16x128xbf16>
    %c0_134 = arith.constant 0 : index
    %c0_135 = arith.constant 0 : index
    %468 = vector.load %arg6[%c0_134, %c0_135] : memref<128x512xbf16, #tpu.memory_space<vmem>>, vector<128x512xbf16>
    %cst_136 = arith.constant dense<0.000000e+00> : vector<16x512xf32>
    %469 = tpu.matmul %467, %468, %cst_136 {dimension_numbers = #tpu.dot_dimension_numbers<[1], [0], [0], [1], [0, 0, 1, 1], [], []>} : vector<16x128xbf16>, vector<128x512xbf16>, vector<16x512xf32> -> vector<16x512xf32>
    %470 = arith.index_cast %466 : i32 to index
    %c0_137 = arith.constant 0 : index
    %471 = vector.load %arg18[%470, %c0_137] : memref<128x512xbf16, #tpu.memory_space<vmem>>, vector<16x512xbf16>
    %472 = arith.extf %471 : vector<16x512xbf16> to vector<16x512xf32>
    %473 = arith.addf %472, %469 : vector<16x512xf32>
    %474 = vector.extract_strided_slice %473 {offsets = [0, 0], sizes = [16, 128], strides = [1, 1]} : vector<16x512xf32> to vector<16x128xf32>
    %475 = arith.negf %474 : vector<16x128xf32>
    %476 = math.exp %475 : vector<16x128xf32>
    %cst_138 = arith.constant 1.000000e+00 : f32
    %477 = vector.broadcast %cst_138 : f32 to vector<16x128xf32>
    %478 = arith.addf %477, %476 : vector<16x128xf32>
    %479 = arith.divf %477, %478 : vector<16x128xf32>
    %480 = vector.extract_strided_slice %473 {offsets = [0, 128], sizes = [16, 128], strides = [1, 1]} : vector<16x512xf32> to vector<16x128xf32>
    %481 = arith.negf %480 : vector<16x128xf32>
    %482 = math.exp %481 : vector<16x128xf32>
    %cst_139 = arith.constant 1.000000e+00 : f32
    %483 = vector.broadcast %cst_139 : f32 to vector<16x128xf32>
    %484 = arith.addf %483, %482 : vector<16x128xf32>
    %485 = arith.divf %483, %484 : vector<16x128xf32>
    %486 = vector.extract_strided_slice %473 {offsets = [0, 256], sizes = [16, 128], strides = [1, 1]} : vector<16x512xf32> to vector<16x128xf32>
    %487 = math.tanh %486 : vector<16x128xf32>
    %488 = vector.extract_strided_slice %473 {offsets = [0, 384], sizes = [16, 128], strides = [1, 1]} : vector<16x512xf32> to vector<16x128xf32>
    %489 = arith.negf %488 : vector<16x128xf32>
    %490 = math.exp %489 : vector<16x128xf32>
    %cst_140 = arith.constant 1.000000e+00 : f32
    %491 = vector.broadcast %cst_140 : f32 to vector<16x128xf32>
    %492 = arith.addf %491, %490 : vector<16x128xf32>
    %493 = arith.divf %491, %492 : vector<16x128xf32>
    %494 = arith.mulf %485, %459 : vector<16x128xf32>
    %495 = arith.mulf %479, %487 : vector<16x128xf32>
    %496 = arith.addf %494, %495 : vector<16x128xf32>
    %497 = math.tanh %496 : vector<16x128xf32>
    %498 = arith.mulf %493, %497 : vector<16x128xf32>
    %499 = arith.truncf %498 : vector<16x128xf32> to vector<16x128xbf16>
    %500 = arith.index_cast %466 : i32 to index
    %c0_141 = arith.constant 0 : index
    %501 = vector.load %arg17[%500, %c0_141] : memref<128x128xbf16, #tpu.memory_space<vmem>>, vector<16x128xbf16>
    tpu.vector_store %arg17[%500, %c0_141], %499 {strides = array<i32>} : memref<128x128xbf16, #tpu.memory_space<vmem>>, vector<16x128xbf16>,
    %c5_i32_142 = arith.constant 5 : i32
    %c16_i32_143 = arith.constant 16 : i32
    %502 = arith.muli %c5_i32_142, %c16_i32_143 : i32
    %503 = tpu.assume_multiple %502, 16 : i32
    %504 = arith.truncf %498 : vector<16x128xf32> to vector<16x128xbf16>
    %c0_144 = arith.constant 0 : index
    %c0_145 = arith.constant 0 : index
    %505 = vector.load %arg6[%c0_144, %c0_145] : memref<128x512xbf16, #tpu.memory_space<vmem>>, vector<128x512xbf16>
    %cst_146 = arith.constant dense<0.000000e+00> : vector<16x512xf32>
    %506 = tpu.matmul %504, %505, %cst_146 {dimension_numbers = #tpu.dot_dimension_numbers<[1], [0], [0], [1], [0, 0, 1, 1], [], []>} : vector<16x128xbf16>, vector<128x512xbf16>, vector<16x512xf32> -> vector<16x512xf32>
    %507 = arith.index_cast %503 : i32 to index
    %c0_147 = arith.constant 0 : index
    %508 = vector.load %arg18[%507, %c0_147] : memref<128x512xbf16, #tpu.memory_space<vmem>>, vector<16x512xbf16>
    %509 = arith.extf %508 : vector<16x512xbf16> to vector<16x512xf32>
    %510 = arith.addf %509, %506 : vector<16x512xf32>
    %511 = vector.extract_strided_slice %510 {offsets = [0, 0], sizes = [16, 128], strides = [1, 1]} : vector<16x512xf32> to vector<16x128xf32>
    %512 = arith.negf %511 : vector<16x128xf32>
    %513 = math.exp %512 : vector<16x128xf32>
    %cst_148 = arith.constant 1.000000e+00 : f32
    %514 = vector.broadcast %cst_148 : f32 to vector<16x128xf32>
    %515 = arith.addf %514, %513 : vector<16x128xf32>
    %516 = arith.divf %514, %515 : vector<16x128xf32>
    %517 = vector.extract_strided_slice %510 {offsets = [0, 128], sizes = [16, 128], strides = [1, 1]} : vector<16x512xf32> to vector<16x128xf32>
    %518 = arith.negf %517 : vector<16x128xf32>
    %519 = math.exp %518 : vector<16x128xf32>
    %cst_149 = arith.constant 1.000000e+00 : f32
    %520 = vector.broadcast %cst_149 : f32 to vector<16x128xf32>
    %521 = arith.addf %520, %519 : vector<16x128xf32>
    %522 = arith.divf %520, %521 : vector<16x128xf32>
    %523 = vector.extract_strided_slice %510 {offsets = [0, 256], sizes = [16, 128], strides = [1, 1]} : vector<16x512xf32> to vector<16x128xf32>
    %524 = math.tanh %523 : vector<16x128xf32>
    %525 = vector.extract_strided_slice %510 {offsets = [0, 384], sizes = [16, 128], strides = [1, 1]} : vector<16x512xf32> to vector<16x128xf32>
    %526 = arith.negf %525 : vector<16x128xf32>
    %527 = math.exp %526 : vector<16x128xf32>
    %cst_150 = arith.constant 1.000000e+00 : f32
    %528 = vector.broadcast %cst_150 : f32 to vector<16x128xf32>
    %529 = arith.addf %528, %527 : vector<16x128xf32>
    %530 = arith.divf %528, %529 : vector<16x128xf32>
    %531 = arith.mulf %522, %496 : vector<16x128xf32>
    %532 = arith.mulf %516, %524 : vector<16x128xf32>
    %533 = arith.addf %531, %532 : vector<16x128xf32>
    %534 = math.tanh %533 : vector<16x128xf32>
    %535 = arith.mulf %530, %534 : vector<16x128xf32>
    %536 = arith.truncf %535 : vector<16x128xf32> to vector<16x128xbf16>
    %537 = arith.index_cast %503 : i32 to index
    %c0_151 = arith.constant 0 : index
    %538 = vector.load %arg17[%537, %c0_151] : memref<128x128xbf16, #tpu.memory_space<vmem>>, vector<16x128xbf16>
    tpu.vector_store %arg17[%537, %c0_151], %536 {strides = array<i32>} : memref<128x128xbf16, #tpu.memory_space<vmem>>, vector<16x128xbf16>,
    %c6_i32_152 = arith.constant 6 : i32
    %c16_i32_153 = arith.constant 16 : i32
    %539 = arith.muli %c6_i32_152, %c16_i32_153 : i32
    %540 = tpu.assume_multiple %539, 16 : i32
    %541 = arith.truncf %535 : vector<16x128xf32> to vector<16x128xbf16>
    %c0_154 = arith.constant 0 : index
    %c0_155 = arith.constant 0 : index
    %542 = vector.load %arg6[%c0_154, %c0_155] : memref<128x512xbf16, #tpu.memory_space<vmem>>, vector<128x512xbf16>
    %cst_156 = arith.constant dense<0.000000e+00> : vector<16x512xf32>
    %543 = tpu.matmul %541, %542, %cst_156 {dimension_numbers = #tpu.dot_dimension_numbers<[1], [0], [0], [1], [0, 0, 1, 1], [], []>} : vector<16x128xbf16>, vector<128x512xbf16>, vector<16x512xf32> -> vector<16x512xf32>
    %544 = arith.index_cast %540 : i32 to index
    %c0_157 = arith.constant 0 : index
    %545 = vector.load %arg18[%544, %c0_157] : memref<128x512xbf16, #tpu.memory_space<vmem>>, vector<16x512xbf16>
    %546 = arith.extf %545 : vector<16x512xbf16> to vector<16x512xf32>
    %547 = arith.addf %546, %543 : vector<16x512xf32>
    %548 = vector.extract_strided_slice %547 {offsets = [0, 0], sizes = [16, 128], strides = [1, 1]} : vector<16x512xf32> to vector<16x128xf32>
    %549 = arith.negf %548 : vector<16x128xf32>
    %550 = math.exp %549 : vector<16x128xf32>
    %cst_158 = arith.constant 1.000000e+00 : f32
    %551 = vector.broadcast %cst_158 : f32 to vector<16x128xf32>
    %552 = arith.addf %551, %550 : vector<16x128xf32>
    %553 = arith.divf %551, %552 : vector<16x128xf32>
    %554 = vector.extract_strided_slice %547 {offsets = [0, 128], sizes = [16, 128], strides = [1, 1]} : vector<16x512xf32> to vector<16x128xf32>
    %555 = arith.negf %554 : vector<16x128xf32>
    %556 = math.exp %555 : vector<16x128xf32>
    %cst_159 = arith.constant 1.000000e+00 : f32
    %557 = vector.broadcast %cst_159 : f32 to vector<16x128xf32>
    %558 = arith.addf %557, %556 : vector<16x128xf32>
    %559 = arith.divf %557, %558 : vector<16x128xf32>
    %560 = vector.extract_strided_slice %547 {offsets = [0, 256], sizes = [16, 128], strides = [1, 1]} : vector<16x512xf32> to vector<16x128xf32>
    %561 = math.tanh %560 : vector<16x128xf32>
    %562 = vector.extract_strided_slice %547 {offsets = [0, 384], sizes = [16, 128], strides = [1, 1]} : vector<16x512xf32> to vector<16x128xf32>
    %563 = arith.negf %562 : vector<16x128xf32>
    %564 = math.exp %563 : vector<16x128xf32>
    %cst_160 = arith.constant 1.000000e+00 : f32
    %565 = vector.broadcast %cst_160 : f32 to vector<16x128xf32>
    %566 = arith.addf %565, %564 : vector<16x128xf32>
    %567 = arith.divf %565, %566 : vector<16x128xf32>
    %568 = arith.mulf %559, %533 : vector<16x128xf32>
    %569 = arith.mulf %553, %561 : vector<16x128xf32>
    %570 = arith.addf %568, %569 : vector<16x128xf32>
    %571 = math.tanh %570 : vector<16x128xf32>
    %572 = arith.mulf %567, %571 : vector<16x128xf32>
    %573 = arith.truncf %572 : vector<16x128xf32> to vector<16x128xbf16>
    %574 = arith.index_cast %540 : i32 to index
    %c0_161 = arith.constant 0 : index
    %575 = vector.load %arg17[%574, %c0_161] : memref<128x128xbf16, #tpu.memory_space<vmem>>, vector<16x128xbf16>
    tpu.vector_store %arg17[%574, %c0_161], %573 {strides = array<i32>} : memref<128x128xbf16, #tpu.memory_space<vmem>>, vector<16x128xbf16>,
    %c7_i32_162 = arith.constant 7 : i32
    %c16_i32_163 = arith.constant 16 : i32
    %576 = arith.muli %c7_i32_162, %c16_i32_163 : i32
    %577 = tpu.assume_multiple %576, 16 : i32
    %578 = arith.truncf %572 : vector<16x128xf32> to vector<16x128xbf16>
    %c0_164 = arith.constant 0 : index
    %c0_165 = arith.constant 0 : index
    %579 = vector.load %arg6[%c0_164, %c0_165] : memref<128x512xbf16, #tpu.memory_space<vmem>>, vector<128x512xbf16>
    %cst_166 = arith.constant dense<0.000000e+00> : vector<16x512xf32>
    %580 = tpu.matmul %578, %579, %cst_166 {dimension_numbers = #tpu.dot_dimension_numbers<[1], [0], [0], [1], [0, 0, 1, 1], [], []>} : vector<16x128xbf16>, vector<128x512xbf16>, vector<16x512xf32> -> vector<16x512xf32>
    %581 = arith.index_cast %577 : i32 to index
    %c0_167 = arith.constant 0 : index
    %582 = vector.load %arg18[%581, %c0_167] : memref<128x512xbf16, #tpu.memory_space<vmem>>, vector<16x512xbf16>
    %583 = arith.extf %582 : vector<16x512xbf16> to vector<16x512xf32>
    %584 = arith.addf %583, %580 : vector<16x512xf32>
    %585 = vector.extract_strided_slice %584 {offsets = [0, 0], sizes = [16, 128], strides = [1, 1]} : vector<16x512xf32> to vector<16x128xf32>
    %586 = arith.negf %585 : vector<16x128xf32>
    %587 = math.exp %586 : vector<16x128xf32>
    %cst_168 = arith.constant 1.000000e+00 : f32
    %588 = vector.broadcast %cst_168 : f32 to vector<16x128xf32>
    %589 = arith.addf %588, %587 : vector<16x128xf32>
    %590 = arith.divf %588, %589 : vector<16x128xf32>
    %591 = vector.extract_strided_slice %584 {offsets = [0, 128], sizes = [16, 128], strides = [1, 1]} : vector<16x512xf32> to vector<16x128xf32>
    %592 = arith.negf %591 : vector<16x128xf32>
    %593 = math.exp %592 : vector<16x128xf32>
    %cst_169 = arith.constant 1.000000e+00 : f32
    %594 = vector.broadcast %cst_169 : f32 to vector<16x128xf32>
    %595 = arith.addf %594, %593 : vector<16x128xf32>
    %596 = arith.divf %594, %595 : vector<16x128xf32>
    %597 = vector.extract_strided_slice %584 {offsets = [0, 256], sizes = [16, 128], strides = [1, 1]} : vector<16x512xf32> to vector<16x128xf32>
    %598 = math.tanh %597 : vector<16x128xf32>
    %599 = vector.extract_strided_slice %584 {offsets = [0, 384], sizes = [16, 128], strides = [1, 1]} : vector<16x512xf32> to vector<16x128xf32>
    %600 = arith.negf %599 : vector<16x128xf32>
    %601 = math.exp %600 : vector<16x128xf32>
    %cst_170 = arith.constant 1.000000e+00 : f32
    %602 = vector.broadcast %cst_170 : f32 to vector<16x128xf32>
    %603 = arith.addf %602, %601 : vector<16x128xf32>
    %604 = arith.divf %602, %603 : vector<16x128xf32>
    %605 = arith.mulf %596, %570 : vector<16x128xf32>
    %606 = arith.mulf %590, %598 : vector<16x128xf32>
    %607 = arith.addf %605, %606 : vector<16x128xf32>
    %608 = math.tanh %607 : vector<16x128xf32>
    %609 = arith.mulf %604, %608 : vector<16x128xf32>
    %610 = arith.truncf %609 : vector<16x128xf32> to vector<16x128xbf16>
    %611 = arith.index_cast %577 : i32 to index
    %c0_171 = arith.constant 0 : index
    %612 = vector.load %arg17[%611, %c0_171] : memref<128x128xbf16, #tpu.memory_space<vmem>>, vector<16x128xbf16>
    tpu.vector_store %arg17[%611, %c0_171], %610 {strides = array<i32>} : memref<128x128xbf16, #tpu.memory_space<vmem>>, vector<16x128xbf16>,
    %c8_i32_172 = arith.constant 8 : i32
    %c0_173 = arith.constant 0 : index
    %c0_174 = arith.constant 0 : index
    %613 = vector.load %arg17[%c0_173, %c0_174] : memref<128x128xbf16, #tpu.memory_space<vmem>>, vector<128x128xbf16>
    %c0_175 = arith.constant 0 : index
    %c0_176 = arith.constant 0 : index
    %614 = vector.load %arg8[%c0_175, %c0_176] : memref<128x128xbf16, #tpu.memory_space<vmem>>, vector<128x128xbf16>
    %cst_177 = arith.constant dense<0.000000e+00> : vector<128x128xf32>
    %615 = tpu.matmul %613, %614, %cst_177 {dimension_numbers = #tpu.dot_dimension_numbers<[1], [0], [0], [1], [0, 0, 1, 1], [], []>} : vector<128x128xbf16>, vector<128x128xbf16>, vector<128x128xf32> -> vector<128x128xf32>
    %c0_178 = arith.constant 0 : index
    %c0_179 = arith.constant 0 : index
    %616 = vector.load %arg9[%c0_178, %c0_179] : memref<1x128xf32, #tpu.memory_space<vmem>>, vector<1x128xf32>
    %617 = vector.broadcast %616 : vector<1x128xf32> to vector<128x128xf32>
    %618 = arith.addf %615, %617 : vector<128x128xf32>
    %619 = math.tanh %618 : vector<128x128xf32>
    %620 = vector.shape_cast %619 : vector<128x128xf32> to vector<8x16x128xf32>
    %c0_180 = arith.constant 0 : index
    %c0_181 = arith.constant 0 : index
    %621 = vector.load %arg10[%c0_180, %c0_181] : memref<1x128xf32, #tpu.memory_space<vmem>>, vector<1x128xf32>
    %622 = vector.shape_cast %621 : vector<1x128xf32> to vector<1x1x128xf32>
    %623 = vector.broadcast %622 : vector<1x1x128xf32> to vector<8x16x128xf32>
    %624 = arith.mulf %620, %623 : vector<8x16x128xf32>
    %cst_182 = arith.constant dense<0.000000e+00> : vector<8x16xf32>
    %625 = vector.multi_reduction <add>, %624, %cst_182 [2] : vector<8x16x128xf32> to vector<8x16xf32>
    %626 = vector.shape_cast %625 : vector<8x16xf32> to vector<8x16x1xf32>
    %c0_183 = arith.constant 0 : index
    %c0_184 = arith.constant 0 : index
    %627 = vector.load %arg11[%c0_183, %c0_184] : memref<1x1xf32, #tpu.memory_space<vmem>>, vector<1x1xf32>
    %628 = vector.shape_cast %627 : vector<1x1xf32> to vector<1x1x1xf32>
    %629 = vector.broadcast %628 : vector<1x1x1xf32> to vector<8x16x1xf32>
    %630 = arith.addf %626, %629 : vector<8x16x1xf32>
    %cst_185 = arith.constant dense<0xFF800000> : vector<16x1xf32>
    %631 = vector.multi_reduction <maximumf>, %630, %cst_185 [0] : vector<8x16x1xf32> to vector<16x1xf32>
    %632 = vector.shape_cast %631 : vector<16x1xf32> to vector<1x16x1xf32>
    %633 = vector.broadcast %632 : vector<1x16x1xf32> to vector<8x16x1xf32>
    %634 = arith.subf %630, %633 : vector<8x16x1xf32>
    %635 = math.exp %634 : vector<8x16x1xf32>
    %cst_186 = arith.constant dense<0.000000e+00> : vector<16x1xf32>
    %636 = vector.multi_reduction <add>, %635, %cst_186 [0] : vector<8x16x1xf32> to vector<16x1xf32>
    %637 = arith.extf %613 : vector<128x128xbf16> to vector<128x128xf32>
    %638 = vector.shape_cast %637 : vector<128x128xf32> to vector<8x16x128xf32>
    %639 = vector.broadcast %635 : vector<8x16x1xf32> to vector<8x16x128xf32>
    %640 = arith.mulf %639, %638 : vector<8x16x128xf32>
    %cst_187 = arith.constant dense<0.000000e+00> : vector<16x128xf32>
    %641 = vector.multi_reduction <add>, %640, %cst_187 [0] : vector<8x16x128xf32> to vector<16x128xf32>
    %642 = tpu.reciprocal %636 {approx = true} : vector<16x1xf32> -> vector<16x1xf32>
    %643 = vector.broadcast %642 : vector<16x1xf32> to vector<16x128xf32>
    %644 = arith.mulf %641, %643 : vector<16x128xf32>
    %645 = arith.truncf %644 : vector<16x128xf32> to vector<16x128xbf16>
    %c0_188 = arith.constant 0 : index
    %c0_189 = arith.constant 0 : index
    %646 = vector.load %arg12[%c0_188, %c0_189] : memref<128x128xbf16, #tpu.memory_space<vmem>>, vector<128x128xbf16>
    %cst_190 = arith.constant dense<0.000000e+00> : vector<16x128xf32>
    %647 = tpu.matmul %645, %646, %cst_190 {dimension_numbers = #tpu.dot_dimension_numbers<[1], [0], [0], [1], [0, 0, 1, 1], [], []>} : vector<16x128xbf16>, vector<128x128xbf16>, vector<16x128xf32> -> vector<16x128xf32>
    %c0_191 = arith.constant 0 : index
    %c0_192 = arith.constant 0 : index
    %648 = vector.load %arg13[%c0_191, %c0_192] : memref<1x128xf32, #tpu.memory_space<vmem>>, vector<1x128xf32>
    %649 = vector.broadcast %648 : vector<1x128xf32> to vector<16x128xf32>
    %650 = arith.addf %647, %649 : vector<16x128xf32>
    %cst_193 = arith.constant 0.000000e+00 : f32
    %651 = vector.broadcast %cst_193 : f32 to vector<16x128xf32>
    %652 = arith.maximumf %650, %651 : vector<16x128xf32>
    %653 = arith.truncf %652 : vector<16x128xf32> to vector<16x128xbf16>
    %c0_194 = arith.constant 0 : index
    %c0_195 = arith.constant 0 : index
    %654 = vector.load %arg14[%c0_194, %c0_195] : memref<128x3xbf16, #tpu.memory_space<vmem>>, vector<128x3xbf16>
    %cst_196 = arith.constant dense<0.000000e+00> : vector<16x3xf32>
    %655 = tpu.matmul %653, %654, %cst_196 {dimension_numbers = #tpu.dot_dimension_numbers<[1], [0], [0], [1], [0, 0, 1, 1], [], []>} : vector<16x128xbf16>, vector<128x3xbf16>, vector<16x3xf32> -> vector<16x3xf32>
    %c0_197 = arith.constant 0 : index
    %c0_198 = arith.constant 0 : index
    %656 = vector.load %arg15[%c0_197, %c0_198] : memref<1x3xf32, #tpu.memory_space<vmem>>, vector<1x3xf32>
    %657 = vector.broadcast %656 : vector<1x3xf32> to vector<16x3xf32>
    %658 = arith.addf %655, %657 : vector<16x3xf32>
    %c0_199 = arith.constant 0 : index
    %c0_200 = arith.constant 0 : index
    %659 = vector.load %arg16[%c0_199, %c0_200] : memref<16x3xf32, #tpu.memory_space<vmem>>, vector<16x3xf32>
    tpu.vector_store %arg16[%c0_199, %c0_200], %658 {strides = array<i32>} : memref<16x3xf32, #tpu.memory_space<vmem>>, vector<16x3xf32>,
    return
  }
  func.func @transform_0(%arg0: i32) -> (i32, i32, i32) {
    %c0_i32 = arith.constant 0 : i32
    %c0_i32_0 = arith.constant 0 : i32
    %c0_i32_1 = arith.constant 0 : i32
    return %arg0, %c0_i32, %c0_i32_0 : i32, i32, i32
  }
  func.func @transform_1(%arg0: i32) -> (i32, i32) {
    %c0_i32 = arith.constant 0 : i32
    %c0_i32_0 = arith.constant 0 : i32
    %c0_i32_1 = arith.constant 0 : i32
    return %c0_i32, %c0_i32_0 : i32, i32
  }
  func.func @transform_2(%arg0: i32) -> (i32, i32) {
    %c0_i32 = arith.constant 0 : i32
    %c0_i32_0 = arith.constant 0 : i32
    %c0_i32_1 = arith.constant 0 : i32
    return %c0_i32, %c0_i32_0 : i32, i32
  }
  func.func @transform_3(%arg0: i32) -> (i32, i32) {
    %c0_i32 = arith.constant 0 : i32
    %c0_i32_0 = arith.constant 0 : i32
    %c0_i32_1 = arith.constant 0 : i32
    return %c0_i32, %c0_i32_0 : i32, i32
  }
  func.func @transform_4(%arg0: i32) -> (i32, i32) {
    %c0_i32 = arith.constant 0 : i32
    %c0_i32_0 = arith.constant 0 : i32
    %c0_i32_1 = arith.constant 0 : i32
    return %c0_i32, %c0_i32_0 : i32, i32
  }
  func.func @transform_5(%arg0: i32) -> (i32, i32) {
    %c0_i32 = arith.constant 0 : i32
    %c0_i32_0 = arith.constant 0 : i32
    %c0_i32_1 = arith.constant 0 : i32
    return %c0_i32, %c0_i32_0 : i32, i32
  }
  func.func @transform_6(%arg0: i32) -> (i32, i32) {
    %c0_i32 = arith.constant 0 : i32
    %c0_i32_0 = arith.constant 0 : i32
    %c0_i32_1 = arith.constant 0 : i32
    return %c0_i32, %c0_i32_0 : i32, i32
  }
  func.func @transform_7(%arg0: i32) -> (i32, i32) {
    %c0_i32 = arith.constant 0 : i32
    %c0_i32_0 = arith.constant 0 : i32
    %c0_i32_1 = arith.constant 0 : i32
    return %c0_i32, %c0_i32_0 : i32, i32
  }
  func.func @transform_8(%arg0: i32) -> (i32, i32) {
    %c0_i32 = arith.constant 0 : i32
    %c0_i32_0 = arith.constant 0 : i32
    %c0_i32_1 = arith.constant 0 : i32
    return %c0_i32, %c0_i32_0 : i32, i32
  }
  func.func @transform_9(%arg0: i32) -> (i32, i32) {
    %c0_i32 = arith.constant 0 : i32
    %c0_i32_0 = arith.constant 0 : i32
    %c0_i32_1 = arith.constant 0 : i32
    return %c0_i32, %c0_i32_0 : i32, i32
  }
  func.func @transform_10(%arg0: i32) -> (i32, i32) {
    %c0_i32 = arith.constant 0 : i32
    %c0_i32_0 = arith.constant 0 : i32
    %c0_i32_1 = arith.constant 0 : i32
    return %c0_i32, %c0_i32_0 : i32, i32
  }
  func.func @transform_11(%arg0: i32) -> (i32, i32) {
    %c0_i32 = arith.constant 0 : i32
    %c0_i32_0 = arith.constant 0 : i32
    %c0_i32_1 = arith.constant 0 : i32
    return %c0_i32, %c0_i32_0 : i32, i32
  }
  func.func @transform_12(%arg0: i32) -> (i32, i32) {
    %c0_i32 = arith.constant 0 : i32
    %c0_i32_0 = arith.constant 0 : i32
    %c0_i32_1 = arith.constant 0 : i32
    return %c0_i32, %c0_i32_0 : i32, i32
  }
  func.func @transform_13(%arg0: i32) -> (i32, i32) {
    %c0_i32 = arith.constant 0 : i32
    %c0_i32_0 = arith.constant 0 : i32
    %c0_i32_1 = arith.constant 0 : i32
    return %c0_i32, %c0_i32_0 : i32, i32
  }
  func.func @transform_14(%arg0: i32) -> (i32, i32) {
    %c0_i32 = arith.constant 0 : i32
    %c0_i32_0 = arith.constant 0 : i32
    %c0_i32_1 = arith.constant 0 : i32
    return %c0_i32, %c0_i32_0 : i32, i32
  }
  func.func @transform_15(%arg0: i32) -> (i32, i32) {
    %c0_i32 = arith.constant 0 : i32
    %c0_i32_0 = arith.constant 0 : i32
    return %arg0, %c0_i32 : i32, i32
  }
}

</mosaic_0001>

<llo_original>
// kernel: lstm_trader_forward.1
$region0: #{lstm_trader_forward.1}
  #allocation0 [shape = 'u32[]', space=smem, size = 0x4, offset = 0x4, fixed_abs, tag = 'smem constant byte address 0x4 - core index']
  #allocation1 [shape = 'u32[72,128]{1,0:T(1,128)}', space=vmem, size = 0x9000, scoped, tag = 'internal scratch']
  #allocation2 [shape = 'bf16[128,128]{1,0:T(8,128)(2,1)}', space=vmem, size = 0x8000, scoped, tag = 'scratch operand']
  #allocation3 [shape = 'bf16[128,512]{1,0:T(8,128)(2,1)}', space=vmem, size = 0x20000, scoped, tag = 'scratch operand']
  #allocation4 [shape = 'f32[1,1]{1,0:T(1,128)S(1)}', space=vmem, size = 0x200, scoped, tag = 'scoped memory for lstm_trader_forward.1']
  %s0 = inlined_call_operand.vmem [shape: bf16[1,128,8], index: 0, kind: input, shape index: {}]
  %s1 = inlined_call_operand.vmem [shape: bf16[8,512], index: 1, kind: input, shape index: {}]
  %s2 = inlined_call_operand.vmem [shape: bf16[128,512], index: 2, kind: input, shape index: {}]
  %s3 = inlined_call_operand.vmem [shape: f32[1,512], index: 3, kind: input, shape index: {}]
  %s4 = inlined_call_operand.vmem [shape: bf16[128,512], index: 4, kind: input, shape index: {}]
  %s5 = inlined_call_operand.vmem [shape: bf16[128,512], index: 5, kind: input, shape index: {}]
  %s6 = inlined_call_operand.vmem [shape: f32[1,512], index: 6, kind: input, shape index: {}]
  %s7 = inlined_call_operand.vmem [shape: bf16[128,128], index: 7, kind: input, shape index: {}]
  %s8 = inlined_call_operand.vmem [shape: f32[1,128], index: 8, kind: input, shape index: {}]
  %s9 = inlined_call_operand.vmem [shape: f32[1,128], index: 9, kind: input, shape index: {}]
  %s10 = inlined_call_operand.<no memory space> [shape: f32[1,1], index: 10, kind: input, shape index: {}]
  %s11 = inlined_call_operand.vmem [shape: bf16[128,128], index: 11, kind: input, shape index: {}]
  %s12 = inlined_call_operand.vmem [shape: f32[1,128], index: 12, kind: input, shape index: {}]
  %s13 = inlined_call_operand.vmem [shape: bf16[128,3], index: 13, kind: input, shape index: {}]
  %s14 = inlined_call_operand.vmem [shape: f32[1,3], index: 14, kind: input, shape index: {}]
  %s15 = inlined_call_operand.vmem [shape: f32[16,3], index: 15, kind: output, shape index: {}]
  %s16 = sld [smem:[#allocation0]]
  $region70: #{lstm_trader_forward.1} parent=0
    _
  %s18 = ssub.s32 1, %s16
  %s19 = scalar_select 0, %s18, %s16
  %v20 = vstv %s10
  %21 = vst [vmem:[#allocation4] sm:$0x1] %v20
  // Predicated region
  $region2: #{lstm_trader_forward.1} parent=0 // pred_check
    _
  $region3: #{lstm_trader_forward.1} parent=0 // pred_check_branch
    %23 = sbr.rel (0) target = $region5
  $region4: #{lstm_trader_forward.1} parent=0 // pred_region
    _
  $region5: #{lstm_trader_forward.1} parent=0 // pred_fallthru
    _
  // Predicated region
  $region6: #{lstm_trader_forward.1} parent=0 // pred_check
    _
  $region7: #{lstm_trader_forward.1} parent=0 // pred_check_branch
    %25 = sbr.rel (0) target = $region9
  $region8: #{lstm_trader_forward.1} parent=0 // pred_region
    _
  $region9: #{lstm_trader_forward.1} parent=0 // pred_fallthru
    _
  // Predicated region
  $region10: #{lstm_trader_forward.1} parent=0 // pred_check
    _
  $region11: #{lstm_trader_forward.1} parent=0 // pred_check_branch
    %27 = sbr.rel (0) target = $region13
  $region12: #{lstm_trader_forward.1} parent=0 // pred_region
    _
  $region13: #{lstm_trader_forward.1} parent=0 // pred_fallthru
    _
  // Predicated region
  $region14: #{lstm_trader_forward.1} parent=0 // pred_check
    _
  $region15: #{lstm_trader_forward.1} parent=0 // pred_check_branch
    %29 = sbr.rel (0) target = $region17
  $region16: #{lstm_trader_forward.1} parent=0 // pred_region
    _
  $region17: #{lstm_trader_forward.1} parent=0 // pred_fallthru
    _
  // Predicated region
  $region18: #{lstm_trader_forward.1} parent=0 // pred_check
    _
  $region19: #{lstm_trader_forward.1} parent=0 // pred_check_branch
    %31 = sbr.rel (0) target = $region21
  $region20: #{lstm_trader_forward.1} parent=0 // pred_region
    _
  $region21: #{lstm_trader_forward.1} parent=0 // pred_fallthru
    _
  // Predicated region
  $region22: #{lstm_trader_forward.1} parent=0 // pred_check
    _
  $region23: #{lstm_trader_forward.1} parent=0 // pred_check_branch
    %33 = sbr.rel (0) target = $region25
  $region24: #{lstm_trader_forward.1} parent=0 // pred_region
    _
  $region25: #{lstm_trader_forward.1} parent=0 // pred_fallthru
    _
  // Predicated region
  $region26: #{lstm_trader_forward.1} parent=0 // pred_check
    _
  $region27: #{lstm_trader_forward.1} parent=0 // pred_check_branch
    %35 = sbr.rel (0) target = $region29
  $region28: #{lstm_trader_forward.1} parent=0 // pred_region
    _
  $region29: #{lstm_trader_forward.1} parent=0 // pred_fallthru
    _
  // Predicated region
  $region30: #{lstm_trader_forward.1} parent=0 // pred_check
    _
  $region31: #{lstm_trader_forward.1} parent=0 // pred_check_branch
    %37 = sbr.rel (0) target = $region33
  $region32: #{lstm_trader_forward.1} parent=0 // pred_region
    _
  $region33: #{lstm_trader_forward.1} parent=0 // pred_fallthru
    _
  // Predicated region
  $region34: #{lstm_trader_forward.1} parent=0 // pred_check
    _
  $region35: #{lstm_trader_forward.1} parent=0 // pred_check_branch
    %39 = sbr.rel (0) target = $region37
  $region36: #{lstm_trader_forward.1} parent=0 // pred_region
    _
  $region37: #{lstm_trader_forward.1} parent=0 // pred_fallthru
    _
  // Predicated region
  $region38: #{lstm_trader_forward.1} parent=0 // pred_check
    _
  $region39: #{lstm_trader_forward.1} parent=0 // pred_check_branch
    %41 = sbr.rel (0) target = $region41
  $region40: #{lstm_trader_forward.1} parent=0 // pred_region
    _
  $region41: #{lstm_trader_forward.1} parent=0 // pred_fallthru
    _
  // Predicated region
  $region42: #{lstm_trader_forward.1} parent=0 // pred_check
    _
  $region43: #{lstm_trader_forward.1} parent=0 // pred_check_branch
    %43 = sbr.rel (0) target = $region45
  $region44: #{lstm_trader_forward.1} parent=0 // pred_region
    _
  $region45: #{lstm_trader_forward.1} parent=0 // pred_fallthru
    _
  // Predicated region
  $region46: #{lstm_trader_forward.1} parent=0 // pred_check
    _
  $region47: #{lstm_trader_forward.1} parent=0 // pred_check_branch
    %45 = sbr.rel (0) target = $region49
  $region48: #{lstm_trader_forward.1} parent=0 // pred_region
    _
  $region49: #{lstm_trader_forward.1} parent=0 // pred_fallthru
    _
  // Predicated region
  $region50: #{lstm_trader_forward.1} parent=0 // pred_check
    _
  $region51: #{lstm_trader_forward.1} parent=0 // pred_check_branch
    %47 = sbr.rel (0) target = $region53
  $region52: #{lstm_trader_forward.1} parent=0 // pred_region
    _
  $region53: #{lstm_trader_forward.1} parent=0 // pred_fallthru
    _
  // Predicated region
  $region54: #{lstm_trader_forward.1} parent=0 // pred_check
    _
  $region55: #{lstm_trader_forward.1} parent=0 // pred_check_branch
    %49 = sbr.rel (0) target = $region57
  $region56: #{lstm_trader_forward.1} parent=0 // pred_region
    _
  $region57: #{lstm_trader_forward.1} parent=0 // pred_fallthru
    _
  // Predicated region
  $region58: #{lstm_trader_forward.1} parent=0 // pred_check
    _
  $region59: #{lstm_trader_forward.1} parent=0 // pred_check_branch
    %51 = sbr.rel (0) target = $region61
  $region60: #{lstm_trader_forward.1} parent=0 // pred_region
    _
  $region61: #{lstm_trader_forward.1} parent=0 // pred_fallthru
    _
  %v53 = vld [vmem:[%s0] sm:$0xf]
  %v54 = vld [vmem:[%s0 + $0x4] sm:$0xf]
  %v55 = vld [vmem:[%s0 + $0x8] sm:$0xf]
  %v56 = vld [vmem:[%s0 + $0xc] sm:$0xf]
  %v57 = vld [vmem:[%s0 + $0x10] sm:$0xf]
  %v58 = vld [vmem:[%s0 + $0x14] sm:$0xf]
  %v59 = vld [vmem:[%s0 + $0x18] sm:$0xf]
  %v60 = vld [vmem:[%s0 + $0x1c] sm:$0xf]
  %v61 = vld [vmem:[%s0 + $0x20] sm:$0xf]
  %v62 = vld [vmem:[%s0 + $0x24] sm:$0xf]
  %v63 = vld [vmem:[%s0 + $0x28] sm:$0xf]
  %v64 = vld [vmem:[%s0 + $0x2c] sm:$0xf]
  %v65 = vld [vmem:[%s0 + $0x30] sm:$0xf]
  %v66 = vld [vmem:[%s0 + $0x34] sm:$0xf]
  %v67 = vld [vmem:[%s0 + $0x38] sm:$0xf]
  %v68 = vld [vmem:[%s0 + $0x3c] sm:$0xf]
  %v69 = vld [vmem:[%s1] sm:$0xff]
  %v70 = vld [vmem:[%s1 + $0x8] sm:$0xff]
  %v71 = vld [vmem:[%s3] sm:$0xf]
  %v73 = vperm.slane %v71, 0
  %v74 = vperm.slane %v71, 1
  %v75 = vperm.slane %v71, 2
  %v76 = vperm.slane %v71, 3
  %v97 = vunpack.c.l.b16 %v53
  %v98 = vunpack.c.l.b16 %v54
  %v99 = vunpack.c.l.b16 %v55
  %v100 = vunpack.c.l.b16 %v56
  %v101 = vunpack.c.l.b16 %v57
  %v102 = vunpack.c.l.b16 %v58
  %v103 = vunpack.c.l.b16 %v59
  %v104 = vunpack.c.l.b16 %v60
  %v105 = vunpack.c.l.b16 %v61
  %v106 = vunpack.c.l.b16 %v62
  %v107 = vunpack.c.l.b16 %v63
  %v108 = vunpack.c.l.b16 %v64
  %v109 = vunpack.c.l.b16 %v65
  %v110 = vunpack.c.l.b16 %v66
  %v111 = vunpack.c.l.b16 %v67
  %v112 = vunpack.c.l.b16 %v68
  %v113 = vpack.c.b16 %v98, %v97
  %v114 = vpack.c.b16 %v100, %v99
  %v115 = vpack.c.b16 %v102, %v101
  %v116 = vpack.c.b16 %v104, %v103
  %v117 = vpack.c.b16 %v106, %v105
  %v118 = vpack.c.b16 %v108, %v107
  %v119 = vpack.c.b16 %v110, %v109
  %v120 = vpack.c.b16 %v112, %v111
  %v123 = vunpack.c.l.b16 %v69
  %v124 = vunpack.c.h.b16 %v69
  %v125 = vunpack.c.l.b16 %v70
  %v126 = vunpack.c.h.b16 %v70
  %v127 = vpack.c.b16 %v123, %v123
  %v128 = vpack.c.b16 %v124, %v124
  %v129 = vpack.c.b16 %v125, %v125
  %v130 = vpack.c.b16 %v126, %v126
  %vm131 = vcmask 64512
  %v133 = vsel %vm131, %v113, 0
  %v136 = vsel %vm131, %v114, 0
  %v139 = vsel %vm131, %v115, 0
  %v142 = vsel %vm131, %v116, 0
  %v145 = vsel %vm131, %v117, 0
  %v148 = vsel %vm131, %v118, 0
  %v151 = vsel %vm131, %v119, 0
  %v154 = vsel %vm131, %v120, 0
  %vm156 = vcmask 1043456
  %v158 = vsel %vm156, %v127, 0
  %v161 = vsel %vm156, %v128, 0
  %v164 = vsel %vm156, %v129, 0
  %v167 = vsel %vm156, %v130, 0
  %169 = vmatpush.bf16.msra.mxu0 0
  %170 = vmatpush.bf16.msra.mxu0 0
  %171 = vmatpush.bf16.msra.mxu0 0
  %172 = vmatpush.bf16.msra.mxu0 0
  %173 = vmatpush.bf16.msra.mxu0 0
  %174 = vmatpush.bf16.msra.mxu0 0
  %175 = vmatpush.bf16.msra.mxu0 0
  %176 = vmatpush.bf16.msra.mxu0 %v158
  %177 = vmatmul.bf16.gmra.mxu0 %v133
  %v178 = vpop.f32.mrf.mxu0
  %v179 = vadd.f32 %v73, %v178
  %v180 = vpop.f32.mrf.mxu0
  %v181 = vadd.f32 %v73, %v180
  %182 = vmatmul.bf16.gmra.mxu0 %v136
  %v183 = vpop.f32.mrf.mxu0
  %v184 = vadd.f32 %v73, %v183
  %v185 = vpop.f32.mrf.mxu0
  %v186 = vadd.f32 %v73, %v185
  %187 = vmatmul.bf16.gmra.mxu0 %v139
  %v188 = vpop.f32.mrf.mxu0
  %v189 = vadd.f32 %v73, %v188
  %v190 = vpop.f32.mrf.mxu0
  %v191 = vadd.f32 %v73, %v190
  %192 = vmatmul.bf16.gmra.mxu0 %v142
  %v193 = vpop.f32.mrf.mxu0
  %v194 = vadd.f32 %v73, %v193
  %v195 = vpop.f32.mrf.mxu0
  %v196 = vadd.f32 %v73, %v195
  %197 = vmatmul.bf16.gmra.mxu0 %v145
  %v198 = vpop.f32.mrf.mxu0
  %v199 = vadd.f32 %v73, %v198
  %v200 = vpop.f32.mrf.mxu0
  %v201 = vadd.f32 %v73, %v200
  %202 = vmatmul.bf16.gmra.mxu0 %v148
  %v203 = vpop.f32.mrf.mxu0
  %v204 = vadd.f32 %v73, %v203
  %v205 = vpop.f32.mrf.mxu0
  %v206 = vadd.f32 %v73, %v205
  %207 = vmatmul.bf16.gmra.mxu0 %v151
  %v208 = vpop.f32.mrf.mxu0
  %v209 = vadd.f32 %v73, %v208
  %v210 = vpop.f32.mrf.mxu0
  %v211 = vadd.f32 %v73, %v210
  %212 = vmatmul.bf16.gmra.mxu0 %v154
  %v213 = vpop.f32.mrf.mxu0
  %v214 = vadd.f32 %v73, %v213
  %v215 = vpop.f32.mrf.mxu0
  %v216 = vadd.f32 %v73, %v215
  %217 = vdwg.mxu0
  %218 = vmatpush.bf16.msra.mxu0 0
  %219 = vmatpush.bf16.msra.mxu0 0
  %220 = vmatpush.bf16.msra.mxu0 0
  %221 = vmatpush.bf16.msra.mxu0 0
  %222 = vmatpush.bf16.msra.mxu0 0
  %223 = vmatpush.bf16.msra.mxu0 0
  %224 = vmatpush.bf16.msra.mxu0 0
  %225 = vmatpush.bf16.msra.mxu0 %v161
  %226 = vmatmul.bf16.gmra.mxu0 %v133
  %v227 = vpop.f32.mrf.mxu0
  %v228 = vadd.f32 %v74, %v227
  %v229 = vpop.f32.mrf.mxu0
  %v230 = vadd.f32 %v74, %v229
  %231 = vmatmul.bf16.gmra.mxu0 %v136
  %v232 = vpop.f32.mrf.mxu0
  %v233 = vadd.f32 %v74, %v232
  %v234 = vpop.f32.mrf.mxu0
  %v235 = vadd.f32 %v74, %v234
  %236 = vmatmul.bf16.gmra.mxu0 %v139
  %v237 = vpop.f32.mrf.mxu0
  %v238 = vadd.f32 %v74, %v237
  %v239 = vpop.f32.mrf.mxu0
  %v240 = vadd.f32 %v74, %v239
  %241 = vmatmul.bf16.gmra.mxu0 %v142
  %v242 = vpop.f32.mrf.mxu0
  %v243 = vadd.f32 %v74, %v242
  %v244 = vpop.f32.mrf.mxu0
  %v245 = vadd.f32 %v74, %v244
  %246 = vmatmul.bf16.gmra.mxu0 %v145
  %v247 = vpop.f32.mrf.mxu0
  %v248 = vadd.f32 %v74, %v247
  %v249 = vpop.f32.mrf.mxu0
  %v250 = vadd.f32 %v74, %v249
  %251 = vmatmul.bf16.gmra.mxu0 %v148
  %v252 = vpop.f32.mrf.mxu0
  %v253 = vadd.f32 %v74, %v252
  %v254 = vpop.f32.mrf.mxu0
  %v255 = vadd.f32 %v74, %v254
  %256 = vmatmul.bf16.gmra.mxu0 %v151
  %v257 = vpop.f32.mrf.mxu0
  %v258 = vadd.f32 %v74, %v257
  %v259 = vpop.f32.mrf.mxu0
  %v260 = vadd.f32 %v74, %v259
  %261 = vmatmul.bf16.gmra.mxu0 %v154
  %v262 = vpop.f32.mrf.mxu0
  %v263 = vadd.f32 %v74, %v262
  %v264 = vpop.f32.mrf.mxu0
  %v265 = vadd.f32 %v74, %v264
  %266 = vdwg.mxu0
  %267 = vmatpush.bf16.msra.mxu0 0
  %268 = vmatpush.bf16.msra.mxu0 0
  %269 = vmatpush.bf16.msra.mxu0 0
  %270 = vmatpush.bf16.msra.mxu0 0
  %271 = vmatpush.bf16.msra.mxu0 0
  %272 = vmatpush.bf16.msra.mxu0 0
  %273 = vmatpush.bf16.msra.mxu0 0
  %274 = vmatpush.bf16.msra.mxu0 %v164
  %275 = vmatmul.bf16.gmra.mxu0 %v133
  %v276 = vpop.f32.mrf.mxu0
  %v277 = vadd.f32 %v75, %v276
  %v278 = vpop.f32.mrf.mxu0
  %v279 = vadd.f32 %v75, %v278
  %280 = vmatmul.bf16.gmra.mxu0 %v136
  %v281 = vpop.f32.mrf.mxu0
  %v282 = vadd.f32 %v75, %v281
  %v283 = vpop.f32.mrf.mxu0
  %v284 = vadd.f32 %v75, %v283
  %285 = vmatmul.bf16.gmra.mxu0 %v139
  %v286 = vpop.f32.mrf.mxu0
  %v287 = vadd.f32 %v75, %v286
  %v288 = vpop.f32.mrf.mxu0
  %v289 = vadd.f32 %v75, %v288
  %290 = vmatmul.bf16.gmra.mxu0 %v142
  %v291 = vpop.f32.mrf.mxu0
  %v292 = vadd.f32 %v75, %v291
  %v293 = vpop.f32.mrf.mxu0
  %v294 = vadd.f32 %v75, %v293
  %295 = vmatmul.bf16.gmra.mxu0 %v145
  %v296 = vpop.f32.mrf.mxu0
  %v297 = vadd.f32 %v75, %v296
  %v298 = vpop.f32.mrf.mxu0
  %v299 = vadd.f32 %v75, %v298
  %300 = vmatmul.bf16.gmra.mxu0 %v148
  %v301 = vpop.f32.mrf.mxu0
  %v302 = vadd.f32 %v75, %v301
  %v303 = vpop.f32.mrf.mxu0
  %v304 = vadd.f32 %v75, %v303
  %305 = vmatmul.bf16.gmra.mxu0 %v151
  %v306 = vpop.f32.mrf.mxu0
  %v307 = vadd.f32 %v75, %v306
  %v308 = vpop.f32.mrf.mxu0
  %v309 = vadd.f32 %v75, %v308
  %310 = vmatmul.bf16.gmra.mxu0 %v154
  %v311 = vpop.f32.mrf.mxu0
  %v312 = vadd.f32 %v75, %v311
  %v313 = vpop.f32.mrf.mxu0
  %v314 = vadd.f32 %v75, %v313
  %315 = vdwg.mxu0
  %316 = vmatpush.bf16.msra.mxu0 0
  %317 = vmatpush.bf16.msra.mxu0 0
  %318 = vmatpush.bf16.msra.mxu0 0
  %319 = vmatpush.bf16.msra.mxu0 0
  %320 = vmatpush.bf16.msra.mxu0 0
  %321 = vmatpush.bf16.msra.mxu0 0
  %322 = vmatpush.bf16.msra.mxu0 0
  %323 = vmatpush.bf16.msra.mxu0 %v167
  %324 = vmatmul.bf16.gmra.mxu0 %v133
  %v325 = vpop.f32.mrf.mxu0
  %v326 = vadd.f32 %v76, %v325
  %v327 = vpop.f32.mrf.mxu0
  %v328 = vadd.f32 %v76, %v327
  %329 = vmatmul.bf16.gmra.mxu0 %v136
  %v330 = vpop.f32.mrf.mxu0
  %v331 = vadd.f32 %v76, %v330
  %v332 = vpop.f32.mrf.mxu0
  %v333 = vadd.f32 %v76, %v332
  %334 = vmatmul.bf16.gmra.mxu0 %v139
  %v335 = vpop.f32.mrf.mxu0
  %v336 = vadd.f32 %v76, %v335
  %v337 = vpop.f32.mrf.mxu0
  %v338 = vadd.f32 %v76, %v337
  %339 = vmatmul.bf16.gmra.mxu0 %v142
  %v340 = vpop.f32.mrf.mxu0
  %v341 = vadd.f32 %v76, %v340
  %v342 = vpop.f32.mrf.mxu0
  %v343 = vadd.f32 %v76, %v342
  %344 = vmatmul.bf16.gmra.mxu0 %v145
  %v345 = vpop.f32.mrf.mxu0
  %v346 = vadd.f32 %v76, %v345
  %v347 = vpop.f32.mrf.mxu0
  %v348 = vadd.f32 %v76, %v347
  %349 = vmatmul.bf16.gmra.mxu0 %v148
  %v350 = vpop.f32.mrf.mxu0
  %v351 = vadd.f32 %v76, %v350
  %v352 = vpop.f32.mrf.mxu0
  %v353 = vadd.f32 %v76, %v352
  %354 = vmatmul.bf16.gmra.mxu0 %v151
  %v355 = vpop.f32.mrf.mxu0
  %v356 = vadd.f32 %v76, %v355
  %v357 = vpop.f32.mrf.mxu0
  %v358 = vadd.f32 %v76, %v357
  %359 = vmatmul.bf16.gmra.mxu0 %v154
  %v360 = vpop.f32.mrf.mxu0
  %v361 = vadd.f32 %v76, %v360
  %v362 = vpop.f32.mrf.mxu0
  %v363 = vadd.f32 %v76, %v362
  %364 = vdwg.mxu0
  %v365 = vpack.c.bf16 %v228, %v179
  %v366 = vpack.c.bf16 %v326, %v277
  %v367 = vpack.c.bf16 %v230, %v181
  %v368 = vpack.c.bf16 %v328, %v279
  %v369 = vpack.c.bf16 %v233, %v184
  %v370 = vpack.c.bf16 %v331, %v282
  %v371 = vpack.c.bf16 %v235, %v186
  %v372 = vpack.c.bf16 %v333, %v284
  %v373 = vpack.c.bf16 %v238, %v189
  %v374 = vpack.c.bf16 %v336, %v287
  %v375 = vpack.c.bf16 %v240, %v191
  %v376 = vpack.c.bf16 %v338, %v289
  %v377 = vpack.c.bf16 %v243, %v194
  %v378 = vpack.c.bf16 %v341, %v292
  %v379 = vpack.c.bf16 %v245, %v196
  %v380 = vpack.c.bf16 %v343, %v294
  %v381 = vpack.c.bf16 %v248, %v199
  %v382 = vpack.c.bf16 %v346, %v297
  %v383 = vpack.c.bf16 %v250, %v201
  %v384 = vpack.c.bf16 %v348, %v299
  %v385 = vpack.c.bf16 %v253, %v204
  %v386 = vpack.c.bf16 %v351, %v302
  %v387 = vpack.c.bf16 %v255, %v206
  %v388 = vpack.c.bf16 %v353, %v304
  %v389 = vpack.c.bf16 %v258, %v209
  %v390 = vpack.c.bf16 %v356, %v307
  %v391 = vpack.c.bf16 %v260, %v211
  %v392 = vpack.c.bf16 %v358, %v309
  %v393 = vpack.c.bf16 %v263, %v214
  %v394 = vpack.c.bf16 %v361, %v312
  %v395 = vpack.c.bf16 %v265, %v216
  %v396 = vpack.c.bf16 %v363, %v314
  %397 = vst [vmem:[#allocation3] sm:$0xff] %v365
  %398 = vst [vmem:[#allocation3 + $0x8] sm:$0xff] %v366
  %399 = vst [vmem:[#allocation3 + $0x10] sm:$0xff] %v367
  %400 = vst [vmem:[#allocation3 + $0x18] sm:$0xff] %v368
  %401 = vst [vmem:[#allocation3 + $0x20] sm:$0xff] %v369
  %402 = vst [vmem:[#allocation3 + $0x28] sm:$0xff] %v370
  %403 = vst [vmem:[#allocation3 + $0x30] sm:$0xff] %v371
  %404 = vst [vmem:[#allocation3 + $0x38] sm:$0xff] %v372
  %405 = vst [vmem:[#allocation3 + $0x40] sm:$0xff] %v373
  %406 = vst [vmem:[#allocation3 + $0x48] sm:$0xff] %v374
  %407 = vst [vmem:[#allocation3 + $0x50] sm:$0xff] %v375
  %408 = vst [vmem:[#allocation3 + $0x58] sm:$0xff] %v376
  %409 = vst [vmem:[#allocation3 + $0x60] sm:$0xff] %v377
  %410 = vst [vmem:[#allocation3 + $0x68] sm:$0xff] %v378
  %411 = vst [vmem:[#allocation3 + $0x70] sm:$0xff] %v379
  %412 = vst [vmem:[#allocation3 + $0x78] sm:$0xff] %v380
  %413 = vst [vmem:[#allocation3 + $0x80] sm:$0xff] %v381
  %414 = vst [vmem:[#allocation3 + $0x88] sm:$0xff] %v382
  %415 = vst [vmem:[#allocation3 + $0x90] sm:$0xff] %v383
  %416 = vst [vmem:[#allocation3 + $0x98] sm:$0xff] %v384
  %417 = vst [vmem:[#allocation3 + $0xa0] sm:$0xff] %v385
  %418 = vst [vmem:[#allocation3 + $0xa8] sm:$0xff] %v386
  %419 = vst [vmem:[#allocation3 + $0xb0] sm:$0xff] %v387
  %420 = vst [vmem:[#allocation3 + $0xb8] sm:$0xff] %v388
  %421 = vst [vmem:[#allocation3 + $0xc0] sm:$0xff] %v389
  %422 = vst [vmem:[#allocation3 + $0xc8] sm:$0xff] %v390
  %423 = vst [vmem:[#allocation3 + $0xd0] sm:$0xff] %v391
  %424 = vst [vmem:[#allocation3 + $0xd8] sm:$0xff] %v392
  %425 = vst [vmem:[#allocation3 + $0xe0] sm:$0xff] %v393
  %426 = vst [vmem:[#allocation3 + $0xe8] sm:$0xff] %v394
  %427 = vst [vmem:[#allocation3 + $0xf0] sm:$0xff] %v395
  %428 = vst [vmem:[#allocation3 + $0xf8] sm:$0xff] %v396
  %v429 = vld [vmem:[%s2] sm:$0xff]
  %v430 = vld [vmem:[%s2 + $0x8] sm:$0xff]
  %v431 = vld [vmem:[%s2 + $0x10] sm:$0xff]
  %v432 = vld [vmem:[%s2 + $0x18] sm:$0xff]
  %v433 = vld [vmem:[%s2 + $0x20] sm:$0xff]
  %v434 = vld [vmem:[%s2 + $0x28] sm:$0xff]
  %v435 = vld [vmem:[%s2 + $0x30] sm:$0xff]
  %v436 = vld [vmem:[%s2 + $0x38] sm:$0xff]
  %v437 = vld [vmem:[%s2 + $0x40] sm:$0xff]
  %v438 = vld [vmem:[%s2 + $0x48] sm:$0xff]
  %v439 = vld [vmem:[%s2 + $0x50] sm:$0xff]
  %v440 = vld [vmem:[%s2 + $0x58] sm:$0xff]
  %v441 = vld [vmem:[%s2 + $0x60] sm:$0xff]
  %v442 = vld [vmem:[%s2 + $0x68] sm:$0xff]
  %v443 = vld [vmem:[%s2 + $0x70] sm:$0xff]
  %v444 = vld [vmem:[%s2 + $0x78] sm:$0xff]
  %v445 = vld [vmem:[%s2 + $0x80] sm:$0xff]
  %v446 = vld [vmem:[%s2 + $0x88] sm:$0xff]
  %v447 = vld [vmem:[%s2 + $0x90] sm:$0xff]
  %v448 = vld [vmem:[%s2 + $0x98] sm:$0xff]
  %v449 = vld [vmem:[%s2 + $0xa0] sm:$0xff]
  %v450 = vld [vmem:[%s2 + $0xa8] sm:$0xff]
  %v451 = vld [vmem:[%s2 + $0xb0] sm:$0xff]
  %v452 = vld [vmem:[%s2 + $0xb8] sm:$0xff]
  %v453 = vld [vmem:[%s2 + $0xc0] sm:$0xff]
  %v454 = vld [vmem:[%s2 + $0xc8] sm:$0xff]
  %v455 = vld [vmem:[%s2 + $0xd0] sm:$0xff]
  %v456 = vld [vmem:[%s2 + $0xd8] sm:$0xff]
  %v457 = vld [vmem:[%s2 + $0xe0] sm:$0xff]
  %v458 = vld [vmem:[%s2 + $0xe8] sm:$0xff]
  %v459 = vld [vmem:[%s2 + $0xf0] sm:$0xff]
  %v460 = vld [vmem:[%s2 + $0xf8] sm:$0xff]
  %v493 = vunpack.c.l.b16 %v429
  %v494 = vunpack.c.h.b16 %v429
  %v495 = vunpack.c.l.b16 %v430
  %v496 = vunpack.c.h.b16 %v430
  %v497 = vunpack.c.l.b16 %v431
  %v498 = vunpack.c.h.b16 %v431
  %v499 = vunpack.c.l.b16 %v432
  %v500 = vunpack.c.h.b16 %v432
  %v501 = vunpack.c.l.b16 %v433
  %v502 = vunpack.c.h.b16 %v433
  %v503 = vunpack.c.l.b16 %v434
  %v504 = vunpack.c.h.b16 %v434
  %v505 = vunpack.c.l.b16 %v435
  %v506 = vunpack.c.h.b16 %v435
  %v507 = vunpack.c.l.b16 %v436
  %v508 = vunpack.c.h.b16 %v436
  %v509 = vunpack.c.l.b16 %v437
  %v510 = vunpack.c.h.b16 %v437
  %v511 = vunpack.c.l.b16 %v438
  %v512 = vunpack.c.h.b16 %v438
  %v513 = vunpack.c.l.b16 %v439
  %v514 = vunpack.c.h.b16 %v439
  %v515 = vunpack.c.l.b16 %v440
  %v516 = vunpack.c.h.b16 %v440
  %v517 = vunpack.c.l.b16 %v441
  %v518 = vunpack.c.h.b16 %v441
  %v519 = vunpack.c.l.b16 %v442
  %v520 = vunpack.c.h.b16 %v442
  %v521 = vunpack.c.l.b16 %v443
  %v522 = vunpack.c.h.b16 %v443
  %v523 = vunpack.c.l.b16 %v444
  %v524 = vunpack.c.h.b16 %v444
  %v525 = vunpack.c.l.b16 %v445
  %v526 = vunpack.c.h.b16 %v445
  %v527 = vunpack.c.l.b16 %v446
  %v528 = vunpack.c.h.b16 %v446
  %v529 = vunpack.c.l.b16 %v447
  %v530 = vunpack.c.h.b16 %v447
  %v531 = vunpack.c.l.b16 %v448
  %v532 = vunpack.c.h.b16 %v448
  %v533 = vunpack.c.l.b16 %v449
  %v534 = vunpack.c.h.b16 %v449
  %v535 = vunpack.c.l.b16 %v450
  %v536 = vunpack.c.h.b16 %v450
  %v537 = vunpack.c.l.b16 %v451
  %v538 = vunpack.c.h.b16 %v451
  %v539 = vunpack.c.l.b16 %v452
  %v540 = vunpack.c.h.b16 %v452
  %v541 = vunpack.c.l.b16 %v453
  %v542 = vunpack.c.h.b16 %v453
  %v543 = vunpack.c.l.b16 %v454
  %v544 = vunpack.c.h.b16 %v454
  %v545 = vunpack.c.l.b16 %v455
  %v546 = vunpack.c.h.b16 %v455
  %v547 = vunpack.c.l.b16 %v456
  %v548 = vunpack.c.h.b16 %v456
  %v549 = vunpack.c.l.b16 %v457
  %v550 = vunpack.c.h.b16 %v457
  %v551 = vunpack.c.l.b16 %v458
  %v552 = vunpack.c.h.b16 %v458
  %v553 = vunpack.c.l.b16 %v459
  %v554 = vunpack.c.h.b16 %v459
  %v555 = vunpack.c.l.b16 %v460
  %v556 = vunpack.c.h.b16 %v460
  %v557 = vpack.c.b16 %v497, %v493
  %v558 = vpack.c.b16 %v498, %v494
  %v559 = vpack.c.b16 %v499, %v495
  %v560 = vpack.c.b16 %v500, %v496
  %v561 = vpack.c.b16 %v505, %v501
  %v562 = vpack.c.b16 %v506, %v502
  %v563 = vpack.c.b16 %v507, %v503
  %v564 = vpack.c.b16 %v508, %v504
  %v565 = vpack.c.b16 %v513, %v509
  %v566 = vpack.c.b16 %v514, %v510
  %v567 = vpack.c.b16 %v515, %v511
  %v568 = vpack.c.b16 %v516, %v512
  %v569 = vpack.c.b16 %v521, %v517
  %v570 = vpack.c.b16 %v522, %v518
  %v571 = vpack.c.b16 %v523, %v519
  %v572 = vpack.c.b16 %v524, %v520
  %v573 = vpack.c.b16 %v529, %v525
  %v574 = vpack.c.b16 %v530, %v526
  %v575 = vpack.c.b16 %v531, %v527
  %v576 = vpack.c.b16 %v532, %v528
  %v577 = vpack.c.b16 %v537, %v533
  %v578 = vpack.c.b16 %v538, %v534
  %v579 = vpack.c.b16 %v539, %v535
  %v580 = vpack.c.b16 %v540, %v536
  %v581 = vpack.c.b16 %v545, %v541
  %v582 = vpack.c.b16 %v546, %v542
  %v583 = vpack.c.b16 %v547, %v543
  %v584 = vpack.c.b16 %v548, %v544
  %v585 = vpack.c.b16 %v553, %v549
  %v586 = vpack.c.b16 %v554, %v550
  %v587 = vpack.c.b16 %v555, %v551
  %v588 = vpack.c.b16 %v556, %v552
  %621 = vmatpush.bf16.msra.mxu0 %v585
  %622 = vmatpush.bf16.msra.mxu0 %v581
  %623 = vmatpush.bf16.msra.mxu0 %v577
  %624 = vmatpush.bf16.msra.mxu0 %v573
  %625 = vmatpush.bf16.msra.mxu0 %v569
  %626 = vmatpush.bf16.msra.mxu0 %v565
  %627 = vmatpush.bf16.msra.mxu0 %v561
  %628 = vmatpush.bf16.msra.mxu0 %v557
  %629 = vmatmul.bf16.gmra.mxu0 0
  %v630 = vpop.f32.mrf.mxu0
  %v631 = vadd.f32 0.0, %v630
  %v632 = vpop.f32.mrf.mxu0
  %v633 = vadd.f32 0.0, %v632
  %634 = vdwg.mxu0
  %635 = vmatpush.bf16.msra.mxu0 %v586
  %636 = vmatpush.bf16.msra.mxu0 %v582
  %637 = vmatpush.bf16.msra.mxu0 %v578
  %638 = vmatpush.bf16.msra.mxu0 %v574
  %639 = vmatpush.bf16.msra.mxu0 %v570
  %640 = vmatpush.bf16.msra.mxu0 %v566
  %641 = vmatpush.bf16.msra.mxu0 %v562
  %642 = vmatpush.bf16.msra.mxu0 %v558
  %643 = vmatmul.bf16.gmra.mxu0 0
  %v644 = vpop.f32.mrf.mxu0
  %v645 = vadd.f32 0.0, %v644
  %v646 = vpop.f32.mrf.mxu0
  %v647 = vadd.f32 0.0, %v646
  %648 = vdwg.mxu0
  %649 = vmatpush.bf16.msra.mxu0 %v587
  %650 = vmatpush.bf16.msra.mxu0 %v583
  %651 = vmatpush.bf16.msra.mxu0 %v579
  %652 = vmatpush.bf16.msra.mxu0 %v575
  %653 = vmatpush.bf16.msra.mxu0 %v571
  %654 = vmatpush.bf16.msra.mxu0 %v567
  %655 = vmatpush.bf16.msra.mxu0 %v563
  %656 = vmatpush.bf16.msra.mxu0 %v559
  %657 = vmatmul.bf16.gmra.mxu0 0
  %v658 = vpop.f32.mrf.mxu0
  %v659 = vadd.f32 0.0, %v658
  %v660 = vpop.f32.mrf.mxu0
  %v661 = vadd.f32 0.0, %v660
  %662 = vdwg.mxu0
  %663 = vmatpush.bf16.msra.mxu0 %v588
  %664 = vmatpush.bf16.msra.mxu0 %v584
  %665 = vmatpush.bf16.msra.mxu0 %v580
  %666 = vmatpush.bf16.msra.mxu0 %v576
  %667 = vmatpush.bf16.msra.mxu0 %v572
  %668 = vmatpush.bf16.msra.mxu0 %v568
  %669 = vmatpush.bf16.msra.mxu0 %v564
  %670 = vmatpush.bf16.msra.mxu0 %v560
  %671 = vmatmul.bf16.gmra.mxu0 0
  %v672 = vpop.f32.mrf.mxu0
  %v673 = vadd.f32 0.0, %v672
  %v674 = vpop.f32.mrf.mxu0
  %v675 = vadd.f32 0.0, %v674
  %676 = vdwg.mxu0
  %s677 = smul.u32 0, 4
  %s678 = smul.addr %s677, 4
  %s679 = scalar_lea.vmem [#allocation3], %s678
  %v680 = vld [vmem:[%s679] sm:$0xff]
  %v681 = vld [vmem:[%s679 + $0x8] sm:$0xff]
  %v682 = vld [vmem:[%s679 + $0x10] sm:$0xff]
  %v683 = vld [vmem:[%s679 + $0x18] sm:$0xff]
  %v684 = vunpack.c.l.bf16 %v680
  %v685 = vunpack.c.h.bf16 %v680
  %v686 = vunpack.c.l.bf16 %v681
  %v687 = vunpack.c.h.bf16 %v681
  %v688 = vunpack.c.l.bf16 %v682
  %v689 = vunpack.c.h.bf16 %v682
  %v690 = vunpack.c.l.bf16 %v683
  %v691 = vunpack.c.h.bf16 %v683
  %v692 = vadd.f32 %v684, %v631
  %v693 = vadd.f32 %v685, %v645
  %v694 = vadd.f32 %v686, %v659
  %v695 = vadd.f32 %v687, %v673
  %v696 = vadd.f32 %v688, %v633
  %v697 = vadd.f32 %v689, %v647
  %v698 = vadd.f32 %v690, %v661
  %v699 = vadd.f32 %v691, %v675
  %v700 = vxor.u32 %v692, 2147483648
  %v701 = vxor.u32 %v696, 2147483648
  %v702 = vmul.f32 %v700, 1.442695
  %v703 = vpow.pop %v702
  %v704 = vmul.f32 %v701, 1.442695
  %v705 = vpow.pop %v704
  %v706 = vadd.f32 %v703, 1.0
  %v707 = vadd.f32 %v705, 1.0
  %v708 = vrcp.pop %v706
  %v709 = vmul.f32 %v706, %v708
  %v710 = vsub.f32 1.0, %v709
  %v711 = vmul.f32 %v708, %v710
  %v712 = vadd.f32 %v708, %v711
  %vm713 = vweird.f32 %v706
  %vm714 = vweird.f32 %v708
  %vm715 = vmor %vm713, %vm714
  %v716 = vsel %vm715, %v708, %v712
  %v717 = vand.u32 2147483647, %v706
  %vm718 = vcmp.eq.f32.partialorder %v717, 8.507059e+37
  %v719 = vand.u32 %v706, 2147483648
  %v720 = vor.u32 1.1754944e-38, %v719
  %v721 = vsel %vm718, %v720, %v716
  %v722 = vmul.f32 1.0, %v721
  %v723 = vrcp.pop %v707
  %v724 = vmul.f32 %v707, %v723
  %v725 = vsub.f32 1.0, %v724
  %v726 = vmul.f32 %v723, %v725
  %v727 = vadd.f32 %v723, %v726
  %vm728 = vweird.f32 %v707
  %vm729 = vweird.f32 %v723
  %vm730 = vmor %vm728, %vm729
  %v731 = vsel %vm730, %v723, %v727
  %v732 = vand.u32 2147483647, %v707
  %vm733 = vcmp.eq.f32.partialorder %v732, 8.507059e+37
  %v734 = vand.u32 %v707, 2147483648
  %v735 = vor.u32 1.1754944e-38, %v734
  %v736 = vsel %vm733, %v735, %v731
  %v737 = vmul.f32 1.0, %v736
  %v738 = vxor.u32 %v693, 2147483648
  %v739 = vxor.u32 %v697, 2147483648
  %v740 = vmul.f32 %v738, 1.442695
  %v741 = vpow.pop %v740
  %v742 = vmul.f32 %v739, 1.442695
  %v743 = vpow.pop %v742
  %v744 = vadd.f32 %v741, 1.0
  %v745 = vadd.f32 %v743, 1.0
  %v746 = vrcp.pop %v744
  %v747 = vmul.f32 %v744, %v746
  %v748 = vsub.f32 1.0, %v747
  %v749 = vmul.f32 %v746, %v748
  %v750 = vadd.f32 %v746, %v749
  %vm751 = vweird.f32 %v744
  %vm752 = vweird.f32 %v746
  %vm753 = vmor %vm751, %vm752
  %v754 = vsel %vm753, %v746, %v750
  %v755 = vand.u32 2147483647, %v744
  %vm756 = vcmp.eq.f32.partialorder %v755, 8.507059e+37
  %v757 = vand.u32 %v744, 2147483648
  %v758 = vor.u32 1.1754944e-38, %v757
  %v759 = vsel %vm756, %v758, %v754
  %v760 = vmul.f32 1.0, %v759
  %v761 = vrcp.pop %v745
  %v762 = vmul.f32 %v745, %v761
  %v763 = vsub.f32 1.0, %v762
  %v764 = vmul.f32 %v761, %v763
  %v765 = vadd.f32 %v761, %v764
  %vm766 = vweird.f32 %v745
  %vm767 = vweird.f32 %v761
  %vm768 = vmor %vm766, %vm767
  %v769 = vsel %vm768, %v761, %v765
  %v770 = vand.u32 2147483647, %v745
  %vm771 = vcmp.eq.f32.partialorder %v770, 8.507059e+37
  %v772 = vand.u32 %v745, 2147483648
  %v773 = vor.u32 1.1754944e-38, %v772
  %v774 = vsel %vm771, %v773, %v769
  %v775 = vmul.f32 1.0, %v774
  %v776 = vtanh.pop %v694
  %v777 = vtanh.pop %v698
  %v778 = vxor.u32 %v695, 2147483648
  %v779 = vxor.u32 %v699, 2147483648
  %v780 = vmul.f32 %v778, 1.442695
  %v781 = vpow.pop %v780
  %v782 = vmul.f32 %v779, 1.442695
  %v783 = vpow.pop %v782
  %v784 = vadd.f32 %v781, 1.0
  %v785 = vadd.f32 %v783, 1.0
  %v786 = vrcp.pop %v784
  %v787 = vmul.f32 %v784, %v786
  %v788 = vsub.f32 1.0, %v787
  %v789 = vmul.f32 %v786, %v788
  %v790 = vadd.f32 %v786, %v789
  %vm791 = vweird.f32 %v784
  %vm792 = vweird.f32 %v786
  %vm793 = vmor %vm791, %vm792
  %v794 = vsel %vm793, %v786, %v790
  %v795 = vand.u32 2147483647, %v784
  %vm796 = vcmp.eq.f32.partialorder %v795, 8.507059e+37
  %v797 = vand.u32 %v784, 2147483648
  %v798 = vor.u32 1.1754944e-38, %v797
  %v799 = vsel %vm796, %v798, %v794
  %v800 = vmul.f32 1.0, %v799
  %v801 = vrcp.pop %v785
  %v802 = vmul.f32 %v785, %v801
  %v803 = vsub.f32 1.0, %v802
  %v804 = vmul.f32 %v801, %v803
  %v805 = vadd.f32 %v801, %v804
  %vm806 = vweird.f32 %v785
  %vm807 = vweird.f32 %v801
  %vm808 = vmor %vm806, %vm807
  %v809 = vsel %vm808, %v801, %v805
  %v810 = vand.u32 2147483647, %v785
  %vm811 = vcmp.eq.f32.partialorder %v810, 8.507059e+37
  %v812 = vand.u32 %v785, 2147483648
  %v813 = vor.u32 1.1754944e-38, %v812
  %v814 = vsel %vm811, %v813, %v809
  %v815 = vmul.f32 1.0, %v814
  %v816 = vmul.f32 %v760, 0.0
  %v817 = vmul.f32 %v775, 0.0
  %v818 = vmul.f32 %v722, %v776
  %v819 = vmul.f32 %v737, %v777
  %v820 = vadd.f32 %v816, %v818
  %v821 = vadd.f32 %v817, %v819
  %v822 = vtanh.pop %v820
  %v823 = vtanh.pop %v821
  %v824 = vmul.f32 %v800, %v822
  %v825 = vmul.f32 %v815, %v823
  %v826 = vpack.c.bf16 %v824, %v824
  %v827 = vpack.c.bf16 %v825, %v825
  %828 = vst [vmem:[#allocation2] sm:$0xf] %v826
  %829 = vst [vmem:[#allocation2 + $0x4] sm:$0xf] %v827
  %v830 = vld [vmem:[%s2] sm:$0xff]
  %v831 = vld [vmem:[%s2 + $0x8] sm:$0xff]
  %v832 = vld [vmem:[%s2 + $0x10] sm:$0xff]
  %v833 = vld [vmem:[%s2 + $0x18] sm:$0xff]
  %v834 = vld [vmem:[%s2 + $0x20] sm:$0xff]
  %v835 = vld [vmem:[%s2 + $0x28] sm:$0xff]
  %v836 = vld [vmem:[%s2 + $0x30] sm:$0xff]
  %v837 = vld [vmem:[%s2 + $0x38] sm:$0xff]
  %v838 = vld [vmem:[%s2 + $0x40] sm:$0xff]
  %v839 = vld [vmem:[%s2 + $0x48] sm:$0xff]
  %v840 = vld [vmem:[%s2 + $0x50] sm:$0xff]
  %v841 = vld [vmem:[%s2 + $0x58] sm:$0xff]
  %v842 = vld [vmem:[%s2 + $0x60] sm:$0xff]
  %v843 = vld [vmem:[%s2 + $0x68] sm:$0xff]
  %v844 = vld [vmem:[%s2 + $0x70] sm:$0xff]
  %v845 = vld [vmem:[%s2 + $0x78] sm:$0xff]
  %v846 = vld [vmem:[%s2 + $0x80] sm:$0xff]
  %v847 = vld [vmem:[%s2 + $0x88] sm:$0xff]
  %v848 = vld [vmem:[%s2 + $0x90] sm:$0xff]
  %v849 = vld [vmem:[%s2 + $0x98] sm:$0xff]
  %v850 = vld [vmem:[%s2 + $0xa0] sm:$0xff]
  %v851 = vld [vmem:[%s2 + $0xa8] sm:$0xff]
  %v852 = vld [vmem:[%s2 + $0xb0] sm:$0xff]
  %v853 = vld [vmem:[%s2 + $0xb8] sm:$0xff]
  %v854 = vld [vmem:[%s2 + $0xc0] sm:$0xff]
  %v855 = vld [vmem:[%s2 + $0xc8] sm:$0xff]
  %v856 = vld [vmem:[%s2 + $0xd0] sm:$0xff]
  %v857 = vld [vmem:[%s2 + $0xd8] sm:$0xff]
  %v858 = vld [vmem:[%s2 + $0xe0] sm:$0xff]
  %v859 = vld [vmem:[%s2 + $0xe8] sm:$0xff]
  %v860 = vld [vmem:[%s2 + $0xf0] sm:$0xff]
  %v861 = vld [vmem:[%s2 + $0xf8] sm:$0xff]
  %v864 = vunpack.c.l.b16 %v826
  %v865 = vunpack.c.l.b16 %v827
  %v866 = vpack.c.b16 %v865, %v864
  %v900 = vunpack.c.l.b16 %v830
  %v901 = vunpack.c.h.b16 %v830
  %v902 = vunpack.c.l.b16 %v831
  %v903 = vunpack.c.h.b16 %v831
  %v904 = vunpack.c.l.b16 %v832
  %v905 = vunpack.c.h.b16 %v832
  %v906 = vunpack.c.l.b16 %v833
  %v907 = vunpack.c.h.b16 %v833
  %v908 = vunpack.c.l.b16 %v834
  %v909 = vunpack.c.h.b16 %v834
  %v910 = vunpack.c.l.b16 %v835
  %v911 = vunpack.c.h.b16 %v835
  %v912 = vunpack.c.l.b16 %v836
  %v913 = vunpack.c.h.b16 %v836
  %v914 = vunpack.c.l.b16 %v837
  %v915 = vunpack.c.h.b16 %v837
  %v916 = vunpack.c.l.b16 %v838
  %v917 = vunpack.c.h.b16 %v838
  %v918 = vunpack.c.l.b16 %v839
  %v919 = vunpack.c.h.b16 %v839
  %v920 = vunpack.c.l.b16 %v840
  %v921 = vunpack.c.h.b16 %v840
  %v922 = vunpack.c.l.b16 %v841
  %v923 = vunpack.c.h.b16 %v841
  %v924 = vunpack.c.l.b16 %v842
  %v925 = vunpack.c.h.b16 %v842
  %v926 = vunpack.c.l.b16 %v843
  %v927 = vunpack.c.h.b16 %v843
  %v928 = vunpack.c.l.b16 %v844
  %v929 = vunpack.c.h.b16 %v844
  %v930 = vunpack.c.l.b16 %v845
  %v931 = vunpack.c.h.b16 %v845
  %v932 = vunpack.c.l.b16 %v846
  %v933 = vunpack.c.h.b16 %v846
  %v934 = vunpack.c.l.b16 %v847
  %v935 = vunpack.c.h.b16 %v847
  %v936 = vunpack.c.l.b16 %v848
  %v937 = vunpack.c.h.b16 %v848
  %v938 = vunpack.c.l.b16 %v849
  %v939 = vunpack.c.h.b16 %v849
  %v940 = vunpack.c.l.b16 %v850
  %v941 = vunpack.c.h.b16 %v850
  %v942 = vunpack.c.l.b16 %v851
  %v943 = vunpack.c.h.b16 %v851
  %v944 = vunpack.c.l.b16 %v852
  %v945 = vunpack.c.h.b16 %v852
  %v946 = vunpack.c.l.b16 %v853
  %v947 = vunpack.c.h.b16 %v853
  %v948 = vunpack.c.l.b16 %v854
  %v949 = vunpack.c.h.b16 %v854
  %v950 = vunpack.c.l.b16 %v855
  %v951 = vunpack.c.h.b16 %v855
  %v952 = vunpack.c.l.b16 %v856
  %v953 = vunpack.c.h.b16 %v856
  %v954 = vunpack.c.l.b16 %v857
  %v955 = vunpack.c.h.b16 %v857
  %v956 = vunpack.c.l.b16 %v858
  %v957 = vunpack.c.h.b16 %v858
  %v958 = vunpack.c.l.b16 %v859
  %v959 = vunpack.c.h.b16 %v859
  %v960 = vunpack.c.l.b16 %v860
  %v961 = vunpack.c.h.b16 %v860
  %v962 = vunpack.c.l.b16 %v861
  %v963 = vunpack.c.h.b16 %v861
  %v964 = vpack.c.b16 %v904, %v900
  %v965 = vpack.c.b16 %v905, %v901
  %v966 = vpack.c.b16 %v906, %v902
  %v967 = vpack.c.b16 %v907, %v903
  %v968 = vpack.c.b16 %v912, %v908
  %v969 = vpack.c.b16 %v913, %v909
  %v970 = vpack.c.b16 %v914, %v910
  %v971 = vpack.c.b16 %v915, %v911
  %v972 = vpack.c.b16 %v920, %v916
  %v973 = vpack.c.b16 %v921, %v917
  %v974 = vpack.c.b16 %v922, %v918
  %v975 = vpack.c.b16 %v923, %v919
  %v976 = vpack.c.b16 %v928, %v924
  %v977 = vpack.c.b16 %v929, %v925
  %v978 = vpack.c.b16 %v930, %v926
  %v979 = vpack.c.b16 %v931, %v927
  %v980 = vpack.c.b16 %v936, %v932
  %v981 = vpack.c.b16 %v937, %v933
  %v982 = vpack.c.b16 %v938, %v934
  %v983 = vpack.c.b16 %v939, %v935
  %v984 = vpack.c.b16 %v944, %v940
  %v985 = vpack.c.b16 %v945, %v941
  %v986 = vpack.c.b16 %v946, %v942
  %v987 = vpack.c.b16 %v947, %v943
  %v988 = vpack.c.b16 %v952, %v948
  %v989 = vpack.c.b16 %v953, %v949
  %v990 = vpack.c.b16 %v954, %v950
  %v991 = vpack.c.b16 %v955, %v951
  %v992 = vpack.c.b16 %v960, %v956
  %v993 = vpack.c.b16 %v961, %v957
  %v994 = vpack.c.b16 %v962, %v958
  %v995 = vpack.c.b16 %v963, %v959
  %1028 = vmatpush.bf16.msra.mxu0 %v992
  %1029 = vmatpush.bf16.msra.mxu0 %v988
  %1030 = vmatpush.bf16.msra.mxu0 %v984
  %1031 = vmatpush.bf16.msra.mxu0 %v980
  %1032 = vmatpush.bf16.msra.mxu0 %v976
  %1033 = vmatpush.bf16.msra.mxu0 %v972
  %1034 = vmatpush.bf16.msra.mxu0 %v968
  %1035 = vmatpush.bf16.msra.mxu0 %v964
  %1036 = vmatmul.bf16.gmra.mxu0 %v866
  %v1037 = vpop.f32.mrf.mxu0
  %v1038 = vadd.f32 0.0, %v1037
  %v1039 = vpop.f32.mrf.mxu0
  %v1040 = vadd.f32 0.0, %v1039
  %1041 = vdwg.mxu0
  %1042 = vmatpush.bf16.msra.mxu0 %v993
  %1043 = vmatpush.bf16.msra.mxu0 %v989
  %1044 = vmatpush.bf16.msra.mxu0 %v985
  %1045 = vmatpush.bf16.msra.mxu0 %v981
  %1046 = vmatpush.bf16.msra.mxu0 %v977
  %1047 = vmatpush.bf16.msra.mxu0 %v973
  %1048 = vmatpush.bf16.msra.mxu0 %v969
  %1049 = vmatpush.bf16.msra.mxu0 %v965
  %1050 = vmatmul.bf16.gmra.mxu0 %v866
  %v1051 = vpop.f32.mrf.mxu0
  %v1052 = vadd.f32 0.0, %v1051
  %v1053 = vpop.f32.mrf.mxu0
  %v1054 = vadd.f32 0.0, %v1053
  %1055 = vdwg.mxu0
  %1056 = vmatpush.bf16.msra.mxu0 %v994
  %1057 = vmatpush.bf16.msra.mxu0 %v990
  %1058 = vmatpush.bf16.msra.mxu0 %v986
  %1059 = vmatpush.bf16.msra.mxu0 %v982
  %1060 = vmatpush.bf16.msra.mxu0 %v978
  %1061 = vmatpush.bf16.msra.mxu0 %v974
  %1062 = vmatpush.bf16.msra.mxu0 %v970
  %1063 = vmatpush.bf16.msra.mxu0 %v966
  %1064 = vmatmul.bf16.gmra.mxu0 %v866
  %v1065 = vpop.f32.mrf.mxu0
  %v1066 = vadd.f32 0.0, %v1065
  %v1067 = vpop.f32.mrf.mxu0
  %v1068 = vadd.f32 0.0, %v1067
  %1069 = vdwg.mxu0
  %1070 = vmatpush.bf16.msra.mxu0 %v995
  %1071 = vmatpush.bf16.msra.mxu0 %v991
  %1072 = vmatpush.bf16.msra.mxu0 %v987
  %1073 = vmatpush.bf16.msra.mxu0 %v983
  %1074 = vmatpush.bf16.msra.mxu0 %v979
  %1075 = vmatpush.bf16.msra.mxu0 %v975
  %1076 = vmatpush.bf16.msra.mxu0 %v971
  %1077 = vmatpush.bf16.msra.mxu0 %v967
  %1078 = vmatmul.bf16.gmra.mxu0 %v866
  %v1079 = vpop.f32.mrf.mxu0
  %v1080 = vadd.f32 0.0, %v1079
  %v1081 = vpop.f32.mrf.mxu0
  %v1082 = vadd.f32 0.0, %v1081
  %1083 = vdwg.mxu0
  %s1084 = smul.u32 2, 4
  %s1085 = smul.addr %s1084, 4
  %s1086 = scalar_lea.vmem [#allocation3], %s1085
  %v1087 = vld [vmem:[%s1086] sm:$0xff]
  %v1088 = vld [vmem:[%s1086 + $0x8] sm:$0xff]
  %v1089 = vld [vmem:[%s1086 + $0x10] sm:$0xff]
  %v1090 = vld [vmem:[%s1086 + $0x18] sm:$0xff]
  %v1091 = vunpack.c.l.bf16 %v1087
  %v1092 = vunpack.c.h.bf16 %v1087
  %v1093 = vunpack.c.l.bf16 %v1088
  %v1094 = vunpack.c.h.bf16 %v1088
  %v1095 = vunpack.c.l.bf16 %v1089
  %v1096 = vunpack.c.h.bf16 %v1089
  %v1097 = vunpack.c.l.bf16 %v1090
  %v1098 = vunpack.c.h.bf16 %v1090
  %v1099 = vadd.f32 %v1091, %v1038
  %v1100 = vadd.f32 %v1092, %v1052
  %v1101 = vadd.f32 %v1093, %v1066
  %v1102 = vadd.f32 %v1094, %v1080
  %v1103 = vadd.f32 %v1095, %v1040
  %v1104 = vadd.f32 %v1096, %v1054
  %v1105 = vadd.f32 %v1097, %v1068
  %v1106 = vadd.f32 %v1098, %v1082
  %v1107 = vxor.u32 %v1099, 2147483648
  %v1108 = vxor.u32 %v1103, 2147483648
  %v1109 = vmul.f32 %v1107, 1.442695
  %v1110 = vpow.pop %v1109
  %v1111 = vmul.f32 %v1108, 1.442695
  %v1112 = vpow.pop %v1111
  %v1113 = vadd.f32 %v1110, 1.0
  %v1114 = vadd.f32 %v1112, 1.0
  %v1115 = vrcp.pop %v1113
  %v1116 = vmul.f32 %v1113, %v1115
  %v1117 = vsub.f32 1.0, %v1116
  %v1118 = vmul.f32 %v1115, %v1117
  %v1119 = vadd.f32 %v1115, %v1118
  %vm1120 = vweird.f32 %v1113
  %vm1121 = vweird.f32 %v1115
  %vm1122 = vmor %vm1120, %vm1121
  %v1123 = vsel %vm1122, %v1115, %v1119
  %v1124 = vand.u32 2147483647, %v1113
  %vm1125 = vcmp.eq.f32.partialorder %v1124, 8.507059e+37
  %v1126 = vand.u32 %v1113, 2147483648
  %v1127 = vor.u32 1.1754944e-38, %v1126
  %v1128 = vsel %vm1125, %v1127, %v1123
  %v1129 = vmul.f32 1.0, %v1128
  %v1130 = vrcp.pop %v1114
  %v1131 = vmul.f32 %v1114, %v1130
  %v1132 = vsub.f32 1.0, %v1131
  %v1133 = vmul.f32 %v1130, %v1132
  %v1134 = vadd.f32 %v1130, %v1133
  %vm1135 = vweird.f32 %v1114
  %vm1136 = vweird.f32 %v1130
  %vm1137 = vmor %vm1135, %vm1136
  %v1138 = vsel %vm1137, %v1130, %v1134
  %v1139 = vand.u32 2147483647, %v1114
  %vm1140 = vcmp.eq.f32.partialorder %v1139, 8.507059e+37
  %v1141 = vand.u32 %v1114, 2147483648
  %v1142 = vor.u32 1.1754944e-38, %v1141
  %v1143 = vsel %vm1140, %v1142, %v1138
  %v1144 = vmul.f32 1.0, %v1143
  %v1145 = vxor.u32 %v1100, 2147483648
  %v1146 = vxor.u32 %v1104, 2147483648
  %v1147 = vmul.f32 %v1145, 1.442695
  %v1148 = vpow.pop %v1147
  %v1149 = vmul.f32 %v1146, 1.442695
  %v1150 = vpow.pop %v1149
  %v1151 = vadd.f32 %v1148, 1.0
  %v1152 = vadd.f32 %v1150, 1.0
  %v1153 = vrcp.pop %v1151
  %v1154 = vmul.f32 %v1151, %v1153
  %v1155 = vsub.f32 1.0, %v1154
  %v1156 = vmul.f32 %v1153, %v1155
  %v1157 = vadd.f32 %v1153, %v1156
  %vm1158 = vweird.f32 %v1151
  %vm1159 = vweird.f32 %v1153
  %vm1160 = vmor %vm1158, %vm1159
  %v1161 = vsel %vm1160, %v1153, %v1157
  %v1162 = vand.u32 2147483647, %v1151
  %vm1163 = vcmp.eq.f32.partialorder %v1162, 8.507059e+37
  %v1164 = vand.u32 %v1151, 2147483648
  %v1165 = vor.u32 1.1754944e-38, %v1164
  %v1166 = vsel %vm1163, %v1165, %v1161
  %v1167 = vmul.f32 1.0, %v1166
  %v1168 = vrcp.pop %v1152
  %v1169 = vmul.f32 %v1152, %v1168
  %v1170 = vsub.f32 1.0, %v1169
  %v1171 = vmul.f32 %v1168, %v1170
  %v1172 = vadd.f32 %v1168, %v1171
  %vm1173 = vweird.f32 %v1152
  %vm1174 = vweird.f32 %v1168
  %vm1175 = vmor %vm1173, %vm1174
  %v1176 = vsel %vm1175, %v1168, %v1172
  %v1177 = vand.u32 2147483647, %v1152
  %vm1178 = vcmp.eq.f32.partialorder %v1177, 8.507059e+37
  %v1179 = vand.u32 %v1152, 2147483648
  %v1180 = vor.u32 1.1754944e-38, %v1179
  %v1181 = vsel %vm1178, %v1180, %v1176
  %v1182 = vmul.f32 1.0, %v1181
  %v1183 = vtanh.pop %v1101
  %v1184 = vtanh.pop %v1105
  %v1185 = vxor.u32 %v1102, 2147483648
  %v1186 = vxor.u32 %v1106, 2147483648
  %v1187 = vmul.f32 %v1185, 1.442695
  %v1188 = vpow.pop %v1187
  %v1189 = vmul.f32 %v1186, 1.442695
  %v1190 = vpow.pop %v1189
  %v1191 = vadd.f32 %v1188, 1.0
  %v1192 = vadd.f32 %v1190, 1.0
  %v1193 = vrcp.pop %v1191
  %v1194 = vmul.f32 %v1191, %v1193
  %v1195 = vsub.f32 1.0, %v1194
  %v1196 = vmul.f32 %v1193, %v1195
  %v1197 = vadd.f32 %v1193, %v1196
  %vm1198 = vweird.f32 %v1191
  %vm1199 = vweird.f32 %v1193
  %vm1200 = vmor %vm1198, %vm1199
  %v1201 = vsel %vm1200, %v1193, %v1197
  %v1202 = vand.u32 2147483647, %v1191
  %vm1203 = vcmp.eq.f32.partialorder %v1202, 8.507059e+37
  %v1204 = vand.u32 %v1191, 2147483648
  %v1205 = vor.u32 1.1754944e-38, %v1204
  %v1206 = vsel %vm1203, %v1205, %v1201
  %v1207 = vmul.f32 1.0, %v1206
  %v1208 = vrcp.pop %v1192
  %v1209 = vmul.f32 %v1192, %v1208
  %v1210 = vsub.f32 1.0, %v1209
  %v1211 = vmul.f32 %v1208, %v1210
  %v1212 = vadd.f32 %v1208, %v1211
  %vm1213 = vweird.f32 %v1192
  %vm1214 = vweird.f32 %v1208
  %vm1215 = vmor %vm1213, %vm1214
  %v1216 = vsel %vm1215, %v1208, %v1212
  %v1217 = vand.u32 2147483647, %v1192
  %vm1218 = vcmp.eq.f32.partialorder %v1217, 8.507059e+37
  %v1219 = vand.u32 %v1192, 2147483648
  %v1220 = vor.u32 1.1754944e-38, %v1219
  %v1221 = vsel %vm1218, %v1220, %v1216
  %v1222 = vmul.f32 1.0, %v1221
  %v1223 = vmul.f32 %v1167, %v820
  %v1224 = vmul.f32 %v1182, %v821
  %v1225 = vmul.f32 %v1129, %v1183
  %v1226 = vmul.f32 %v1144, %v1184
  %v1227 = vadd.f32 %v1223, %v1225
  %v1228 = vadd.f32 %v1224, %v1226
  %v1229 = vtanh.pop %v1227
  %v1230 = vtanh.pop %v1228
  %v1231 = vmul.f32 %v1207, %v1229
  %v1232 = vmul.f32 %v1222, %v1230
  %v1233 = vpack.c.bf16 %v1231, %v1231
  %v1234 = vpack.c.bf16 %v1232, %v1232
  %s1235 = scalar_lea.vmem [#allocation2], 8
  %1236 = vst [vmem:[%s1235] sm:$0xf] %v1233
  %1237 = vst [vmem:[%s1235 + $0x4] sm:$0xf] %v1234
  %v1238 = vld [vmem:[%s2] sm:$0xff]
  %v1239 = vld [vmem:[%s2 + $0x8] sm:$0xff]
  %v1240 = vld [vmem:[%s2 + $0x10] sm:$0xff]
  %v1241 = vld [vmem:[%s2 + $0x18] sm:$0xff]
  %v1242 = vld [vmem:[%s2 + $0x20] sm:$0xff]
  %v1243 = vld [vmem:[%s2 + $0x28] sm:$0xff]
  %v1244 = vld [vmem:[%s2 + $0x30] sm:$0xff]
  %v1245 = vld [vmem:[%s2 + $0x38] sm:$0xff]
  %v1246 = vld [vmem:[%s2 + $0x40] sm:$0xff]
  %v1247 = vld [vmem:[%s2 + $0x48] sm:$0xff]
  %v1248 = vld [vmem:[%s2 + $0x50] sm:$0xff]
  %v1249 = vld [vmem:[%s2 + $0x58] sm:$0xff]
  %v1250 = vld [vmem:[%s2 + $0x60] sm:$0xff]
  %v1251 = vld [vmem:[%s2 + $0x68] sm:$0xff]
  %v1252 = vld [vmem:[%s2 + $0x70] sm:$0xff]
  %v1253 = vld [vmem:[%s2 + $0x78] sm:$0xff]
  %v1254 = vld [vmem:[%s2 + $0x80] sm:$0xff]
  %v1255 = vld [vmem:[%s2 + $0x88] sm:$0xff]
  %v1256 = vld [vmem:[%s2 + $0x90] sm:$0xff]
  %v1257 = vld [vmem:[%s2 + $0x98] sm:$0xff]
  %v1258 = vld [vmem:[%s2 + $0xa0] sm:$0xff]
  %v1259 = vld [vmem:[%s2 + $0xa8] sm:$0xff]
  %v1260 = vld [vmem:[%s2 + $0xb0] sm:$0xff]
  %v1261 = vld [vmem:[%s2 + $0xb8] sm:$0xff]
  %v1262 = vld [vmem:[%s2 + $0xc0] sm:$0xff]
  %v1263 = vld [vmem:[%s2 + $0xc8] sm:$0xff]
  %v1264 = vld [vmem:[%s2 + $0xd0] sm:$0xff]
  %v1265 = vld [vmem:[%s2 + $0xd8] sm:$0xff]
  %v1266 = vld [vmem:[%s2 + $0xe0] sm:$0xff]
  %v1267 = vld [vmem:[%s2 + $0xe8] sm:$0xff]
  %v1268 = vld [vmem:[%s2 + $0xf0] sm:$0xff]
  %v1269 = vld [vmem:[%s2 + $0xf8] sm:$0xff]
  %v1272 = vunpack.c.l.b16 %v1233
  %v1273 = vunpack.c.l.b16 %v1234
  %v1274 = vpack.c.b16 %v1273, %v1272
  %v1308 = vunpack.c.l.b16 %v1238
  %v1309 = vunpack.c.h.b16 %v1238
  %v1310 = vunpack.c.l.b16 %v1239
  %v1311 = vunpack.c.h.b16 %v1239
  %v1312 = vunpack.c.l.b16 %v1240
  %v1313 = vunpack.c.h.b16 %v1240
  %v1314 = vunpack.c.l.b16 %v1241
  %v1315 = vunpack.c.h.b16 %v1241
  %v1316 = vunpack.c.l.b16 %v1242
  %v1317 = vunpack.c.h.b16 %v1242
  %v1318 = vunpack.c.l.b16 %v1243
  %v1319 = vunpack.c.h.b16 %v1243
  %v1320 = vunpack.c.l.b16 %v1244
  %v1321 = vunpack.c.h.b16 %v1244
  %v1322 = vunpack.c.l.b16 %v1245
  %v1323 = vunpack.c.h.b16 %v1245
  %v1324 = vunpack.c.l.b16 %v1246
  %v1325 = vunpack.c.h.b16 %v1246
  %v1326 = vunpack.c.l.b16 %v1247
  %v1327 = vunpack.c.h.b16 %v1247
  %v1328 = vunpack.c.l.b16 %v1248
  %v1329 = vunpack.c.h.b16 %v1248
  %v1330 = vunpack.c.l.b16 %v1249
  %v1331 = vunpack.c.h.b16 %v1249
  %v1332 = vunpack.c.l.b16 %v1250
  %v1333 = vunpack.c.h.b16 %v1250
  %v1334 = vunpack.c.l.b16 %v1251
  %v1335 = vunpack.c.h.b16 %v1251
  %v1336 = vunpack.c.l.b16 %v1252
  %v1337 = vunpack.c.h.b16 %v1252
  %v1338 = vunpack.c.l.b16 %v1253
  %v1339 = vunpack.c.h.b16 %v1253
  %v1340 = vunpack.c.l.b16 %v1254
  %v1341 = vunpack.c.h.b16 %v1254
  %v1342 = vunpack.c.l.b16 %v1255
  %v1343 = vunpack.c.h.b16 %v1255
  %v1344 = vunpack.c.l.b16 %v1256
  %v1345 = vunpack.c.h.b16 %v1256
  %v1346 = vunpack.c.l.b16 %v1257
  %v1347 = vunpack.c.h.b16 %v1257
  %v1348 = vunpack.c.l.b16 %v1258
  %v1349 = vunpack.c.h.b16 %v1258
  %v1350 = vunpack.c.l.b16 %v1259
  %v1351 = vunpack.c.h.b16 %v1259
  %v1352 = vunpack.c.l.b16 %v1260
  %v1353 = vunpack.c.h.b16 %v1260
  %v1354 = vunpack.c.l.b16 %v1261
  %v1355 = vunpack.c.h.b16 %v1261
  %v1356 = vunpack.c.l.b16 %v1262
  %v1357 = vunpack.c.h.b16 %v1262
  %v1358 = vunpack.c.l.b16 %v1263
  %v1359 = vunpack.c.h.b16 %v1263
  %v1360 = vunpack.c.l.b16 %v1264
  %v1361 = vunpack.c.h.b16 %v1264
  %v1362 = vunpack.c.l.b16 %v1265
  %v1363 = vunpack.c.h.b16 %v1265
  %v1364 = vunpack.c.l.b16 %v1266
  %v1365 = vunpack.c.h.b16 %v1266
  %v1366 = vunpack.c.l.b16 %v1267
  %v1367 = vunpack.c.h.b16 %v1267
  %v1368 = vunpack.c.l.b16 %v1268
  %v1369 = vunpack.c.h.b16 %v1268
  %v1370 = vunpack.c.l.b16 %v1269
  %v1371 = vunpack.c.h.b16 %v1269
  %v1372 = vpack.c.b16 %v1312, %v1308
  %v1373 = vpack.c.b16 %v1313, %v1309
  %v1374 = vpack.c.b16 %v1314, %v1310
  %v1375 = vpack.c.b16 %v1315, %v1311
  %v1376 = vpack.c.b16 %v1320, %v1316
  %v1377 = vpack.c.b16 %v1321, %v1317
  %v1378 = vpack.c.b16 %v1322, %v1318
  %v1379 = vpack.c.b16 %v1323, %v1319
  %v1380 = vpack.c.b16 %v1328, %v1324
  %v1381 = vpack.c.b16 %v1329, %v1325
  %v1382 = vpack.c.b16 %v1330, %v1326
  %v1383 = vpack.c.b16 %v1331, %v1327
  %v1384 = vpack.c.b16 %v1336, %v1332
  %v1385 = vpack.c.b16 %v1337, %v1333
  %v1386 = vpack.c.b16 %v1338, %v1334
  %v1387 = vpack.c.b16 %v1339, %v1335
  %v1388 = vpack.c.b16 %v1344, %v1340
  %v1389 = vpack.c.b16 %v1345, %v1341
  %v1390 = vpack.c.b16 %v1346, %v1342
  %v1391 = vpack.c.b16 %v1347, %v1343
  %v1392 = vpack.c.b16 %v1352, %v1348
  %v1393 = vpack.c.b16 %v1353, %v1349
  %v1394 = vpack.c.b16 %v1354, %v1350
  %v1395 = vpack.c.b16 %v1355, %v1351
  %v1396 = vpack.c.b16 %v1360, %v1356
  %v1397 = vpack.c.b16 %v1361, %v1357
  %v1398 = vpack.c.b16 %v1362, %v1358
  %v1399 = vpack.c.b16 %v1363, %v1359
  %v1400 = vpack.c.b16 %v1368, %v1364
  %v1401 = vpack.c.b16 %v1369, %v1365
  %v1402 = vpack.c.b16 %v1370, %v1366
  %v1403 = vpack.c.b16 %v1371, %v1367
  %1436 = vmatpush.bf16.msra.mxu0 %v1400
  %1437 = vmatpush.bf16.msra.mxu0 %v1396
  %1438 = vmatpush.bf16.msra.mxu0 %v1392
  %1439 = vmatpush.bf16.msra.mxu0 %v1388
  %1440 = vmatpush.bf16.msra.mxu0 %v1384
  %1441 = vmatpush.bf16.msra.mxu0 %v1380
  %1442 = vmatpush.bf16.msra.mxu0 %v1376
  %1443 = vmatpush.bf16.msra.mxu0 %v1372
  %1444 = vmatmul.bf16.gmra.mxu0 %v1274
  %v1445 = vpop.f32.mrf.mxu0
  %v1446 = vadd.f32 0.0, %v1445
  %v1447 = vpop.f32.mrf.mxu0
  %v1448 = vadd.f32 0.0, %v1447
  %1449 = vdwg.mxu0
  %1450 = vmatpush.bf16.msra.mxu0 %v1401
  %1451 = vmatpush.bf16.msra.mxu0 %v1397
  %1452 = vmatpush.bf16.msra.mxu0 %v1393
  %1453 = vmatpush.bf16.msra.mxu0 %v1389
  %1454 = vmatpush.bf16.msra.mxu0 %v1385
  %1455 = vmatpush.bf16.msra.mxu0 %v1381
  %1456 = vmatpush.bf16.msra.mxu0 %v1377
  %1457 = vmatpush.bf16.msra.mxu0 %v1373
  %1458 = vmatmul.bf16.gmra.mxu0 %v1274
  %v1459 = vpop.f32.mrf.mxu0
  %v1460 = vadd.f32 0.0, %v1459
  %v1461 = vpop.f32.mrf.mxu0
  %v1462 = vadd.f32 0.0, %v1461
  %1463 = vdwg.mxu0
  %1464 = vmatpush.bf16.msra.mxu0 %v1402
  %1465 = vmatpush.bf16.msra.mxu0 %v1398
  %1466 = vmatpush.bf16.msra.mxu0 %v1394
  %1467 = vmatpush.bf16.msra.mxu0 %v1390
  %1468 = vmatpush.bf16.msra.mxu0 %v1386
  %1469 = vmatpush.bf16.msra.mxu0 %v1382
  %1470 = vmatpush.bf16.msra.mxu0 %v1378
  %1471 = vmatpush.bf16.msra.mxu0 %v1374
  %1472 = vmatmul.bf16.gmra.mxu0 %v1274
  %v1473 = vpop.f32.mrf.mxu0
  %v1474 = vadd.f32 0.0, %v1473
  %v1475 = vpop.f32.mrf.mxu0
  %v1476 = vadd.f32 0.0, %v1475
  %1477 = vdwg.mxu0
  %1478 = vmatpush.bf16.msra.mxu0 %v1403
  %1479 = vmatpush.bf16.msra.mxu0 %v1399
  %1480 = vmatpush.bf16.msra.mxu0 %v1395
  %1481 = vmatpush.bf16.msra.mxu0 %v1391
  %1482 = vmatpush.bf16.msra.mxu0 %v1387
  %1483 = vmatpush.bf16.msra.mxu0 %v1383
  %1484 = vmatpush.bf16.msra.mxu0 %v1379
  %1485 = vmatpush.bf16.msra.mxu0 %v1375
  %1486 = vmatmul.bf16.gmra.mxu0 %v1274
  %v1487 = vpop.f32.mrf.mxu0
  %v1488 = vadd.f32 0.0, %v1487
  %v1489 = vpop.f32.mrf.mxu0
  %v1490 = vadd.f32 0.0, %v1489
  %1491 = vdwg.mxu0
  %s1492 = smul.u32 4, 4
  %s1493 = smul.addr %s1492, 4
  %s1494 = scalar_lea.vmem [#allocation3], %s1493
  %v1495 = vld [vmem:[%s1494] sm:$0xff]
  %v1496 = vld [vmem:[%s1494 + $0x8] sm:$0xff]
  %v1497 = vld [vmem:[%s1494 + $0x10] sm:$0xff]
  %v1498 = vld [vmem:[%s1494 + $0x18] sm:$0xff]
  %v1499 = vunpack.c.l.bf16 %v1495
  %v1500 = vunpack.c.h.bf16 %v1495
  %v1501 = vunpack.c.l.bf16 %v1496
  %v1502 = vunpack.c.h.bf16 %v1496
  %v1503 = vunpack.c.l.bf16 %v1497
  %v1504 = vunpack.c.h.bf16 %v1497
  %v1505 = vunpack.c.l.bf16 %v1498
  %v1506 = vunpack.c.h.bf16 %v1498
  %v1507 = vadd.f32 %v1499, %v1446
  %v1508 = vadd.f32 %v1500, %v1460
  %v1509 = vadd.f32 %v1501, %v1474
  %v1510 = vadd.f32 %v1502, %v1488
  %v1511 = vadd.f32 %v1503, %v1448
  %v1512 = vadd.f32 %v1504, %v1462
  %v1513 = vadd.f32 %v1505, %v1476
  %v1514 = vadd.f32 %v1506, %v1490
  %v1515 = vxor.u32 %v1507, 2147483648
  %v1516 = vxor.u32 %v1511, 2147483648
  %v1517 = vmul.f32 %v1515, 1.442695
  %v1518 = vpow.pop %v1517
  %v1519 = vmul.f32 %v1516, 1.442695
  %v1520 = vpow.pop %v1519
  %v1521 = vadd.f32 %v1518, 1.0
  %v1522 = vadd.f32 %v1520, 1.0
  %v1523 = vrcp.pop %v1521
  %v1524 = vmul.f32 %v1521, %v1523
  %v1525 = vsub.f32 1.0, %v1524
  %v1526 = vmul.f32 %v1523, %v1525
  %v1527 = vadd.f32 %v1523, %v1526
  %vm1528 = vweird.f32 %v1521
  %vm1529 = vweird.f32 %v1523
  %vm1530 = vmor %vm1528, %vm1529
  %v1531 = vsel %vm1530, %v1523, %v1527
  %v1532 = vand.u32 2147483647, %v1521
  %vm1533 = vcmp.eq.f32.partialorder %v1532, 8.507059e+37
  %v1534 = vand.u32 %v1521, 2147483648
  %v1535 = vor.u32 1.1754944e-38, %v1534
  %v1536 = vsel %vm1533, %v1535, %v1531
  %v1537 = vmul.f32 1.0, %v1536
  %v1538 = vrcp.pop %v1522
  %v1539 = vmul.f32 %v1522, %v1538
  %v1540 = vsub.f32 1.0, %v1539
  %v1541 = vmul.f32 %v1538, %v1540
  %v1542 = vadd.f32 %v1538, %v1541
  %vm1543 = vweird.f32 %v1522
  %vm1544 = vweird.f32 %v1538
  %vm1545 = vmor %vm1543, %vm1544
  %v1546 = vsel %vm1545, %v1538, %v1542
  %v1547 = vand.u32 2147483647, %v1522
  %vm1548 = vcmp.eq.f32.partialorder %v1547, 8.507059e+37
  %v1549 = vand.u32 %v1522, 2147483648
  %v1550 = vor.u32 1.1754944e-38, %v1549
  %v1551 = vsel %vm1548, %v1550, %v1546
  %v1552 = vmul.f32 1.0, %v1551
  %v1553 = vxor.u32 %v1508, 2147483648
  %v1554 = vxor.u32 %v1512, 2147483648
  %v1555 = vmul.f32 %v1553, 1.442695
  %v1556 = vpow.pop %v1555
  %v1557 = vmul.f32 %v1554, 1.442695
  %v1558 = vpow.pop %v1557
  %v1559 = vadd.f32 %v1556, 1.0
  %v1560 = vadd.f32 %v1558, 1.0
  %v1561 = vrcp.pop %v1559
  %v1562 = vmul.f32 %v1559, %v1561
  %v1563 = vsub.f32 1.0, %v1562
  %v1564 = vmul.f32 %v1561, %v1563
  %v1565 = vadd.f32 %v1561, %v1564
  %vm1566 = vweird.f32 %v1559
  %vm1567 = vweird.f32 %v1561
  %vm1568 = vmor %vm1566, %vm1567
  %v1569 = vsel %vm1568, %v1561, %v1565
  %v1570 = vand.u32 2147483647, %v1559
  %vm1571 = vcmp.eq.f32.partialorder %v1570, 8.507059e+37
  %v1572 = vand.u32 %v1559, 2147483648
  %v1573 = vor.u32 1.1754944e-38, %v1572
  %v1574 = vsel %vm1571, %v1573, %v1569
  %v1575 = vmul.f32 1.0, %v1574
  %v1576 = vrcp.pop %v1560
  %v1577 = vmul.f32 %v1560, %v1576
  %v1578 = vsub.f32 1.0, %v1577
  %v1579 = vmul.f32 %v1576, %v1578
  %v1580 = vadd.f32 %v1576, %v1579
  %vm1581 = vweird.f32 %v1560
  %vm1582 = vweird.f32 %v1576
  %vm1583 = vmor %vm1581, %vm1582
  %v1584 = vsel %vm1583, %v1576, %v1580
  %v1585 = vand.u32 2147483647, %v1560
  %vm1586 = vcmp.eq.f32.partialorder %v1585, 8.507059e+37
  %v1587 = vand.u32 %v1560, 2147483648
  %v1588 = vor.u32 1.1754944e-38, %v1587
  %v1589 = vsel %vm1586, %v1588, %v1584
  %v1590 = vmul.f32 1.0, %v1589
  %v1591 = vtanh.pop %v1509
  %v1592 = vtanh.pop %v1513
  %v1593 = vxor.u32 %v1510, 2147483648
  %v1594 = vxor.u32 %v1514, 2147483648
  %v1595 = vmul.f32 %v1593, 1.442695
  %v1596 = vpow.pop %v1595
  %v1597 = vmul.f32 %v1594, 1.442695
  %v1598 = vpow.pop %v1597
  %v1599 = vadd.f32 %v1596, 1.0
  %v1600 = vadd.f32 %v1598, 1.0
  %v1601 = vrcp.pop %v1599
  %v1602 = vmul.f32 %v1599, %v1601
  %v1603 = vsub.f32 1.0, %v1602
  %v1604 = vmul.f32 %v1601, %v1603
  %v1605 = vadd.f32 %v1601, %v1604
  %vm1606 = vweird.f32 %v1599
  %vm1607 = vweird.f32 %v1601
  %vm1608 = vmor %vm1606, %vm1607
  %v1609 = vsel %vm1608, %v1601, %v1605
  %v1610 = vand.u32 2147483647, %v1599
  %vm1611 = vcmp.eq.f32.partialorder %v1610, 8.507059e+37
  %v1612 = vand.u32 %v1599, 2147483648
  %v1613 = vor.u32 1.1754944e-38, %v1612
  %v1614 = vsel %vm1611, %v1613, %v1609
  %v1615 = vmul.f32 1.0, %v1614
  %v1616 = vrcp.pop %v1600
  %v1617 = vmul.f32 %v1600, %v1616
  %v1618 = vsub.f32 1.0, %v1617
  %v1619 = vmul.f32 %v1616, %v1618
  %v1620 = vadd.f32 %v1616, %v1619
  %vm1621 = vweird.f32 %v1600
  %vm1622 = vweird.f32 %v1616
  %vm1623 = vmor %vm1621, %vm1622
  %v1624 = vsel %vm1623, %v1616, %v1620
  %v1625 = vand.u32 2147483647, %v1600
  %vm1626 = vcmp.eq.f32.partialorder %v1625, 8.507059e+37
  %v1627 = vand.u32 %v1600, 2147483648
  %v1628 = vor.u32 1.1754944e-38, %v1627
  %v1629 = vsel %vm1626, %v1628, %v1624
  %v1630 = vmul.f32 1.0, %v1629
  %v1631 = vmul.f32 %v1575, %v1227
  %v1632 = vmul.f32 %v1590, %v1228
  %v1633 = vmul.f32 %v1537, %v1591
  %v1634 = vmul.f32 %v1552, %v1592
  %v1635 = vadd.f32 %v1631, %v1633
  %v1636 = vadd.f32 %v1632, %v1634
  %v1637 = vtanh.pop %v1635
  %v1638 = vtanh.pop %v1636
  %v1639 = vmul.f32 %v1615, %v1637
  %v1640 = vmul.f32 %v1630, %v1638
  %v1641 = vpack.c.bf16 %v1639, %v1639
  %v1642 = vpack.c.bf16 %v1640, %v1640
  %s1643 = scalar_lea.vmem [#allocation2], 16
  %1644 = vst [vmem:[%s1643] sm:$0xf] %v1641
  %1645 = vst [vmem:[%s1643 + $0x4] sm:$0xf] %v1642
  %v1646 = vld [vmem:[%s2] sm:$0xff]
  %v1647 = vld [vmem:[%s2 + $0x8] sm:$0xff]
  %v1648 = vld [vmem:[%s2 + $0x10] sm:$0xff]
  %v1649 = vld [vmem:[%s2 + $0x18] sm:$0xff]
  %v1650 = vld [vmem:[%s2 + $0x20] sm:$0xff]
  %v1651 = vld [vmem:[%s2 + $0x28] sm:$0xff]
  %v1652 = vld [vmem:[%s2 + $0x30] sm:$0xff]
  %v1653 = vld [vmem:[%s2 + $0x38] sm:$0xff]
  %v1654 = vld [vmem:[%s2 + $0x40] sm:$0xff]
  %v1655 = vld [vmem:[%s2 + $0x48] sm:$0xff]
  %v1656 = vld [vmem:[%s2 + $0x50] sm:$0xff]
  %v1657 = vld [vmem:[%s2 + $0x58] sm:$0xff]
  %v1658 = vld [vmem:[%s2 + $0x60] sm:$0xff]
  %v1659 = vld [vmem:[%s2 + $0x68] sm:$0xff]
  %v1660 = vld [vmem:[%s2 + $0x70] sm:$0xff]
  %v1661 = vld [vmem:[%s2 + $0x78] sm:$0xff]
  %v1662 = vld [vmem:[%s2 + $0x80] sm:$0xff]
  %v1663 = vld [vmem:[%s2 + $0x88] sm:$0xff]
  %v1664 = vld [vmem:[%s2 + $0x90] sm:$0xff]
  %v1665 = vld [vmem:[%s2 + $0x98] sm:$0xff]
  %v1666 = vld [vmem:[%s2 + $0xa0] sm:$0xff]
  %v1667 = vld [vmem:[%s2 + $0xa8] sm:$0xff]
  %v1668 = vld [vmem:[%s2 + $0xb0] sm:$0xff]
  %v1669 = vld [vmem:[%s2 + $0xb8] sm:$0xff]
  %v1670 = vld [vmem:[%s2 + $0xc0] sm:$0xff]
  %v1671 = vld [vmem:[%s2 + $0xc8] sm:$0xff]
  %v1672 = vld [vmem:[%s2 + $0xd0] sm:$0xff]
  %v1673 = vld [vmem:[%s2 + $0xd8] sm:$0xff]
  %v1674 = vld [vmem:[%s2 + $0xe0] sm:$0xff]
  %v1675 = vld [vmem:[%s2 + $0xe8] sm:$0xff]
  %v1676 = vld [vmem:[%s2 + $0xf0] sm:$0xff]
  %v1677 = vld [vmem:[%s2 + $0xf8] sm:$0xff]
  %v1680 = vunpack.c.l.b16 %v1641
  %v1681 = vunpack.c.l.b16 %v1642
  %v1682 = vpack.c.b16 %v1681, %v1680
  %v1716 = vunpack.c.l.b16 %v1646
  %v1717 = vunpack.c.h.b16 %v1646
  %v1718 = vunpack.c.l.b16 %v1647
  %v1719 = vunpack.c.h.b16 %v1647
  %v1720 = vunpack.c.l.b16 %v1648
  %v1721 = vunpack.c.h.b16 %v1648
  %v1722 = vunpack.c.l.b16 %v1649
  %v1723 = vunpack.c.h.b16 %v1649
  %v1724 = vunpack.c.l.b16 %v1650
  %v1725 = vunpack.c.h.b16 %v1650
  %v1726 = vunpack.c.l.b16 %v1651
  %v1727 = vunpack.c.h.b16 %v1651
  %v1728 = vunpack.c.l.b16 %v1652
  %v1729 = vunpack.c.h.b16 %v1652
  %v1730 = vunpack.c.l.b16 %v1653
  %v1731 = vunpack.c.h.b16 %v1653
  %v1732 = vunpack.c.l.b16 %v1654
  %v1733 = vunpack.c.h.b16 %v1654
  %v1734 = vunpack.c.l.b16 %v1655
  %v1735 = vunpack.c.h.b16 %v1655
  %v1736 = vunpack.c.l.b16 %v1656
  %v1737 = vunpack.c.h.b16 %v1656
  %v1738 = vunpack.c.l.b16 %v1657
  %v1739 = vunpack.c.h.b16 %v1657
  %v1740 = vunpack.c.l.b16 %v1658
  %v1741 = vunpack.c.h.b16 %v1658
  %v1742 = vunpack.c.l.b16 %v1659
  %v1743 = vunpack.c.h.b16 %v1659
  %v1744 = vunpack.c.l.b16 %v1660
  %v1745 = vunpack.c.h.b16 %v1660
  %v1746 = vunpack.c.l.b16 %v1661
  %v1747 = vunpack.c.h.b16 %v1661
  %v1748 = vunpack.c.l.b16 %v1662
  %v1749 = vunpack.c.h.b16 %v1662
  %v1750 = vunpack.c.l.b16 %v1663
  %v1751 = vunpack.c.h.b16 %v1663
  %v1752 = vunpack.c.l.b16 %v1664
  %v1753 = vunpack.c.h.b16 %v1664
  %v1754 = vunpack.c.l.b16 %v1665
  %v1755 = vunpack.c.h.b16 %v1665
  %v1756 = vunpack.c.l.b16 %v1666
  %v1757 = vunpack.c.h.b16 %v1666
  %v1758 = vunpack.c.l.b16 %v1667
  %v1759 = vunpack.c.h.b16 %v1667
  %v1760 = vunpack.c.l.b16 %v1668
  %v1761 = vunpack.c.h.b16 %v1668
  %v1762 = vunpack.c.l.b16 %v1669
  %v1763 = vunpack.c.h.b16 %v1669
  %v1764 = vunpack.c.l.b16 %v1670
  %v1765 = vunpack.c.h.b16 %v1670
  %v1766 = vunpack.c.l.b16 %v1671
  %v1767 = vunpack.c.h.b16 %v1671
  %v1768 = vunpack.c.l.b16 %v1672
  %v1769 = vunpack.c.h.b16 %v1672
  %v1770 = vunpack.c.l.b16 %v1673
  %v1771 = vunpack.c.h.b16 %v1673
  %v1772 = vunpack.c.l.b16 %v1674
  %v1773 = vunpack.c.h.b16 %v1674
  %v1774 = vunpack.c.l.b16 %v1675
  %v1775 = vunpack.c.h.b16 %v1675
  %v1776 = vunpack.c.l.b16 %v1676
  %v1777 = vunpack.c.h.b16 %v1676
  %v1778 = vunpack.c.l.b16 %v1677
  %v1779 = vunpack.c.h.b16 %v1677
  %v1780 = vpack.c.b16 %v1720, %v1716
  %v1781 = vpack.c.b16 %v1721, %v1717
  %v1782 = vpack.c.b16 %v1722, %v1718
  %v1783 = vpack.c.b16 %v1723, %v1719
  %v1784 = vpack.c.b16 %v1728, %v1724
  %v1785 = vpack.c.b16 %v1729, %v1725
  %v1786 = vpack.c.b16 %v1730, %v1726
  %v1787 = vpack.c.b16 %v1731, %v1727
  %v1788 = vpack.c.b16 %v1736, %v1732
  %v1789 = vpack.c.b16 %v1737, %v1733
  %v1790 = vpack.c.b16 %v1738, %v1734
  %v1791 = vpack.c.b16 %v1739, %v1735
  %v1792 = vpack.c.b16 %v1744, %v1740
  %v1793 = vpack.c.b16 %v1745, %v1741
  %v1794 = vpack.c.b16 %v1746, %v1742
  %v1795 = vpack.c.b16 %v1747, %v1743
  %v1796 = vpack.c.b16 %v1752, %v1748
  %v1797 = vpack.c.b16 %v1753, %v1749
  %v1798 = vpack.c.b16 %v1754, %v1750
  %v1799 = vpack.c.b16 %v1755, %v1751
  %v1800 = vpack.c.b16 %v1760, %v1756
  %v1801 = vpack.c.b16 %v1761, %v1757
  %v1802 = vpack.c.b16 %v1762, %v1758
  %v1803 = vpack.c.b16 %v1763, %v1759
  %v1804 = vpack.c.b16 %v1768, %v1764
  %v1805 = vpack.c.b16 %v1769, %v1765
  %v1806 = vpack.c.b16 %v1770, %v1766
  %v1807 = vpack.c.b16 %v1771, %v1767
  %v1808 = vpack.c.b16 %v1776, %v1772
  %v1809 = vpack.c.b16 %v1777, %v1773
  %v1810 = vpack.c.b16 %v1778, %v1774
  %v1811 = vpack.c.b16 %v1779, %v1775
  %1844 = vmatpush.bf16.msra.mxu0 %v1808
  %1845 = vmatpush.bf16.msra.mxu0 %v1804
  %1846 = vmatpush.bf16.msra.mxu0 %v1800
  %1847 = vmatpush.bf16.msra.mxu0 %v1796
  %1848 = vmatpush.bf16.msra.mxu0 %v1792
  %1849 = vmatpush.bf16.msra.mxu0 %v1788
  %1850 = vmatpush.bf16.msra.mxu0 %v1784
  %1851 = vmatpush.bf16.msra.mxu0 %v1780
  %1852 = vmatmul.bf16.gmra.mxu0 %v1682
  %v1853 = vpop.f32.mrf.mxu0
  %v1854 = vadd.f32 0.0, %v1853
  %v1855 = vpop.f32.mrf.mxu0
  %v1856 = vadd.f32 0.0, %v1855
  %1857 = vdwg.mxu0
  %1858 = vmatpush.bf16.msra.mxu0 %v1809
  %1859 = vmatpush.bf16.msra.mxu0 %v1805
  %1860 = vmatpush.bf16.msra.mxu0 %v1801
  %1861 = vmatpush.bf16.msra.mxu0 %v1797
  %1862 = vmatpush.bf16.msra.mxu0 %v1793
  %1863 = vmatpush.bf16.msra.mxu0 %v1789
  %1864 = vmatpush.bf16.msra.mxu0 %v1785
  %1865 = vmatpush.bf16.msra.mxu0 %v1781
  %1866 = vmatmul.bf16.gmra.mxu0 %v1682
  %v1867 = vpop.f32.mrf.mxu0
  %v1868 = vadd.f32 0.0, %v1867
  %v1869 = vpop.f32.mrf.mxu0
  %v1870 = vadd.f32 0.0, %v1869
  %1871 = vdwg.mxu0
  %1872 = vmatpush.bf16.msra.mxu0 %v1810
  %1873 = vmatpush.bf16.msra.mxu0 %v1806
  %1874 = vmatpush.bf16.msra.mxu0 %v1802
  %1875 = vmatpush.bf16.msra.mxu0 %v1798
  %1876 = vmatpush.bf16.msra.mxu0 %v1794
  %1877 = vmatpush.bf16.msra.mxu0 %v1790
  %1878 = vmatpush.bf16.msra.mxu0 %v1786
  %1879 = vmatpush.bf16.msra.mxu0 %v1782
  %1880 = vmatmul.bf16.gmra.mxu0 %v1682
  %v1881 = vpop.f32.mrf.mxu0
  %v1882 = vadd.f32 0.0, %v1881
  %v1883 = vpop.f32.mrf.mxu0
  %v1884 = vadd.f32 0.0, %v1883
  %1885 = vdwg.mxu0
  %1886 = vmatpush.bf16.msra.mxu0 %v1811
  %1887 = vmatpush.bf16.msra.mxu0 %v1807
  %1888 = vmatpush.bf16.msra.mxu0 %v1803
  %1889 = vmatpush.bf16.msra.mxu0 %v1799
  %1890 = vmatpush.bf16.msra.mxu0 %v1795
  %1891 = vmatpush.bf16.msra.mxu0 %v1791
  %1892 = vmatpush.bf16.msra.mxu0 %v1787
  %1893 = vmatpush.bf16.msra.mxu0 %v1783
  %1894 = vmatmul.bf16.gmra.mxu0 %v1682
  %v1895 = vpop.f32.mrf.mxu0
  %v1896 = vadd.f32 0.0, %v1895
  %v1897 = vpop.f32.mrf.mxu0
  %v1898 = vadd.f32 0.0, %v1897
  %1899 = vdwg.mxu0
  %s1900 = smul.u32 6, 4
  %s1901 = smul.addr %s1900, 4
  %s1902 = scalar_lea.vmem [#allocation3], %s1901
  %v1903 = vld [vmem:[%s1902] sm:$0xff]
  %v1904 = vld [vmem:[%s1902 + $0x8] sm:$0xff]
  %v1905 = vld [vmem:[%s1902 + $0x10] sm:$0xff]
  %v1906 = vld [vmem:[%s1902 + $0x18] sm:$0xff]
  %v1907 = vunpack.c.l.bf16 %v1903
  %v1908 = vunpack.c.h.bf16 %v1903
  %v1909 = vunpack.c.l.bf16 %v1904
  %v1910 = vunpack.c.h.bf16 %v1904
  %v1911 = vunpack.c.l.bf16 %v1905
  %v1912 = vunpack.c.h.bf16 %v1905
  %v1913 = vunpack.c.l.bf16 %v1906
  %v1914 = vunpack.c.h.bf16 %v1906
  %v1915 = vadd.f32 %v1907, %v1854
  %v1916 = vadd.f32 %v1908, %v1868
  %v1917 = vadd.f32 %v1909, %v1882
  %v1918 = vadd.f32 %v1910, %v1896
  %v1919 = vadd.f32 %v1911, %v1856
  %v1920 = vadd.f32 %v1912, %v1870
  %v1921 = vadd.f32 %v1913, %v1884
  %v1922 = vadd.f32 %v1914, %v1898
  %v1923 = vxor.u32 %v1915, 2147483648
  %v1924 = vxor.u32 %v1919, 2147483648
  %v1925 = vmul.f32 %v1923, 1.442695
  %v1926 = vpow.pop %v1925
  %v1927 = vmul.f32 %v1924, 1.442695
  %v1928 = vpow.pop %v1927
  %v1929 = vadd.f32 %v1926, 1.0
  %v1930 = vadd.f32 %v1928, 1.0
  %v1931 = vrcp.pop %v1929
  %v1932 = vmul.f32 %v1929, %v1931
  %v1933 = vsub.f32 1.0, %v1932
  %v1934 = vmul.f32 %v1931, %v1933
  %v1935 = vadd.f32 %v1931, %v1934
  %vm1936 = vweird.f32 %v1929
  %vm1937 = vweird.f32 %v1931
  %vm1938 = vmor %vm1936, %vm1937
  %v1939 = vsel %vm1938, %v1931, %v1935
  %v1940 = vand.u32 2147483647, %v1929
  %vm1941 = vcmp.eq.f32.partialorder %v1940, 8.507059e+37
  %v1942 = vand.u32 %v1929, 2147483648
  %v1943 = vor.u32 1.1754944e-38, %v1942
  %v1944 = vsel %vm1941, %v1943, %v1939
  %v1945 = vmul.f32 1.0, %v1944
  %v1946 = vrcp.pop %v1930
  %v1947 = vmul.f32 %v1930, %v1946
  %v1948 = vsub.f32 1.0, %v1947
  %v1949 = vmul.f32 %v1946, %v1948
  %v1950 = vadd.f32 %v1946, %v1949
  %vm1951 = vweird.f32 %v1930
  %vm1952 = vweird.f32 %v1946
  %vm1953 = vmor %vm1951, %vm1952
  %v1954 = vsel %vm1953, %v1946, %v1950
  %v1955 = vand.u32 2147483647, %v1930
  %vm1956 = vcmp.eq.f32.partialorder %v1955, 8.507059e+37
  %v1957 = vand.u32 %v1930, 2147483648
  %v1958 = vor.u32 1.1754944e-38, %v1957
  %v1959 = vsel %vm1956, %v1958, %v1954
  %v1960 = vmul.f32 1.0, %v1959
  %v1961 = vxor.u32 %v1916, 2147483648
  %v1962 = vxor.u32 %v1920, 2147483648
  %v1963 = vmul.f32 %v1961, 1.442695
  %v1964 = vpow.pop %v1963
  %v1965 = vmul.f32 %v1962, 1.442695
  %v1966 = vpow.pop %v1965
  %v1967 = vadd.f32 %v1964, 1.0
  %v1968 = vadd.f32 %v1966, 1.0
  %v1969 = vrcp.pop %v1967
  %v1970 = vmul.f32 %v1967, %v1969
  %v1971 = vsub.f32 1.0, %v1970
  %v1972 = vmul.f32 %v1969, %v1971
  %v1973 = vadd.f32 %v1969, %v1972
  %vm1974 = vweird.f32 %v1967
  %vm1975 = vweird.f32 %v1969
  %vm1976 = vmor %vm1974, %vm1975
  %v1977 = vsel %vm1976, %v1969, %v1973
  %v1978 = vand.u32 2147483647, %v1967
  %vm1979 = vcmp.eq.f32.partialorder %v1978, 8.507059e+37
  %v1980 = vand.u32 %v1967, 2147483648
  %v1981 = vor.u32 1.1754944e-38, %v1980
  %v1982 = vsel %vm1979, %v1981, %v1977
  %v1983 = vmul.f32 1.0, %v1982
  %v1984 = vrcp.pop %v1968
  %v1985 = vmul.f32 %v1968, %v1984
  %v1986 = vsub.f32 1.0, %v1985
  %v1987 = vmul.f32 %v1984, %v1986
  %v1988 = vadd.f32 %v1984, %v1987
  %vm1989 = vweird.f32 %v1968
  %vm1990 = vweird.f32 %v1984
  %vm1991 = vmor %vm1989, %vm1990
  %v1992 = vsel %vm1991, %v1984, %v1988
  %v1993 = vand.u32 2147483647, %v1968
  %vm1994 = vcmp.eq.f32.partialorder %v1993, 8.507059e+37
  %v1995 = vand.u32 %v1968, 2147483648
  %v1996 = vor.u32 1.1754944e-38, %v1995
  %v1997 = vsel %vm1994, %v1996, %v1992
  %v1998 = vmul.f32 1.0, %v1997
  %v1999 = vtanh.pop %v1917
  %v2000 = vtanh.pop %v1921
  %v2001 = vxor.u32 %v1918, 2147483648
  %v2002 = vxor.u32 %v1922, 2147483648
  %v2003 = vmul.f32 %v2001, 1.442695
  %v2004 = vpow.pop %v2003
  %v2005 = vmul.f32 %v2002, 1.442695
  %v2006 = vpow.pop %v2005
  %v2007 = vadd.f32 %v2004, 1.0
  %v2008 = vadd.f32 %v2006, 1.0
  %v2009 = vrcp.pop %v2007
  %v2010 = vmul.f32 %v2007, %v2009
  %v2011 = vsub.f32 1.0, %v2010
  %v2012 = vmul.f32 %v2009, %v2011
  %v2013 = vadd.f32 %v2009, %v2012
  %vm2014 = vweird.f32 %v2007
  %vm2015 = vweird.f32 %v2009
  %vm2016 = vmor %vm2014, %vm2015
  %v2017 = vsel %vm2016, %v2009, %v2013
  %v2018 = vand.u32 2147483647, %v2007
  %vm2019 = vcmp.eq.f32.partialorder %v2018, 8.507059e+37
  %v2020 = vand.u32 %v2007, 2147483648
  %v2021 = vor.u32 1.1754944e-38, %v2020
  %v2022 = vsel %vm2019, %v2021, %v2017
  %v2023 = vmul.f32 1.0, %v2022
  %v2024 = vrcp.pop %v2008
  %v2025 = vmul.f32 %v2008, %v2024
  %v2026 = vsub.f32 1.0, %v2025
  %v2027 = vmul.f32 %v2024, %v2026
  %v2028 = vadd.f32 %v2024, %v2027
  %vm2029 = vweird.f32 %v2008
  %vm2030 = vweird.f32 %v2024
  %vm2031 = vmor %vm2029, %vm2030
  %v2032 = vsel %vm2031, %v2024, %v2028
  %v2033 = vand.u32 2147483647, %v2008
  %vm2034 = vcmp.eq.f32.partialorder %v2033, 8.507059e+37
  %v2035 = vand.u32 %v2008, 2147483648
  %v2036 = vor.u32 1.1754944e-38, %v2035
  %v2037 = vsel %vm2034, %v2036, %v2032
  %v2038 = vmul.f32 1.0, %v2037
  %v2039 = vmul.f32 %v1983, %v1635
  %v2040 = vmul.f32 %v1998, %v1636
  %v2041 = vmul.f32 %v1945, %v1999
  %v2042 = vmul.f32 %v1960, %v2000
  %v2043 = vadd.f32 %v2039, %v2041
  %v2044 = vadd.f32 %v2040, %v2042
  %v2045 = vtanh.pop %v2043
  %v2046 = vtanh.pop %v2044
  %v2047 = vmul.f32 %v2023, %v2045
  %v2048 = vmul.f32 %v2038, %v2046
  %v2049 = vpack.c.bf16 %v2047, %v2047
  %v2050 = vpack.c.bf16 %v2048, %v2048
  %s2051 = scalar_lea.vmem [#allocation2], 24
  %2052 = vst [vmem:[%s2051] sm:$0xf] %v2049
  %2053 = vst [vmem:[%s2051 + $0x4] sm:$0xf] %v2050
  %v2054 = vld [vmem:[%s2] sm:$0xff]
  %v2055 = vld [vmem:[%s2 + $0x8] sm:$0xff]
  %v2056 = vld [vmem:[%s2 + $0x10] sm:$0xff]
  %v2057 = vld [vmem:[%s2 + $0x18] sm:$0xff]
  %v2058 = vld [vmem:[%s2 + $0x20] sm:$0xff]
  %v2059 = vld [vmem:[%s2 + $0x28] sm:$0xff]
  %v2060 = vld [vmem:[%s2 + $0x30] sm:$0xff]
  %v2061 = vld [vmem:[%s2 + $0x38] sm:$0xff]
  %v2062 = vld [vmem:[%s2 + $0x40] sm:$0xff]
  %v2063 = vld [vmem:[%s2 + $0x48] sm:$0xff]
  %v2064 = vld [vmem:[%s2 + $0x50] sm:$0xff]
  %v2065 = vld [vmem:[%s2 + $0x58] sm:$0xff]
  %v2066 = vld [vmem:[%s2 + $0x60] sm:$0xff]
  %v2067 = vld [vmem:[%s2 + $0x68] sm:$0xff]
  %v2068 = vld [vmem:[%s2 + $0x70] sm:$0xff]
  %v2069 = vld [vmem:[%s2 + $0x78] sm:$0xff]
  %v2070 = vld [vmem:[%s2 + $0x80] sm:$0xff]
  %v2071 = vld [vmem:[%s2 + $0x88] sm:$0xff]
  %v2072 = vld [vmem:[%s2 + $0x90] sm:$0xff]
  %v2073 = vld [vmem:[%s2 + $0x98] sm:$0xff]
  %v2074 = vld [vmem:[%s2 + $0xa0] sm:$0xff]
  %v2075 = vld [vmem:[%s2 + $0xa8] sm:$0xff]
  %v2076 = vld [vmem:[%s2 + $0xb0] sm:$0xff]
  %v2077 = vld [vmem:[%s2 + $0xb8] sm:$0xff]
  %v2078 = vld [vmem:[%s2 + $0xc0] sm:$0xff]
  %v2079 = vld [vmem:[%s2 + $0xc8] sm:$0xff]
  %v2080 = vld [vmem:[%s2 + $0xd0] sm:$0xff]
  %v2081 = vld [vmem:[%s2 + $0xd8] sm:$0xff]
  %v2082 = vld [vmem:[%s2 + $0xe0] sm:$0xff]
  %v2083 = vld [vmem:[%s2 + $0xe8] sm:$0xff]
  %v2084 = vld [vmem:[%s2 + $0xf0] sm:$0xff]
  %v2085 = vld [vmem:[%s2 + $0xf8] sm:$0xff]
  %v2088 = vunpack.c.l.b16 %v2049
  %v2089 = vunpack.c.l.b16 %v2050
  %v2090 = vpack.c.b16 %v2089, %v2088
  %v2124 = vunpack.c.l.b16 %v2054
  %v2125 = vunpack.c.h.b16 %v2054
  %v2126 = vunpack.c.l.b16 %v2055
  %v2127 = vunpack.c.h.b16 %v2055
  %v2128 = vunpack.c.l.b16 %v2056
  %v2129 = vunpack.c.h.b16 %v2056
  %v2130 = vunpack.c.l.b16 %v2057
  %v2131 = vunpack.c.h.b16 %v2057
  %v2132 = vunpack.c.l.b16 %v2058
  %v2133 = vunpack.c.h.b16 %v2058
  %v2134 = vunpack.c.l.b16 %v2059
  %v2135 = vunpack.c.h.b16 %v2059
  %v2136 = vunpack.c.l.b16 %v2060
  %v2137 = vunpack.c.h.b16 %v2060
  %v2138 = vunpack.c.l.b16 %v2061
  %v2139 = vunpack.c.h.b16 %v2061
  %v2140 = vunpack.c.l.b16 %v2062
  %v2141 = vunpack.c.h.b16 %v2062
  %v2142 = vunpack.c.l.b16 %v2063
  %v2143 = vunpack.c.h.b16 %v2063
  %v2144 = vunpack.c.l.b16 %v2064
  %v2145 = vunpack.c.h.b16 %v2064
  %v2146 = vunpack.c.l.b16 %v2065
  %v2147 = vunpack.c.h.b16 %v2065
  %v2148 = vunpack.c.l.b16 %v2066
  %v2149 = vunpack.c.h.b16 %v2066
  %v2150 = vunpack.c.l.b16 %v2067
  %v2151 = vunpack.c.h.b16 %v2067
  %v2152 = vunpack.c.l.b16 %v2068
  %v2153 = vunpack.c.h.b16 %v2068
  %v2154 = vunpack.c.l.b16 %v2069
  %v2155 = vunpack.c.h.b16 %v2069
  %v2156 = vunpack.c.l.b16 %v2070
  %v2157 = vunpack.c.h.b16 %v2070
  %v2158 = vunpack.c.l.b16 %v2071
  %v2159 = vunpack.c.h.b16 %v2071
  %v2160 = vunpack.c.l.b16 %v2072
  %v2161 = vunpack.c.h.b16 %v2072
  %v2162 = vunpack.c.l.b16 %v2073
  %v2163 = vunpack.c.h.b16 %v2073
  %v2164 = vunpack.c.l.b16 %v2074
  %v2165 = vunpack.c.h.b16 %v2074
  %v2166 = vunpack.c.l.b16 %v2075
  %v2167 = vunpack.c.h.b16 %v2075
  %v2168 = vunpack.c.l.b16 %v2076
  %v2169 = vunpack.c.h.b16 %v2076
  %v2170 = vunpack.c.l.b16 %v2077
  %v2171 = vunpack.c.h.b16 %v2077
  %v2172 = vunpack.c.l.b16 %v2078
  %v2173 = vunpack.c.h.b16 %v2078
  %v2174 = vunpack.c.l.b16 %v2079
  %v2175 = vunpack.c.h.b16 %v2079
  %v2176 = vunpack.c.l.b16 %v2080
  %v2177 = vunpack.c.h.b16 %v2080
  %v2178 = vunpack.c.l.b16 %v2081
  %v2179 = vunpack.c.h.b16 %v2081
  %v2180 = vunpack.c.l.b16 %v2082
  %v2181 = vunpack.c.h.b16 %v2082
  %v2182 = vunpack.c.l.b16 %v2083
  %v2183 = vunpack.c.h.b16 %v2083
  %v2184 = vunpack.c.l.b16 %v2084
  %v2185 = vunpack.c.h.b16 %v2084
  %v2186 = vunpack.c.l.b16 %v2085
  %v2187 = vunpack.c.h.b16 %v2085
  %v2188 = vpack.c.b16 %v2128, %v2124
  %v2189 = vpack.c.b16 %v2129, %v2125
  %v2190 = vpack.c.b16 %v2130, %v2126
  %v2191 = vpack.c.b16 %v2131, %v2127
  %v2192 = vpack.c.b16 %v2136, %v2132
  %v2193 = vpack.c.b16 %v2137, %v2133
  %v2194 = vpack.c.b16 %v2138, %v2134
  %v2195 = vpack.c.b16 %v2139, %v2135
  %v2196 = vpack.c.b16 %v2144, %v2140
  %v2197 = vpack.c.b16 %v2145, %v2141
  %v2198 = vpack.c.b16 %v2146, %v2142
  %v2199 = vpack.c.b16 %v2147, %v2143
  %v2200 = vpack.c.b16 %v2152, %v2148
  %v2201 = vpack.c.b16 %v2153, %v2149
  %v2202 = vpack.c.b16 %v2154, %v2150
  %v2203 = vpack.c.b16 %v2155, %v2151
  %v2204 = vpack.c.b16 %v2160, %v2156
  %v2205 = vpack.c.b16 %v2161, %v2157
  %v2206 = vpack.c.b16 %v2162, %v2158
  %v2207 = vpack.c.b16 %v2163, %v2159
  %v2208 = vpack.c.b16 %v2168, %v2164
  %v2209 = vpack.c.b16 %v2169, %v2165
  %v2210 = vpack.c.b16 %v2170, %v2166
  %v2211 = vpack.c.b16 %v2171, %v2167
  %v2212 = vpack.c.b16 %v2176, %v2172
  %v2213 = vpack.c.b16 %v2177, %v2173
  %v2214 = vpack.c.b16 %v2178, %v2174
  %v2215 = vpack.c.b16 %v2179, %v2175
  %v2216 = vpack.c.b16 %v2184, %v2180
  %v2217 = vpack.c.b16 %v2185, %v2181
  %v2218 = vpack.c.b16 %v2186, %v2182
  %v2219 = vpack.c.b16 %v2187, %v2183
  %2252 = vmatpush.bf16.msra.mxu0 %v2216
  %2253 = vmatpush.bf16.msra.mxu0 %v2212
  %2254 = vmatpush.bf16.msra.mxu0 %v2208
  %2255 = vmatpush.bf16.msra.mxu0 %v2204
  %2256 = vmatpush.bf16.msra.mxu0 %v2200
  %2257 = vmatpush.bf16.msra.mxu0 %v2196
  %2258 = vmatpush.bf16.msra.mxu0 %v2192
  %2259 = vmatpush.bf16.msra.mxu0 %v2188
  %2260 = vmatmul.bf16.gmra.mxu0 %v2090
  %v2261 = vpop.f32.mrf.mxu0
  %v2262 = vadd.f32 0.0, %v2261
  %v2263 = vpop.f32.mrf.mxu0
  %v2264 = vadd.f32 0.0, %v2263
  %2265 = vdwg.mxu0
  %2266 = vmatpush.bf16.msra.mxu0 %v2217
  %2267 = vmatpush.bf16.msra.mxu0 %v2213
  %2268 = vmatpush.bf16.msra.mxu0 %v2209
  %2269 = vmatpush.bf16.msra.mxu0 %v2205
  %2270 = vmatpush.bf16.msra.mxu0 %v2201
  %2271 = vmatpush.bf16.msra.mxu0 %v2197
  %2272 = vmatpush.bf16.msra.mxu0 %v2193
  %2273 = vmatpush.bf16.msra.mxu0 %v2189
  %2274 = vmatmul.bf16.gmra.mxu0 %v2090
  %v2275 = vpop.f32.mrf.mxu0
  %v2276 = vadd.f32 0.0, %v2275
  %v2277 = vpop.f32.mrf.mxu0
  %v2278 = vadd.f32 0.0, %v2277
  %2279 = vdwg.mxu0
  %2280 = vmatpush.bf16.msra.mxu0 %v2218
  %2281 = vmatpush.bf16.msra.mxu0 %v2214
  %2282 = vmatpush.bf16.msra.mxu0 %v2210
  %2283 = vmatpush.bf16.msra.mxu0 %v2206
  %2284 = vmatpush.bf16.msra.mxu0 %v2202
  %2285 = vmatpush.bf16.msra.mxu0 %v2198
  %2286 = vmatpush.bf16.msra.mxu0 %v2194
  %2287 = vmatpush.bf16.msra.mxu0 %v2190
  %2288 = vmatmul.bf16.gmra.mxu0 %v2090
  %v2289 = vpop.f32.mrf.mxu0
  %v2290 = vadd.f32 0.0, %v2289
  %v2291 = vpop.f32.mrf.mxu0
  %v2292 = vadd.f32 0.0, %v2291
  %2293 = vdwg.mxu0
  %2294 = vmatpush.bf16.msra.mxu0 %v2219
  %2295 = vmatpush.bf16.msra.mxu0 %v2215
  %2296 = vmatpush.bf16.msra.mxu0 %v2211
  %2297 = vmatpush.bf16.msra.mxu0 %v2207
  %2298 = vmatpush.bf16.msra.mxu0 %v2203
  %2299 = vmatpush.bf16.msra.mxu0 %v2199
  %2300 = vmatpush.bf16.msra.mxu0 %v2195
  %2301 = vmatpush.bf16.msra.mxu0 %v2191
  %2302 = vmatmul.bf16.gmra.mxu0 %v2090
  %v2303 = vpop.f32.mrf.mxu0
  %v2304 = vadd.f32 0.0, %v2303
  %v2305 = vpop.f32.mrf.mxu0
  %v2306 = vadd.f32 0.0, %v2305
  %2307 = vdwg.mxu0
  %s2308 = smul.u32 8, 4
  %s2309 = smul.addr %s2308, 4
  %s2310 = scalar_lea.vmem [#allocation3], %s2309
  %v2311 = vld [vmem:[%s2310] sm:$0xff]
  %v2312 = vld [vmem:[%s2310 + $0x8] sm:$0xff]
  %v2313 = vld [vmem:[%s2310 + $0x10] sm:$0xff]
  %v2314 = vld [vmem:[%s2310 + $0x18] sm:$0xff]
  %v2315 = vunpack.c.l.bf16 %v2311
  %v2316 = vunpack.c.h.bf16 %v2311
  %v2317 = vunpack.c.l.bf16 %v2312
  %v2318 = vunpack.c.h.bf16 %v2312
  %v2319 = vunpack.c.l.bf16 %v2313
  %v2320 = vunpack.c.h.bf16 %v2313
  %v2321 = vunpack.c.l.bf16 %v2314
  %v2322 = vunpack.c.h.bf16 %v2314
  %v2323 = vadd.f32 %v2315, %v2262
  %v2324 = vadd.f32 %v2316, %v2276
  %v2325 = vadd.f32 %v2317, %v2290
  %v2326 = vadd.f32 %v2318, %v2304
  %v2327 = vadd.f32 %v2319, %v2264
  %v2328 = vadd.f32 %v2320, %v2278
  %v2329 = vadd.f32 %v2321, %v2292
  %v2330 = vadd.f32 %v2322, %v2306
  %v2331 = vxor.u32 %v2323, 2147483648
  %v2332 = vxor.u32 %v2327, 2147483648
  %v2333 = vmul.f32 %v2331, 1.442695
  %v2334 = vpow.pop %v2333
  %v2335 = vmul.f32 %v2332, 1.442695
  %v2336 = vpow.pop %v2335
  %v2337 = vadd.f32 %v2334, 1.0
  %v2338 = vadd.f32 %v2336, 1.0
  %v2339 = vrcp.pop %v2337
  %v2340 = vmul.f32 %v2337, %v2339
  %v2341 = vsub.f32 1.0, %v2340
  %v2342 = vmul.f32 %v2339, %v2341
  %v2343 = vadd.f32 %v2339, %v2342
  %vm2344 = vweird.f32 %v2337
  %vm2345 = vweird.f32 %v2339
  %vm2346 = vmor %vm2344, %vm2345
  %v2347 = vsel %vm2346, %v2339, %v2343
  %v2348 = vand.u32 2147483647, %v2337
  %vm2349 = vcmp.eq.f32.partialorder %v2348, 8.507059e+37
  %v2350 = vand.u32 %v2337, 2147483648
  %v2351 = vor.u32 1.1754944e-38, %v2350
  %v2352 = vsel %vm2349, %v2351, %v2347
  %v2353 = vmul.f32 1.0, %v2352
  %v2354 = vrcp.pop %v2338
  %v2355 = vmul.f32 %v2338, %v2354
  %v2356 = vsub.f32 1.0, %v2355
  %v2357 = vmul.f32 %v2354, %v2356
  %v2358 = vadd.f32 %v2354, %v2357
  %vm2359 = vweird.f32 %v2338
  %vm2360 = vweird.f32 %v2354
  %vm2361 = vmor %vm2359, %vm2360
  %v2362 = vsel %vm2361, %v2354, %v2358
  %v2363 = vand.u32 2147483647, %v2338
  %vm2364 = vcmp.eq.f32.partialorder %v2363, 8.507059e+37
  %v2365 = vand.u32 %v2338, 2147483648
  %v2366 = vor.u32 1.1754944e-38, %v2365
  %v2367 = vsel %vm2364, %v2366, %v2362
  %v2368 = vmul.f32 1.0, %v2367
  %v2369 = vxor.u32 %v2324, 2147483648
  %v2370 = vxor.u32 %v2328, 2147483648
  %v2371 = vmul.f32 %v2369, 1.442695
  %v2372 = vpow.pop %v2371
  %v2373 = vmul.f32 %v2370, 1.442695
  %v2374 = vpow.pop %v2373
  %v2375 = vadd.f32 %v2372, 1.0
  %v2376 = vadd.f32 %v2374, 1.0
  %v2377 = vrcp.pop %v2375
  %v2378 = vmul.f32 %v2375, %v2377
  %v2379 = vsub.f32 1.0, %v2378
  %v2380 = vmul.f32 %v2377, %v2379
  %v2381 = vadd.f32 %v2377, %v2380
  %vm2382 = vweird.f32 %v2375
  %vm2383 = vweird.f32 %v2377
  %vm2384 = vmor %vm2382, %vm2383
  %v2385 = vsel %vm2384, %v2377, %v2381
  %v2386 = vand.u32 2147483647, %v2375
  %vm2387 = vcmp.eq.f32.partialorder %v2386, 8.507059e+37
  %v2388 = vand.u32 %v2375, 2147483648
  %v2389 = vor.u32 1.1754944e-38, %v2388
  %v2390 = vsel %vm2387, %v2389, %v2385
  %v2391 = vmul.f32 1.0, %v2390
  %v2392 = vrcp.pop %v2376
  %v2393 = vmul.f32 %v2376, %v2392
  %v2394 = vsub.f32 1.0, %v2393
  %v2395 = vmul.f32 %v2392, %v2394
  %v2396 = vadd.f32 %v2392, %v2395
  %vm2397 = vweird.f32 %v2376
  %vm2398 = vweird.f32 %v2392
  %vm2399 = vmor %vm2397, %vm2398
  %v2400 = vsel %vm2399, %v2392, %v2396
  %v2401 = vand.u32 2147483647, %v2376
  %vm2402 = vcmp.eq.f32.partialorder %v2401, 8.507059e+37
  %v2403 = vand.u32 %v2376, 2147483648
  %v2404 = vor.u32 1.1754944e-38, %v2403
  %v2405 = vsel %vm2402, %v2404, %v2400
  %v2406 = vmul.f32 1.0, %v2405
  %v2407 = vtanh.pop %v2325
  %v2408 = vtanh.pop %v2329
  %v2409 = vxor.u32 %v2326, 2147483648
  %v2410 = vxor.u32 %v2330, 2147483648
  %v2411 = vmul.f32 %v2409, 1.442695
  %v2412 = vpow.pop %v2411
  %v2413 = vmul.f32 %v2410, 1.442695
  %v2414 = vpow.pop %v2413
  %v2415 = vadd.f32 %v2412, 1.0
  %v2416 = vadd.f32 %v2414, 1.0
  %v2417 = vrcp.pop %v2415
  %v2418 = vmul.f32 %v2415, %v2417
  %v2419 = vsub.f32 1.0, %v2418
  %v2420 = vmul.f32 %v2417, %v2419
  %v2421 = vadd.f32 %v2417, %v2420
  %vm2422 = vweird.f32 %v2415
  %vm2423 = vweird.f32 %v2417
  %vm2424 = vmor %vm2422, %vm2423
  %v2425 = vsel %vm2424, %v2417, %v2421
  %v2426 = vand.u32 2147483647, %v2415
  %vm2427 = vcmp.eq.f32.partialorder %v2426, 8.507059e+37
  %v2428 = vand.u32 %v2415, 2147483648
  %v2429 = vor.u32 1.1754944e-38, %v2428
  %v2430 = vsel %vm2427, %v2429, %v2425
  %v2431 = vmul.f32 1.0, %v2430
  %v2432 = vrcp.pop %v2416
  %v2433 = vmul.f32 %v2416, %v2432
  %v2434 = vsub.f32 1.0, %v2433
  %v2435 = vmul.f32 %v2432, %v2434
  %v2436 = vadd.f32 %v2432, %v2435
  %vm2437 = vweird.f32 %v2416
  %vm2438 = vweird.f32 %v2432
  %vm2439 = vmor %vm2437, %vm2438
  %v2440 = vsel %vm2439, %v2432, %v2436
  %v2441 = vand.u32 2147483647, %v2416
  %vm2442 = vcmp.eq.f32.partialorder %v2441, 8.507059e+37
  %v2443 = vand.u32 %v2416, 2147483648
  %v2444 = vor.u32 1.1754944e-38, %v2443
  %v2445 = vsel %vm2442, %v2444, %v2440
  %v2446 = vmul.f32 1.0, %v2445
  %v2447 = vmul.f32 %v2391, %v2043
  %v2448 = vmul.f32 %v2406, %v2044
  %v2449 = vmul.f32 %v2353, %v2407
  %v2450 = vmul.f32 %v2368, %v2408
  %v2451 = vadd.f32 %v2447, %v2449
  %v2452 = vadd.f32 %v2448, %v2450
  %v2453 = vtanh.pop %v2451
  %v2454 = vtanh.pop %v2452
  %v2455 = vmul.f32 %v2431, %v2453
  %v2456 = vmul.f32 %v2446, %v2454
  %v2457 = vpack.c.bf16 %v2455, %v2455
  %v2458 = vpack.c.bf16 %v2456, %v2456
  %s2459 = scalar_lea.vmem [#allocation2], 32
  %2460 = vst [vmem:[%s2459] sm:$0xf] %v2457
  %2461 = vst [vmem:[%s2459 + $0x4] sm:$0xf] %v2458
  %v2462 = vld [vmem:[%s2] sm:$0xff]
  %v2463 = vld [vmem:[%s2 + $0x8] sm:$0xff]
  %v2464 = vld [vmem:[%s2 + $0x10] sm:$0xff]
  %v2465 = vld [vmem:[%s2 + $0x18] sm:$0xff]
  %v2466 = vld [vmem:[%s2 + $0x20] sm:$0xff]
  %v2467 = vld [vmem:[%s2 + $0x28] sm:$0xff]
  %v2468 = vld [vmem:[%s2 + $0x30] sm:$0xff]
  %v2469 = vld [vmem:[%s2 + $0x38] sm:$0xff]
  %v2470 = vld [vmem:[%s2 + $0x40] sm:$0xff]
  %v2471 = vld [vmem:[%s2 + $0x48] sm:$0xff]
  %v2472 = vld [vmem:[%s2 + $0x50] sm:$0xff]
  %v2473 = vld [vmem:[%s2 + $0x58] sm:$0xff]
  %v2474 = vld [vmem:[%s2 + $0x60] sm:$0xff]
  %v2475 = vld [vmem:[%s2 + $0x68] sm:$0xff]
  %v2476 = vld [vmem:[%s2 + $0x70] sm:$0xff]
  %v2477 = vld [vmem:[%s2 + $0x78] sm:$0xff]
  %v2478 = vld [vmem:[%s2 + $0x80] sm:$0xff]
  %v2479 = vld [vmem:[%s2 + $0x88] sm:$0xff]
  %v2480 = vld [vmem:[%s2 + $0x90] sm:$0xff]
  %v2481 = vld [vmem:[%s2 + $0x98] sm:$0xff]
  %v2482 = vld [vmem:[%s2 + $0xa0] sm:$0xff]
  %v2483 = vld [vmem:[%s2 + $0xa8] sm:$0xff]
  %v2484 = vld [vmem:[%s2 + $0xb0] sm:$0xff]
  %v2485 = vld [vmem:[%s2 + $0xb8] sm:$0xff]
  %v2486 = vld [vmem:[%s2 + $0xc0] sm:$0xff]
  %v2487 = vld [vmem:[%s2 + $0xc8] sm:$0xff]
  %v2488 = vld [vmem:[%s2 + $0xd0] sm:$0xff]
  %v2489 = vld [vmem:[%s2 + $0xd8] sm:$0xff]
  %v2490 = vld [vmem:[%s2 + $0xe0] sm:$0xff]
  %v2491 = vld [vmem:[%s2 + $0xe8] sm:$0xff]
  %v2492 = vld [vmem:[%s2 + $0xf0] sm:$0xff]
  %v2493 = vld [vmem:[%s2 + $0xf8] sm:$0xff]
  %v2496 = vunpack.c.l.b16 %v2457
  %v2497 = vunpack.c.l.b16 %v2458
  %v2498 = vpack.c.b16 %v2497, %v2496
  %v2532 = vunpack.c.l.b16 %v2462
  %v2533 = vunpack.c.h.b16 %v2462
  %v2534 = vunpack.c.l.b16 %v2463
  %v2535 = vunpack.c.h.b16 %v2463
  %v2536 = vunpack.c.l.b16 %v2464
  %v2537 = vunpack.c.h.b16 %v2464
  %v2538 = vunpack.c.l.b16 %v2465
  %v2539 = vunpack.c.h.b16 %v2465
  %v2540 = vunpack.c.l.b16 %v2466
  %v2541 = vunpack.c.h.b16 %v2466
  %v2542 = vunpack.c.l.b16 %v2467
  %v2543 = vunpack.c.h.b16 %v2467
  %v2544 = vunpack.c.l.b16 %v2468
  %v2545 = vunpack.c.h.b16 %v2468
  %v2546 = vunpack.c.l.b16 %v2469
  %v2547 = vunpack.c.h.b16 %v2469
  %v2548 = vunpack.c.l.b16 %v2470
  %v2549 = vunpack.c.h.b16 %v2470
  %v2550 = vunpack.c.l.b16 %v2471
  %v2551 = vunpack.c.h.b16 %v2471
  %v2552 = vunpack.c.l.b16 %v2472
  %v2553 = vunpack.c.h.b16 %v2472
  %v2554 = vunpack.c.l.b16 %v2473
  %v2555 = vunpack.c.h.b16 %v2473
  %v2556 = vunpack.c.l.b16 %v2474
  %v2557 = vunpack.c.h.b16 %v2474
  %v2558 = vunpack.c.l.b16 %v2475
  %v2559 = vunpack.c.h.b16 %v2475
  %v2560 = vunpack.c.l.b16 %v2476
  %v2561 = vunpack.c.h.b16 %v2476
  %v2562 = vunpack.c.l.b16 %v2477
  %v2563 = vunpack.c.h.b16 %v2477
  %v2564 = vunpack.c.l.b16 %v2478
  %v2565 = vunpack.c.h.b16 %v2478
  %v2566 = vunpack.c.l.b16 %v2479
  %v2567 = vunpack.c.h.b16 %v2479
  %v2568 = vunpack.c.l.b16 %v2480
  %v2569 = vunpack.c.h.b16 %v2480
  %v2570 = vunpack.c.l.b16 %v2481
  %v2571 = vunpack.c.h.b16 %v2481
  %v2572 = vunpack.c.l.b16 %v2482
  %v2573 = vunpack.c.h.b16 %v2482
  %v2574 = vunpack.c.l.b16 %v2483
  %v2575 = vunpack.c.h.b16 %v2483
  %v2576 = vunpack.c.l.b16 %v2484
  %v2577 = vunpack.c.h.b16 %v2484
  %v2578 = vunpack.c.l.b16 %v2485
  %v2579 = vunpack.c.h.b16 %v2485
  %v2580 = vunpack.c.l.b16 %v2486
  %v2581 = vunpack.c.h.b16 %v2486
  %v2582 = vunpack.c.l.b16 %v2487
  %v2583 = vunpack.c.h.b16 %v2487
  %v2584 = vunpack.c.l.b16 %v2488
  %v2585 = vunpack.c.h.b16 %v2488
  %v2586 = vunpack.c.l.b16 %v2489
  %v2587 = vunpack.c.h.b16 %v2489
  %v2588 = vunpack.c.l.b16 %v2490
  %v2589 = vunpack.c.h.b16 %v2490
  %v2590 = vunpack.c.l.b16 %v2491
  %v2591 = vunpack.c.h.b16 %v2491
  %v2592 = vunpack.c.l.b16 %v2492
  %v2593 = vunpack.c.h.b16 %v2492
  %v2594 = vunpack.c.l.b16 %v2493
  %v2595 = vunpack.c.h.b16 %v2493
  %v2596 = vpack.c.b16 %v2536, %v2532
  %v2597 = vpack.c.b16 %v2537, %v2533
  %v2598 = vpack.c.b16 %v2538, %v2534
  %v2599 = vpack.c.b16 %v2539, %v2535
  %v2600 = vpack.c.b16 %v2544, %v2540
  %v2601 = vpack.c.b16 %v2545, %v2541
  %v2602 = vpack.c.b16 %v2546, %v2542
  %v2603 = vpack.c.b16 %v2547, %v2543
  %v2604 = vpack.c.b16 %v2552, %v2548
  %v2605 = vpack.c.b16 %v2553, %v2549
  %v2606 = vpack.c.b16 %v2554, %v2550
  %v2607 = vpack.c.b16 %v2555, %v2551
  %v2608 = vpack.c.b16 %v2560, %v2556
  %v2609 = vpack.c.b16 %v2561, %v2557
  %v2610 = vpack.c.b16 %v2562, %v2558
  %v2611 = vpack.c.b16 %v2563, %v2559
  %v2612 = vpack.c.b16 %v2568, %v2564
  %v2613 = vpack.c.b16 %v2569, %v2565
  %v2614 = vpack.c.b16 %v2570, %v2566
  %v2615 = vpack.c.b16 %v2571, %v2567
  %v2616 = vpack.c.b16 %v2576, %v2572
  %v2617 = vpack.c.b16 %v2577, %v2573
  %v2618 = vpack.c.b16 %v2578, %v2574
  %v2619 = vpack.c.b16 %v2579, %v2575
  %v2620 = vpack.c.b16 %v2584, %v2580
  %v2621 = vpack.c.b16 %v2585, %v2581
  %v2622 = vpack.c.b16 %v2586, %v2582
  %v2623 = vpack.c.b16 %v2587, %v2583
  %v2624 = vpack.c.b16 %v2592, %v2588
  %v2625 = vpack.c.b16 %v2593, %v2589
  %v2626 = vpack.c.b16 %v2594, %v2590
  %v2627 = vpack.c.b16 %v2595, %v2591
  %2660 = vmatpush.bf16.msra.mxu0 %v2624
  %2661 = vmatpush.bf16.msra.mxu0 %v2620
  %2662 = vmatpush.bf16.msra.mxu0 %v2616
  %2663 = vmatpush.bf16.msra.mxu0 %v2612
  %2664 = vmatpush.bf16.msra.mxu0 %v2608
  %2665 = vmatpush.bf16.msra.mxu0 %v2604
  %2666 = vmatpush.bf16.msra.mxu0 %v2600
  %2667 = vmatpush.bf16.msra.mxu0 %v2596
  %2668 = vmatmul.bf16.gmra.mxu0 %v2498
  %v2669 = vpop.f32.mrf.mxu0
  %v2670 = vadd.f32 0.0, %v2669
  %v2671 = vpop.f32.mrf.mxu0
  %v2672 = vadd.f32 0.0, %v2671
  %2673 = vdwg.mxu0
  %2674 = vmatpush.bf16.msra.mxu0 %v2625
  %2675 = vmatpush.bf16.msra.mxu0 %v2621
  %2676 = vmatpush.bf16.msra.mxu0 %v2617
  %2677 = vmatpush.bf16.msra.mxu0 %v2613
  %2678 = vmatpush.bf16.msra.mxu0 %v2609
  %2679 = vmatpush.bf16.msra.mxu0 %v2605
  %2680 = vmatpush.bf16.msra.mxu0 %v2601
  %2681 = vmatpush.bf16.msra.mxu0 %v2597
  %2682 = vmatmul.bf16.gmra.mxu0 %v2498
  %v2683 = vpop.f32.mrf.mxu0
  %v2684 = vadd.f32 0.0, %v2683
  %v2685 = vpop.f32.mrf.mxu0
  %v2686 = vadd.f32 0.0, %v2685
  %2687 = vdwg.mxu0
  %2688 = vmatpush.bf16.msra.mxu0 %v2626
  %2689 = vmatpush.bf16.msra.mxu0 %v2622
  %2690 = vmatpush.bf16.msra.mxu0 %v2618
  %2691 = vmatpush.bf16.msra.mxu0 %v2614
  %2692 = vmatpush.bf16.msra.mxu0 %v2610
  %2693 = vmatpush.bf16.msra.mxu0 %v2606
  %2694 = vmatpush.bf16.msra.mxu0 %v2602
  %2695 = vmatpush.bf16.msra.mxu0 %v2598
  %2696 = vmatmul.bf16.gmra.mxu0 %v2498
  %v2697 = vpop.f32.mrf.mxu0
  %v2698 = vadd.f32 0.0, %v2697
  %v2699 = vpop.f32.mrf.mxu0
  %v2700 = vadd.f32 0.0, %v2699
  %2701 = vdwg.mxu0
  %2702 = vmatpush.bf16.msra.mxu0 %v2627
  %2703 = vmatpush.bf16.msra.mxu0 %v2623
  %2704 = vmatpush.bf16.msra.mxu0 %v2619
  %2705 = vmatpush.bf16.msra.mxu0 %v2615
  %2706 = vmatpush.bf16.msra.mxu0 %v2611
  %2707 = vmatpush.bf16.msra.mxu0 %v2607
  %2708 = vmatpush.bf16.msra.mxu0 %v2603
  %2709 = vmatpush.bf16.msra.mxu0 %v2599
  %2710 = vmatmul.bf16.gmra.mxu0 %v2498
  %v2711 = vpop.f32.mrf.mxu0
  %v2712 = vadd.f32 0.0, %v2711
  %v2713 = vpop.f32.mrf.mxu0
  %v2714 = vadd.f32 0.0, %v2713
  %2715 = vdwg.mxu0
  %s2716 = smul.u32 10, 4
  %s2717 = smul.addr %s2716, 4
  %s2718 = scalar_lea.vmem [#allocation3], %s2717
  %v2719 = vld [vmem:[%s2718] sm:$0xff]
  %v2720 = vld [vmem:[%s2718 + $0x8] sm:$0xff]
  %v2721 = vld [vmem:[%s2718 + $0x10] sm:$0xff]
  %v2722 = vld [vmem:[%s2718 + $0x18] sm:$0xff]
  %v2723 = vunpack.c.l.bf16 %v2719
  %v2724 = vunpack.c.h.bf16 %v2719
  %v2725 = vunpack.c.l.bf16 %v2720
  %v2726 = vunpack.c.h.bf16 %v2720
  %v2727 = vunpack.c.l.bf16 %v2721
  %v2728 = vunpack.c.h.bf16 %v2721
  %v2729 = vunpack.c.l.bf16 %v2722
  %v2730 = vunpack.c.h.bf16 %v2722
  %v2731 = vadd.f32 %v2723, %v2670
  %v2732 = vadd.f32 %v2724, %v2684
  %v2733 = vadd.f32 %v2725, %v2698
  %v2734 = vadd.f32 %v2726, %v2712
  %v2735 = vadd.f32 %v2727, %v2672
  %v2736 = vadd.f32 %v2728, %v2686
  %v2737 = vadd.f32 %v2729, %v2700
  %v2738 = vadd.f32 %v2730, %v2714
  %v2739 = vxor.u32 %v2731, 2147483648
  %v2740 = vxor.u32 %v2735, 2147483648
  %v2741 = vmul.f32 %v2739, 1.442695
  %v2742 = vpow.pop %v2741
  %v2743 = vmul.f32 %v2740, 1.442695
  %v2744 = vpow.pop %v2743
  %v2745 = vadd.f32 %v2742, 1.0
  %v2746 = vadd.f32 %v2744, 1.0
  %v2747 = vrcp.pop %v2745
  %v2748 = vmul.f32 %v2745, %v2747
  %v2749 = vsub.f32 1.0, %v2748
  %v2750 = vmul.f32 %v2747, %v2749
  %v2751 = vadd.f32 %v2747, %v2750
  %vm2752 = vweird.f32 %v2745
  %vm2753 = vweird.f32 %v2747
  %vm2754 = vmor %vm2752, %vm2753
  %v2755 = vsel %vm2754, %v2747, %v2751
  %v2756 = vand.u32 2147483647, %v2745
  %vm2757 = vcmp.eq.f32.partialorder %v2756, 8.507059e+37
  %v2758 = vand.u32 %v2745, 2147483648
  %v2759 = vor.u32 1.1754944e-38, %v2758
  %v2760 = vsel %vm2757, %v2759, %v2755
  %v2761 = vmul.f32 1.0, %v2760
  %v2762 = vrcp.pop %v2746
  %v2763 = vmul.f32 %v2746, %v2762
  %v2764 = vsub.f32 1.0, %v2763
  %v2765 = vmul.f32 %v2762, %v2764
  %v2766 = vadd.f32 %v2762, %v2765
  %vm2767 = vweird.f32 %v2746
  %vm2768 = vweird.f32 %v2762
  %vm2769 = vmor %vm2767, %vm2768
  %v2770 = vsel %vm2769, %v2762, %v2766
  %v2771 = vand.u32 2147483647, %v2746
  %vm2772 = vcmp.eq.f32.partialorder %v2771, 8.507059e+37
  %v2773 = vand.u32 %v2746, 2147483648
  %v2774 = vor.u32 1.1754944e-38, %v2773
  %v2775 = vsel %vm2772, %v2774, %v2770
  %v2776 = vmul.f32 1.0, %v2775
  %v2777 = vxor.u32 %v2732, 2147483648
  %v2778 = vxor.u32 %v2736, 2147483648
  %v2779 = vmul.f32 %v2777, 1.442695
  %v2780 = vpow.pop %v2779
  %v2781 = vmul.f32 %v2778, 1.442695
  %v2782 = vpow.pop %v2781
  %v2783 = vadd.f32 %v2780, 1.0
  %v2784 = vadd.f32 %v2782, 1.0
  %v2785 = vrcp.pop %v2783
  %v2786 = vmul.f32 %v2783, %v2785
  %v2787 = vsub.f32 1.0, %v2786
  %v2788 = vmul.f32 %v2785, %v2787
  %v2789 = vadd.f32 %v2785, %v2788
  %vm2790 = vweird.f32 %v2783
  %vm2791 = vweird.f32 %v2785
  %vm2792 = vmor %vm2790, %vm2791
  %v2793 = vsel %vm2792, %v2785, %v2789
  %v2794 = vand.u32 2147483647, %v2783
  %vm2795 = vcmp.eq.f32.partialorder %v2794, 8.507059e+37
  %v2796 = vand.u32 %v2783, 2147483648
  %v2797 = vor.u32 1.1754944e-38, %v2796
  %v2798 = vsel %vm2795, %v2797, %v2793
  %v2799 = vmul.f32 1.0, %v2798
  %v2800 = vrcp.pop %v2784
  %v2801 = vmul.f32 %v2784, %v2800
  %v2802 = vsub.f32 1.0, %v2801
  %v2803 = vmul.f32 %v2800, %v2802
  %v2804 = vadd.f32 %v2800, %v2803
  %vm2805 = vweird.f32 %v2784
  %vm2806 = vweird.f32 %v2800
  %vm2807 = vmor %vm2805, %vm2806
  %v2808 = vsel %vm2807, %v2800, %v2804
  %v2809 = vand.u32 2147483647, %v2784
  %vm2810 = vcmp.eq.f32.partialorder %v2809, 8.507059e+37
  %v2811 = vand.u32 %v2784, 2147483648
  %v2812 = vor.u32 1.1754944e-38, %v2811
  %v2813 = vsel %vm2810, %v2812, %v2808
  %v2814 = vmul.f32 1.0, %v2813
  %v2815 = vtanh.pop %v2733
  %v2816 = vtanh.pop %v2737
  %v2817 = vxor.u32 %v2734, 2147483648
  %v2818 = vxor.u32 %v2738, 2147483648
  %v2819 = vmul.f32 %v2817, 1.442695
  %v2820 = vpow.pop %v2819
  %v2821 = vmul.f32 %v2818, 1.442695
  %v2822 = vpow.pop %v2821
  %v2823 = vadd.f32 %v2820, 1.0
  %v2824 = vadd.f32 %v2822, 1.0
  %v2825 = vrcp.pop %v2823
  %v2826 = vmul.f32 %v2823, %v2825
  %v2827 = vsub.f32 1.0, %v2826
  %v2828 = vmul.f32 %v2825, %v2827
  %v2829 = vadd.f32 %v2825, %v2828
  %vm2830 = vweird.f32 %v2823
  %vm2831 = vweird.f32 %v2825
  %vm2832 = vmor %vm2830, %vm2831
  %v2833 = vsel %vm2832, %v2825, %v2829
  %v2834 = vand.u32 2147483647, %v2823
  %vm2835 = vcmp.eq.f32.partialorder %v2834, 8.507059e+37
  %v2836 = vand.u32 %v2823, 2147483648
  %v2837 = vor.u32 1.1754944e-38, %v2836
  %v2838 = vsel %vm2835, %v2837, %v2833
  %v2839 = vmul.f32 1.0, %v2838
  %v2840 = vrcp.pop %v2824
  %v2841 = vmul.f32 %v2824, %v2840
  %v2842 = vsub.f32 1.0, %v2841
  %v2843 = vmul.f32 %v2840, %v2842
  %v2844 = vadd.f32 %v2840, %v2843
  %vm2845 = vweird.f32 %v2824
  %vm2846 = vweird.f32 %v2840
  %vm2847 = vmor %vm2845, %vm2846
  %v2848 = vsel %vm2847, %v2840, %v2844
  %v2849 = vand.u32 2147483647, %v2824
  %vm2850 = vcmp.eq.f32.partialorder %v2849, 8.507059e+37
  %v2851 = vand.u32 %v2824, 2147483648
  %v2852 = vor.u32 1.1754944e-38, %v2851
  %v2853 = vsel %vm2850, %v2852, %v2848
  %v2854 = vmul.f32 1.0, %v2853
  %v2855 = vmul.f32 %v2799, %v2451
  %v2856 = vmul.f32 %v2814, %v2452
  %v2857 = vmul.f32 %v2761, %v2815
  %v2858 = vmul.f32 %v2776, %v2816
  %v2859 = vadd.f32 %v2855, %v2857
  %v2860 = vadd.f32 %v2856, %v2858
  %v2861 = vtanh.pop %v2859
  %v2862 = vtanh.pop %v2860
  %v2863 = vmul.f32 %v2839, %v2861
  %v2864 = vmul.f32 %v2854, %v2862
  %v2865 = vpack.c.bf16 %v2863, %v2863
  %v2866 = vpack.c.bf16 %v2864, %v2864
  %s2867 = scalar_lea.vmem [#allocation2], 40
  %2868 = vst [vmem:[%s2867] sm:$0xf] %v2865
  %2869 = vst [vmem:[%s2867 + $0x4] sm:$0xf] %v2866
  %v2870 = vld [vmem:[%s2] sm:$0xff]
  %v2871 = vld [vmem:[%s2 + $0x8] sm:$0xff]
  %v2872 = vld [vmem:[%s2 + $0x10] sm:$0xff]
  %v2873 = vld [vmem:[%s2 + $0x18] sm:$0xff]
  %v2874 = vld [vmem:[%s2 + $0x20] sm:$0xff]
  %v2875 = vld [vmem:[%s2 + $0x28] sm:$0xff]
  %v2876 = vld [vmem:[%s2 + $0x30] sm:$0xff]
  %v2877 = vld [vmem:[%s2 + $0x38] sm:$0xff]
  %v2878 = vld [vmem:[%s2 + $0x40] sm:$0xff]
  %v2879 = vld [vmem:[%s2 + $0x48] sm:$0xff]
  %v2880 = vld [vmem:[%s2 + $0x50] sm:$0xff]
  %v2881 = vld [vmem:[%s2 + $0x58] sm:$0xff]
  %v2882 = vld [vmem:[%s2 + $0x60] sm:$0xff]
  %v2883 = vld [vmem:[%s2 + $0x68] sm:$0xff]
  %v2884 = vld [vmem:[%s2 + $0x70] sm:$0xff]
  %v2885 = vld [vmem:[%s2 + $0x78] sm:$0xff]
  %v2886 = vld [vmem:[%s2 + $0x80] sm:$0xff]
  %v2887 = vld [vmem:[%s2 + $0x88] sm:$0xff]
  %v2888 = vld [vmem:[%s2 + $0x90] sm:$0xff]
  %v2889 = vld [vmem:[%s2 + $0x98] sm:$0xff]
  %v2890 = vld [vmem:[%s2 + $0xa0] sm:$0xff]
  %v2891 = vld [vmem:[%s2 + $0xa8] sm:$0xff]
  %v2892 = vld [vmem:[%s2 + $0xb0] sm:$0xff]
  %v2893 = vld [vmem:[%s2 + $0xb8] sm:$0xff]
  %v2894 = vld [vmem:[%s2 + $0xc0] sm:$0xff]
  %v2895 = vld [vmem:[%s2 + $0xc8] sm:$0xff]
  %v2896 = vld [vmem:[%s2 + $0xd0] sm:$0xff]
  %v2897 = vld [vmem:[%s2 + $0xd8] sm:$0xff]
  %v2898 = vld [vmem:[%s2 + $0xe0] sm:$0xff]
  %v2899 = vld [vmem:[%s2 + $0xe8] sm:$0xff]
  %v2900 = vld [vmem:[%s2 + $0xf0] sm:$0xff]
  %v2901 = vld [vmem:[%s2 + $0xf8] sm:$0xff]
  %v2904 = vunpack.c.l.b16 %v2865
  %v2905 = vunpack.c.l.b16 %v2866
  %v2906 = vpack.c.b16 %v2905, %v2904
  %v2940 = vunpack.c.l.b16 %v2870
  %v2941 = vunpack.c.h.b16 %v2870
  %v2942 = vunpack.c.l.b16 %v2871
  %v2943 = vunpack.c.h.b16 %v2871
  %v2944 = vunpack.c.l.b16 %v2872
  %v2945 = vunpack.c.h.b16 %v2872
  %v2946 = vunpack.c.l.b16 %v2873
  %v2947 = vunpack.c.h.b16 %v2873
  %v2948 = vunpack.c.l.b16 %v2874
  %v2949 = vunpack.c.h.b16 %v2874
  %v2950 = vunpack.c.l.b16 %v2875
  %v2951 = vunpack.c.h.b16 %v2875
  %v2952 = vunpack.c.l.b16 %v2876
  %v2953 = vunpack.c.h.b16 %v2876
  %v2954 = vunpack.c.l.b16 %v2877
  %v2955 = vunpack.c.h.b16 %v2877
  %v2956 = vunpack.c.l.b16 %v2878
  %v2957 = vunpack.c.h.b16 %v2878
  %v2958 = vunpack.c.l.b16 %v2879
  %v2959 = vunpack.c.h.b16 %v2879
  %v2960 = vunpack.c.l.b16 %v2880
  %v2961 = vunpack.c.h.b16 %v2880
  %v2962 = vunpack.c.l.b16 %v2881
  %v2963 = vunpack.c.h.b16 %v2881
  %v2964 = vunpack.c.l.b16 %v2882
  %v2965 = vunpack.c.h.b16 %v2882
  %v2966 = vunpack.c.l.b16 %v2883
  %v2967 = vunpack.c.h.b16 %v2883
  %v2968 = vunpack.c.l.b16 %v2884
  %v2969 = vunpack.c.h.b16 %v2884
  %v2970 = vunpack.c.l.b16 %v2885
  %v2971 = vunpack.c.h.b16 %v2885
  %v2972 = vunpack.c.l.b16 %v2886
  %v2973 = vunpack.c.h.b16 %v2886
  %v2974 = vunpack.c.l.b16 %v2887
  %v2975 = vunpack.c.h.b16 %v2887
  %v2976 = vunpack.c.l.b16 %v2888
  %v2977 = vunpack.c.h.b16 %v2888
  %v2978 = vunpack.c.l.b16 %v2889
  %v2979 = vunpack.c.h.b16 %v2889
  %v2980 = vunpack.c.l.b16 %v2890
  %v2981 = vunpack.c.h.b16 %v2890
  %v2982 = vunpack.c.l.b16 %v2891
  %v2983 = vunpack.c.h.b16 %v2891
  %v2984 = vunpack.c.l.b16 %v2892
  %v2985 = vunpack.c.h.b16 %v2892
  %v2986 = vunpack.c.l.b16 %v2893
  %v2987 = vunpack.c.h.b16 %v2893
  %v2988 = vunpack.c.l.b16 %v2894
  %v2989 = vunpack.c.h.b16 %v2894
  %v2990 = vunpack.c.l.b16 %v2895
  %v2991 = vunpack.c.h.b16 %v2895
  %v2992 = vunpack.c.l.b16 %v2896
  %v2993 = vunpack.c.h.b16 %v2896
  %v2994 = vunpack.c.l.b16 %v2897
  %v2995 = vunpack.c.h.b16 %v2897
  %v2996 = vunpack.c.l.b16 %v2898
  %v2997 = vunpack.c.h.b16 %v2898
  %v2998 = vunpack.c.l.b16 %v2899
  %v2999 = vunpack.c.h.b16 %v2899
  %v3000 = vunpack.c.l.b16 %v2900
  %v3001 = vunpack.c.h.b16 %v2900
  %v3002 = vunpack.c.l.b16 %v2901
  %v3003 = vunpack.c.h.b16 %v2901
  %v3004 = vpack.c.b16 %v2944, %v2940
  %v3005 = vpack.c.b16 %v2945, %v2941
  %v3006 = vpack.c.b16 %v2946, %v2942
  %v3007 = vpack.c.b16 %v2947, %v2943
  %v3008 = vpack.c.b16 %v2952, %v2948
  %v3009 = vpack.c.b16 %v2953, %v2949
  %v3010 = vpack.c.b16 %v2954, %v2950
  %v3011 = vpack.c.b16 %v2955, %v2951
  %v3012 = vpack.c.b16 %v2960, %v2956
  %v3013 = vpack.c.b16 %v2961, %v2957
  %v3014 = vpack.c.b16 %v2962, %v2958
  %v3015 = vpack.c.b16 %v2963, %v2959
  %v3016 = vpack.c.b16 %v2968, %v2964
  %v3017 = vpack.c.b16 %v2969, %v2965
  %v3018 = vpack.c.b16 %v2970, %v2966
  %v3019 = vpack.c.b16 %v2971, %v2967
  %v3020 = vpack.c.b16 %v2976, %v2972
  %v3021 = vpack.c.b16 %v2977, %v2973
  %v3022 = vpack.c.b16 %v2978, %v2974
  %v3023 = vpack.c.b16 %v2979, %v2975
  %v3024 = vpack.c.b16 %v2984, %v2980
  %v3025 = vpack.c.b16 %v2985, %v2981
  %v3026 = vpack.c.b16 %v2986, %v2982
  %v3027 = vpack.c.b16 %v2987, %v2983
  %v3028 = vpack.c.b16 %v2992, %v2988
  %v3029 = vpack.c.b16 %v2993, %v2989
  %v3030 = vpack.c.b16 %v2994, %v2990
  %v3031 = vpack.c.b16 %v2995, %v2991
  %v3032 = vpack.c.b16 %v3000, %v2996
  %v3033 = vpack.c.b16 %v3001, %v2997
  %v3034 = vpack.c.b16 %v3002, %v2998
  %v3035 = vpack.c.b16 %v3003, %v2999
  %3068 = vmatpush.bf16.msra.mxu0 %v3032
  %3069 = vmatpush.bf16.msra.mxu0 %v3028
  %3070 = vmatpush.bf16.msra.mxu0 %v3024
  %3071 = vmatpush.bf16.msra.mxu0 %v3020
  %3072 = vmatpush.bf16.msra.mxu0 %v3016
  %3073 = vmatpush.bf16.msra.mxu0 %v3012
  %3074 = vmatpush.bf16.msra.mxu0 %v3008
  %3075 = vmatpush.bf16.msra.mxu0 %v3004
  %3076 = vmatmul.bf16.gmra.mxu0 %v2906
  %v3077 = vpop.f32.mrf.mxu0
  %v3078 = vadd.f32 0.0, %v3077
  %v3079 = vpop.f32.mrf.mxu0
  %v3080 = vadd.f32 0.0, %v3079
  %3081 = vdwg.mxu0
  %3082 = vmatpush.bf16.msra.mxu0 %v3033
  %3083 = vmatpush.bf16.msra.mxu0 %v3029
  %3084 = vmatpush.bf16.msra.mxu0 %v3025
  %3085 = vmatpush.bf16.msra.mxu0 %v3021
  %3086 = vmatpush.bf16.msra.mxu0 %v3017
  %3087 = vmatpush.bf16.msra.mxu0 %v3013
  %3088 = vmatpush.bf16.msra.mxu0 %v3009
  %3089 = vmatpush.bf16.msra.mxu0 %v3005
  %3090 = vmatmul.bf16.gmra.mxu0 %v2906
  %v3091 = vpop.f32.mrf.mxu0
  %v3092 = vadd.f32 0.0, %v3091
  %v3093 = vpop.f32.mrf.mxu0
  %v3094 = vadd.f32 0.0, %v3093
  %3095 = vdwg.mxu0
  %3096 = vmatpush.bf16.msra.mxu0 %v3034
  %3097 = vmatpush.bf16.msra.mxu0 %v3030
  %3098 = vmatpush.bf16.msra.mxu0 %v3026
  %3099 = vmatpush.bf16.msra.mxu0 %v3022
  %3100 = vmatpush.bf16.msra.mxu0 %v3018
  %3101 = vmatpush.bf16.msra.mxu0 %v3014
  %3102 = vmatpush.bf16.msra.mxu0 %v3010
  %3103 = vmatpush.bf16.msra.mxu0 %v3006
  %3104 = vmatmul.bf16.gmra.mxu0 %v2906
  %v3105 = vpop.f32.mrf.mxu0
  %v3106 = vadd.f32 0.0, %v3105
  %v3107 = vpop.f32.mrf.mxu0
  %v3108 = vadd.f32 0.0, %v3107
  %3109 = vdwg.mxu0
  %3110 = vmatpush.bf16.msra.mxu0 %v3035
  %3111 = vmatpush.bf16.msra.mxu0 %v3031
  %3112 = vmatpush.bf16.msra.mxu0 %v3027
  %3113 = vmatpush.bf16.msra.mxu0 %v3023
  %3114 = vmatpush.bf16.msra.mxu0 %v3019
  %3115 = vmatpush.bf16.msra.mxu0 %v3015
  %3116 = vmatpush.bf16.msra.mxu0 %v3011
  %3117 = vmatpush.bf16.msra.mxu0 %v3007
  %3118 = vmatmul.bf16.gmra.mxu0 %v2906
  %v3119 = vpop.f32.mrf.mxu0
  %v3120 = vadd.f32 0.0, %v3119
  %v3121 = vpop.f32.mrf.mxu0
  %v3122 = vadd.f32 0.0, %v3121
  %3123 = vdwg.mxu0
  %s3124 = smul.u32 12, 4
  %s3125 = smul.addr %s3124, 4
  %s3126 = scalar_lea.vmem [#allocation3], %s3125
  %v3127 = vld [vmem:[%s3126] sm:$0xff]
  %v3128 = vld [vmem:[%s3126 + $0x8] sm:$0xff]
  %v3129 = vld [vmem:[%s3126 + $0x10] sm:$0xff]
  %v3130 = vld [vmem:[%s3126 + $0x18] sm:$0xff]
  %v3131 = vunpack.c.l.bf16 %v3127
  %v3132 = vunpack.c.h.bf16 %v3127
  %v3133 = vunpack.c.l.bf16 %v3128
  %v3134 = vunpack.c.h.bf16 %v3128
  %v3135 = vunpack.c.l.bf16 %v3129
  %v3136 = vunpack.c.h.bf16 %v3129
  %v3137 = vunpack.c.l.bf16 %v3130
  %v3138 = vunpack.c.h.bf16 %v3130
  %v3139 = vadd.f32 %v3131, %v3078
  %v3140 = vadd.f32 %v3132, %v3092
  %v3141 = vadd.f32 %v3133, %v3106
  %v3142 = vadd.f32 %v3134, %v3120
  %v3143 = vadd.f32 %v3135, %v3080
  %v3144 = vadd.f32 %v3136, %v3094
  %v3145 = vadd.f32 %v3137, %v3108
  %v3146 = vadd.f32 %v3138, %v3122
  %v3147 = vxor.u32 %v3139, 2147483648
  %v3148 = vxor.u32 %v3143, 2147483648
  %v3149 = vmul.f32 %v3147, 1.442695
  %v3150 = vpow.pop %v3149
  %v3151 = vmul.f32 %v3148, 1.442695
  %v3152 = vpow.pop %v3151
  %v3153 = vadd.f32 %v3150, 1.0
  %v3154 = vadd.f32 %v3152, 1.0
  %v3155 = vrcp.pop %v3153
  %v3156 = vmul.f32 %v3153, %v3155
  %v3157 = vsub.f32 1.0, %v3156
  %v3158 = vmul.f32 %v3155, %v3157
  %v3159 = vadd.f32 %v3155, %v3158
  %vm3160 = vweird.f32 %v3153
  %vm3161 = vweird.f32 %v3155
  %vm3162 = vmor %vm3160, %vm3161
  %v3163 = vsel %vm3162, %v3155, %v3159
  %v3164 = vand.u32 2147483647, %v3153
  %vm3165 = vcmp.eq.f32.partialorder %v3164, 8.507059e+37
  %v3166 = vand.u32 %v3153, 2147483648
  %v3167 = vor.u32 1.1754944e-38, %v3166
  %v3168 = vsel %vm3165, %v3167, %v3163
  %v3169 = vmul.f32 1.0, %v3168
  %v3170 = vrcp.pop %v3154
  %v3171 = vmul.f32 %v3154, %v3170
  %v3172 = vsub.f32 1.0, %v3171
  %v3173 = vmul.f32 %v3170, %v3172
  %v3174 = vadd.f32 %v3170, %v3173
  %vm3175 = vweird.f32 %v3154
  %vm3176 = vweird.f32 %v3170
  %vm3177 = vmor %vm3175, %vm3176
  %v3178 = vsel %vm3177, %v3170, %v3174
  %v3179 = vand.u32 2147483647, %v3154
  %vm3180 = vcmp.eq.f32.partialorder %v3179, 8.507059e+37
  %v3181 = vand.u32 %v3154, 2147483648
  %v3182 = vor.u32 1.1754944e-38, %v3181
  %v3183 = vsel %vm3180, %v3182, %v3178
  %v3184 = vmul.f32 1.0, %v3183
  %v3185 = vxor.u32 %v3140, 2147483648
  %v3186 = vxor.u32 %v3144, 2147483648
  %v3187 = vmul.f32 %v3185, 1.442695
  %v3188 = vpow.pop %v3187
  %v3189 = vmul.f32 %v3186, 1.442695
  %v3190 = vpow.pop %v3189
  %v3191 = vadd.f32 %v3188, 1.0
  %v3192 = vadd.f32 %v3190, 1.0
  %v3193 = vrcp.pop %v3191
  %v3194 = vmul.f32 %v3191, %v3193
  %v3195 = vsub.f32 1.0, %v3194
  %v3196 = vmul.f32 %v3193, %v3195
  %v3197 = vadd.f32 %v3193, %v3196
  %vm3198 = vweird.f32 %v3191
  %vm3199 = vweird.f32 %v3193
  %vm3200 = vmor %vm3198, %vm3199
  %v3201 = vsel %vm3200, %v3193, %v3197
  %v3202 = vand.u32 2147483647, %v3191
  %vm3203 = vcmp.eq.f32.partialorder %v3202, 8.507059e+37
  %v3204 = vand.u32 %v3191, 2147483648
  %v3205 = vor.u32 1.1754944e-38, %v3204
  %v3206 = vsel %vm3203, %v3205, %v3201
  %v3207 = vmul.f32 1.0, %v3206
  %v3208 = vrcp.pop %v3192
  %v3209 = vmul.f32 %v3192, %v3208
  %v3210 = vsub.f32 1.0, %v3209
  %v3211 = vmul.f32 %v3208, %v3210
  %v3212 = vadd.f32 %v3208, %v3211
  %vm3213 = vweird.f32 %v3192
  %vm3214 = vweird.f32 %v3208
  %vm3215 = vmor %vm3213, %vm3214
  %v3216 = vsel %vm3215, %v3208, %v3212
  %v3217 = vand.u32 2147483647, %v3192
  %vm3218 = vcmp.eq.f32.partialorder %v3217, 8.507059e+37
  %v3219 = vand.u32 %v3192, 2147483648
  %v3220 = vor.u32 1.1754944e-38, %v3219
  %v3221 = vsel %vm3218, %v3220, %v3216
  %v3222 = vmul.f32 1.0, %v3221
  %v3223 = vtanh.pop %v3141
  %v3224 = vtanh.pop %v3145
  %v3225 = vxor.u32 %v3142, 2147483648
  %v3226 = vxor.u32 %v3146, 2147483648
  %v3227 = vmul.f32 %v3225, 1.442695
  %v3228 = vpow.pop %v3227
  %v3229 = vmul.f32 %v3226, 1.442695
  %v3230 = vpow.pop %v3229
  %v3231 = vadd.f32 %v3228, 1.0
  %v3232 = vadd.f32 %v3230, 1.0
  %v3233 = vrcp.pop %v3231
  %v3234 = vmul.f32 %v3231, %v3233
  %v3235 = vsub.f32 1.0, %v3234
  %v3236 = vmul.f32 %v3233, %v3235
  %v3237 = vadd.f32 %v3233, %v3236
  %vm3238 = vweird.f32 %v3231
  %vm3239 = vweird.f32 %v3233
  %vm3240 = vmor %vm3238, %vm3239
  %v3241 = vsel %vm3240, %v3233, %v3237
  %v3242 = vand.u32 2147483647, %v3231
  %vm3243 = vcmp.eq.f32.partialorder %v3242, 8.507059e+37
  %v3244 = vand.u32 %v3231, 2147483648
  %v3245 = vor.u32 1.1754944e-38, %v3244
  %v3246 = vsel %vm3243, %v3245, %v3241
  %v3247 = vmul.f32 1.0, %v3246
  %v3248 = vrcp.pop %v3232
  %v3249 = vmul.f32 %v3232, %v3248
  %v3250 = vsub.f32 1.0, %v3249
  %v3251 = vmul.f32 %v3248, %v3250
  %v3252 = vadd.f32 %v3248, %v3251
  %vm3253 = vweird.f32 %v3232
  %vm3254 = vweird.f32 %v3248
  %vm3255 = vmor %vm3253, %vm3254
  %v3256 = vsel %vm3255, %v3248, %v3252
  %v3257 = vand.u32 2147483647, %v3232
  %vm3258 = vcmp.eq.f32.partialorder %v3257, 8.507059e+37
  %v3259 = vand.u32 %v3232, 2147483648
  %v3260 = vor.u32 1.1754944e-38, %v3259
  %v3261 = vsel %vm3258, %v3260, %v3256
  %v3262 = vmul.f32 1.0, %v3261
  %v3263 = vmul.f32 %v3207, %v2859
  %v3264 = vmul.f32 %v3222, %v2860
  %v3265 = vmul.f32 %v3169, %v3223
  %v3266 = vmul.f32 %v3184, %v3224
  %v3267 = vadd.f32 %v3263, %v3265
  %v3268 = vadd.f32 %v3264, %v3266
  %v3269 = vtanh.pop %v3267
  %v3270 = vtanh.pop %v3268
  %v3271 = vmul.f32 %v3247, %v3269
  %v3272 = vmul.f32 %v3262, %v3270
  %v3273 = vpack.c.bf16 %v3271, %v3271
  %v3274 = vpack.c.bf16 %v3272, %v3272
  %s3275 = scalar_lea.vmem [#allocation2], 48
  %3276 = vst [vmem:[%s3275] sm:$0xf] %v3273
  %3277 = vst [vmem:[%s3275 + $0x4] sm:$0xf] %v3274
  %v3278 = vld [vmem:[%s2] sm:$0xff]
  %v3279 = vld [vmem:[%s2 + $0x8] sm:$0xff]
  %v3280 = vld [vmem:[%s2 + $0x10] sm:$0xff]
  %v3281 = vld [vmem:[%s2 + $0x18] sm:$0xff]
  %v3282 = vld [vmem:[%s2 + $0x20] sm:$0xff]
  %v3283 = vld [vmem:[%s2 + $0x28] sm:$0xff]
  %v3284 = vld [vmem:[%s2 + $0x30] sm:$0xff]
  %v3285 = vld [vmem:[%s2 + $0x38] sm:$0xff]
  %v3286 = vld [vmem:[%s2 + $0x40] sm:$0xff]
  %v3287 = vld [vmem:[%s2 + $0x48] sm:$0xff]
  %v3288 = vld [vmem:[%s2 + $0x50] sm:$0xff]
  %v3289 = vld [vmem:[%s2 + $0x58] sm:$0xff]
  %v3290 = vld [vmem:[%s2 + $0x60] sm:$0xff]
  %v3291 = vld [vmem:[%s2 + $0x68] sm:$0xff]
  %v3292 = vld [vmem:[%s2 + $0x70] sm:$0xff]
  %v3293 = vld [vmem:[%s2 + $0x78] sm:$0xff]
  %v3294 = vld [vmem:[%s2 + $0x80] sm:$0xff]
  %v3295 = vld [vmem:[%s2 + $0x88] sm:$0xff]
  %v3296 = vld [vmem:[%s2 + $0x90] sm:$0xff]
  %v3297 = vld [vmem:[%s2 + $0x98] sm:$0xff]
  %v3298 = vld [vmem:[%s2 + $0xa0] sm:$0xff]
  %v3299 = vld [vmem:[%s2 + $0xa8] sm:$0xff]
  %v3300 = vld [vmem:[%s2 + $0xb0] sm:$0xff]
  %v3301 = vld [vmem:[%s2 + $0xb8] sm:$0xff]
  %v3302 = vld [vmem:[%s2 + $0xc0] sm:$0xff]
  %v3303 = vld [vmem:[%s2 + $0xc8] sm:$0xff]
  %v3304 = vld [vmem:[%s2 + $0xd0] sm:$0xff]
  %v3305 = vld [vmem:[%s2 + $0xd8] sm:$0xff]
  %v3306 = vld [vmem:[%s2 + $0xe0] sm:$0xff]
  %v3307 = vld [vmem:[%s2 + $0xe8] sm:$0xff]
  %v3308 = vld [vmem:[%s2 + $0xf0] sm:$0xff]
  %v3309 = vld [vmem:[%s2 + $0xf8] sm:$0xff]
  %v3312 = vunpack.c.l.b16 %v3273
  %v3313 = vunpack.c.l.b16 %v3274
  %v3314 = vpack.c.b16 %v3313, %v3312
  %v3348 = vunpack.c.l.b16 %v3278
  %v3349 = vunpack.c.h.b16 %v3278
  %v3350 = vunpack.c.l.b16 %v3279
  %v3351 = vunpack.c.h.b16 %v3279
  %v3352 = vunpack.c.l.b16 %v3280
  %v3353 = vunpack.c.h.b16 %v3280
  %v3354 = vunpack.c.l.b16 %v3281
  %v3355 = vunpack.c.h.b16 %v3281
  %v3356 = vunpack.c.l.b16 %v3282
  %v3357 = vunpack.c.h.b16 %v3282
  %v3358 = vunpack.c.l.b16 %v3283
  %v3359 = vunpack.c.h.b16 %v3283
  %v3360 = vunpack.c.l.b16 %v3284
  %v3361 = vunpack.c.h.b16 %v3284
  %v3362 = vunpack.c.l.b16 %v3285
  %v3363 = vunpack.c.h.b16 %v3285
  %v3364 = vunpack.c.l.b16 %v3286
  %v3365 = vunpack.c.h.b16 %v3286
  %v3366 = vunpack.c.l.b16 %v3287
  %v3367 = vunpack.c.h.b16 %v3287
  %v3368 = vunpack.c.l.b16 %v3288
  %v3369 = vunpack.c.h.b16 %v3288
  %v3370 = vunpack.c.l.b16 %v3289
  %v3371 = vunpack.c.h.b16 %v3289
  %v3372 = vunpack.c.l.b16 %v3290
  %v3373 = vunpack.c.h.b16 %v3290
  %v3374 = vunpack.c.l.b16 %v3291
  %v3375 = vunpack.c.h.b16 %v3291
  %v3376 = vunpack.c.l.b16 %v3292
  %v3377 = vunpack.c.h.b16 %v3292
  %v3378 = vunpack.c.l.b16 %v3293
  %v3379 = vunpack.c.h.b16 %v3293
  %v3380 = vunpack.c.l.b16 %v3294
  %v3381 = vunpack.c.h.b16 %v3294
  %v3382 = vunpack.c.l.b16 %v3295
  %v3383 = vunpack.c.h.b16 %v3295
  %v3384 = vunpack.c.l.b16 %v3296
  %v3385 = vunpack.c.h.b16 %v3296
  %v3386 = vunpack.c.l.b16 %v3297
  %v3387 = vunpack.c.h.b16 %v3297
  %v3388 = vunpack.c.l.b16 %v3298
  %v3389 = vunpack.c.h.b16 %v3298
  %v3390 = vunpack.c.l.b16 %v3299
  %v3391 = vunpack.c.h.b16 %v3299
  %v3392 = vunpack.c.l.b16 %v3300
  %v3393 = vunpack.c.h.b16 %v3300
  %v3394 = vunpack.c.l.b16 %v3301
  %v3395 = vunpack.c.h.b16 %v3301
  %v3396 = vunpack.c.l.b16 %v3302
  %v3397 = vunpack.c.h.b16 %v3302
  %v3398 = vunpack.c.l.b16 %v3303
  %v3399 = vunpack.c.h.b16 %v3303
  %v3400 = vunpack.c.l.b16 %v3304
  %v3401 = vunpack.c.h.b16 %v3304
  %v3402 = vunpack.c.l.b16 %v3305
  %v3403 = vunpack.c.h.b16 %v3305
  %v3404 = vunpack.c.l.b16 %v3306
  %v3405 = vunpack.c.h.b16 %v3306
  %v3406 = vunpack.c.l.b16 %v3307
  %v3407 = vunpack.c.h.b16 %v3307
  %v3408 = vunpack.c.l.b16 %v3308
  %v3409 = vunpack.c.h.b16 %v3308
  %v3410 = vunpack.c.l.b16 %v3309
  %v3411 = vunpack.c.h.b16 %v3309
  %v3412 = vpack.c.b16 %v3352, %v3348
  %v3413 = vpack.c.b16 %v3353, %v3349
  %v3414 = vpack.c.b16 %v3354, %v3350
  %v3415 = vpack.c.b16 %v3355, %v3351
  %v3416 = vpack.c.b16 %v3360, %v3356
  %v3417 = vpack.c.b16 %v3361, %v3357
  %v3418 = vpack.c.b16 %v3362, %v3358
  %v3419 = vpack.c.b16 %v3363, %v3359
  %v3420 = vpack.c.b16 %v3368, %v3364
  %v3421 = vpack.c.b16 %v3369, %v3365
  %v3422 = vpack.c.b16 %v3370, %v3366
  %v3423 = vpack.c.b16 %v3371, %v3367
  %v3424 = vpack.c.b16 %v3376, %v3372
  %v3425 = vpack.c.b16 %v3377, %v3373
  %v3426 = vpack.c.b16 %v3378, %v3374
  %v3427 = vpack.c.b16 %v3379, %v3375
  %v3428 = vpack.c.b16 %v3384, %v3380
  %v3429 = vpack.c.b16 %v3385, %v3381
  %v3430 = vpack.c.b16 %v3386, %v3382
  %v3431 = vpack.c.b16 %v3387, %v3383
  %v3432 = vpack.c.b16 %v3392, %v3388
  %v3433 = vpack.c.b16 %v3393, %v3389
  %v3434 = vpack.c.b16 %v3394, %v3390
  %v3435 = vpack.c.b16 %v3395, %v3391
  %v3436 = vpack.c.b16 %v3400, %v3396
  %v3437 = vpack.c.b16 %v3401, %v3397
  %v3438 = vpack.c.b16 %v3402, %v3398
  %v3439 = vpack.c.b16 %v3403, %v3399
  %v3440 = vpack.c.b16 %v3408, %v3404
  %v3441 = vpack.c.b16 %v3409, %v3405
  %v3442 = vpack.c.b16 %v3410, %v3406
  %v3443 = vpack.c.b16 %v3411, %v3407
  %3476 = vmatpush.bf16.msra.mxu0 %v3440
  %3477 = vmatpush.bf16.msra.mxu0 %v3436
  %3478 = vmatpush.bf16.msra.mxu0 %v3432
  %3479 = vmatpush.bf16.msra.mxu0 %v3428
  %3480 = vmatpush.bf16.msra.mxu0 %v3424
  %3481 = vmatpush.bf16.msra.mxu0 %v3420
  %3482 = vmatpush.bf16.msra.mxu0 %v3416
  %3483 = vmatpush.bf16.msra.mxu0 %v3412
  %3484 = vmatmul.bf16.gmra.mxu0 %v3314
  %v3485 = vpop.f32.mrf.mxu0
  %v3486 = vadd.f32 0.0, %v3485
  %v3487 = vpop.f32.mrf.mxu0
  %v3488 = vadd.f32 0.0, %v3487
  %3489 = vdwg.mxu0
  %3490 = vmatpush.bf16.msra.mxu0 %v3441
  %3491 = vmatpush.bf16.msra.mxu0 %v3437
  %3492 = vmatpush.bf16.msra.mxu0 %v3433
  %3493 = vmatpush.bf16.msra.mxu0 %v3429
  %3494 = vmatpush.bf16.msra.mxu0 %v3425
  %3495 = vmatpush.bf16.msra.mxu0 %v3421
  %3496 = vmatpush.bf16.msra.mxu0 %v3417
  %3497 = vmatpush.bf16.msra.mxu0 %v3413
  %3498 = vmatmul.bf16.gmra.mxu0 %v3314
  %v3499 = vpop.f32.mrf.mxu0
  %v3500 = vadd.f32 0.0, %v3499
  %v3501 = vpop.f32.mrf.mxu0
  %v3502 = vadd.f32 0.0, %v3501
  %3503 = vdwg.mxu0
  %3504 = vmatpush.bf16.msra.mxu0 %v3442
  %3505 = vmatpush.bf16.msra.mxu0 %v3438
  %3506 = vmatpush.bf16.msra.mxu0 %v3434
  %3507 = vmatpush.bf16.msra.mxu0 %v3430
  %3508 = vmatpush.bf16.msra.mxu0 %v3426
  %3509 = vmatpush.bf16.msra.mxu0 %v3422
  %3510 = vmatpush.bf16.msra.mxu0 %v3418
  %3511 = vmatpush.bf16.msra.mxu0 %v3414
  %3512 = vmatmul.bf16.gmra.mxu0 %v3314
  %v3513 = vpop.f32.mrf.mxu0
  %v3514 = vadd.f32 0.0, %v3513
  %v3515 = vpop.f32.mrf.mxu0
  %v3516 = vadd.f32 0.0, %v3515
  %3517 = vdwg.mxu0
  %3518 = vmatpush.bf16.msra.mxu0 %v3443
  %3519 = vmatpush.bf16.msra.mxu0 %v3439
  %3520 = vmatpush.bf16.msra.mxu0 %v3435
  %3521 = vmatpush.bf16.msra.mxu0 %v3431
  %3522 = vmatpush.bf16.msra.mxu0 %v3427
  %3523 = vmatpush.bf16.msra.mxu0 %v3423
  %3524 = vmatpush.bf16.msra.mxu0 %v3419
  %3525 = vmatpush.bf16.msra.mxu0 %v3415
  %3526 = vmatmul.bf16.gmra.mxu0 %v3314
  %v3527 = vpop.f32.mrf.mxu0
  %v3528 = vadd.f32 0.0, %v3527
  %v3529 = vpop.f32.mrf.mxu0
  %v3530 = vadd.f32 0.0, %v3529
  %3531 = vdwg.mxu0
  %s3532 = smul.u32 14, 4
  %s3533 = smul.addr %s3532, 4
  %s3534 = scalar_lea.vmem [#allocation3], %s3533
  %v3535 = vld [vmem:[%s3534] sm:$0xff]
  %v3536 = vld [vmem:[%s3534 + $0x8] sm:$0xff]
  %v3537 = vld [vmem:[%s3534 + $0x10] sm:$0xff]
  %v3538 = vld [vmem:[%s3534 + $0x18] sm:$0xff]
  %v3539 = vunpack.c.l.bf16 %v3535
  %v3540 = vunpack.c.h.bf16 %v3535
  %v3541 = vunpack.c.l.bf16 %v3536
  %v3542 = vunpack.c.h.bf16 %v3536
  %v3543 = vunpack.c.l.bf16 %v3537
  %v3544 = vunpack.c.h.bf16 %v3537
  %v3545 = vunpack.c.l.bf16 %v3538
  %v3546 = vunpack.c.h.bf16 %v3538
  %v3547 = vadd.f32 %v3539, %v3486
  %v3548 = vadd.f32 %v3540, %v3500
  %v3549 = vadd.f32 %v3541, %v3514
  %v3550 = vadd.f32 %v3542, %v3528
  %v3551 = vadd.f32 %v3543, %v3488
  %v3552 = vadd.f32 %v3544, %v3502
  %v3553 = vadd.f32 %v3545, %v3516
  %v3554 = vadd.f32 %v3546, %v3530
  %v3555 = vxor.u32 %v3547, 2147483648
  %v3556 = vxor.u32 %v3551, 2147483648
  %v3557 = vmul.f32 %v3555, 1.442695
  %v3558 = vpow.pop %v3557
  %v3559 = vmul.f32 %v3556, 1.442695
  %v3560 = vpow.pop %v3559
  %v3561 = vadd.f32 %v3558, 1.0
  %v3562 = vadd.f32 %v3560, 1.0
  %v3563 = vrcp.pop %v3561
  %v3564 = vmul.f32 %v3561, %v3563
  %v3565 = vsub.f32 1.0, %v3564
  %v3566 = vmul.f32 %v3563, %v3565
  %v3567 = vadd.f32 %v3563, %v3566
  %vm3568 = vweird.f32 %v3561
  %vm3569 = vweird.f32 %v3563
  %vm3570 = vmor %vm3568, %vm3569
  %v3571 = vsel %vm3570, %v3563, %v3567
  %v3572 = vand.u32 2147483647, %v3561
  %vm3573 = vcmp.eq.f32.partialorder %v3572, 8.507059e+37
  %v3574 = vand.u32 %v3561, 2147483648
  %v3575 = vor.u32 1.1754944e-38, %v3574
  %v3576 = vsel %vm3573, %v3575, %v3571
  %v3577 = vmul.f32 1.0, %v3576
  %v3578 = vrcp.pop %v3562
  %v3579 = vmul.f32 %v3562, %v3578
  %v3580 = vsub.f32 1.0, %v3579
  %v3581 = vmul.f32 %v3578, %v3580
  %v3582 = vadd.f32 %v3578, %v3581
  %vm3583 = vweird.f32 %v3562
  %vm3584 = vweird.f32 %v3578
  %vm3585 = vmor %vm3583, %vm3584
  %v3586 = vsel %vm3585, %v3578, %v3582
  %v3587 = vand.u32 2147483647, %v3562
  %vm3588 = vcmp.eq.f32.partialorder %v3587, 8.507059e+37
  %v3589 = vand.u32 %v3562, 2147483648
  %v3590 = vor.u32 1.1754944e-38, %v3589
  %v3591 = vsel %vm3588, %v3590, %v3586
  %v3592 = vmul.f32 1.0, %v3591
  %v3593 = vxor.u32 %v3548, 2147483648
  %v3594 = vxor.u32 %v3552, 2147483648
  %v3595 = vmul.f32 %v3593, 1.442695
  %v3596 = vpow.pop %v3595
  %v3597 = vmul.f32 %v3594, 1.442695
  %v3598 = vpow.pop %v3597
  %v3599 = vadd.f32 %v3596, 1.0
  %v3600 = vadd.f32 %v3598, 1.0
  %v3601 = vrcp.pop %v3599
  %v3602 = vmul.f32 %v3599, %v3601
  %v3603 = vsub.f32 1.0, %v3602
  %v3604 = vmul.f32 %v3601, %v3603
  %v3605 = vadd.f32 %v3601, %v3604
  %vm3606 = vweird.f32 %v3599
  %vm3607 = vweird.f32 %v3601
  %vm3608 = vmor %vm3606, %vm3607
  %v3609 = vsel %vm3608, %v3601, %v3605
  %v3610 = vand.u32 2147483647, %v3599
  %vm3611 = vcmp.eq.f32.partialorder %v3610, 8.507059e+37
  %v3612 = vand.u32 %v3599, 2147483648
  %v3613 = vor.u32 1.1754944e-38, %v3612
  %v3614 = vsel %vm3611, %v3613, %v3609
  %v3615 = vmul.f32 1.0, %v3614
  %v3616 = vrcp.pop %v3600
  %v3617 = vmul.f32 %v3600, %v3616
  %v3618 = vsub.f32 1.0, %v3617
  %v3619 = vmul.f32 %v3616, %v3618
  %v3620 = vadd.f32 %v3616, %v3619
  %vm3621 = vweird.f32 %v3600
  %vm3622 = vweird.f32 %v3616
  %vm3623 = vmor %vm3621, %vm3622
  %v3624 = vsel %vm3623, %v3616, %v3620
  %v3625 = vand.u32 2147483647, %v3600
  %vm3626 = vcmp.eq.f32.partialorder %v3625, 8.507059e+37
  %v3627 = vand.u32 %v3600, 2147483648
  %v3628 = vor.u32 1.1754944e-38, %v3627
  %v3629 = vsel %vm3626, %v3628, %v3624
  %v3630 = vmul.f32 1.0, %v3629
  %v3631 = vtanh.pop %v3549
  %v3632 = vtanh.pop %v3553
  %v3633 = vxor.u32 %v3550, 2147483648
  %v3634 = vxor.u32 %v3554, 2147483648
  %v3635 = vmul.f32 %v3633, 1.442695
  %v3636 = vpow.pop %v3635
  %v3637 = vmul.f32 %v3634, 1.442695
  %v3638 = vpow.pop %v3637
  %v3639 = vadd.f32 %v3636, 1.0
  %v3640 = vadd.f32 %v3638, 1.0
  %v3641 = vrcp.pop %v3639
  %v3642 = vmul.f32 %v3639, %v3641
  %v3643 = vsub.f32 1.0, %v3642
  %v3644 = vmul.f32 %v3641, %v3643
  %v3645 = vadd.f32 %v3641, %v3644
  %vm3646 = vweird.f32 %v3639
  %vm3647 = vweird.f32 %v3641
  %vm3648 = vmor %vm3646, %vm3647
  %v3649 = vsel %vm3648, %v3641, %v3645
  %v3650 = vand.u32 2147483647, %v3639
  %vm3651 = vcmp.eq.f32.partialorder %v3650, 8.507059e+37
  %v3652 = vand.u32 %v3639, 2147483648
  %v3653 = vor.u32 1.1754944e-38, %v3652
  %v3654 = vsel %vm3651, %v3653, %v3649
  %v3655 = vmul.f32 1.0, %v3654
  %v3656 = vrcp.pop %v3640
  %v3657 = vmul.f32 %v3640, %v3656
  %v3658 = vsub.f32 1.0, %v3657
  %v3659 = vmul.f32 %v3656, %v3658
  %v3660 = vadd.f32 %v3656, %v3659
  %vm3661 = vweird.f32 %v3640
  %vm3662 = vweird.f32 %v3656
  %vm3663 = vmor %vm3661, %vm3662
  %v3664 = vsel %vm3663, %v3656, %v3660
  %v3665 = vand.u32 2147483647, %v3640
  %vm3666 = vcmp.eq.f32.partialorder %v3665, 8.507059e+37
  %v3667 = vand.u32 %v3640, 2147483648
  %v3668 = vor.u32 1.1754944e-38, %v3667
  %v3669 = vsel %vm3666, %v3668, %v3664
  %v3670 = vmul.f32 1.0, %v3669
  %v3671 = vmul.f32 %v3615, %v3267
  %v3672 = vmul.f32 %v3630, %v3268
  %v3673 = vmul.f32 %v3577, %v3631
  %v3674 = vmul.f32 %v3592, %v3632
  %v3675 = vadd.f32 %v3671, %v3673
  %v3676 = vadd.f32 %v3672, %v3674
  %v3677 = vtanh.pop %v3675
  %v3678 = vtanh.pop %v3676
  %v3679 = vmul.f32 %v3655, %v3677
  %v3680 = vmul.f32 %v3670, %v3678
  %v3681 = vpack.c.bf16 %v3679, %v3679
  %v3682 = vpack.c.bf16 %v3680, %v3680
  %s3683 = scalar_lea.vmem [#allocation2], 56
  %3684 = vst [vmem:[%s3683] sm:$0xf] %v3681
  %3685 = vst [vmem:[%s3683 + $0x4] sm:$0xf] %v3682
  %v3686 = vld [vmem:[#allocation2] sm:$0xf]
  %v3687 = vld [vmem:[#allocation2 + $0x4] sm:$0xf]
  %v3688 = vld [vmem:[#allocation2 + $0x8] sm:$0xf]
  %v3689 = vld [vmem:[#allocation2 + $0xc] sm:$0xf]
  %v3690 = vld [vmem:[#allocation2 + $0x10] sm:$0xf]
  %v3691 = vld [vmem:[#allocation2 + $0x14] sm:$0xf]
  %v3692 = vld [vmem:[#allocation2 + $0x18] sm:$0xf]
  %v3693 = vld [vmem:[#allocation2 + $0x1c] sm:$0xf]
  %v3694 = vld [vmem:[#allocation2 + $0x20] sm:$0xf]
  %v3695 = vld [vmem:[#allocation2 + $0x24] sm:$0xf]
  %v3696 = vld [vmem:[#allocation2 + $0x28] sm:$0xf]
  %v3697 = vld [vmem:[#allocation2 + $0x2c] sm:$0xf]
  %v3698 = vld [vmem:[#allocation2 + $0x30] sm:$0xf]
  %v3699 = vld [vmem:[#allocation2 + $0x34] sm:$0xf]
  %v3700 = vld [vmem:[#allocation2 + $0x38] sm:$0xf]
  %v3701 = vld [vmem:[#allocation2 + $0x3c] sm:$0xf]
  %v3702 = vld [vmem:[%s4] sm:$0xff]
  %v3703 = vld [vmem:[%s4 + $0x8] sm:$0xff]
  %v3704 = vld [vmem:[%s4 + $0x10] sm:$0xff]
  %v3705 = vld [vmem:[%s4 + $0x18] sm:$0xff]
  %v3706 = vld [vmem:[%s4 + $0x20] sm:$0xff]
  %v3707 = vld [vmem:[%s4 + $0x28] sm:$0xff]
  %v3708 = vld [vmem:[%s4 + $0x30] sm:$0xff]
  %v3709 = vld [vmem:[%s4 + $0x38] sm:$0xff]
  %v3710 = vld [vmem:[%s4 + $0x40] sm:$0xff]
  %v3711 = vld [vmem:[%s4 + $0x48] sm:$0xff]
  %v3712 = vld [vmem:[%s4 + $0x50] sm:$0xff]
  %v3713 = vld [vmem:[%s4 + $0x58] sm:$0xff]
  %v3714 = vld [vmem:[%s4 + $0x60] sm:$0xff]
  %v3715 = vld [vmem:[%s4 + $0x68] sm:$0xff]
  %v3716 = vld [vmem:[%s4 + $0x70] sm:$0xff]
  %v3717 = vld [vmem:[%s4 + $0x78] sm:$0xff]
  %v3718 = vld [vmem:[%s4 + $0x80] sm:$0xff]
  %v3719 = vld [vmem:[%s4 + $0x88] sm:$0xff]
  %v3720 = vld [vmem:[%s4 + $0x90] sm:$0xff]
  %v3721 = vld [vmem:[%s4 + $0x98] sm:$0xff]
  %v3722 = vld [vmem:[%s4 + $0xa0] sm:$0xff]
  %v3723 = vld [vmem:[%s4 + $0xa8] sm:$0xff]
  %v3724 = vld [vmem:[%s4 + $0xb0] sm:$0xff]
  %v3725 = vld [vmem:[%s4 + $0xb8] sm:$0xff]
  %v3726 = vld [vmem:[%s4 + $0xc0] sm:$0xff]
  %v3727 = vld [vmem:[%s4 + $0xc8] sm:$0xff]
  %v3728 = vld [vmem:[%s4 + $0xd0] sm:$0xff]
  %v3729 = vld [vmem:[%s4 + $0xd8] sm:$0xff]
  %v3730 = vld [vmem:[%s4 + $0xe0] sm:$0xff]
  %v3731 = vld [vmem:[%s4 + $0xe8] sm:$0xff]
  %v3732 = vld [vmem:[%s4 + $0xf0] sm:$0xff]
  %v3733 = vld [vmem:[%s4 + $0xf8] sm:$0xff]
  %v3734 = vld [vmem:[%s6] sm:$0xf]
  %v3736 = vperm.slane %v3734, 0
  %v3737 = vperm.slane %v3734, 1
  %v3738 = vperm.slane %v3734, 2
  %v3739 = vperm.slane %v3734, 3
  %v3760 = vunpack.c.l.b16 %v3686
  %v3761 = vunpack.c.l.b16 %v3687
  %v3762 = vunpack.c.l.b16 %v3688
  %v3763 = vunpack.c.l.b16 %v3689
  %v3764 = vunpack.c.l.b16 %v3690
  %v3765 = vunpack.c.l.b16 %v3691
  %v3766 = vunpack.c.l.b16 %v3692
  %v3767 = vunpack.c.l.b16 %v3693
  %v3768 = vunpack.c.l.b16 %v3694
  %v3769 = vunpack.c.l.b16 %v3695
  %v3770 = vunpack.c.l.b16 %v3696
  %v3771 = vunpack.c.l.b16 %v3697
  %v3772 = vunpack.c.l.b16 %v3698
  %v3773 = vunpack.c.l.b16 %v3699
  %v3774 = vunpack.c.l.b16 %v3700
  %v3775 = vunpack.c.l.b16 %v3701
  %v3776 = vpack.c.b16 %v3761, %v3760
  %v3777 = vpack.c.b16 %v3763, %v3762
  %v3778 = vpack.c.b16 %v3765, %v3764
  %v3779 = vpack.c.b16 %v3767, %v3766
  %v3780 = vpack.c.b16 %v3769, %v3768
  %v3781 = vpack.c.b16 %v3771, %v3770
  %v3782 = vpack.c.b16 %v3773, %v3772
  %v3783 = vpack.c.b16 %v3775, %v3774
  %v3824 = vunpack.c.l.b16 %v3702
  %v3825 = vunpack.c.h.b16 %v3702
  %v3826 = vunpack.c.l.b16 %v3703
  %v3827 = vunpack.c.h.b16 %v3703
  %v3828 = vunpack.c.l.b16 %v3704
  %v3829 = vunpack.c.h.b16 %v3704
  %v3830 = vunpack.c.l.b16 %v3705
  %v3831 = vunpack.c.h.b16 %v3705
  %v3832 = vunpack.c.l.b16 %v3706
  %v3833 = vunpack.c.h.b16 %v3706
  %v3834 = vunpack.c.l.b16 %v3707
  %v3835 = vunpack.c.h.b16 %v3707
  %v3836 = vunpack.c.l.b16 %v3708
  %v3837 = vunpack.c.h.b16 %v3708
  %v3838 = vunpack.c.l.b16 %v3709
  %v3839 = vunpack.c.h.b16 %v3709
  %v3840 = vunpack.c.l.b16 %v3710
  %v3841 = vunpack.c.h.b16 %v3710
  %v3842 = vunpack.c.l.b16 %v3711
  %v3843 = vunpack.c.h.b16 %v3711
  %v3844 = vunpack.c.l.b16 %v3712
  %v3845 = vunpack.c.h.b16 %v3712
  %v3846 = vunpack.c.l.b16 %v3713
  %v3847 = vunpack.c.h.b16 %v3713
  %v3848 = vunpack.c.l.b16 %v3714
  %v3849 = vunpack.c.h.b16 %v3714
  %v3850 = vunpack.c.l.b16 %v3715
  %v3851 = vunpack.c.h.b16 %v3715
  %v3852 = vunpack.c.l.b16 %v3716
  %v3853 = vunpack.c.h.b16 %v3716
  %v3854 = vunpack.c.l.b16 %v3717
  %v3855 = vunpack.c.h.b16 %v3717
  %v3856 = vunpack.c.l.b16 %v3718
  %v3857 = vunpack.c.h.b16 %v3718
  %v3858 = vunpack.c.l.b16 %v3719
  %v3859 = vunpack.c.h.b16 %v3719
  %v3860 = vunpack.c.l.b16 %v3720
  %v3861 = vunpack.c.h.b16 %v3720
  %v3862 = vunpack.c.l.b16 %v3721
  %v3863 = vunpack.c.h.b16 %v3721
  %v3864 = vunpack.c.l.b16 %v3722
  %v3865 = vunpack.c.h.b16 %v3722
  %v3866 = vunpack.c.l.b16 %v3723
  %v3867 = vunpack.c.h.b16 %v3723
  %v3868 = vunpack.c.l.b16 %v3724
  %v3869 = vunpack.c.h.b16 %v3724
  %v3870 = vunpack.c.l.b16 %v3725
  %v3871 = vunpack.c.h.b16 %v3725
  %v3872 = vunpack.c.l.b16 %v3726
  %v3873 = vunpack.c.h.b16 %v3726
  %v3874 = vunpack.c.l.b16 %v3727
  %v3875 = vunpack.c.h.b16 %v3727
  %v3876 = vunpack.c.l.b16 %v3728
  %v3877 = vunpack.c.h.b16 %v3728
  %v3878 = vunpack.c.l.b16 %v3729
  %v3879 = vunpack.c.h.b16 %v3729
  %v3880 = vunpack.c.l.b16 %v3730
  %v3881 = vunpack.c.h.b16 %v3730
  %v3882 = vunpack.c.l.b16 %v3731
  %v3883 = vunpack.c.h.b16 %v3731
  %v3884 = vunpack.c.l.b16 %v3732
  %v3885 = vunpack.c.h.b16 %v3732
  %v3886 = vunpack.c.l.b16 %v3733
  %v3887 = vunpack.c.h.b16 %v3733
  %v3888 = vpack.c.b16 %v3828, %v3824
  %v3889 = vpack.c.b16 %v3829, %v3825
  %v3890 = vpack.c.b16 %v3830, %v3826
  %v3891 = vpack.c.b16 %v3831, %v3827
  %v3892 = vpack.c.b16 %v3836, %v3832
  %v3893 = vpack.c.b16 %v3837, %v3833
  %v3894 = vpack.c.b16 %v3838, %v3834
  %v3895 = vpack.c.b16 %v3839, %v3835
  %v3896 = vpack.c.b16 %v3844, %v3840
  %v3897 = vpack.c.b16 %v3845, %v3841
  %v3898 = vpack.c.b16 %v3846, %v3842
  %v3899 = vpack.c.b16 %v3847, %v3843
  %v3900 = vpack.c.b16 %v3852, %v3848
  %v3901 = vpack.c.b16 %v3853, %v3849
  %v3902 = vpack.c.b16 %v3854, %v3850
  %v3903 = vpack.c.b16 %v3855, %v3851
  %v3904 = vpack.c.b16 %v3860, %v3856
  %v3905 = vpack.c.b16 %v3861, %v3857
  %v3906 = vpack.c.b16 %v3862, %v3858
  %v3907 = vpack.c.b16 %v3863, %v3859
  %v3908 = vpack.c.b16 %v3868, %v3864
  %v3909 = vpack.c.b16 %v3869, %v3865
  %v3910 = vpack.c.b16 %v3870, %v3866
  %v3911 = vpack.c.b16 %v3871, %v3867
  %v3912 = vpack.c.b16 %v3876, %v3872
  %v3913 = vpack.c.b16 %v3877, %v3873
  %v3914 = vpack.c.b16 %v3878, %v3874
  %v3915 = vpack.c.b16 %v3879, %v3875
  %v3916 = vpack.c.b16 %v3884, %v3880
  %v3917 = vpack.c.b16 %v3885, %v3881
  %v3918 = vpack.c.b16 %v3886, %v3882
  %v3919 = vpack.c.b16 %v3887, %v3883
  %3952 = vmatpush.bf16.msra.mxu0 %v3916
  %3953 = vmatpush.bf16.msra.mxu0 %v3912
  %3954 = vmatpush.bf16.msra.mxu0 %v3908
  %3955 = vmatpush.bf16.msra.mxu0 %v3904
  %3956 = vmatpush.bf16.msra.mxu0 %v3900
  %3957 = vmatpush.bf16.msra.mxu0 %v3896
  %3958 = vmatpush.bf16.msra.mxu0 %v3892
  %3959 = vmatpush.bf16.msra.mxu0 %v3888
  %3960 = vmatmul.bf16.gmra.mxu0 %v3776
  %v3961 = vpop.f32.mrf.mxu0
  %v3962 = vadd.f32 %v3736, %v3961
  %v3963 = vpop.f32.mrf.mxu0
  %v3964 = vadd.f32 %v3736, %v3963
  %3965 = vmatmul.bf16.gmra.mxu0 %v3777
  %v3966 = vpop.f32.mrf.mxu0
  %v3967 = vadd.f32 %v3736, %v3966
  %v3968 = vpop.f32.mrf.mxu0
  %v3969 = vadd.f32 %v3736, %v3968
  %3970 = vmatmul.bf16.gmra.mxu0 %v3778
  %v3971 = vpop.f32.mrf.mxu0
  %v3972 = vadd.f32 %v3736, %v3971
  %v3973 = vpop.f32.mrf.mxu0
  %v3974 = vadd.f32 %v3736, %v3973
  %3975 = vmatmul.bf16.gmra.mxu0 %v3779
  %v3976 = vpop.f32.mrf.mxu0
  %v3977 = vadd.f32 %v3736, %v3976
  %v3978 = vpop.f32.mrf.mxu0
  %v3979 = vadd.f32 %v3736, %v3978
  %3980 = vmatmul.bf16.gmra.mxu0 %v3780
  %v3981 = vpop.f32.mrf.mxu0
  %v3982 = vadd.f32 %v3736, %v3981
  %v3983 = vpop.f32.mrf.mxu0
  %v3984 = vadd.f32 %v3736, %v3983
  %3985 = vmatmul.bf16.gmra.mxu0 %v3781
  %v3986 = vpop.f32.mrf.mxu0
  %v3987 = vadd.f32 %v3736, %v3986
  %v3988 = vpop.f32.mrf.mxu0
  %v3989 = vadd.f32 %v3736, %v3988
  %3990 = vmatmul.bf16.gmra.mxu0 %v3782
  %v3991 = vpop.f32.mrf.mxu0
  %v3992 = vadd.f32 %v3736, %v3991
  %v3993 = vpop.f32.mrf.mxu0
  %v3994 = vadd.f32 %v3736, %v3993
  %3995 = vmatmul.bf16.gmra.mxu0 %v3783
  %v3996 = vpop.f32.mrf.mxu0
  %v3997 = vadd.f32 %v3736, %v3996
  %v3998 = vpop.f32.mrf.mxu0
  %v3999 = vadd.f32 %v3736, %v3998
  %4000 = vdwg.mxu0
  %4001 = vmatpush.bf16.msra.mxu0 %v3917
  %4002 = vmatpush.bf16.msra.mxu0 %v3913
  %4003 = vmatpush.bf16.msra.mxu0 %v3909
  %4004 = vmatpush.bf16.msra.mxu0 %v3905
  %4005 = vmatpush.bf16.msra.mxu0 %v3901
  %4006 = vmatpush.bf16.msra.mxu0 %v3897
  %4007 = vmatpush.bf16.msra.mxu0 %v3893
  %4008 = vmatpush.bf16.msra.mxu0 %v3889
  %4009 = vmatmul.bf16.gmra.mxu0 %v3776
  %v4010 = vpop.f32.mrf.mxu0
  %v4011 = vadd.f32 %v3737, %v4010
  %v4012 = vpop.f32.mrf.mxu0
  %v4013 = vadd.f32 %v3737, %v4012
  %4014 = vmatmul.bf16.gmra.mxu0 %v3777
  %v4015 = vpop.f32.mrf.mxu0
  %v4016 = vadd.f32 %v3737, %v4015
  %v4017 = vpop.f32.mrf.mxu0
  %v4018 = vadd.f32 %v3737, %v4017
  %4019 = vmatmul.bf16.gmra.mxu0 %v3778
  %v4020 = vpop.f32.mrf.mxu0
  %v4021 = vadd.f32 %v3737, %v4020
  %v4022 = vpop.f32.mrf.mxu0
  %v4023 = vadd.f32 %v3737, %v4022
  %4024 = vmatmul.bf16.gmra.mxu0 %v3779
  %v4025 = vpop.f32.mrf.mxu0
  %v4026 = vadd.f32 %v3737, %v4025
  %v4027 = vpop.f32.mrf.mxu0
  %v4028 = vadd.f32 %v3737, %v4027
  %4029 = vmatmul.bf16.gmra.mxu0 %v3780
  %v4030 = vpop.f32.mrf.mxu0
  %v4031 = vadd.f32 %v3737, %v4030
  %v4032 = vpop.f32.mrf.mxu0
  %v4033 = vadd.f32 %v3737, %v4032
  %4034 = vmatmul.bf16.gmra.mxu0 %v3781
  %v4035 = vpop.f32.mrf.mxu0
  %v4036 = vadd.f32 %v3737, %v4035
  %v4037 = vpop.f32.mrf.mxu0
  %v4038 = vadd.f32 %v3737, %v4037
  %4039 = vmatmul.bf16.gmra.mxu0 %v3782
  %v4040 = vpop.f32.mrf.mxu0
  %v4041 = vadd.f32 %v3737, %v4040
  %v4042 = vpop.f32.mrf.mxu0
  %v4043 = vadd.f32 %v3737, %v4042
  %4044 = vmatmul.bf16.gmra.mxu0 %v3783
  %v4045 = vpop.f32.mrf.mxu0
  %v4046 = vadd.f32 %v3737, %v4045
  %v4047 = vpop.f32.mrf.mxu0
  %v4048 = vadd.f32 %v3737, %v4047
  %4049 = vdwg.mxu0
  %4050 = vmatpush.bf16.msra.mxu0 %v3918
  %4051 = vmatpush.bf16.msra.mxu0 %v3914
  %4052 = vmatpush.bf16.msra.mxu0 %v3910
  %4053 = vmatpush.bf16.msra.mxu0 %v3906
  %4054 = vmatpush.bf16.msra.mxu0 %v3902
  %4055 = vmatpush.bf16.msra.mxu0 %v3898
  %4056 = vmatpush.bf16.msra.mxu0 %v3894
  %4057 = vmatpush.bf16.msra.mxu0 %v3890
  %4058 = vmatmul.bf16.gmra.mxu0 %v3776
  %v4059 = vpop.f32.mrf.mxu0
  %v4060 = vadd.f32 %v3738, %v4059
  %v4061 = vpop.f32.mrf.mxu0
  %v4062 = vadd.f32 %v3738, %v4061
  %4063 = vmatmul.bf16.gmra.mxu0 %v3777
  %v4064 = vpop.f32.mrf.mxu0
  %v4065 = vadd.f32 %v3738, %v4064
  %v4066 = vpop.f32.mrf.mxu0
  %v4067 = vadd.f32 %v3738, %v4066
  %4068 = vmatmul.bf16.gmra.mxu0 %v3778
  %v4069 = vpop.f32.mrf.mxu0
  %v4070 = vadd.f32 %v3738, %v4069
  %v4071 = vpop.f32.mrf.mxu0
  %v4072 = vadd.f32 %v3738, %v4071
  %4073 = vmatmul.bf16.gmra.mxu0 %v3779
  %v4074 = vpop.f32.mrf.mxu0
  %v4075 = vadd.f32 %v3738, %v4074
  %v4076 = vpop.f32.mrf.mxu0
  %v4077 = vadd.f32 %v3738, %v4076
  %4078 = vmatmul.bf16.gmra.mxu0 %v3780
  %v4079 = vpop.f32.mrf.mxu0
  %v4080 = vadd.f32 %v3738, %v4079
  %v4081 = vpop.f32.mrf.mxu0
  %v4082 = vadd.f32 %v3738, %v4081
  %4083 = vmatmul.bf16.gmra.mxu0 %v3781
  %v4084 = vpop.f32.mrf.mxu0
  %v4085 = vadd.f32 %v3738, %v4084
  %v4086 = vpop.f32.mrf.mxu0
  %v4087 = vadd.f32 %v3738, %v4086
  %4088 = vmatmul.bf16.gmra.mxu0 %v3782
  %v4089 = vpop.f32.mrf.mxu0
  %v4090 = vadd.f32 %v3738, %v4089
  %v4091 = vpop.f32.mrf.mxu0
  %v4092 = vadd.f32 %v3738, %v4091
  %4093 = vmatmul.bf16.gmra.mxu0 %v3783
  %v4094 = vpop.f32.mrf.mxu0
  %v4095 = vadd.f32 %v3738, %v4094
  %v4096 = vpop.f32.mrf.mxu0
  %v4097 = vadd.f32 %v3738, %v4096
  %4098 = vdwg.mxu0
  %4099 = vmatpush.bf16.msra.mxu0 %v3919
  %4100 = vmatpush.bf16.msra.mxu0 %v3915
  %4101 = vmatpush.bf16.msra.mxu0 %v3911
  %4102 = vmatpush.bf16.msra.mxu0 %v3907
  %4103 = vmatpush.bf16.msra.mxu0 %v3903
  %4104 = vmatpush.bf16.msra.mxu0 %v3899
  %4105 = vmatpush.bf16.msra.mxu0 %v3895
  %4106 = vmatpush.bf16.msra.mxu0 %v3891
  %4107 = vmatmul.bf16.gmra.mxu0 %v3776
  %v4108 = vpop.f32.mrf.mxu0
  %v4109 = vadd.f32 %v3739, %v4108
  %v4110 = vpop.f32.mrf.mxu0
  %v4111 = vadd.f32 %v3739, %v4110
  %4112 = vmatmul.bf16.gmra.mxu0 %v3777
  %v4113 = vpop.f32.mrf.mxu0
  %v4114 = vadd.f32 %v3739, %v4113
  %v4115 = vpop.f32.mrf.mxu0
  %v4116 = vadd.f32 %v3739, %v4115
  %4117 = vmatmul.bf16.gmra.mxu0 %v3778
  %v4118 = vpop.f32.mrf.mxu0
  %v4119 = vadd.f32 %v3739, %v4118
  %v4120 = vpop.f32.mrf.mxu0
  %v4121 = vadd.f32 %v3739, %v4120
  %4122 = vmatmul.bf16.gmra.mxu0 %v3779
  %v4123 = vpop.f32.mrf.mxu0
  %v4124 = vadd.f32 %v3739, %v4123
  %v4125 = vpop.f32.mrf.mxu0
  %v4126 = vadd.f32 %v3739, %v4125
  %4127 = vmatmul.bf16.gmra.mxu0 %v3780
  %v4128 = vpop.f32.mrf.mxu0
  %v4129 = vadd.f32 %v3739, %v4128
  %v4130 = vpop.f32.mrf.mxu0
  %v4131 = vadd.f32 %v3739, %v4130
  %4132 = vmatmul.bf16.gmra.mxu0 %v3781
  %v4133 = vpop.f32.mrf.mxu0
  %v4134 = vadd.f32 %v3739, %v4133
  %v4135 = vpop.f32.mrf.mxu0
  %v4136 = vadd.f32 %v3739, %v4135
  %4137 = vmatmul.bf16.gmra.mxu0 %v3782
  %v4138 = vpop.f32.mrf.mxu0
  %v4139 = vadd.f32 %v3739, %v4138
  %v4140 = vpop.f32.mrf.mxu0
  %v4141 = vadd.f32 %v3739, %v4140
  %4142 = vmatmul.bf16.gmra.mxu0 %v3783
  %v4143 = vpop.f32.mrf.mxu0
  %v4144 = vadd.f32 %v3739, %v4143
  %v4145 = vpop.f32.mrf.mxu0
  %v4146 = vadd.f32 %v3739, %v4145
  %4147 = vdwg.mxu0
  %v4148 = vpack.c.bf16 %v4011, %v3962
  %v4149 = vpack.c.bf16 %v4109, %v4060
  %v4150 = vpack.c.bf16 %v4013, %v3964
  %v4151 = vpack.c.bf16 %v4111, %v4062
  %v4152 = vpack.c.bf16 %v4016, %v3967
  %v4153 = vpack.c.bf16 %v4114, %v4065
  %v4154 = vpack.c.bf16 %v4018, %v3969
  %v4155 = vpack.c.bf16 %v4116, %v4067
  %v4156 = vpack.c.bf16 %v4021, %v3972
  %v4157 = vpack.c.bf16 %v4119, %v4070
  %v4158 = vpack.c.bf16 %v4023, %v3974
  %v4159 = vpack.c.bf16 %v4121, %v4072
  %v4160 = vpack.c.bf16 %v4026, %v3977
  %v4161 = vpack.c.bf16 %v4124, %v4075
  %v4162 = vpack.c.bf16 %v4028, %v3979
  %v4163 = vpack.c.bf16 %v4126, %v4077
  %v4164 = vpack.c.bf16 %v4031, %v3982
  %v4165 = vpack.c.bf16 %v4129, %v4080
  %v4166 = vpack.c.bf16 %v4033, %v3984
  %v4167 = vpack.c.bf16 %v4131, %v4082
  %v4168 = vpack.c.bf16 %v4036, %v3987
  %v4169 = vpack.c.bf16 %v4134, %v4085
  %v4170 = vpack.c.bf16 %v4038, %v3989
  %v4171 = vpack.c.bf16 %v4136, %v4087
  %v4172 = vpack.c.bf16 %v4041, %v3992
  %v4173 = vpack.c.bf16 %v4139, %v4090
  %v4174 = vpack.c.bf16 %v4043, %v3994
  %v4175 = vpack.c.bf16 %v4141, %v4092
  %v4176 = vpack.c.bf16 %v4046, %v3997
  %v4177 = vpack.c.bf16 %v4144, %v4095
  %v4178 = vpack.c.bf16 %v4048, %v3999
  %v4179 = vpack.c.bf16 %v4146, %v4097
  %4180 = vst [vmem:[#allocation3] sm:$0xff] %v4148
  %4181 = vst [vmem:[#allocation3 + $0x8] sm:$0xff] %v4149
  %4182 = vst [vmem:[#allocation3 + $0x10] sm:$0xff] %v4150
  %4183 = vst [vmem:[#allocation3 + $0x18] sm:$0xff] %v4151
  %4184 = vst [vmem:[#allocation3 + $0x20] sm:$0xff] %v4152
  %4185 = vst [vmem:[#allocation3 + $0x28] sm:$0xff] %v4153
  %4186 = vst [vmem:[#allocation3 + $0x30] sm:$0xff] %v4154
  %4187 = vst [vmem:[#allocation3 + $0x38] sm:$0xff] %v4155
  %4188 = vst [vmem:[#allocation3 + $0x40] sm:$0xff] %v4156
  %4189 = vst [vmem:[#allocation3 + $0x48] sm:$0xff] %v4157
  %4190 = vst [vmem:[#allocation3 + $0x50] sm:$0xff] %v4158
  %4191 = vst [vmem:[#allocation3 + $0x58] sm:$0xff] %v4159
  %4192 = vst [vmem:[#allocation3 + $0x60] sm:$0xff] %v4160
  %4193 = vst [vmem:[#allocation3 + $0x68] sm:$0xff] %v4161
  %4194 = vst [vmem:[#allocation3 + $0x70] sm:$0xff] %v4162
  %4195 = vst [vmem:[#allocation3 + $0x78] sm:$0xff] %v4163
  %4196 = vst [vmem:[#allocation3 + $0x80] sm:$0xff] %v4164
  %4197 = vst [vmem:[#allocation3 + $0x88] sm:$0xff] %v4165
  %4198 = vst [vmem:[#allocation3 + $0x90] sm:$0xff] %v4166
  %4199 = vst [vmem:[#allocation3 + $0x98] sm:$0xff] %v4167
  %4200 = vst [vmem:[#allocation3 + $0xa0] sm:$0xff] %v4168
  %4201 = vst [vmem:[#allocation3 + $0xa8] sm:$0xff] %v4169
  %4202 = vst [vmem:[#allocation3 + $0xb0] sm:$0xff] %v4170
  %4203 = vst [vmem:[#allocation3 + $0xb8] sm:$0xff] %v4171
  %4204 = vst [vmem:[#allocation3 + $0xc0] sm:$0xff] %v4172
  %4205 = vst [vmem:[#allocation3 + $0xc8] sm:$0xff] %v4173
  %4206 = vst [vmem:[#allocation3 + $0xd0] sm:$0xff] %v4174
  %4207 = vst [vmem:[#allocation3 + $0xd8] sm:$0xff] %v4175
  %4208 = vst [vmem:[#allocation3 + $0xe0] sm:$0xff] %v4176
  %4209 = vst [vmem:[#allocation3 + $0xe8] sm:$0xff] %v4177
  %4210 = vst [vmem:[#allocation3 + $0xf0] sm:$0xff] %v4178
  %4211 = vst [vmem:[#allocation3 + $0xf8] sm:$0xff] %v4179
  %v4212 = vld [vmem:[%s5] sm:$0xff]
  %v4213 = vld [vmem:[%s5 + $0x8] sm:$0xff]
  %v4214 = vld [vmem:[%s5 + $0x10] sm:$0xff]
  %v4215 = vld [vmem:[%s5 + $0x18] sm:$0xff]
  %v4216 = vld [vmem:[%s5 + $0x20] sm:$0xff]
  %v4217 = vld [vmem:[%s5 + $0x28] sm:$0xff]
  %v4218 = vld [vmem:[%s5 + $0x30] sm:$0xff]
  %v4219 = vld [vmem:[%s5 + $0x38] sm:$0xff]
  %v4220 = vld [vmem:[%s5 + $0x40] sm:$0xff]
  %v4221 = vld [vmem:[%s5 + $0x48] sm:$0xff]
  %v4222 = vld [vmem:[%s5 + $0x50] sm:$0xff]
  %v4223 = vld [vmem:[%s5 + $0x58] sm:$0xff]
  %v4224 = vld [vmem:[%s5 + $0x60] sm:$0xff]
  %v4225 = vld [vmem:[%s5 + $0x68] sm:$0xff]
  %v4226 = vld [vmem:[%s5 + $0x70] sm:$0xff]
  %v4227 = vld [vmem:[%s5 + $0x78] sm:$0xff]
  %v4228 = vld [vmem:[%s5 + $0x80] sm:$0xff]
  %v4229 = vld [vmem:[%s5 + $0x88] sm:$0xff]
  %v4230 = vld [vmem:[%s5 + $0x90] sm:$0xff]
  %v4231 = vld [vmem:[%s5 + $0x98] sm:$0xff]
  %v4232 = vld [vmem:[%s5 + $0xa0] sm:$0xff]
  %v4233 = vld [vmem:[%s5 + $0xa8] sm:$0xff]
  %v4234 = vld [vmem:[%s5 + $0xb0] sm:$0xff]
  %v4235 = vld [vmem:[%s5 + $0xb8] sm:$0xff]
  %v4236 = vld [vmem:[%s5 + $0xc0] sm:$0xff]
  %v4237 = vld [vmem:[%s5 + $0xc8] sm:$0xff]
  %v4238 = vld [vmem:[%s5 + $0xd0] sm:$0xff]
  %v4239 = vld [vmem:[%s5 + $0xd8] sm:$0xff]
  %v4240 = vld [vmem:[%s5 + $0xe0] sm:$0xff]
  %v4241 = vld [vmem:[%s5 + $0xe8] sm:$0xff]
  %v4242 = vld [vmem:[%s5 + $0xf0] sm:$0xff]
  %v4243 = vld [vmem:[%s5 + $0xf8] sm:$0xff]
  %v4276 = vunpack.c.l.b16 %v4212
  %v4277 = vunpack.c.h.b16 %v4212
  %v4278 = vunpack.c.l.b16 %v4213
  %v4279 = vunpack.c.h.b16 %v4213
  %v4280 = vunpack.c.l.b16 %v4214
  %v4281 = vunpack.c.h.b16 %v4214
  %v4282 = vunpack.c.l.b16 %v4215
  %v4283 = vunpack.c.h.b16 %v4215
  %v4284 = vunpack.c.l.b16 %v4216
  %v4285 = vunpack.c.h.b16 %v4216
  %v4286 = vunpack.c.l.b16 %v4217
  %v4287 = vunpack.c.h.b16 %v4217
  %v4288 = vunpack.c.l.b16 %v4218
  %v4289 = vunpack.c.h.b16 %v4218
  %v4290 = vunpack.c.l.b16 %v4219
  %v4291 = vunpack.c.h.b16 %v4219
  %v4292 = vunpack.c.l.b16 %v4220
  %v4293 = vunpack.c.h.b16 %v4220
  %v4294 = vunpack.c.l.b16 %v4221
  %v4295 = vunpack.c.h.b16 %v4221
  %v4296 = vunpack.c.l.b16 %v4222
  %v4297 = vunpack.c.h.b16 %v4222
  %v4298 = vunpack.c.l.b16 %v4223
  %v4299 = vunpack.c.h.b16 %v4223
  %v4300 = vunpack.c.l.b16 %v4224
  %v4301 = vunpack.c.h.b16 %v4224
  %v4302 = vunpack.c.l.b16 %v4225
  %v4303 = vunpack.c.h.b16 %v4225
  %v4304 = vunpack.c.l.b16 %v4226
  %v4305 = vunpack.c.h.b16 %v4226
  %v4306 = vunpack.c.l.b16 %v4227
  %v4307 = vunpack.c.h.b16 %v4227
  %v4308 = vunpack.c.l.b16 %v4228
  %v4309 = vunpack.c.h.b16 %v4228
  %v4310 = vunpack.c.l.b16 %v4229
  %v4311 = vunpack.c.h.b16 %v4229
  %v4312 = vunpack.c.l.b16 %v4230
  %v4313 = vunpack.c.h.b16 %v4230
  %v4314 = vunpack.c.l.b16 %v4231
  %v4315 = vunpack.c.h.b16 %v4231
  %v4316 = vunpack.c.l.b16 %v4232
  %v4317 = vunpack.c.h.b16 %v4232
  %v4318 = vunpack.c.l.b16 %v4233
  %v4319 = vunpack.c.h.b16 %v4233
  %v4320 = vunpack.c.l.b16 %v4234
  %v4321 = vunpack.c.h.b16 %v4234
  %v4322 = vunpack.c.l.b16 %v4235
  %v4323 = vunpack.c.h.b16 %v4235
  %v4324 = vunpack.c.l.b16 %v4236
  %v4325 = vunpack.c.h.b16 %v4236
  %v4326 = vunpack.c.l.b16 %v4237
  %v4327 = vunpack.c.h.b16 %v4237
  %v4328 = vunpack.c.l.b16 %v4238
  %v4329 = vunpack.c.h.b16 %v4238
  %v4330 = vunpack.c.l.b16 %v4239
  %v4331 = vunpack.c.h.b16 %v4239
  %v4332 = vunpack.c.l.b16 %v4240
  %v4333 = vunpack.c.h.b16 %v4240
  %v4334 = vunpack.c.l.b16 %v4241
  %v4335 = vunpack.c.h.b16 %v4241
  %v4336 = vunpack.c.l.b16 %v4242
  %v4337 = vunpack.c.h.b16 %v4242
  %v4338 = vunpack.c.l.b16 %v4243
  %v4339 = vunpack.c.h.b16 %v4243
  %v4340 = vpack.c.b16 %v4280, %v4276
  %v4341 = vpack.c.b16 %v4281, %v4277
  %v4342 = vpack.c.b16 %v4282, %v4278
  %v4343 = vpack.c.b16 %v4283, %v4279
  %v4344 = vpack.c.b16 %v4288, %v4284
  %v4345 = vpack.c.b16 %v4289, %v4285
  %v4346 = vpack.c.b16 %v4290, %v4286
  %v4347 = vpack.c.b16 %v4291, %v4287
  %v4348 = vpack.c.b16 %v4296, %v4292
  %v4349 = vpack.c.b16 %v4297, %v4293
  %v4350 = vpack.c.b16 %v4298, %v4294
  %v4351 = vpack.c.b16 %v4299, %v4295
  %v4352 = vpack.c.b16 %v4304, %v4300
  %v4353 = vpack.c.b16 %v4305, %v4301
  %v4354 = vpack.c.b16 %v4306, %v4302
  %v4355 = vpack.c.b16 %v4307, %v4303
  %v4356 = vpack.c.b16 %v4312, %v4308
  %v4357 = vpack.c.b16 %v4313, %v4309
  %v4358 = vpack.c.b16 %v4314, %v4310
  %v4359 = vpack.c.b16 %v4315, %v4311
  %v4360 = vpack.c.b16 %v4320, %v4316
  %v4361 = vpack.c.b16 %v4321, %v4317
  %v4362 = vpack.c.b16 %v4322, %v4318
  %v4363 = vpack.c.b16 %v4323, %v4319
  %v4364 = vpack.c.b16 %v4328, %v4324
  %v4365 = vpack.c.b16 %v4329, %v4325
  %v4366 = vpack.c.b16 %v4330, %v4326
  %v4367 = vpack.c.b16 %v4331, %v4327
  %v4368 = vpack.c.b16 %v4336, %v4332
  %v4369 = vpack.c.b16 %v4337, %v4333
  %v4370 = vpack.c.b16 %v4338, %v4334
  %v4371 = vpack.c.b16 %v4339, %v4335
  %4404 = vmatpush.bf16.msra.mxu0 %v4368
  %4405 = vmatpush.bf16.msra.mxu0 %v4364
  %4406 = vmatpush.bf16.msra.mxu0 %v4360
  %4407 = vmatpush.bf16.msra.mxu0 %v4356
  %4408 = vmatpush.bf16.msra.mxu0 %v4352
  %4409 = vmatpush.bf16.msra.mxu0 %v4348
  %4410 = vmatpush.bf16.msra.mxu0 %v4344
  %4411 = vmatpush.bf16.msra.mxu0 %v4340
  %4412 = vmatmul.bf16.gmra.mxu0 0
  %v4413 = vpop.f32.mrf.mxu0
  %v4414 = vadd.f32 0.0, %v4413
  %v4415 = vpop.f32.mrf.mxu0
  %v4416 = vadd.f32 0.0, %v4415
  %4417 = vdwg.mxu0
  %4418 = vmatpush.bf16.msra.mxu0 %v4369
  %4419 = vmatpush.bf16.msra.mxu0 %v4365
  %4420 = vmatpush.bf16.msra.mxu0 %v4361
  %4421 = vmatpush.bf16.msra.mxu0 %v4357
  %4422 = vmatpush.bf16.msra.mxu0 %v4353
  %4423 = vmatpush.bf16.msra.mxu0 %v4349
  %4424 = vmatpush.bf16.msra.mxu0 %v4345
  %4425 = vmatpush.bf16.msra.mxu0 %v4341
  %4426 = vmatmul.bf16.gmra.mxu0 0
  %v4427 = vpop.f32.mrf.mxu0
  %v4428 = vadd.f32 0.0, %v4427
  %v4429 = vpop.f32.mrf.mxu0
  %v4430 = vadd.f32 0.0, %v4429
  %4431 = vdwg.mxu0
  %4432 = vmatpush.bf16.msra.mxu0 %v4370
  %4433 = vmatpush.bf16.msra.mxu0 %v4366
  %4434 = vmatpush.bf16.msra.mxu0 %v4362
  %4435 = vmatpush.bf16.msra.mxu0 %v4358
  %4436 = vmatpush.bf16.msra.mxu0 %v4354
  %4437 = vmatpush.bf16.msra.mxu0 %v4350
  %4438 = vmatpush.bf16.msra.mxu0 %v4346
  %4439 = vmatpush.bf16.msra.mxu0 %v4342
  %4440 = vmatmul.bf16.gmra.mxu0 0
  %v4441 = vpop.f32.mrf.mxu0
  %v4442 = vadd.f32 0.0, %v4441
  %v4443 = vpop.f32.mrf.mxu0
  %v4444 = vadd.f32 0.0, %v4443
  %4445 = vdwg.mxu0
  %4446 = vmatpush.bf16.msra.mxu0 %v4371
  %4447 = vmatpush.bf16.msra.mxu0 %v4367
  %4448 = vmatpush.bf16.msra.mxu0 %v4363
  %4449 = vmatpush.bf16.msra.mxu0 %v4359
  %4450 = vmatpush.bf16.msra.mxu0 %v4355
  %4451 = vmatpush.bf16.msra.mxu0 %v4351
  %4452 = vmatpush.bf16.msra.mxu0 %v4347
  %4453 = vmatpush.bf16.msra.mxu0 %v4343
  %4454 = vmatmul.bf16.gmra.mxu0 0
  %v4455 = vpop.f32.mrf.mxu0
  %v4456 = vadd.f32 0.0, %v4455
  %v4457 = vpop.f32.mrf.mxu0
  %v4458 = vadd.f32 0.0, %v4457
  %4459 = vdwg.mxu0
  %v4460 = vld [vmem:[%s679] sm:$0xff]
  %v4461 = vld [vmem:[%s679 + $0x8] sm:$0xff]
  %v4462 = vld [vmem:[%s679 + $0x10] sm:$0xff]
  %v4463 = vld [vmem:[%s679 + $0x18] sm:$0xff]
  %v4464 = vunpack.c.l.bf16 %v4460
  %v4465 = vunpack.c.h.bf16 %v4460
  %v4466 = vunpack.c.l.bf16 %v4461
  %v4467 = vunpack.c.h.bf16 %v4461
  %v4468 = vunpack.c.l.bf16 %v4462
  %v4469 = vunpack.c.h.bf16 %v4462
  %v4470 = vunpack.c.l.bf16 %v4463
  %v4471 = vunpack.c.h.bf16 %v4463
  %v4472 = vadd.f32 %v4464, %v4414
  %v4473 = vadd.f32 %v4465, %v4428
  %v4474 = vadd.f32 %v4466, %v4442
  %v4475 = vadd.f32 %v4467, %v4456
  %v4476 = vadd.f32 %v4468, %v4416
  %v4477 = vadd.f32 %v4469, %v4430
  %v4478 = vadd.f32 %v4470, %v4444
  %v4479 = vadd.f32 %v4471, %v4458
  %v4480 = vxor.u32 %v4472, 2147483648
  %v4481 = vxor.u32 %v4476, 2147483648
  %v4482 = vmul.f32 %v4480, 1.442695
  %v4483 = vpow.pop %v4482
  %v4484 = vmul.f32 %v4481, 1.442695
  %v4485 = vpow.pop %v4484
  %v4486 = vadd.f32 %v4483, 1.0
  %v4487 = vadd.f32 %v4485, 1.0
  %v4488 = vrcp.pop %v4486
  %v4489 = vmul.f32 %v4486, %v4488
  %v4490 = vsub.f32 1.0, %v4489
  %v4491 = vmul.f32 %v4488, %v4490
  %v4492 = vadd.f32 %v4488, %v4491
  %vm4493 = vweird.f32 %v4486
  %vm4494 = vweird.f32 %v4488
  %vm4495 = vmor %vm4493, %vm4494
  %v4496 = vsel %vm4495, %v4488, %v4492
  %v4497 = vand.u32 2147483647, %v4486
  %vm4498 = vcmp.eq.f32.partialorder %v4497, 8.507059e+37
  %v4499 = vand.u32 %v4486, 2147483648
  %v4500 = vor.u32 1.1754944e-38, %v4499
  %v4501 = vsel %vm4498, %v4500, %v4496
  %v4502 = vmul.f32 1.0, %v4501
  %v4503 = vrcp.pop %v4487
  %v4504 = vmul.f32 %v4487, %v4503
  %v4505 = vsub.f32 1.0, %v4504
  %v4506 = vmul.f32 %v4503, %v4505
  %v4507 = vadd.f32 %v4503, %v4506
  %vm4508 = vweird.f32 %v4487
  %vm4509 = vweird.f32 %v4503
  %vm4510 = vmor %vm4508, %vm4509
  %v4511 = vsel %vm4510, %v4503, %v4507
  %v4512 = vand.u32 2147483647, %v4487
  %vm4513 = vcmp.eq.f32.partialorder %v4512, 8.507059e+37
  %v4514 = vand.u32 %v4487, 2147483648
  %v4515 = vor.u32 1.1754944e-38, %v4514
  %v4516 = vsel %vm4513, %v4515, %v4511
  %v4517 = vmul.f32 1.0, %v4516
  %v4518 = vxor.u32 %v4473, 2147483648
  %v4519 = vxor.u32 %v4477, 2147483648
  %v4520 = vmul.f32 %v4518, 1.442695
  %v4521 = vpow.pop %v4520
  %v4522 = vmul.f32 %v4519, 1.442695
  %v4523 = vpow.pop %v4522
  %v4524 = vadd.f32 %v4521, 1.0
  %v4525 = vadd.f32 %v4523, 1.0
  %v4526 = vrcp.pop %v4524
  %v4527 = vmul.f32 %v4524, %v4526
  %v4528 = vsub.f32 1.0, %v4527
  %v4529 = vmul.f32 %v4526, %v4528
  %v4530 = vadd.f32 %v4526, %v4529
  %vm4531 = vweird.f32 %v4524
  %vm4532 = vweird.f32 %v4526
  %vm4533 = vmor %vm4531, %vm4532
  %v4534 = vsel %vm4533, %v4526, %v4530
  %v4535 = vand.u32 2147483647, %v4524
  %vm4536 = vcmp.eq.f32.partialorder %v4535, 8.507059e+37
  %v4537 = vand.u32 %v4524, 2147483648
  %v4538 = vor.u32 1.1754944e-38, %v4537
  %v4539 = vsel %vm4536, %v4538, %v4534
  %v4540 = vmul.f32 1.0, %v4539
  %v4541 = vrcp.pop %v4525
  %v4542 = vmul.f32 %v4525, %v4541
  %v4543 = vsub.f32 1.0, %v4542
  %v4544 = vmul.f32 %v4541, %v4543
  %v4545 = vadd.f32 %v4541, %v4544
  %vm4546 = vweird.f32 %v4525
  %vm4547 = vweird.f32 %v4541
  %vm4548 = vmor %vm4546, %vm4547
  %v4549 = vsel %vm4548, %v4541, %v4545
  %v4550 = vand.u32 2147483647, %v4525
  %vm4551 = vcmp.eq.f32.partialorder %v4550, 8.507059e+37
  %v4552 = vand.u32 %v4525, 2147483648
  %v4553 = vor.u32 1.1754944e-38, %v4552
  %v4554 = vsel %vm4551, %v4553, %v4549
  %v4555 = vmul.f32 1.0, %v4554
  %v4556 = vtanh.pop %v4474
  %v4557 = vtanh.pop %v4478
  %v4558 = vxor.u32 %v4475, 2147483648
  %v4559 = vxor.u32 %v4479, 2147483648
  %v4560 = vmul.f32 %v4558, 1.442695
  %v4561 = vpow.pop %v4560
  %v4562 = vmul.f32 %v4559, 1.442695
  %v4563 = vpow.pop %v4562
  %v4564 = vadd.f32 %v4561, 1.0
  %v4565 = vadd.f32 %v4563, 1.0
  %v4566 = vrcp.pop %v4564
  %v4567 = vmul.f32 %v4564, %v4566
  %v4568 = vsub.f32 1.0, %v4567
  %v4569 = vmul.f32 %v4566, %v4568
  %v4570 = vadd.f32 %v4566, %v4569
  %vm4571 = vweird.f32 %v4564
  %vm4572 = vweird.f32 %v4566
  %vm4573 = vmor %vm4571, %vm4572
  %v4574 = vsel %vm4573, %v4566, %v4570
  %v4575 = vand.u32 2147483647, %v4564
  %vm4576 = vcmp.eq.f32.partialorder %v4575, 8.507059e+37
  %v4577 = vand.u32 %v4564, 2147483648
  %v4578 = vor.u32 1.1754944e-38, %v4577
  %v4579 = vsel %vm4576, %v4578, %v4574
  %v4580 = vmul.f32 1.0, %v4579
  %v4581 = vrcp.pop %v4565
  %v4582 = vmul.f32 %v4565, %v4581
  %v4583 = vsub.f32 1.0, %v4582
  %v4584 = vmul.f32 %v4581, %v4583
  %v4585 = vadd.f32 %v4581, %v4584
  %vm4586 = vweird.f32 %v4565
  %vm4587 = vweird.f32 %v4581
  %vm4588 = vmor %vm4586, %vm4587
  %v4589 = vsel %vm4588, %v4581, %v4585
  %v4590 = vand.u32 2147483647, %v4565
  %vm4591 = vcmp.eq.f32.partialorder %v4590, 8.507059e+37
  %v4592 = vand.u32 %v4565, 2147483648
  %v4593 = vor.u32 1.1754944e-38, %v4592
  %v4594 = vsel %vm4591, %v4593, %v4589
  %v4595 = vmul.f32 1.0, %v4594
  %v4596 = vmul.f32 %v4540, 0.0
  %v4597 = vmul.f32 %v4555, 0.0
  %v4598 = vmul.f32 %v4502, %v4556
  %v4599 = vmul.f32 %v4517, %v4557
  %v4600 = vadd.f32 %v4596, %v4598
  %v4601 = vadd.f32 %v4597, %v4599
  %v4602 = vtanh.pop %v4600
  %v4603 = vtanh.pop %v4601
  %v4604 = vmul.f32 %v4580, %v4602
  %v4605 = vmul.f32 %v4595, %v4603
  %v4606 = vpack.c.bf16 %v4604, %v4604
  %v4607 = vpack.c.bf16 %v4605, %v4605
  %4608 = vst [vmem:[#allocation2] sm:$0xf] %v4606
  %4609 = vst [vmem:[#allocation2 + $0x4] sm:$0xf] %v4607
  %v4610 = vld [vmem:[%s5] sm:$0xff]
  %v4611 = vld [vmem:[%s5 + $0x8] sm:$0xff]
  %v4612 = vld [vmem:[%s5 + $0x10] sm:$0xff]
  %v4613 = vld [vmem:[%s5 + $0x18] sm:$0xff]
  %v4614 = vld [vmem:[%s5 + $0x20] sm:$0xff]
  %v4615 = vld [vmem:[%s5 + $0x28] sm:$0xff]
  %v4616 = vld [vmem:[%s5 + $0x30] sm:$0xff]
  %v4617 = vld [vmem:[%s5 + $0x38] sm:$0xff]
  %v4618 = vld [vmem:[%s5 + $0x40] sm:$0xff]
  %v4619 = vld [vmem:[%s5 + $0x48] sm:$0xff]
  %v4620 = vld [vmem:[%s5 + $0x50] sm:$0xff]
  %v4621 = vld [vmem:[%s5 + $0x58] sm:$0xff]
  %v4622 = vld [vmem:[%s5 + $0x60] sm:$0xff]
  %v4623 = vld [vmem:[%s5 + $0x68] sm:$0xff]
  %v4624 = vld [vmem:[%s5 + $0x70] sm:$0xff]
  %v4625 = vld [vmem:[%s5 + $0x78] sm:$0xff]
  %v4626 = vld [vmem:[%s5 + $0x80] sm:$0xff]
  %v4627 = vld [vmem:[%s5 + $0x88] sm:$0xff]
  %v4628 = vld [vmem:[%s5 + $0x90] sm:$0xff]
  %v4629 = vld [vmem:[%s5 + $0x98] sm:$0xff]
  %v4630 = vld [vmem:[%s5 + $0xa0] sm:$0xff]
  %v4631 = vld [vmem:[%s5 + $0xa8] sm:$0xff]
  %v4632 = vld [vmem:[%s5 + $0xb0] sm:$0xff]
  %v4633 = vld [vmem:[%s5 + $0xb8] sm:$0xff]
  %v4634 = vld [vmem:[%s5 + $0xc0] sm:$0xff]
  %v4635 = vld [vmem:[%s5 + $0xc8] sm:$0xff]
  %v4636 = vld [vmem:[%s5 + $0xd0] sm:$0xff]
  %v4637 = vld [vmem:[%s5 + $0xd8] sm:$0xff]
  %v4638 = vld [vmem:[%s5 + $0xe0] sm:$0xff]
  %v4639 = vld [vmem:[%s5 + $0xe8] sm:$0xff]
  %v4640 = vld [vmem:[%s5 + $0xf0] sm:$0xff]
  %v4641 = vld [vmem:[%s5 + $0xf8] sm:$0xff]
  %v4644 = vunpack.c.l.b16 %v4606
  %v4645 = vunpack.c.l.b16 %v4607
  %v4646 = vpack.c.b16 %v4645, %v4644
  %v4680 = vunpack.c.l.b16 %v4610
  %v4681 = vunpack.c.h.b16 %v4610
  %v4682 = vunpack.c.l.b16 %v4611
  %v4683 = vunpack.c.h.b16 %v4611
  %v4684 = vunpack.c.l.b16 %v4612
  %v4685 = vunpack.c.h.b16 %v4612
  %v4686 = vunpack.c.l.b16 %v4613
  %v4687 = vunpack.c.h.b16 %v4613
  %v4688 = vunpack.c.l.b16 %v4614
  %v4689 = vunpack.c.h.b16 %v4614
  %v4690 = vunpack.c.l.b16 %v4615
  %v4691 = vunpack.c.h.b16 %v4615
  %v4692 = vunpack.c.l.b16 %v4616
  %v4693 = vunpack.c.h.b16 %v4616
  %v4694 = vunpack.c.l.b16 %v4617
  %v4695 = vunpack.c.h.b16 %v4617
  %v4696 = vunpack.c.l.b16 %v4618
  %v4697 = vunpack.c.h.b16 %v4618
  %v4698 = vunpack.c.l.b16 %v4619
  %v4699 = vunpack.c.h.b16 %v4619
  %v4700 = vunpack.c.l.b16 %v4620
  %v4701 = vunpack.c.h.b16 %v4620
  %v4702 = vunpack.c.l.b16 %v4621
  %v4703 = vunpack.c.h.b16 %v4621
  %v4704 = vunpack.c.l.b16 %v4622
  %v4705 = vunpack.c.h.b16 %v4622
  %v4706 = vunpack.c.l.b16 %v4623
  %v4707 = vunpack.c.h.b16 %v4623
  %v4708 = vunpack.c.l.b16 %v4624
  %v4709 = vunpack.c.h.b16 %v4624
  %v4710 = vunpack.c.l.b16 %v4625
  %v4711 = vunpack.c.h.b16 %v4625
  %v4712 = vunpack.c.l.b16 %v4626
  %v4713 = vunpack.c.h.b16 %v4626
  %v4714 = vunpack.c.l.b16 %v4627
  %v4715 = vunpack.c.h.b16 %v4627
  %v4716 = vunpack.c.l.b16 %v4628
  %v4717 = vunpack.c.h.b16 %v4628
  %v4718 = vunpack.c.l.b16 %v4629
  %v4719 = vunpack.c.h.b16 %v4629
  %v4720 = vunpack.c.l.b16 %v4630
  %v4721 = vunpack.c.h.b16 %v4630
  %v4722 = vunpack.c.l.b16 %v4631
  %v4723 = vunpack.c.h.b16 %v4631
  %v4724 = vunpack.c.l.b16 %v4632
  %v4725 = vunpack.c.h.b16 %v4632
  %v4726 = vunpack.c.l.b16 %v4633
  %v4727 = vunpack.c.h.b16 %v4633
  %v4728 = vunpack.c.l.b16 %v4634
  %v4729 = vunpack.c.h.b16 %v4634
  %v4730 = vunpack.c.l.b16 %v4635
  %v4731 = vunpack.c.h.b16 %v4635
  %v4732 = vunpack.c.l.b16 %v4636
  %v4733 = vunpack.c.h.b16 %v4636
  %v4734 = vunpack.c.l.b16 %v4637
  %v4735 = vunpack.c.h.b16 %v4637
  %v4736 = vunpack.c.l.b16 %v4638
  %v4737 = vunpack.c.h.b16 %v4638
  %v4738 = vunpack.c.l.b16 %v4639
  %v4739 = vunpack.c.h.b16 %v4639
  %v4740 = vunpack.c.l.b16 %v4640
  %v4741 = vunpack.c.h.b16 %v4640
  %v4742 = vunpack.c.l.b16 %v4641
  %v4743 = vunpack.c.h.b16 %v4641
  %v4744 = vpack.c.b16 %v4684, %v4680
  %v4745 = vpack.c.b16 %v4685, %v4681
  %v4746 = vpack.c.b16 %v4686, %v4682
  %v4747 = vpack.c.b16 %v4687, %v4683
  %v4748 = vpack.c.b16 %v4692, %v4688
  %v4749 = vpack.c.b16 %v4693, %v4689
  %v4750 = vpack.c.b16 %v4694, %v4690
  %v4751 = vpack.c.b16 %v4695, %v4691
  %v4752 = vpack.c.b16 %v4700, %v4696
  %v4753 = vpack.c.b16 %v4701, %v4697
  %v4754 = vpack.c.b16 %v4702, %v4698
  %v4755 = vpack.c.b16 %v4703, %v4699
  %v4756 = vpack.c.b16 %v4708, %v4704
  %v4757 = vpack.c.b16 %v4709, %v4705
  %v4758 = vpack.c.b16 %v4710, %v4706
  %v4759 = vpack.c.b16 %v4711, %v4707
  %v4760 = vpack.c.b16 %v4716, %v4712
  %v4761 = vpack.c.b16 %v4717, %v4713
  %v4762 = vpack.c.b16 %v4718, %v4714
  %v4763 = vpack.c.b16 %v4719, %v4715
  %v4764 = vpack.c.b16 %v4724, %v4720
  %v4765 = vpack.c.b16 %v4725, %v4721
  %v4766 = vpack.c.b16 %v4726, %v4722
  %v4767 = vpack.c.b16 %v4727, %v4723
  %v4768 = vpack.c.b16 %v4732, %v4728
  %v4769 = vpack.c.b16 %v4733, %v4729
  %v4770 = vpack.c.b16 %v4734, %v4730
  %v4771 = vpack.c.b16 %v4735, %v4731
  %v4772 = vpack.c.b16 %v4740, %v4736
  %v4773 = vpack.c.b16 %v4741, %v4737
  %v4774 = vpack.c.b16 %v4742, %v4738
  %v4775 = vpack.c.b16 %v4743, %v4739
  %4808 = vmatpush.bf16.msra.mxu0 %v4772
  %4809 = vmatpush.bf16.msra.mxu0 %v4768
  %4810 = vmatpush.bf16.msra.mxu0 %v4764
  %4811 = vmatpush.bf16.msra.mxu0 %v4760
  %4812 = vmatpush.bf16.msra.mxu0 %v4756
  %4813 = vmatpush.bf16.msra.mxu0 %v4752
  %4814 = vmatpush.bf16.msra.mxu0 %v4748
  %4815 = vmatpush.bf16.msra.mxu0 %v4744
  %4816 = vmatmul.bf16.gmra.mxu0 %v4646
  %v4817 = vpop.f32.mrf.mxu0
  %v4818 = vadd.f32 0.0, %v4817
  %v4819 = vpop.f32.mrf.mxu0
  %v4820 = vadd.f32 0.0, %v4819
  %4821 = vdwg.mxu0
  %4822 = vmatpush.bf16.msra.mxu0 %v4773
  %4823 = vmatpush.bf16.msra.mxu0 %v4769
  %4824 = vmatpush.bf16.msra.mxu0 %v4765
  %4825 = vmatpush.bf16.msra.mxu0 %v4761
  %4826 = vmatpush.bf16.msra.mxu0 %v4757
  %4827 = vmatpush.bf16.msra.mxu0 %v4753
  %4828 = vmatpush.bf16.msra.mxu0 %v4749
  %4829 = vmatpush.bf16.msra.mxu0 %v4745
  %4830 = vmatmul.bf16.gmra.mxu0 %v4646
  %v4831 = vpop.f32.mrf.mxu0
  %v4832 = vadd.f32 0.0, %v4831
  %v4833 = vpop.f32.mrf.mxu0
  %v4834 = vadd.f32 0.0, %v4833
  %4835 = vdwg.mxu0
  %4836 = vmatpush.bf16.msra.mxu0 %v4774
  %4837 = vmatpush.bf16.msra.mxu0 %v4770
  %4838 = vmatpush.bf16.msra.mxu0 %v4766
  %4839 = vmatpush.bf16.msra.mxu0 %v4762
  %4840 = vmatpush.bf16.msra.mxu0 %v4758
  %4841 = vmatpush.bf16.msra.mxu0 %v4754
  %4842 = vmatpush.bf16.msra.mxu0 %v4750
  %4843 = vmatpush.bf16.msra.mxu0 %v4746
  %4844 = vmatmul.bf16.gmra.mxu0 %v4646
  %v4845 = vpop.f32.mrf.mxu0
  %v4846 = vadd.f32 0.0, %v4845
  %v4847 = vpop.f32.mrf.mxu0
  %v4848 = vadd.f32 0.0, %v4847
  %4849 = vdwg.mxu0
  %4850 = vmatpush.bf16.msra.mxu0 %v4775
  %4851 = vmatpush.bf16.msra.mxu0 %v4771
  %4852 = vmatpush.bf16.msra.mxu0 %v4767
  %4853 = vmatpush.bf16.msra.mxu0 %v4763
  %4854 = vmatpush.bf16.msra.mxu0 %v4759
  %4855 = vmatpush.bf16.msra.mxu0 %v4755
  %4856 = vmatpush.bf16.msra.mxu0 %v4751
  %4857 = vmatpush.bf16.msra.mxu0 %v4747
  %4858 = vmatmul.bf16.gmra.mxu0 %v4646
  %v4859 = vpop.f32.mrf.mxu0
  %v4860 = vadd.f32 0.0, %v4859
  %v4861 = vpop.f32.mrf.mxu0
  %v4862 = vadd.f32 0.0, %v4861
  %4863 = vdwg.mxu0
  %v4864 = vld [vmem:[%s1086] sm:$0xff]
  %v4865 = vld [vmem:[%s1086 + $0x8] sm:$0xff]
  %v4866 = vld [vmem:[%s1086 + $0x10] sm:$0xff]
  %v4867 = vld [vmem:[%s1086 + $0x18] sm:$0xff]
  %v4868 = vunpack.c.l.bf16 %v4864
  %v4869 = vunpack.c.h.bf16 %v4864
  %v4870 = vunpack.c.l.bf16 %v4865
  %v4871 = vunpack.c.h.bf16 %v4865
  %v4872 = vunpack.c.l.bf16 %v4866
  %v4873 = vunpack.c.h.bf16 %v4866
  %v4874 = vunpack.c.l.bf16 %v4867
  %v4875 = vunpack.c.h.bf16 %v4867
  %v4876 = vadd.f32 %v4868, %v4818
  %v4877 = vadd.f32 %v4869, %v4832
  %v4878 = vadd.f32 %v4870, %v4846
  %v4879 = vadd.f32 %v4871, %v4860
  %v4880 = vadd.f32 %v4872, %v4820
  %v4881 = vadd.f32 %v4873, %v4834
  %v4882 = vadd.f32 %v4874, %v4848
  %v4883 = vadd.f32 %v4875, %v4862
  %v4884 = vxor.u32 %v4876, 2147483648
  %v4885 = vxor.u32 %v4880, 2147483648
  %v4886 = vmul.f32 %v4884, 1.442695
  %v4887 = vpow.pop %v4886
  %v4888 = vmul.f32 %v4885, 1.442695
  %v4889 = vpow.pop %v4888
  %v4890 = vadd.f32 %v4887, 1.0
  %v4891 = vadd.f32 %v4889, 1.0
  %v4892 = vrcp.pop %v4890
  %v4893 = vmul.f32 %v4890, %v4892
  %v4894 = vsub.f32 1.0, %v4893
  %v4895 = vmul.f32 %v4892, %v4894
  %v4896 = vadd.f32 %v4892, %v4895
  %vm4897 = vweird.f32 %v4890
  %vm4898 = vweird.f32 %v4892
  %vm4899 = vmor %vm4897, %vm4898
  %v4900 = vsel %vm4899, %v4892, %v4896
  %v4901 = vand.u32 2147483647, %v4890
  %vm4902 = vcmp.eq.f32.partialorder %v4901, 8.507059e+37
  %v4903 = vand.u32 %v4890, 2147483648
  %v4904 = vor.u32 1.1754944e-38, %v4903
  %v4905 = vsel %vm4902, %v4904, %v4900
  %v4906 = vmul.f32 1.0, %v4905
  %v4907 = vrcp.pop %v4891
  %v4908 = vmul.f32 %v4891, %v4907
  %v4909 = vsub.f32 1.0, %v4908
  %v4910 = vmul.f32 %v4907, %v4909
  %v4911 = vadd.f32 %v4907, %v4910
  %vm4912 = vweird.f32 %v4891
  %vm4913 = vweird.f32 %v4907
  %vm4914 = vmor %vm4912, %vm4913
  %v4915 = vsel %vm4914, %v4907, %v4911
  %v4916 = vand.u32 2147483647, %v4891
  %vm4917 = vcmp.eq.f32.partialorder %v4916, 8.507059e+37
  %v4918 = vand.u32 %v4891, 2147483648
  %v4919 = vor.u32 1.1754944e-38, %v4918
  %v4920 = vsel %vm4917, %v4919, %v4915
  %v4921 = vmul.f32 1.0, %v4920
  %v4922 = vxor.u32 %v4877, 2147483648
  %v4923 = vxor.u32 %v4881, 2147483648
  %v4924 = vmul.f32 %v4922, 1.442695
  %v4925 = vpow.pop %v4924
  %v4926 = vmul.f32 %v4923, 1.442695
  %v4927 = vpow.pop %v4926
  %v4928 = vadd.f32 %v4925, 1.0
  %v4929 = vadd.f32 %v4927, 1.0
  %v4930 = vrcp.pop %v4928
  %v4931 = vmul.f32 %v4928, %v4930
  %v4932 = vsub.f32 1.0, %v4931
  %v4933 = vmul.f32 %v4930, %v4932
  %v4934 = vadd.f32 %v4930, %v4933
  %vm4935 = vweird.f32 %v4928
  %vm4936 = vweird.f32 %v4930
  %vm4937 = vmor %vm4935, %vm4936
  %v4938 = vsel %vm4937, %v4930, %v4934
  %v4939 = vand.u32 2147483647, %v4928
  %vm4940 = vcmp.eq.f32.partialorder %v4939, 8.507059e+37
  %v4941 = vand.u32 %v4928, 2147483648
  %v4942 = vor.u32 1.1754944e-38, %v4941
  %v4943 = vsel %vm4940, %v4942, %v4938
  %v4944 = vmul.f32 1.0, %v4943
  %v4945 = vrcp.pop %v4929
  %v4946 = vmul.f32 %v4929, %v4945
  %v4947 = vsub.f32 1.0, %v4946
  %v4948 = vmul.f32 %v4945, %v4947
  %v4949 = vadd.f32 %v4945, %v4948
  %vm4950 = vweird.f32 %v4929
  %vm4951 = vweird.f32 %v4945
  %vm4952 = vmor %vm4950, %vm4951
  %v4953 = vsel %vm4952, %v4945, %v4949
  %v4954 = vand.u32 2147483647, %v4929
  %vm4955 = vcmp.eq.f32.partialorder %v4954, 8.507059e+37
  %v4956 = vand.u32 %v4929, 2147483648
  %v4957 = vor.u32 1.1754944e-38, %v4956
  %v4958 = vsel %vm4955, %v4957, %v4953
  %v4959 = vmul.f32 1.0, %v4958
  %v4960 = vtanh.pop %v4878
  %v4961 = vtanh.pop %v4882
  %v4962 = vxor.u32 %v4879, 2147483648
  %v4963 = vxor.u32 %v4883, 2147483648
  %v4964 = vmul.f32 %v4962, 1.442695
  %v4965 = vpow.pop %v4964
  %v4966 = vmul.f32 %v4963, 1.442695
  %v4967 = vpow.pop %v4966
  %v4968 = vadd.f32 %v4965, 1.0
  %v4969 = vadd.f32 %v4967, 1.0
  %v4970 = vrcp.pop %v4968
  %v4971 = vmul.f32 %v4968, %v4970
  %v4972 = vsub.f32 1.0, %v4971
  %v4973 = vmul.f32 %v4970, %v4972
  %v4974 = vadd.f32 %v4970, %v4973
  %vm4975 = vweird.f32 %v4968
  %vm4976 = vweird.f32 %v4970
  %vm4977 = vmor %vm4975, %vm4976
  %v4978 = vsel %vm4977, %v4970, %v4974
  %v4979 = vand.u32 2147483647, %v4968
  %vm4980 = vcmp.eq.f32.partialorder %v4979, 8.507059e+37
  %v4981 = vand.u32 %v4968, 2147483648
  %v4982 = vor.u32 1.1754944e-38, %v4981
  %v4983 = vsel %vm4980, %v4982, %v4978
  %v4984 = vmul.f32 1.0, %v4983
  %v4985 = vrcp.pop %v4969
  %v4986 = vmul.f32 %v4969, %v4985
  %v4987 = vsub.f32 1.0, %v4986
  %v4988 = vmul.f32 %v4985, %v4987
  %v4989 = vadd.f32 %v4985, %v4988
  %vm4990 = vweird.f32 %v4969
  %vm4991 = vweird.f32 %v4985
  %vm4992 = vmor %vm4990, %vm4991
  %v4993 = vsel %vm4992, %v4985, %v4989
  %v4994 = vand.u32 2147483647, %v4969
  %vm4995 = vcmp.eq.f32.partialorder %v4994, 8.507059e+37
  %v4996 = vand.u32 %v4969, 2147483648
  %v4997 = vor.u32 1.1754944e-38, %v4996
  %v4998 = vsel %vm4995, %v4997, %v4993
  %v4999 = vmul.f32 1.0, %v4998
  %v5000 = vmul.f32 %v4944, %v4600
  %v5001 = vmul.f32 %v4959, %v4601
  %v5002 = vmul.f32 %v4906, %v4960
  %v5003 = vmul.f32 %v4921, %v4961
  %v5004 = vadd.f32 %v5000, %v5002
  %v5005 = vadd.f32 %v5001, %v5003
  %v5006 = vtanh.pop %v5004
  %v5007 = vtanh.pop %v5005
  %v5008 = vmul.f32 %v4984, %v5006
  %v5009 = vmul.f32 %v4999, %v5007
  %v5010 = vpack.c.bf16 %v5008, %v5008
  %v5011 = vpack.c.bf16 %v5009, %v5009
  %5012 = vst [vmem:[%s1235] sm:$0xf] %v5010
  %5013 = vst [vmem:[%s1235 + $0x4] sm:$0xf] %v5011
  %v5014 = vld [vmem:[%s5] sm:$0xff]
  %v5015 = vld [vmem:[%s5 + $0x8] sm:$0xff]
  %v5016 = vld [vmem:[%s5 + $0x10] sm:$0xff]
  %v5017 = vld [vmem:[%s5 + $0x18] sm:$0xff]
  %v5018 = vld [vmem:[%s5 + $0x20] sm:$0xff]
  %v5019 = vld [vmem:[%s5 + $0x28] sm:$0xff]
  %v5020 = vld [vmem:[%s5 + $0x30] sm:$0xff]
  %v5021 = vld [vmem:[%s5 + $0x38] sm:$0xff]
  %v5022 = vld [vmem:[%s5 + $0x40] sm:$0xff]
  %v5023 = vld [vmem:[%s5 + $0x48] sm:$0xff]
  %v5024 = vld [vmem:[%s5 + $0x50] sm:$0xff]
  %v5025 = vld [vmem:[%s5 + $0x58] sm:$0xff]
  %v5026 = vld [vmem:[%s5 + $0x60] sm:$0xff]
  %v5027 = vld [vmem:[%s5 + $0x68] sm:$0xff]
  %v5028 = vld [vmem:[%s5 + $0x70] sm:$0xff]
  %v5029 = vld [vmem:[%s5 + $0x78] sm:$0xff]
  %v5030 = vld [vmem:[%s5 + $0x80] sm:$0xff]
  %v5031 = vld [vmem:[%s5 + $0x88] sm:$0xff]
  %v5032 = vld [vmem:[%s5 + $0x90] sm:$0xff]
  %v5033 = vld [vmem:[%s5 + $0x98] sm:$0xff]
  %v5034 = vld [vmem:[%s5 + $0xa0] sm:$0xff]
  %v5035 = vld [vmem:[%s5 + $0xa8] sm:$0xff]
  %v5036 = vld [vmem:[%s5 + $0xb0] sm:$0xff]
  %v5037 = vld [vmem:[%s5 + $0xb8] sm:$0xff]
  %v5038 = vld [vmem:[%s5 + $0xc0] sm:$0xff]
  %v5039 = vld [vmem:[%s5 + $0xc8] sm:$0xff]
  %v5040 = vld [vmem:[%s5 + $0xd0] sm:$0xff]
  %v5041 = vld [vmem:[%s5 + $0xd8] sm:$0xff]
  %v5042 = vld [vmem:[%s5 + $0xe0] sm:$0xff]
  %v5043 = vld [vmem:[%s5 + $0xe8] sm:$0xff]
  %v5044 = vld [vmem:[%s5 + $0xf0] sm:$0xff]
  %v5045 = vld [vmem:[%s5 + $0xf8] sm:$0xff]
  %v5048 = vunpack.c.l.b16 %v5010
  %v5049 = vunpack.c.l.b16 %v5011
  %v5050 = vpack.c.b16 %v5049, %v5048
  %v5084 = vunpack.c.l.b16 %v5014
  %v5085 = vunpack.c.h.b16 %v5014
  %v5086 = vunpack.c.l.b16 %v5015
  %v5087 = vunpack.c.h.b16 %v5015
  %v5088 = vunpack.c.l.b16 %v5016
  %v5089 = vunpack.c.h.b16 %v5016
  %v5090 = vunpack.c.l.b16 %v5017
  %v5091 = vunpack.c.h.b16 %v5017
  %v5092 = vunpack.c.l.b16 %v5018
  %v5093 = vunpack.c.h.b16 %v5018
  %v5094 = vunpack.c.l.b16 %v5019
  %v5095 = vunpack.c.h.b16 %v5019
  %v5096 = vunpack.c.l.b16 %v5020
  %v5097 = vunpack.c.h.b16 %v5020
  %v5098 = vunpack.c.l.b16 %v5021
  %v5099 = vunpack.c.h.b16 %v5021
  %v5100 = vunpack.c.l.b16 %v5022
  %v5101 = vunpack.c.h.b16 %v5022
  %v5102 = vunpack.c.l.b16 %v5023
  %v5103 = vunpack.c.h.b16 %v5023
  %v5104 = vunpack.c.l.b16 %v5024
  %v5105 = vunpack.c.h.b16 %v5024
  %v5106 = vunpack.c.l.b16 %v5025
  %v5107 = vunpack.c.h.b16 %v5025
  %v5108 = vunpack.c.l.b16 %v5026
  %v5109 = vunpack.c.h.b16 %v5026
  %v5110 = vunpack.c.l.b16 %v5027
  %v5111 = vunpack.c.h.b16 %v5027
  %v5112 = vunpack.c.l.b16 %v5028
  %v5113 = vunpack.c.h.b16 %v5028
  %v5114 = vunpack.c.l.b16 %v5029
  %v5115 = vunpack.c.h.b16 %v5029
  %v5116 = vunpack.c.l.b16 %v5030
  %v5117 = vunpack.c.h.b16 %v5030
  %v5118 = vunpack.c.l.b16 %v5031
  %v5119 = vunpack.c.h.b16 %v5031
  %v5120 = vunpack.c.l.b16 %v5032
  %v5121 = vunpack.c.h.b16 %v5032
  %v5122 = vunpack.c.l.b16 %v5033
  %v5123 = vunpack.c.h.b16 %v5033
  %v5124 = vunpack.c.l.b16 %v5034
  %v5125 = vunpack.c.h.b16 %v5034
  %v5126 = vunpack.c.l.b16 %v5035
  %v5127 = vunpack.c.h.b16 %v5035
  %v5128 = vunpack.c.l.b16 %v5036
  %v5129 = vunpack.c.h.b16 %v5036
  %v5130 = vunpack.c.l.b16 %v5037
  %v5131 = vunpack.c.h.b16 %v5037
  %v5132 = vunpack.c.l.b16 %v5038
  %v5133 = vunpack.c.h.b16 %v5038
  %v5134 = vunpack.c.l.b16 %v5039
  %v5135 = vunpack.c.h.b16 %v5039
  %v5136 = vunpack.c.l.b16 %v5040
  %v5137 = vunpack.c.h.b16 %v5040
  %v5138 = vunpack.c.l.b16 %v5041
  %v5139 = vunpack.c.h.b16 %v5041
  %v5140 = vunpack.c.l.b16 %v5042
  %v5141 = vunpack.c.h.b16 %v5042
  %v5142 = vunpack.c.l.b16 %v5043
  %v5143 = vunpack.c.h.b16 %v5043
  %v5144 = vunpack.c.l.b16 %v5044
  %v5145 = vunpack.c.h.b16 %v5044
  %v5146 = vunpack.c.l.b16 %v5045
  %v5147 = vunpack.c.h.b16 %v5045
  %v5148 = vpack.c.b16 %v5088, %v5084
  %v5149 = vpack.c.b16 %v5089, %v5085
  %v5150 = vpack.c.b16 %v5090, %v5086
  %v5151 = vpack.c.b16 %v5091, %v5087
  %v5152 = vpack.c.b16 %v5096, %v5092
  %v5153 = vpack.c.b16 %v5097, %v5093
  %v5154 = vpack.c.b16 %v5098, %v5094
  %v5155 = vpack.c.b16 %v5099, %v5095
  %v5156 = vpack.c.b16 %v5104, %v5100
  %v5157 = vpack.c.b16 %v5105, %v5101
  %v5158 = vpack.c.b16 %v5106, %v5102
  %v5159 = vpack.c.b16 %v5107, %v5103
  %v5160 = vpack.c.b16 %v5112, %v5108
  %v5161 = vpack.c.b16 %v5113, %v5109
  %v5162 = vpack.c.b16 %v5114, %v5110
  %v5163 = vpack.c.b16 %v5115, %v5111
  %v5164 = vpack.c.b16 %v5120, %v5116
  %v5165 = vpack.c.b16 %v5121, %v5117
  %v5166 = vpack.c.b16 %v5122, %v5118
  %v5167 = vpack.c.b16 %v5123, %v5119
  %v5168 = vpack.c.b16 %v5128, %v5124
  %v5169 = vpack.c.b16 %v5129, %v5125
  %v5170 = vpack.c.b16 %v5130, %v5126
  %v5171 = vpack.c.b16 %v5131, %v5127
  %v5172 = vpack.c.b16 %v5136, %v5132
  %v5173 = vpack.c.b16 %v5137, %v5133
  %v5174 = vpack.c.b16 %v5138, %v5134
  %v5175 = vpack.c.b16 %v5139, %v5135
  %v5176 = vpack.c.b16 %v5144, %v5140
  %v5177 = vpack.c.b16 %v5145, %v5141
  %v5178 = vpack.c.b16 %v5146, %v5142
  %v5179 = vpack.c.b16 %v5147, %v5143
  %5212 = vmatpush.bf16.msra.mxu0 %v5176
  %5213 = vmatpush.bf16.msra.mxu0 %v5172
  %5214 = vmatpush.bf16.msra.mxu0 %v5168
  %5215 = vmatpush.bf16.msra.mxu0 %v5164
  %5216 = vmatpush.bf16.msra.mxu0 %v5160
  %5217 = vmatpush.bf16.msra.mxu0 %v5156
  %5218 = vmatpush.bf16.msra.mxu0 %v5152
  %5219 = vmatpush.bf16.msra.mxu0 %v5148
  %5220 = vmatmul.bf16.gmra.mxu0 %v5050
  %v5221 = vpop.f32.mrf.mxu0
  %v5222 = vadd.f32 0.0, %v5221
  %v5223 = vpop.f32.mrf.mxu0
  %v5224 = vadd.f32 0.0, %v5223
  %5225 = vdwg.mxu0
  %5226 = vmatpush.bf16.msra.mxu0 %v5177
  %5227 = vmatpush.bf16.msra.mxu0 %v5173
  %5228 = vmatpush.bf16.msra.mxu0 %v5169
  %5229 = vmatpush.bf16.msra.mxu0 %v5165
  %5230 = vmatpush.bf16.msra.mxu0 %v5161
  %5231 = vmatpush.bf16.msra.mxu0 %v5157
  %5232 = vmatpush.bf16.msra.mxu0 %v5153
  %5233 = vmatpush.bf16.msra.mxu0 %v5149
  %5234 = vmatmul.bf16.gmra.mxu0 %v5050
  %v5235 = vpop.f32.mrf.mxu0
  %v5236 = vadd.f32 0.0, %v5235
  %v5237 = vpop.f32.mrf.mxu0
  %v5238 = vadd.f32 0.0, %v5237
  %5239 = vdwg.mxu0
  %5240 = vmatpush.bf16.msra.mxu0 %v5178
  %5241 = vmatpush.bf16.msra.mxu0 %v5174
  %5242 = vmatpush.bf16.msra.mxu0 %v5170
  %5243 = vmatpush.bf16.msra.mxu0 %v5166
  %5244 = vmatpush.bf16.msra.mxu0 %v5162
  %5245 = vmatpush.bf16.msra.mxu0 %v5158
  %5246 = vmatpush.bf16.msra.mxu0 %v5154
  %5247 = vmatpush.bf16.msra.mxu0 %v5150
  %5248 = vmatmul.bf16.gmra.mxu0 %v5050
  %v5249 = vpop.f32.mrf.mxu0
  %v5250 = vadd.f32 0.0, %v5249
  %v5251 = vpop.f32.mrf.mxu0
  %v5252 = vadd.f32 0.0, %v5251
  %5253 = vdwg.mxu0
  %5254 = vmatpush.bf16.msra.mxu0 %v5179
  %5255 = vmatpush.bf16.msra.mxu0 %v5175
  %5256 = vmatpush.bf16.msra.mxu0 %v5171
  %5257 = vmatpush.bf16.msra.mxu0 %v5167
  %5258 = vmatpush.bf16.msra.mxu0 %v5163
  %5259 = vmatpush.bf16.msra.mxu0 %v5159
  %5260 = vmatpush.bf16.msra.mxu0 %v5155
  %5261 = vmatpush.bf16.msra.mxu0 %v5151
  %5262 = vmatmul.bf16.gmra.mxu0 %v5050
  %v5263 = vpop.f32.mrf.mxu0
  %v5264 = vadd.f32 0.0, %v5263
  %v5265 = vpop.f32.mrf.mxu0
  %v5266 = vadd.f32 0.0, %v5265
  %5267 = vdwg.mxu0
  %v5268 = vld [vmem:[%s1494] sm:$0xff]
  %v5269 = vld [vmem:[%s1494 + $0x8] sm:$0xff]
  %v5270 = vld [vmem:[%s1494 + $0x10] sm:$0xff]
  %v5271 = vld [vmem:[%s1494 + $0x18] sm:$0xff]
  %v5272 = vunpack.c.l.bf16 %v5268
  %v5273 = vunpack.c.h.bf16 %v5268
  %v5274 = vunpack.c.l.bf16 %v5269
  %v5275 = vunpack.c.h.bf16 %v5269
  %v5276 = vunpack.c.l.bf16 %v5270
  %v5277 = vunpack.c.h.bf16 %v5270
  %v5278 = vunpack.c.l.bf16 %v5271
  %v5279 = vunpack.c.h.bf16 %v5271
  %v5280 = vadd.f32 %v5272, %v5222
  %v5281 = vadd.f32 %v5273, %v5236
  %v5282 = vadd.f32 %v5274, %v5250
  %v5283 = vadd.f32 %v5275, %v5264
  %v5284 = vadd.f32 %v5276, %v5224
  %v5285 = vadd.f32 %v5277, %v5238
  %v5286 = vadd.f32 %v5278, %v5252
  %v5287 = vadd.f32 %v5279, %v5266
  %v5288 = vxor.u32 %v5280, 2147483648
  %v5289 = vxor.u32 %v5284, 2147483648
  %v5290 = vmul.f32 %v5288, 1.442695
  %v5291 = vpow.pop %v5290
  %v5292 = vmul.f32 %v5289, 1.442695
  %v5293 = vpow.pop %v5292
  %v5294 = vadd.f32 %v5291, 1.0
  %v5295 = vadd.f32 %v5293, 1.0
  %v5296 = vrcp.pop %v5294
  %v5297 = vmul.f32 %v5294, %v5296
  %v5298 = vsub.f32 1.0, %v5297
  %v5299 = vmul.f32 %v5296, %v5298
  %v5300 = vadd.f32 %v5296, %v5299
  %vm5301 = vweird.f32 %v5294
  %vm5302 = vweird.f32 %v5296
  %vm5303 = vmor %vm5301, %vm5302
  %v5304 = vsel %vm5303, %v5296, %v5300
  %v5305 = vand.u32 2147483647, %v5294
  %vm5306 = vcmp.eq.f32.partialorder %v5305, 8.507059e+37
  %v5307 = vand.u32 %v5294, 2147483648
  %v5308 = vor.u32 1.1754944e-38, %v5307
  %v5309 = vsel %vm5306, %v5308, %v5304
  %v5310 = vmul.f32 1.0, %v5309
  %v5311 = vrcp.pop %v5295
  %v5312 = vmul.f32 %v5295, %v5311
  %v5313 = vsub.f32 1.0, %v5312
  %v5314 = vmul.f32 %v5311, %v5313
  %v5315 = vadd.f32 %v5311, %v5314
  %vm5316 = vweird.f32 %v5295
  %vm5317 = vweird.f32 %v5311
  %vm5318 = vmor %vm5316, %vm5317
  %v5319 = vsel %vm5318, %v5311, %v5315
  %v5320 = vand.u32 2147483647, %v5295
  %vm5321 = vcmp.eq.f32.partialorder %v5320, 8.507059e+37
  %v5322 = vand.u32 %v5295, 2147483648
  %v5323 = vor.u32 1.1754944e-38, %v5322
  %v5324 = vsel %vm5321, %v5323, %v5319
  %v5325 = vmul.f32 1.0, %v5324
  %v5326 = vxor.u32 %v5281, 2147483648
  %v5327 = vxor.u32 %v5285, 2147483648
  %v5328 = vmul.f32 %v5326, 1.442695
  %v5329 = vpow.pop %v5328
  %v5330 = vmul.f32 %v5327, 1.442695
  %v5331 = vpow.pop %v5330
  %v5332 = vadd.f32 %v5329, 1.0
  %v5333 = vadd.f32 %v5331, 1.0
  %v5334 = vrcp.pop %v5332
  %v5335 = vmul.f32 %v5332, %v5334
  %v5336 = vsub.f32 1.0, %v5335
  %v5337 = vmul.f32 %v5334, %v5336
  %v5338 = vadd.f32 %v5334, %v5337
  %vm5339 = vweird.f32 %v5332
  %vm5340 = vweird.f32 %v5334
  %vm5341 = vmor %vm5339, %vm5340
  %v5342 = vsel %vm5341, %v5334, %v5338
  %v5343 = vand.u32 2147483647, %v5332
  %vm5344 = vcmp.eq.f32.partialorder %v5343, 8.507059e+37
  %v5345 = vand.u32 %v5332, 2147483648
  %v5346 = vor.u32 1.1754944e-38, %v5345
  %v5347 = vsel %vm5344, %v5346, %v5342
  %v5348 = vmul.f32 1.0, %v5347
  %v5349 = vrcp.pop %v5333
  %v5350 = vmul.f32 %v5333, %v5349
  %v5351 = vsub.f32 1.0, %v5350
  %v5352 = vmul.f32 %v5349, %v5351
  %v5353 = vadd.f32 %v5349, %v5352
  %vm5354 = vweird.f32 %v5333
  %vm5355 = vweird.f32 %v5349
  %vm5356 = vmor %vm5354, %vm5355
  %v5357 = vsel %vm5356, %v5349, %v5353
  %v5358 = vand.u32 2147483647, %v5333
  %vm5359 = vcmp.eq.f32.partialorder %v5358, 8.507059e+37
  %v5360 = vand.u32 %v5333, 2147483648
  %v5361 = vor.u32 1.1754944e-38, %v5360
  %v5362 = vsel %vm5359, %v5361, %v5357
  %v5363 = vmul.f32 1.0, %v5362
  %v5364 = vtanh.pop %v5282
  %v5365 = vtanh.pop %v5286
  %v5366 = vxor.u32 %v5283, 2147483648
  %v5367 = vxor.u32 %v5287, 2147483648
  %v5368 = vmul.f32 %v5366, 1.442695
  %v5369 = vpow.pop %v5368
  %v5370 = vmul.f32 %v5367, 1.442695
  %v5371 = vpow.pop %v5370
  %v5372 = vadd.f32 %v5369, 1.0
  %v5373 = vadd.f32 %v5371, 1.0
  %v5374 = vrcp.pop %v5372
  %v5375 = vmul.f32 %v5372, %v5374
  %v5376 = vsub.f32 1.0, %v5375
  %v5377 = vmul.f32 %v5374, %v5376
  %v5378 = vadd.f32 %v5374, %v5377
  %vm5379 = vweird.f32 %v5372
  %vm5380 = vweird.f32 %v5374
  %vm5381 = vmor %vm5379, %vm5380
  %v5382 = vsel %vm5381, %v5374, %v5378
  %v5383 = vand.u32 2147483647, %v5372
  %vm5384 = vcmp.eq.f32.partialorder %v5383, 8.507059e+37
  %v5385 = vand.u32 %v5372, 2147483648
  %v5386 = vor.u32 1.1754944e-38, %v5385
  %v5387 = vsel %vm5384, %v5386, %v5382
  %v5388 = vmul.f32 1.0, %v5387
  %v5389 = vrcp.pop %v5373
  %v5390 = vmul.f32 %v5373, %v5389
  %v5391 = vsub.f32 1.0, %v5390
  %v5392 = vmul.f32 %v5389, %v5391
  %v5393 = vadd.f32 %v5389, %v5392
  %vm5394 = vweird.f32 %v5373
  %vm5395 = vweird.f32 %v5389
  %vm5396 = vmor %vm5394, %vm5395
  %v5397 = vsel %vm5396, %v5389, %v5393
  %v5398 = vand.u32 2147483647, %v5373
  %vm5399 = vcmp.eq.f32.partialorder %v5398, 8.507059e+37
  %v5400 = vand.u32 %v5373, 2147483648
  %v5401 = vor.u32 1.1754944e-38, %v5400
  %v5402 = vsel %vm5399, %v5401, %v5397
  %v5403 = vmul.f32 1.0, %v5402
  %v5404 = vmul.f32 %v5348, %v5004
  %v5405 = vmul.f32 %v5363, %v5005
  %v5406 = vmul.f32 %v5310, %v5364
  %v5407 = vmul.f32 %v5325, %v5365
  %v5408 = vadd.f32 %v5404, %v5406
  %v5409 = vadd.f32 %v5405, %v5407
  %v5410 = vtanh.pop %v5408
  %v5411 = vtanh.pop %v5409
  %v5412 = vmul.f32 %v5388, %v5410
  %v5413 = vmul.f32 %v5403, %v5411
  %v5414 = vpack.c.bf16 %v5412, %v5412
  %v5415 = vpack.c.bf16 %v5413, %v5413
  %5416 = vst [vmem:[%s1643] sm:$0xf] %v5414
  %5417 = vst [vmem:[%s1643 + $0x4] sm:$0xf] %v5415
  %v5418 = vld [vmem:[%s5] sm:$0xff]
  %v5419 = vld [vmem:[%s5 + $0x8] sm:$0xff]
  %v5420 = vld [vmem:[%s5 + $0x10] sm:$0xff]
  %v5421 = vld [vmem:[%s5 + $0x18] sm:$0xff]
  %v5422 = vld [vmem:[%s5 + $0x20] sm:$0xff]
  %v5423 = vld [vmem:[%s5 + $0x28] sm:$0xff]
  %v5424 = vld [vmem:[%s5 + $0x30] sm:$0xff]
  %v5425 = vld [vmem:[%s5 + $0x38] sm:$0xff]
  %v5426 = vld [vmem:[%s5 + $0x40] sm:$0xff]
  %v5427 = vld [vmem:[%s5 + $0x48] sm:$0xff]
  %v5428 = vld [vmem:[%s5 + $0x50] sm:$0xff]
  %v5429 = vld [vmem:[%s5 + $0x58] sm:$0xff]
  %v5430 = vld [vmem:[%s5 + $0x60] sm:$0xff]
  %v5431 = vld [vmem:[%s5 + $0x68] sm:$0xff]
  %v5432 = vld [vmem:[%s5 + $0x70] sm:$0xff]
  %v5433 = vld [vmem:[%s5 + $0x78] sm:$0xff]
  %v5434 = vld [vmem:[%s5 + $0x80] sm:$0xff]
  %v5435 = vld [vmem:[%s5 + $0x88] sm:$0xff]
  %v5436 = vld [vmem:[%s5 + $0x90] sm:$0xff]
  %v5437 = vld [vmem:[%s5 + $0x98] sm:$0xff]
  %v5438 = vld [vmem:[%s5 + $0xa0] sm:$0xff]
  %v5439 = vld [vmem:[%s5 + $0xa8] sm:$0xff]
  %v5440 = vld [vmem:[%s5 + $0xb0] sm:$0xff]
  %v5441 = vld [vmem:[%s5 + $0xb8] sm:$0xff]
  %v5442 = vld [vmem:[%s5 + $0xc0] sm:$0xff]
  %v5443 = vld [vmem:[%s5 + $0xc8] sm:$0xff]
  %v5444 = vld [vmem:[%s5 + $0xd0] sm:$0xff]
  %v5445 = vld [vmem:[%s5 + $0xd8] sm:$0xff]
  %v5446 = vld [vmem:[%s5 + $0xe0] sm:$0xff]
  %v5447 = vld [vmem:[%s5 + $0xe8] sm:$0xff]
  %v5448 = vld [vmem:[%s5 + $0xf0] sm:$0xff]
  %v5449 = vld [vmem:[%s5 + $0xf8] sm:$0xff]
  %v5452 = vunpack.c.l.b16 %v5414
  %v5453 = vunpack.c.l.b16 %v5415
  %v5454 = vpack.c.b16 %v5453, %v5452
  %v5488 = vunpack.c.l.b16 %v5418
  %v5489 = vunpack.c.h.b16 %v5418
  %v5490 = vunpack.c.l.b16 %v5419
  %v5491 = vunpack.c.h.b16 %v5419
  %v5492 = vunpack.c.l.b16 %v5420
  %v5493 = vunpack.c.h.b16 %v5420
  %v5494 = vunpack.c.l.b16 %v5421
  %v5495 = vunpack.c.h.b16 %v5421
  %v5496 = vunpack.c.l.b16 %v5422
  %v5497 = vunpack.c.h.b16 %v5422
  %v5498 = vunpack.c.l.b16 %v5423
  %v5499 = vunpack.c.h.b16 %v5423
  %v5500 = vunpack.c.l.b16 %v5424
  %v5501 = vunpack.c.h.b16 %v5424
  %v5502 = vunpack.c.l.b16 %v5425
  %v5503 = vunpack.c.h.b16 %v5425
  %v5504 = vunpack.c.l.b16 %v5426
  %v5505 = vunpack.c.h.b16 %v5426
  %v5506 = vunpack.c.l.b16 %v5427
  %v5507 = vunpack.c.h.b16 %v5427
  %v5508 = vunpack.c.l.b16 %v5428
  %v5509 = vunpack.c.h.b16 %v5428
  %v5510 = vunpack.c.l.b16 %v5429
  %v5511 = vunpack.c.h.b16 %v5429
  %v5512 = vunpack.c.l.b16 %v5430
  %v5513 = vunpack.c.h.b16 %v5430
  %v5514 = vunpack.c.l.b16 %v5431
  %v5515 = vunpack.c.h.b16 %v5431
  %v5516 = vunpack.c.l.b16 %v5432
  %v5517 = vunpack.c.h.b16 %v5432
  %v5518 = vunpack.c.l.b16 %v5433
  %v5519 = vunpack.c.h.b16 %v5433
  %v5520 = vunpack.c.l.b16 %v5434
  %v5521 = vunpack.c.h.b16 %v5434
  %v5522 = vunpack.c.l.b16 %v5435
  %v5523 = vunpack.c.h.b16 %v5435
  %v5524 = vunpack.c.l.b16 %v5436
  %v5525 = vunpack.c.h.b16 %v5436
  %v5526 = vunpack.c.l.b16 %v5437
  %v5527 = vunpack.c.h.b16 %v5437
  %v5528 = vunpack.c.l.b16 %v5438
  %v5529 = vunpack.c.h.b16 %v5438
  %v5530 = vunpack.c.l.b16 %v5439
  %v5531 = vunpack.c.h.b16 %v5439
  %v5532 = vunpack.c.l.b16 %v5440
  %v5533 = vunpack.c.h.b16 %v5440
  %v5534 = vunpack.c.l.b16 %v5441
  %v5535 = vunpack.c.h.b16 %v5441
  %v5536 = vunpack.c.l.b16 %v5442
  %v5537 = vunpack.c.h.b16 %v5442
  %v5538 = vunpack.c.l.b16 %v5443
  %v5539 = vunpack.c.h.b16 %v5443
  %v5540 = vunpack.c.l.b16 %v5444
  %v5541 = vunpack.c.h.b16 %v5444
  %v5542 = vunpack.c.l.b16 %v5445
  %v5543 = vunpack.c.h.b16 %v5445
  %v5544 = vunpack.c.l.b16 %v5446
  %v5545 = vunpack.c.h.b16 %v5446
  %v5546 = vunpack.c.l.b16 %v5447
  %v5547 = vunpack.c.h.b16 %v5447
  %v5548 = vunpack.c.l.b16 %v5448
  %v5549 = vunpack.c.h.b16 %v5448
  %v5550 = vunpack.c.l.b16 %v5449
  %v5551 = vunpack.c.h.b16 %v5449
  %v5552 = vpack.c.b16 %v5492, %v5488
  %v5553 = vpack.c.b16 %v5493, %v5489
  %v5554 = vpack.c.b16 %v5494, %v5490
  %v5555 = vpack.c.b16 %v5495, %v5491
  %v5556 = vpack.c.b16 %v5500, %v5496
  %v5557 = vpack.c.b16 %v5501, %v5497
  %v5558 = vpack.c.b16 %v5502, %v5498
  %v5559 = vpack.c.b16 %v5503, %v5499
  %v5560 = vpack.c.b16 %v5508, %v5504
  %v5561 = vpack.c.b16 %v5509, %v5505
  %v5562 = vpack.c.b16 %v5510, %v5506
  %v5563 = vpack.c.b16 %v5511, %v5507
  %v5564 = vpack.c.b16 %v5516, %v5512
  %v5565 = vpack.c.b16 %v5517, %v5513
  %v5566 = vpack.c.b16 %v5518, %v5514
  %v5567 = vpack.c.b16 %v5519, %v5515
  %v5568 = vpack.c.b16 %v5524, %v5520
  %v5569 = vpack.c.b16 %v5525, %v5521
  %v5570 = vpack.c.b16 %v5526, %v5522
  %v5571 = vpack.c.b16 %v5527, %v5523
  %v5572 = vpack.c.b16 %v5532, %v5528
  %v5573 = vpack.c.b16 %v5533, %v5529
  %v5574 = vpack.c.b16 %v5534, %v5530
  %v5575 = vpack.c.b16 %v5535, %v5531
  %v5576 = vpack.c.b16 %v5540, %v5536
  %v5577 = vpack.c.b16 %v5541, %v5537
  %v5578 = vpack.c.b16 %v5542, %v5538
  %v5579 = vpack.c.b16 %v5543, %v5539
  %v5580 = vpack.c.b16 %v5548, %v5544
  %v5581 = vpack.c.b16 %v5549, %v5545
  %v5582 = vpack.c.b16 %v5550, %v5546
  %v5583 = vpack.c.b16 %v5551, %v5547
  %5616 = vmatpush.bf16.msra.mxu0 %v5580
  %5617 = vmatpush.bf16.msra.mxu0 %v5576
  %5618 = vmatpush.bf16.msra.mxu0 %v5572
  %5619 = vmatpush.bf16.msra.mxu0 %v5568
  %5620 = vmatpush.bf16.msra.mxu0 %v5564
  %5621 = vmatpush.bf16.msra.mxu0 %v5560
  %5622 = vmatpush.bf16.msra.mxu0 %v5556
  %5623 = vmatpush.bf16.msra.mxu0 %v5552
  %5624 = vmatmul.bf16.gmra.mxu0 %v5454
  %v5625 = vpop.f32.mrf.mxu0
  %v5626 = vadd.f32 0.0, %v5625
  %v5627 = vpop.f32.mrf.mxu0
  %v5628 = vadd.f32 0.0, %v5627
  %5629 = vdwg.mxu0
  %5630 = vmatpush.bf16.msra.mxu0 %v5581
  %5631 = vmatpush.bf16.msra.mxu0 %v5577
  %5632 = vmatpush.bf16.msra.mxu0 %v5573
  %5633 = vmatpush.bf16.msra.mxu0 %v5569
  %5634 = vmatpush.bf16.msra.mxu0 %v5565
  %5635 = vmatpush.bf16.msra.mxu0 %v5561
  %5636 = vmatpush.bf16.msra.mxu0 %v5557
  %5637 = vmatpush.bf16.msra.mxu0 %v5553
  %5638 = vmatmul.bf16.gmra.mxu0 %v5454
  %v5639 = vpop.f32.mrf.mxu0
  %v5640 = vadd.f32 0.0, %v5639
  %v5641 = vpop.f32.mrf.mxu0
  %v5642 = vadd.f32 0.0, %v5641
  %5643 = vdwg.mxu0
  %5644 = vmatpush.bf16.msra.mxu0 %v5582
  %5645 = vmatpush.bf16.msra.mxu0 %v5578
  %5646 = vmatpush.bf16.msra.mxu0 %v5574
  %5647 = vmatpush.bf16.msra.mxu0 %v5570
  %5648 = vmatpush.bf16.msra.mxu0 %v5566
  %5649 = vmatpush.bf16.msra.mxu0 %v5562
  %5650 = vmatpush.bf16.msra.mxu0 %v5558
  %5651 = vmatpush.bf16.msra.mxu0 %v5554
  %5652 = vmatmul.bf16.gmra.mxu0 %v5454
  %v5653 = vpop.f32.mrf.mxu0
  %v5654 = vadd.f32 0.0, %v5653
  %v5655 = vpop.f32.mrf.mxu0
  %v5656 = vadd.f32 0.0, %v5655
  %5657 = vdwg.mxu0
  %5658 = vmatpush.bf16.msra.mxu0 %v5583
  %5659 = vmatpush.bf16.msra.mxu0 %v5579
  %5660 = vmatpush.bf16.msra.mxu0 %v5575
  %5661 = vmatpush.bf16.msra.mxu0 %v5571
  %5662 = vmatpush.bf16.msra.mxu0 %v5567
  %5663 = vmatpush.bf16.msra.mxu0 %v5563
  %5664 = vmatpush.bf16.msra.mxu0 %v5559
  %5665 = vmatpush.bf16.msra.mxu0 %v5555
  %5666 = vmatmul.bf16.gmra.mxu0 %v5454
  %v5667 = vpop.f32.mrf.mxu0
  %v5668 = vadd.f32 0.0, %v5667
  %v5669 = vpop.f32.mrf.mxu0
  %v5670 = vadd.f32 0.0, %v5669
  %5671 = vdwg.mxu0
  %v5672 = vld [vmem:[%s1902] sm:$0xff]
  %v5673 = vld [vmem:[%s1902 + $0x8] sm:$0xff]
  %v5674 = vld [vmem:[%s1902 + $0x10] sm:$0xff]
  %v5675 = vld [vmem:[%s1902 + $0x18] sm:$0xff]
  %v5676 = vunpack.c.l.bf16 %v5672
  %v5677 = vunpack.c.h.bf16 %v5672
  %v5678 = vunpack.c.l.bf16 %v5673
  %v5679 = vunpack.c.h.bf16 %v5673
  %v5680 = vunpack.c.l.bf16 %v5674
  %v5681 = vunpack.c.h.bf16 %v5674
  %v5682 = vunpack.c.l.bf16 %v5675
  %v5683 = vunpack.c.h.bf16 %v5675
  %v5684 = vadd.f32 %v5676, %v5626
  %v5685 = vadd.f32 %v5677, %v5640
  %v5686 = vadd.f32 %v5678, %v5654
  %v5687 = vadd.f32 %v5679, %v5668
  %v5688 = vadd.f32 %v5680, %v5628
  %v5689 = vadd.f32 %v5681, %v5642
  %v5690 = vadd.f32 %v5682, %v5656
  %v5691 = vadd.f32 %v5683, %v5670
  %v5692 = vxor.u32 %v5684, 2147483648
  %v5693 = vxor.u32 %v5688, 2147483648
  %v5694 = vmul.f32 %v5692, 1.442695
  %v5695 = vpow.pop %v5694
  %v5696 = vmul.f32 %v5693, 1.442695
  %v5697 = vpow.pop %v5696
  %v5698 = vadd.f32 %v5695, 1.0
  %v5699 = vadd.f32 %v5697, 1.0
  %v5700 = vrcp.pop %v5698
  %v5701 = vmul.f32 %v5698, %v5700
  %v5702 = vsub.f32 1.0, %v5701
  %v5703 = vmul.f32 %v5700, %v5702
  %v5704 = vadd.f32 %v5700, %v5703
  %vm5705 = vweird.f32 %v5698
  %vm5706 = vweird.f32 %v5700
  %vm5707 = vmor %vm5705, %vm5706
  %v5708 = vsel %vm5707, %v5700, %v5704
  %v5709 = vand.u32 2147483647, %v5698
  %vm5710 = vcmp.eq.f32.partialorder %v5709, 8.507059e+37
  %v5711 = vand.u32 %v5698, 2147483648
  %v5712 = vor.u32 1.1754944e-38, %v5711
  %v5713 = vsel %vm5710, %v5712, %v5708
  %v5714 = vmul.f32 1.0, %v5713
  %v5715 = vrcp.pop %v5699
  %v5716 = vmul.f32 %v5699, %v5715
  %v5717 = vsub.f32 1.0, %v5716
  %v5718 = vmul.f32 %v5715, %v5717
  %v5719 = vadd.f32 %v5715, %v5718
  %vm5720 = vweird.f32 %v5699
  %vm5721 = vweird.f32 %v5715
  %vm5722 = vmor %vm5720, %vm5721
  %v5723 = vsel %vm5722, %v5715, %v5719
  %v5724 = vand.u32 2147483647, %v5699
  %vm5725 = vcmp.eq.f32.partialorder %v5724, 8.507059e+37
  %v5726 = vand.u32 %v5699, 2147483648
  %v5727 = vor.u32 1.1754944e-38, %v5726
  %v5728 = vsel %vm5725, %v5727, %v5723
  %v5729 = vmul.f32 1.0, %v5728
  %v5730 = vxor.u32 %v5685, 2147483648
  %v5731 = vxor.u32 %v5689, 2147483648
  %v5732 = vmul.f32 %v5730, 1.442695
  %v5733 = vpow.pop %v5732
  %v5734 = vmul.f32 %v5731, 1.442695
  %v5735 = vpow.pop %v5734
  %v5736 = vadd.f32 %v5733, 1.0
  %v5737 = vadd.f32 %v5735, 1.0
  %v5738 = vrcp.pop %v5736
  %v5739 = vmul.f32 %v5736, %v5738
  %v5740 = vsub.f32 1.0, %v5739
  %v5741 = vmul.f32 %v5738, %v5740
  %v5742 = vadd.f32 %v5738, %v5741
  %vm5743 = vweird.f32 %v5736
  %vm5744 = vweird.f32 %v5738
  %vm5745 = vmor %vm5743, %vm5744
  %v5746 = vsel %vm5745, %v5738, %v5742
  %v5747 = vand.u32 2147483647, %v5736
  %vm5748 = vcmp.eq.f32.partialorder %v5747, 8.507059e+37
  %v5749 = vand.u32 %v5736, 2147483648
  %v5750 = vor.u32 1.1754944e-38, %v5749
  %v5751 = vsel %vm5748, %v5750, %v5746
  %v5752 = vmul.f32 1.0, %v5751
  %v5753 = vrcp.pop %v5737
  %v5754 = vmul.f32 %v5737, %v5753
  %v5755 = vsub.f32 1.0, %v5754
  %v5756 = vmul.f32 %v5753, %v5755
  %v5757 = vadd.f32 %v5753, %v5756
  %vm5758 = vweird.f32 %v5737
  %vm5759 = vweird.f32 %v5753
  %vm5760 = vmor %vm5758, %vm5759
  %v5761 = vsel %vm5760, %v5753, %v5757
  %v5762 = vand.u32 2147483647, %v5737
  %vm5763 = vcmp.eq.f32.partialorder %v5762, 8.507059e+37
  %v5764 = vand.u32 %v5737, 2147483648
  %v5765 = vor.u32 1.1754944e-38, %v5764
  %v5766 = vsel %vm5763, %v5765, %v5761
  %v5767 = vmul.f32 1.0, %v5766
  %v5768 = vtanh.pop %v5686
  %v5769 = vtanh.pop %v5690
  %v5770 = vxor.u32 %v5687, 2147483648
  %v5771 = vxor.u32 %v5691, 2147483648
  %v5772 = vmul.f32 %v5770, 1.442695
  %v5773 = vpow.pop %v5772
  %v5774 = vmul.f32 %v5771, 1.442695
  %v5775 = vpow.pop %v5774
  %v5776 = vadd.f32 %v5773, 1.0
  %v5777 = vadd.f32 %v5775, 1.0
  %v5778 = vrcp.pop %v5776
  %v5779 = vmul.f32 %v5776, %v5778
  %v5780 = vsub.f32 1.0, %v5779
  %v5781 = vmul.f32 %v5778, %v5780
  %v5782 = vadd.f32 %v5778, %v5781
  %vm5783 = vweird.f32 %v5776
  %vm5784 = vweird.f32 %v5778
  %vm5785 = vmor %vm5783, %vm5784
  %v5786 = vsel %vm5785, %v5778, %v5782
  %v5787 = vand.u32 2147483647, %v5776
  %vm5788 = vcmp.eq.f32.partialorder %v5787, 8.507059e+37
  %v5789 = vand.u32 %v5776, 2147483648
  %v5790 = vor.u32 1.1754944e-38, %v5789
  %v5791 = vsel %vm5788, %v5790, %v5786
  %v5792 = vmul.f32 1.0, %v5791
  %v5793 = vrcp.pop %v5777
  %v5794 = vmul.f32 %v5777, %v5793
  %v5795 = vsub.f32 1.0, %v5794
  %v5796 = vmul.f32 %v5793, %v5795
  %v5797 = vadd.f32 %v5793, %v5796
  %vm5798 = vweird.f32 %v5777
  %vm5799 = vweird.f32 %v5793
  %vm5800 = vmor %vm5798, %vm5799
  %v5801 = vsel %vm5800, %v5793, %v5797
  %v5802 = vand.u32 2147483647, %v5777
  %vm5803 = vcmp.eq.f32.partialorder %v5802, 8.507059e+37
  %v5804 = vand.u32 %v5777, 2147483648
  %v5805 = vor.u32 1.1754944e-38, %v5804
  %v5806 = vsel %vm5803, %v5805, %v5801
  %v5807 = vmul.f32 1.0, %v5806
  %v5808 = vmul.f32 %v5752, %v5408
  %v5809 = vmul.f32 %v5767, %v5409
  %v5810 = vmul.f32 %v5714, %v5768
  %v5811 = vmul.f32 %v5729, %v5769
  %v5812 = vadd.f32 %v5808, %v5810
  %v5813 = vadd.f32 %v5809, %v5811
  %v5814 = vtanh.pop %v5812
  %v5815 = vtanh.pop %v5813
  %v5816 = vmul.f32 %v5792, %v5814
  %v5817 = vmul.f32 %v5807, %v5815
  %v5818 = vpack.c.bf16 %v5816, %v5816
  %v5819 = vpack.c.bf16 %v5817, %v5817
  %5820 = vst [vmem:[%s2051] sm:$0xf] %v5818
  %5821 = vst [vmem:[%s2051 + $0x4] sm:$0xf] %v5819
  %v5822 = vld [vmem:[%s5] sm:$0xff]
  %v5823 = vld [vmem:[%s5 + $0x8] sm:$0xff]
  %v5824 = vld [vmem:[%s5 + $0x10] sm:$0xff]
  %v5825 = vld [vmem:[%s5 + $0x18] sm:$0xff]
  %v5826 = vld [vmem:[%s5 + $0x20] sm:$0xff]
  %v5827 = vld [vmem:[%s5 + $0x28] sm:$0xff]
  %v5828 = vld [vmem:[%s5 + $0x30] sm:$0xff]
  %v5829 = vld [vmem:[%s5 + $0x38] sm:$0xff]
  %v5830 = vld [vmem:[%s5 + $0x40] sm:$0xff]
  %v5831 = vld [vmem:[%s5 + $0x48] sm:$0xff]
  %v5832 = vld [vmem:[%s5 + $0x50] sm:$0xff]
  %v5833 = vld [vmem:[%s5 + $0x58] sm:$0xff]
  %v5834 = vld [vmem:[%s5 + $0x60] sm:$0xff]
  %v5835 = vld [vmem:[%s5 + $0x68] sm:$0xff]
  %v5836 = vld [vmem:[%s5 + $0x70] sm:$0xff]
  %v5837 = vld [vmem:[%s5 + $0x78] sm:$0xff]
  %v5838 = vld [vmem:[%s5 + $0x80] sm:$0xff]
  %v5839 = vld [vmem:[%s5 + $0x88] sm:$0xff]
  %v5840 = vld [vmem:[%s5 + $0x90] sm:$0xff]
  %v5841 = vld [vmem:[%s5 + $0x98] sm:$0xff]
  %v5842 = vld [vmem:[%s5 + $0xa0] sm:$0xff]
  %v5843 = vld [vmem:[%s5 + $0xa8] sm:$0xff]
  %v5844 = vld [vmem:[%s5 + $0xb0] sm:$0xff]
  %v5845 = vld [vmem:[%s5 + $0xb8] sm:$0xff]
  %v5846 = vld [vmem:[%s5 + $0xc0] sm:$0xff]
  %v5847 = vld [vmem:[%s5 + $0xc8] sm:$0xff]
  %v5848 = vld [vmem:[%s5 + $0xd0] sm:$0xff]
  %v5849 = vld [vmem:[%s5 + $0xd8] sm:$0xff]
  %v5850 = vld [vmem:[%s5 + $0xe0] sm:$0xff]
  %v5851 = vld [vmem:[%s5 + $0xe8] sm:$0xff]
  %v5852 = vld [vmem:[%s5 + $0xf0] sm:$0xff]
  %v5853 = vld [vmem:[%s5 + $0xf8] sm:$0xff]
  %v5856 = vunpack.c.l.b16 %v5818
  %v5857 = vunpack.c.l.b16 %v5819
  %v5858 = vpack.c.b16 %v5857, %v5856
  %v5892 = vunpack.c.l.b16 %v5822
  %v5893 = vunpack.c.h.b16 %v5822
  %v5894 = vunpack.c.l.b16 %v5823
  %v5895 = vunpack.c.h.b16 %v5823
  %v5896 = vunpack.c.l.b16 %v5824
  %v5897 = vunpack.c.h.b16 %v5824
  %v5898 = vunpack.c.l.b16 %v5825
  %v5899 = vunpack.c.h.b16 %v5825
  %v5900 = vunpack.c.l.b16 %v5826
  %v5901 = vunpack.c.h.b16 %v5826
  %v5902 = vunpack.c.l.b16 %v5827
  %v5903 = vunpack.c.h.b16 %v5827
  %v5904 = vunpack.c.l.b16 %v5828
  %v5905 = vunpack.c.h.b16 %v5828
  %v5906 = vunpack.c.l.b16 %v5829
  %v5907 = vunpack.c.h.b16 %v5829
  %v5908 = vunpack.c.l.b16 %v5830
  %v5909 = vunpack.c.h.b16 %v5830
  %v5910 = vunpack.c.l.b16 %v5831
  %v5911 = vunpack.c.h.b16 %v5831
  %v5912 = vunpack.c.l.b16 %v5832
  %v5913 = vunpack.c.h.b16 %v5832
  %v5914 = vunpack.c.l.b16 %v5833
  %v5915 = vunpack.c.h.b16 %v5833
  %v5916 = vunpack.c.l.b16 %v5834
  %v5917 = vunpack.c.h.b16 %v5834
  %v5918 = vunpack.c.l.b16 %v5835
  %v5919 = vunpack.c.h.b16 %v5835
  %v5920 = vunpack.c.l.b16 %v5836
  %v5921 = vunpack.c.h.b16 %v5836
  %v5922 = vunpack.c.l.b16 %v5837
  %v5923 = vunpack.c.h.b16 %v5837
  %v5924 = vunpack.c.l.b16 %v5838
  %v5925 = vunpack.c.h.b16 %v5838
  %v5926 = vunpack.c.l.b16 %v5839
  %v5927 = vunpack.c.h.b16 %v5839
  %v5928 = vunpack.c.l.b16 %v5840
  %v5929 = vunpack.c.h.b16 %v5840
  %v5930 = vunpack.c.l.b16 %v5841
  %v5931 = vunpack.c.h.b16 %v5841
  %v5932 = vunpack.c.l.b16 %v5842
  %v5933 = vunpack.c.h.b16 %v5842
  %v5934 = vunpack.c.l.b16 %v5843
  %v5935 = vunpack.c.h.b16 %v5843
  %v5936 = vunpack.c.l.b16 %v5844
  %v5937 = vunpack.c.h.b16 %v5844
  %v5938 = vunpack.c.l.b16 %v5845
  %v5939 = vunpack.c.h.b16 %v5845
  %v5940 = vunpack.c.l.b16 %v5846
  %v5941 = vunpack.c.h.b16 %v5846
  %v5942 = vunpack.c.l.b16 %v5847
  %v5943 = vunpack.c.h.b16 %v5847
  %v5944 = vunpack.c.l.b16 %v5848
  %v5945 = vunpack.c.h.b16 %v5848
  %v5946 = vunpack.c.l.b16 %v5849
  %v5947 = vunpack.c.h.b16 %v5849
  %v5948 = vunpack.c.l.b16 %v5850
  %v5949 = vunpack.c.h.b16 %v5850
  %v5950 = vunpack.c.l.b16 %v5851
  %v5951 = vunpack.c.h.b16 %v5851
  %v5952 = vunpack.c.l.b16 %v5852
  %v5953 = vunpack.c.h.b16 %v5852
  %v5954 = vunpack.c.l.b16 %v5853
  %v5955 = vunpack.c.h.b16 %v5853
  %v5956 = vpack.c.b16 %v5896, %v5892
  %v5957 = vpack.c.b16 %v5897, %v5893
  %v5958 = vpack.c.b16 %v5898, %v5894
  %v5959 = vpack.c.b16 %v5899, %v5895
  %v5960 = vpack.c.b16 %v5904, %v5900
  %v5961 = vpack.c.b16 %v5905, %v5901
  %v5962 = vpack.c.b16 %v5906, %v5902
  %v5963 = vpack.c.b16 %v5907, %v5903
  %v5964 = vpack.c.b16 %v5912, %v5908
  %v5965 = vpack.c.b16 %v5913, %v5909
  %v5966 = vpack.c.b16 %v5914, %v5910
  %v5967 = vpack.c.b16 %v5915, %v5911
  %v5968 = vpack.c.b16 %v5920, %v5916
  %v5969 = vpack.c.b16 %v5921, %v5917
  %v5970 = vpack.c.b16 %v5922, %v5918
  %v5971 = vpack.c.b16 %v5923, %v5919
  %v5972 = vpack.c.b16 %v5928, %v5924
  %v5973 = vpack.c.b16 %v5929, %v5925
  %v5974 = vpack.c.b16 %v5930, %v5926
  %v5975 = vpack.c.b16 %v5931, %v5927
  %v5976 = vpack.c.b16 %v5936, %v5932
  %v5977 = vpack.c.b16 %v5937, %v5933
  %v5978 = vpack.c.b16 %v5938, %v5934
  %v5979 = vpack.c.b16 %v5939, %v5935
  %v5980 = vpack.c.b16 %v5944, %v5940
  %v5981 = vpack.c.b16 %v5945, %v5941
  %v5982 = vpack.c.b16 %v5946, %v5942
  %v5983 = vpack.c.b16 %v5947, %v5943
  %v5984 = vpack.c.b16 %v5952, %v5948
  %v5985 = vpack.c.b16 %v5953, %v5949
  %v5986 = vpack.c.b16 %v5954, %v5950
  %v5987 = vpack.c.b16 %v5955, %v5951
  %6020 = vmatpush.bf16.msra.mxu0 %v5984
  %6021 = vmatpush.bf16.msra.mxu0 %v5980
  %6022 = vmatpush.bf16.msra.mxu0 %v5976
  %6023 = vmatpush.bf16.msra.mxu0 %v5972
  %6024 = vmatpush.bf16.msra.mxu0 %v5968
  %6025 = vmatpush.bf16.msra.mxu0 %v5964
  %6026 = vmatpush.bf16.msra.mxu0 %v5960
  %6027 = vmatpush.bf16.msra.mxu0 %v5956
  %6028 = vmatmul.bf16.gmra.mxu0 %v5858
  %v6029 = vpop.f32.mrf.mxu0
  %v6030 = vadd.f32 0.0, %v6029
  %v6031 = vpop.f32.mrf.mxu0
  %v6032 = vadd.f32 0.0, %v6031
  %6033 = vdwg.mxu0
  %6034 = vmatpush.bf16.msra.mxu0 %v5985
  %6035 = vmatpush.bf16.msra.mxu0 %v5981
  %6036 = vmatpush.bf16.msra.mxu0 %v5977
  %6037 = vmatpush.bf16.msra.mxu0 %v5973
  %6038 = vmatpush.bf16.msra.mxu0 %v5969
  %6039 = vmatpush.bf16.msra.mxu0 %v5965
  %6040 = vmatpush.bf16.msra.mxu0 %v5961
  %6041 = vmatpush.bf16.msra.mxu0 %v5957
  %6042 = vmatmul.bf16.gmra.mxu0 %v5858
  %v6043 = vpop.f32.mrf.mxu0
  %v6044 = vadd.f32 0.0, %v6043
  %v6045 = vpop.f32.mrf.mxu0
  %v6046 = vadd.f32 0.0, %v6045
  %6047 = vdwg.mxu0
  %6048 = vmatpush.bf16.msra.mxu0 %v5986
  %6049 = vmatpush.bf16.msra.mxu0 %v5982
  %6050 = vmatpush.bf16.msra.mxu0 %v5978
  %6051 = vmatpush.bf16.msra.mxu0 %v5974
  %6052 = vmatpush.bf16.msra.mxu0 %v5970
  %6053 = vmatpush.bf16.msra.mxu0 %v5966
  %6054 = vmatpush.bf16.msra.mxu0 %v5962
  %6055 = vmatpush.bf16.msra.mxu0 %v5958
  %6056 = vmatmul.bf16.gmra.mxu0 %v5858
  %v6057 = vpop.f32.mrf.mxu0
  %v6058 = vadd.f32 0.0, %v6057
  %v6059 = vpop.f32.mrf.mxu0
  %v6060 = vadd.f32 0.0, %v6059
  %6061 = vdwg.mxu0
  %6062 = vmatpush.bf16.msra.mxu0 %v5987
  %6063 = vmatpush.bf16.msra.mxu0 %v5983
  %6064 = vmatpush.bf16.msra.mxu0 %v5979
  %6065 = vmatpush.bf16.msra.mxu0 %v5975
  %6066 = vmatpush.bf16.msra.mxu0 %v5971
  %6067 = vmatpush.bf16.msra.mxu0 %v5967
  %6068 = vmatpush.bf16.msra.mxu0 %v5963
  %6069 = vmatpush.bf16.msra.mxu0 %v5959
  %6070 = vmatmul.bf16.gmra.mxu0 %v5858
  %v6071 = vpop.f32.mrf.mxu0
  %v6072 = vadd.f32 0.0, %v6071
  %v6073 = vpop.f32.mrf.mxu0
  %v6074 = vadd.f32 0.0, %v6073
  %6075 = vdwg.mxu0
  %v6076 = vld [vmem:[%s2310] sm:$0xff]
  %v6077 = vld [vmem:[%s2310 + $0x8] sm:$0xff]
  %v6078 = vld [vmem:[%s2310 + $0x10] sm:$0xff]
  %v6079 = vld [vmem:[%s2310 + $0x18] sm:$0xff]
  %v6080 = vunpack.c.l.bf16 %v6076
  %v6081 = vunpack.c.h.bf16 %v6076
  %v6082 = vunpack.c.l.bf16 %v6077
  %v6083 = vunpack.c.h.bf16 %v6077
  %v6084 = vunpack.c.l.bf16 %v6078
  %v6085 = vunpack.c.h.bf16 %v6078
  %v6086 = vunpack.c.l.bf16 %v6079
  %v6087 = vunpack.c.h.bf16 %v6079
  %v6088 = vadd.f32 %v6080, %v6030
  %v6089 = vadd.f32 %v6081, %v6044
  %v6090 = vadd.f32 %v6082, %v6058
  %v6091 = vadd.f32 %v6083, %v6072
  %v6092 = vadd.f32 %v6084, %v6032
  %v6093 = vadd.f32 %v6085, %v6046
  %v6094 = vadd.f32 %v6086, %v6060
  %v6095 = vadd.f32 %v6087, %v6074
  %v6096 = vxor.u32 %v6088, 2147483648
  %v6097 = vxor.u32 %v6092, 2147483648
  %v6098 = vmul.f32 %v6096, 1.442695
  %v6099 = vpow.pop %v6098
  %v6100 = vmul.f32 %v6097, 1.442695
  %v6101 = vpow.pop %v6100
  %v6102 = vadd.f32 %v6099, 1.0
  %v6103 = vadd.f32 %v6101, 1.0
  %v6104 = vrcp.pop %v6102
  %v6105 = vmul.f32 %v6102, %v6104
  %v6106 = vsub.f32 1.0, %v6105
  %v6107 = vmul.f32 %v6104, %v6106
  %v6108 = vadd.f32 %v6104, %v6107
  %vm6109 = vweird.f32 %v6102
  %vm6110 = vweird.f32 %v6104
  %vm6111 = vmor %vm6109, %vm6110
  %v6112 = vsel %vm6111, %v6104, %v6108
  %v6113 = vand.u32 2147483647, %v6102
  %vm6114 = vcmp.eq.f32.partialorder %v6113, 8.507059e+37
  %v6115 = vand.u32 %v6102, 2147483648
  %v6116 = vor.u32 1.1754944e-38, %v6115
  %v6117 = vsel %vm6114, %v6116, %v6112
  %v6118 = vmul.f32 1.0, %v6117
  %v6119 = vrcp.pop %v6103
  %v6120 = vmul.f32 %v6103, %v6119
  %v6121 = vsub.f32 1.0, %v6120
  %v6122 = vmul.f32 %v6119, %v6121
  %v6123 = vadd.f32 %v6119, %v6122
  %vm6124 = vweird.f32 %v6103
  %vm6125 = vweird.f32 %v6119
  %vm6126 = vmor %vm6124, %vm6125
  %v6127 = vsel %vm6126, %v6119, %v6123
  %v6128 = vand.u32 2147483647, %v6103
  %vm6129 = vcmp.eq.f32.partialorder %v6128, 8.507059e+37
  %v6130 = vand.u32 %v6103, 2147483648
  %v6131 = vor.u32 1.1754944e-38, %v6130
  %v6132 = vsel %vm6129, %v6131, %v6127
  %v6133 = vmul.f32 1.0, %v6132
  %v6134 = vxor.u32 %v6089, 2147483648
  %v6135 = vxor.u32 %v6093, 2147483648
  %v6136 = vmul.f32 %v6134, 1.442695
  %v6137 = vpow.pop %v6136
  %v6138 = vmul.f32 %v6135, 1.442695
  %v6139 = vpow.pop %v6138
  %v6140 = vadd.f32 %v6137, 1.0
  %v6141 = vadd.f32 %v6139, 1.0
  %v6142 = vrcp.pop %v6140
  %v6143 = vmul.f32 %v6140, %v6142
  %v6144 = vsub.f32 1.0, %v6143
  %v6145 = vmul.f32 %v6142, %v6144
  %v6146 = vadd.f32 %v6142, %v6145
  %vm6147 = vweird.f32 %v6140
  %vm6148 = vweird.f32 %v6142
  %vm6149 = vmor %vm6147, %vm6148
  %v6150 = vsel %vm6149, %v6142, %v6146
  %v6151 = vand.u32 2147483647, %v6140
  %vm6152 = vcmp.eq.f32.partialorder %v6151, 8.507059e+37
  %v6153 = vand.u32 %v6140, 2147483648
  %v6154 = vor.u32 1.1754944e-38, %v6153
  %v6155 = vsel %vm6152, %v6154, %v6150
  %v6156 = vmul.f32 1.0, %v6155
  %v6157 = vrcp.pop %v6141
  %v6158 = vmul.f32 %v6141, %v6157
  %v6159 = vsub.f32 1.0, %v6158
  %v6160 = vmul.f32 %v6157, %v6159
  %v6161 = vadd.f32 %v6157, %v6160
  %vm6162 = vweird.f32 %v6141
  %vm6163 = vweird.f32 %v6157
  %vm6164 = vmor %vm6162, %vm6163
  %v6165 = vsel %vm6164, %v6157, %v6161
  %v6166 = vand.u32 2147483647, %v6141
  %vm6167 = vcmp.eq.f32.partialorder %v6166, 8.507059e+37
  %v6168 = vand.u32 %v6141, 2147483648
  %v6169 = vor.u32 1.1754944e-38, %v6168
  %v6170 = vsel %vm6167, %v6169, %v6165
  %v6171 = vmul.f32 1.0, %v6170
  %v6172 = vtanh.pop %v6090
  %v6173 = vtanh.pop %v6094
  %v6174 = vxor.u32 %v6091, 2147483648
  %v6175 = vxor.u32 %v6095, 2147483648
  %v6176 = vmul.f32 %v6174, 1.442695
  %v6177 = vpow.pop %v6176
  %v6178 = vmul.f32 %v6175, 1.442695
  %v6179 = vpow.pop %v6178
  %v6180 = vadd.f32 %v6177, 1.0
  %v6181 = vadd.f32 %v6179, 1.0
  %v6182 = vrcp.pop %v6180
  %v6183 = vmul.f32 %v6180, %v6182
  %v6184 = vsub.f32 1.0, %v6183
  %v6185 = vmul.f32 %v6182, %v6184
  %v6186 = vadd.f32 %v6182, %v6185
  %vm6187 = vweird.f32 %v6180
  %vm6188 = vweird.f32 %v6182
  %vm6189 = vmor %vm6187, %vm6188
  %v6190 = vsel %vm6189, %v6182, %v6186
  %v6191 = vand.u32 2147483647, %v6180
  %vm6192 = vcmp.eq.f32.partialorder %v6191, 8.507059e+37
  %v6193 = vand.u32 %v6180, 2147483648
  %v6194 = vor.u32 1.1754944e-38, %v6193
  %v6195 = vsel %vm6192, %v6194, %v6190
  %v6196 = vmul.f32 1.0, %v6195
  %v6197 = vrcp.pop %v6181
  %v6198 = vmul.f32 %v6181, %v6197
  %v6199 = vsub.f32 1.0, %v6198
  %v6200 = vmul.f32 %v6197, %v6199
  %v6201 = vadd.f32 %v6197, %v6200
  %vm6202 = vweird.f32 %v6181
  %vm6203 = vweird.f32 %v6197
  %vm6204 = vmor %vm6202, %vm6203
  %v6205 = vsel %vm6204, %v6197, %v6201
  %v6206 = vand.u32 2147483647, %v6181
  %vm6207 = vcmp.eq.f32.partialorder %v6206, 8.507059e+37
  %v6208 = vand.u32 %v6181, 2147483648
  %v6209 = vor.u32 1.1754944e-38, %v6208
  %v6210 = vsel %vm6207, %v6209, %v6205
  %v6211 = vmul.f32 1.0, %v6210
  %v6212 = vmul.f32 %v6156, %v5812
  %v6213 = vmul.f32 %v6171, %v5813
  %v6214 = vmul.f32 %v6118, %v6172
  %v6215 = vmul.f32 %v6133, %v6173
  %v6216 = vadd.f32 %v6212, %v6214
  %v6217 = vadd.f32 %v6213, %v6215
  %v6218 = vtanh.pop %v6216
  %v6219 = vtanh.pop %v6217
  %v6220 = vmul.f32 %v6196, %v6218
  %v6221 = vmul.f32 %v6211, %v6219
  %v6222 = vpack.c.bf16 %v6220, %v6220
  %v6223 = vpack.c.bf16 %v6221, %v6221
  %6224 = vst [vmem:[%s2459] sm:$0xf] %v6222
  %6225 = vst [vmem:[%s2459 + $0x4] sm:$0xf] %v6223
  %v6226 = vld [vmem:[%s5] sm:$0xff]
  %v6227 = vld [vmem:[%s5 + $0x8] sm:$0xff]
  %v6228 = vld [vmem:[%s5 + $0x10] sm:$0xff]
  %v6229 = vld [vmem:[%s5 + $0x18] sm:$0xff]
  %v6230 = vld [vmem:[%s5 + $0x20] sm:$0xff]
  %v6231 = vld [vmem:[%s5 + $0x28] sm:$0xff]
  %v6232 = vld [vmem:[%s5 + $0x30] sm:$0xff]
  %v6233 = vld [vmem:[%s5 + $0x38] sm:$0xff]
  %v6234 = vld [vmem:[%s5 + $0x40] sm:$0xff]
  %v6235 = vld [vmem:[%s5 + $0x48] sm:$0xff]
  %v6236 = vld [vmem:[%s5 + $0x50] sm:$0xff]
  %v6237 = vld [vmem:[%s5 + $0x58] sm:$0xff]
  %v6238 = vld [vmem:[%s5 + $0x60] sm:$0xff]
  %v6239 = vld [vmem:[%s5 + $0x68] sm:$0xff]
  %v6240 = vld [vmem:[%s5 + $0x70] sm:$0xff]
  %v6241 = vld [vmem:[%s5 + $0x78] sm:$0xff]
  %v6242 = vld [vmem:[%s5 + $0x80] sm:$0xff]
  %v6243 = vld [vmem:[%s5 + $0x88] sm:$0xff]
  %v6244 = vld [vmem:[%s5 + $0x90] sm:$0xff]
  %v6245 = vld [vmem:[%s5 + $0x98] sm:$0xff]
  %v6246 = vld [vmem:[%s5 + $0xa0] sm:$0xff]
  %v6247 = vld [vmem:[%s5 + $0xa8] sm:$0xff]
  %v6248 = vld [vmem:[%s5 + $0xb0] sm:$0xff]
  %v6249 = vld [vmem:[%s5 + $0xb8] sm:$0xff]
  %v6250 = vld [vmem:[%s5 + $0xc0] sm:$0xff]
  %v6251 = vld [vmem:[%s5 + $0xc8] sm:$0xff]
  %v6252 = vld [vmem:[%s5 + $0xd0] sm:$0xff]
  %v6253 = vld [vmem:[%s5 + $0xd8] sm:$0xff]
  %v6254 = vld [vmem:[%s5 + $0xe0] sm:$0xff]
  %v6255 = vld [vmem:[%s5 + $0xe8] sm:$0xff]
  %v6256 = vld [vmem:[%s5 + $0xf0] sm:$0xff]
  %v6257 = vld [vmem:[%s5 + $0xf8] sm:$0xff]
  %v6260 = vunpack.c.l.b16 %v6222
  %v6261 = vunpack.c.l.b16 %v6223
  %v6262 = vpack.c.b16 %v6261, %v6260
  %v6296 = vunpack.c.l.b16 %v6226
  %v6297 = vunpack.c.h.b16 %v6226
  %v6298 = vunpack.c.l.b16 %v6227
  %v6299 = vunpack.c.h.b16 %v6227
  %v6300 = vunpack.c.l.b16 %v6228
  %v6301 = vunpack.c.h.b16 %v6228
  %v6302 = vunpack.c.l.b16 %v6229
  %v6303 = vunpack.c.h.b16 %v6229
  %v6304 = vunpack.c.l.b16 %v6230
  %v6305 = vunpack.c.h.b16 %v6230
  %v6306 = vunpack.c.l.b16 %v6231
  %v6307 = vunpack.c.h.b16 %v6231
  %v6308 = vunpack.c.l.b16 %v6232
  %v6309 = vunpack.c.h.b16 %v6232
  %v6310 = vunpack.c.l.b16 %v6233
  %v6311 = vunpack.c.h.b16 %v6233
  %v6312 = vunpack.c.l.b16 %v6234
  %v6313 = vunpack.c.h.b16 %v6234
  %v6314 = vunpack.c.l.b16 %v6235
  %v6315 = vunpack.c.h.b16 %v6235
  %v6316 = vunpack.c.l.b16 %v6236
  %v6317 = vunpack.c.h.b16 %v6236
  %v6318 = vunpack.c.l.b16 %v6237
  %v6319 = vunpack.c.h.b16 %v6237
  %v6320 = vunpack.c.l.b16 %v6238
  %v6321 = vunpack.c.h.b16 %v6238
  %v6322 = vunpack.c.l.b16 %v6239
  %v6323 = vunpack.c.h.b16 %v6239
  %v6324 = vunpack.c.l.b16 %v6240
  %v6325 = vunpack.c.h.b16 %v6240
  %v6326 = vunpack.c.l.b16 %v6241
  %v6327 = vunpack.c.h.b16 %v6241
  %v6328 = vunpack.c.l.b16 %v6242
  %v6329 = vunpack.c.h.b16 %v6242
  %v6330 = vunpack.c.l.b16 %v6243
  %v6331 = vunpack.c.h.b16 %v6243
  %v6332 = vunpack.c.l.b16 %v6244
  %v6333 = vunpack.c.h.b16 %v6244
  %v6334 = vunpack.c.l.b16 %v6245
  %v6335 = vunpack.c.h.b16 %v6245
  %v6336 = vunpack.c.l.b16 %v6246
  %v6337 = vunpack.c.h.b16 %v6246
  %v6338 = vunpack.c.l.b16 %v6247
  %v6339 = vunpack.c.h.b16 %v6247
  %v6340 = vunpack.c.l.b16 %v6248
  %v6341 = vunpack.c.h.b16 %v6248
  %v6342 = vunpack.c.l.b16 %v6249
  %v6343 = vunpack.c.h.b16 %v6249
  %v6344 = vunpack.c.l.b16 %v6250
  %v6345 = vunpack.c.h.b16 %v6250
  %v6346 = vunpack.c.l.b16 %v6251
  %v6347 = vunpack.c.h.b16 %v6251
  %v6348 = vunpack.c.l.b16 %v6252
  %v6349 = vunpack.c.h.b16 %v6252
  %v6350 = vunpack.c.l.b16 %v6253
  %v6351 = vunpack.c.h.b16 %v6253
  %v6352 = vunpack.c.l.b16 %v6254
  %v6353 = vunpack.c.h.b16 %v6254
  %v6354 = vunpack.c.l.b16 %v6255
  %v6355 = vunpack.c.h.b16 %v6255
  %v6356 = vunpack.c.l.b16 %v6256
  %v6357 = vunpack.c.h.b16 %v6256
  %v6358 = vunpack.c.l.b16 %v6257
  %v6359 = vunpack.c.h.b16 %v6257
  %v6360 = vpack.c.b16 %v6300, %v6296
  %v6361 = vpack.c.b16 %v6301, %v6297
  %v6362 = vpack.c.b16 %v6302, %v6298
  %v6363 = vpack.c.b16 %v6303, %v6299
  %v6364 = vpack.c.b16 %v6308, %v6304
  %v6365 = vpack.c.b16 %v6309, %v6305
  %v6366 = vpack.c.b16 %v6310, %v6306
  %v6367 = vpack.c.b16 %v6311, %v6307
  %v6368 = vpack.c.b16 %v6316, %v6312
  %v6369 = vpack.c.b16 %v6317, %v6313
  %v6370 = vpack.c.b16 %v6318, %v6314
  %v6371 = vpack.c.b16 %v6319, %v6315
  %v6372 = vpack.c.b16 %v6324, %v6320
  %v6373 = vpack.c.b16 %v6325, %v6321
  %v6374 = vpack.c.b16 %v6326, %v6322
  %v6375 = vpack.c.b16 %v6327, %v6323
  %v6376 = vpack.c.b16 %v6332, %v6328
  %v6377 = vpack.c.b16 %v6333, %v6329
  %v6378 = vpack.c.b16 %v6334, %v6330
  %v6379 = vpack.c.b16 %v6335, %v6331
  %v6380 = vpack.c.b16 %v6340, %v6336
  %v6381 = vpack.c.b16 %v6341, %v6337
  %v6382 = vpack.c.b16 %v6342, %v6338
  %v6383 = vpack.c.b16 %v6343, %v6339
  %v6384 = vpack.c.b16 %v6348, %v6344
  %v6385 = vpack.c.b16 %v6349, %v6345
  %v6386 = vpack.c.b16 %v6350, %v6346
  %v6387 = vpack.c.b16 %v6351, %v6347
  %v6388 = vpack.c.b16 %v6356, %v6352
  %v6389 = vpack.c.b16 %v6357, %v6353
  %v6390 = vpack.c.b16 %v6358, %v6354
  %v6391 = vpack.c.b16 %v6359, %v6355
  %6424 = vmatpush.bf16.msra.mxu0 %v6388
  %6425 = vmatpush.bf16.msra.mxu0 %v6384
  %6426 = vmatpush.bf16.msra.mxu0 %v6380
  %6427 = vmatpush.bf16.msra.mxu0 %v6376
  %6428 = vmatpush.bf16.msra.mxu0 %v6372
  %6429 = vmatpush.bf16.msra.mxu0 %v6368
  %6430 = vmatpush.bf16.msra.mxu0 %v6364
  %6431 = vmatpush.bf16.msra.mxu0 %v6360
  %6432 = vmatmul.bf16.gmra.mxu0 %v6262
  %v6433 = vpop.f32.mrf.mxu0
  %v6434 = vadd.f32 0.0, %v6433
  %v6435 = vpop.f32.mrf.mxu0
  %v6436 = vadd.f32 0.0, %v6435
  %6437 = vdwg.mxu0
  %6438 = vmatpush.bf16.msra.mxu0 %v6389
  %6439 = vmatpush.bf16.msra.mxu0 %v6385
  %6440 = vmatpush.bf16.msra.mxu0 %v6381
  %6441 = vmatpush.bf16.msra.mxu0 %v6377
  %6442 = vmatpush.bf16.msra.mxu0 %v6373
  %6443 = vmatpush.bf16.msra.mxu0 %v6369
  %6444 = vmatpush.bf16.msra.mxu0 %v6365
  %6445 = vmatpush.bf16.msra.mxu0 %v6361
  %6446 = vmatmul.bf16.gmra.mxu0 %v6262
  %v6447 = vpop.f32.mrf.mxu0
  %v6448 = vadd.f32 0.0, %v6447
  %v6449 = vpop.f32.mrf.mxu0
  %v6450 = vadd.f32 0.0, %v6449
  %6451 = vdwg.mxu0
  %6452 = vmatpush.bf16.msra.mxu0 %v6390
  %6453 = vmatpush.bf16.msra.mxu0 %v6386
  %6454 = vmatpush.bf16.msra.mxu0 %v6382
  %6455 = vmatpush.bf16.msra.mxu0 %v6378
  %6456 = vmatpush.bf16.msra.mxu0 %v6374
  %6457 = vmatpush.bf16.msra.mxu0 %v6370
  %6458 = vmatpush.bf16.msra.mxu0 %v6366
  %6459 = vmatpush.bf16.msra.mxu0 %v6362
  %6460 = vmatmul.bf16.gmra.mxu0 %v6262
  %v6461 = vpop.f32.mrf.mxu0
  %v6462 = vadd.f32 0.0, %v6461
  %v6463 = vpop.f32.mrf.mxu0
  %v6464 = vadd.f32 0.0, %v6463
  %6465 = vdwg.mxu0
  %6466 = vmatpush.bf16.msra.mxu0 %v6391
  %6467 = vmatpush.bf16.msra.mxu0 %v6387
  %6468 = vmatpush.bf16.msra.mxu0 %v6383
  %6469 = vmatpush.bf16.msra.mxu0 %v6379
  %6470 = vmatpush.bf16.msra.mxu0 %v6375
  %6471 = vmatpush.bf16.msra.mxu0 %v6371
  %6472 = vmatpush.bf16.msra.mxu0 %v6367
  %6473 = vmatpush.bf16.msra.mxu0 %v6363
  %6474 = vmatmul.bf16.gmra.mxu0 %v6262
  %v6475 = vpop.f32.mrf.mxu0
  %v6476 = vadd.f32 0.0, %v6475
  %v6477 = vpop.f32.mrf.mxu0
  %v6478 = vadd.f32 0.0, %v6477
  %6479 = vdwg.mxu0
  %v6480 = vld [vmem:[%s2718] sm:$0xff]
  %v6481 = vld [vmem:[%s2718 + $0x8] sm:$0xff]
  %v6482 = vld [vmem:[%s2718 + $0x10] sm:$0xff]
  %v6483 = vld [vmem:[%s2718 + $0x18] sm:$0xff]
  %v6484 = vunpack.c.l.bf16 %v6480
  %v6485 = vunpack.c.h.bf16 %v6480
  %v6486 = vunpack.c.l.bf16 %v6481
  %v6487 = vunpack.c.h.bf16 %v6481
  %v6488 = vunpack.c.l.bf16 %v6482
  %v6489 = vunpack.c.h.bf16 %v6482
  %v6490 = vunpack.c.l.bf16 %v6483
  %v6491 = vunpack.c.h.bf16 %v6483
  %v6492 = vadd.f32 %v6484, %v6434
  %v6493 = vadd.f32 %v6485, %v6448
  %v6494 = vadd.f32 %v6486, %v6462
  %v6495 = vadd.f32 %v6487, %v6476
  %v6496 = vadd.f32 %v6488, %v6436
  %v6497 = vadd.f32 %v6489, %v6450
  %v6498 = vadd.f32 %v6490, %v6464
  %v6499 = vadd.f32 %v6491, %v6478
  %v6500 = vxor.u32 %v6492, 2147483648
  %v6501 = vxor.u32 %v6496, 2147483648
  %v6502 = vmul.f32 %v6500, 1.442695
  %v6503 = vpow.pop %v6502
  %v6504 = vmul.f32 %v6501, 1.442695
  %v6505 = vpow.pop %v6504
  %v6506 = vadd.f32 %v6503, 1.0
  %v6507 = vadd.f32 %v6505, 1.0
  %v6508 = vrcp.pop %v6506
  %v6509 = vmul.f32 %v6506, %v6508
  %v6510 = vsub.f32 1.0, %v6509
  %v6511 = vmul.f32 %v6508, %v6510
  %v6512 = vadd.f32 %v6508, %v6511
  %vm6513 = vweird.f32 %v6506
  %vm6514 = vweird.f32 %v6508
  %vm6515 = vmor %vm6513, %vm6514
  %v6516 = vsel %vm6515, %v6508, %v6512
  %v6517 = vand.u32 2147483647, %v6506
  %vm6518 = vcmp.eq.f32.partialorder %v6517, 8.507059e+37
  %v6519 = vand.u32 %v6506, 2147483648
  %v6520 = vor.u32 1.1754944e-38, %v6519
  %v6521 = vsel %vm6518, %v6520, %v6516
  %v6522 = vmul.f32 1.0, %v6521
  %v6523 = vrcp.pop %v6507
  %v6524 = vmul.f32 %v6507, %v6523
  %v6525 = vsub.f32 1.0, %v6524
  %v6526 = vmul.f32 %v6523, %v6525
  %v6527 = vadd.f32 %v6523, %v6526
  %vm6528 = vweird.f32 %v6507
  %vm6529 = vweird.f32 %v6523
  %vm6530 = vmor %vm6528, %vm6529
  %v6531 = vsel %vm6530, %v6523, %v6527
  %v6532 = vand.u32 2147483647, %v6507
  %vm6533 = vcmp.eq.f32.partialorder %v6532, 8.507059e+37
  %v6534 = vand.u32 %v6507, 2147483648
  %v6535 = vor.u32 1.1754944e-38, %v6534
  %v6536 = vsel %vm6533, %v6535, %v6531
  %v6537 = vmul.f32 1.0, %v6536
  %v6538 = vxor.u32 %v6493, 2147483648
  %v6539 = vxor.u32 %v6497, 2147483648
  %v6540 = vmul.f32 %v6538, 1.442695
  %v6541 = vpow.pop %v6540
  %v6542 = vmul.f32 %v6539, 1.442695
  %v6543 = vpow.pop %v6542
  %v6544 = vadd.f32 %v6541, 1.0
  %v6545 = vadd.f32 %v6543, 1.0
  %v6546 = vrcp.pop %v6544
  %v6547 = vmul.f32 %v6544, %v6546
  %v6548 = vsub.f32 1.0, %v6547
  %v6549 = vmul.f32 %v6546, %v6548
  %v6550 = vadd.f32 %v6546, %v6549
  %vm6551 = vweird.f32 %v6544
  %vm6552 = vweird.f32 %v6546
  %vm6553 = vmor %vm6551, %vm6552
  %v6554 = vsel %vm6553, %v6546, %v6550
  %v6555 = vand.u32 2147483647, %v6544
  %vm6556 = vcmp.eq.f32.partialorder %v6555, 8.507059e+37
  %v6557 = vand.u32 %v6544, 2147483648
  %v6558 = vor.u32 1.1754944e-38, %v6557
  %v6559 = vsel %vm6556, %v6558, %v6554
  %v6560 = vmul.f32 1.0, %v6559
  %v6561 = vrcp.pop %v6545
  %v6562 = vmul.f32 %v6545, %v6561
  %v6563 = vsub.f32 1.0, %v6562
  %v6564 = vmul.f32 %v6561, %v6563
  %v6565 = vadd.f32 %v6561, %v6564
  %vm6566 = vweird.f32 %v6545
  %vm6567 = vweird.f32 %v6561
  %vm6568 = vmor %vm6566, %vm6567
  %v6569 = vsel %vm6568, %v6561, %v6565
  %v6570 = vand.u32 2147483647, %v6545
  %vm6571 = vcmp.eq.f32.partialorder %v6570, 8.507059e+37
  %v6572 = vand.u32 %v6545, 2147483648
  %v6573 = vor.u32 1.1754944e-38, %v6572
  %v6574 = vsel %vm6571, %v6573, %v6569
  %v6575 = vmul.f32 1.0, %v6574
  %v6576 = vtanh.pop %v6494
  %v6577 = vtanh.pop %v6498
  %v6578 = vxor.u32 %v6495, 2147483648
  %v6579 = vxor.u32 %v6499, 2147483648
  %v6580 = vmul.f32 %v6578, 1.442695
  %v6581 = vpow.pop %v6580
  %v6582 = vmul.f32 %v6579, 1.442695
  %v6583 = vpow.pop %v6582
  %v6584 = vadd.f32 %v6581, 1.0
  %v6585 = vadd.f32 %v6583, 1.0
  %v6586 = vrcp.pop %v6584
  %v6587 = vmul.f32 %v6584, %v6586
  %v6588 = vsub.f32 1.0, %v6587
  %v6589 = vmul.f32 %v6586, %v6588
  %v6590 = vadd.f32 %v6586, %v6589
  %vm6591 = vweird.f32 %v6584
  %vm6592 = vweird.f32 %v6586
  %vm6593 = vmor %vm6591, %vm6592
  %v6594 = vsel %vm6593, %v6586, %v6590
  %v6595 = vand.u32 2147483647, %v6584
  %vm6596 = vcmp.eq.f32.partialorder %v6595, 8.507059e+37
  %v6597 = vand.u32 %v6584, 2147483648
  %v6598 = vor.u32 1.1754944e-38, %v6597
  %v6599 = vsel %vm6596, %v6598, %v6594
  %v6600 = vmul.f32 1.0, %v6599
  %v6601 = vrcp.pop %v6585
  %v6602 = vmul.f32 %v6585, %v6601
  %v6603 = vsub.f32 1.0, %v6602
  %v6604 = vmul.f32 %v6601, %v6603
  %v6605 = vadd.f32 %v6601, %v6604
  %vm6606 = vweird.f32 %v6585
  %vm6607 = vweird.f32 %v6601
  %vm6608 = vmor %vm6606, %vm6607
  %v6609 = vsel %vm6608, %v6601, %v6605
  %v6610 = vand.u32 2147483647, %v6585
  %vm6611 = vcmp.eq.f32.partialorder %v6610, 8.507059e+37
  %v6612 = vand.u32 %v6585, 2147483648
  %v6613 = vor.u32 1.1754944e-38, %v6612
  %v6614 = vsel %vm6611, %v6613, %v6609
  %v6615 = vmul.f32 1.0, %v6614
  %v6616 = vmul.f32 %v6560, %v6216
  %v6617 = vmul.f32 %v6575, %v6217
  %v6618 = vmul.f32 %v6522, %v6576
  %v6619 = vmul.f32 %v6537, %v6577
  %v6620 = vadd.f32 %v6616, %v6618
  %v6621 = vadd.f32 %v6617, %v6619
  %v6622 = vtanh.pop %v6620
  %v6623 = vtanh.pop %v6621
  %v6624 = vmul.f32 %v6600, %v6622
  %v6625 = vmul.f32 %v6615, %v6623
  %v6626 = vpack.c.bf16 %v6624, %v6624
  %v6627 = vpack.c.bf16 %v6625, %v6625
  %6628 = vst [vmem:[%s2867] sm:$0xf] %v6626
  %6629 = vst [vmem:[%s2867 + $0x4] sm:$0xf] %v6627
  %v6630 = vld [vmem:[%s5] sm:$0xff]
  %v6631 = vld [vmem:[%s5 + $0x8] sm:$0xff]
  %v6632 = vld [vmem:[%s5 + $0x10] sm:$0xff]
  %v6633 = vld [vmem:[%s5 + $0x18] sm:$0xff]
  %v6634 = vld [vmem:[%s5 + $0x20] sm:$0xff]
  %v6635 = vld [vmem:[%s5 + $0x28] sm:$0xff]
  %v6636 = vld [vmem:[%s5 + $0x30] sm:$0xff]
  %v6637 = vld [vmem:[%s5 + $0x38] sm:$0xff]
  %v6638 = vld [vmem:[%s5 + $0x40] sm:$0xff]
  %v6639 = vld [vmem:[%s5 + $0x48] sm:$0xff]
  %v6640 = vld [vmem:[%s5 + $0x50] sm:$0xff]
  %v6641 = vld [vmem:[%s5 + $0x58] sm:$0xff]
  %v6642 = vld [vmem:[%s5 + $0x60] sm:$0xff]
  %v6643 = vld [vmem:[%s5 + $0x68] sm:$0xff]
  %v6644 = vld [vmem:[%s5 + $0x70] sm:$0xff]
  %v6645 = vld [vmem:[%s5 + $0x78] sm:$0xff]
  %v6646 = vld [vmem:[%s5 + $0x80] sm:$0xff]
  %v6647 = vld [vmem:[%s5 + $0x88] sm:$0xff]
  %v6648 = vld [vmem:[%s5 + $0x90] sm:$0xff]
  %v6649 = vld [vmem:[%s5 + $0x98] sm:$0xff]
  %v6650 = vld [vmem:[%s5 + $0xa0] sm:$0xff]
  %v6651 = vld [vmem:[%s5 + $0xa8] sm:$0xff]
  %v6652 = vld [vmem:[%s5 + $0xb0] sm:$0xff]
  %v6653 = vld [vmem:[%s5 + $0xb8] sm:$0xff]
  %v6654 = vld [vmem:[%s5 + $0xc0] sm:$0xff]
  %v6655 = vld [vmem:[%s5 + $0xc8] sm:$0xff]
  %v6656 = vld [vmem:[%s5 + $0xd0] sm:$0xff]
  %v6657 = vld [vmem:[%s5 + $0xd8] sm:$0xff]
  %v6658 = vld [vmem:[%s5 + $0xe0] sm:$0xff]
  %v6659 = vld [vmem:[%s5 + $0xe8] sm:$0xff]
  %v6660 = vld [vmem:[%s5 + $0xf0] sm:$0xff]
  %v6661 = vld [vmem:[%s5 + $0xf8] sm:$0xff]
  %v6664 = vunpack.c.l.b16 %v6626
  %v6665 = vunpack.c.l.b16 %v6627
  %v6666 = vpack.c.b16 %v6665, %v6664
  %v6700 = vunpack.c.l.b16 %v6630
  %v6701 = vunpack.c.h.b16 %v6630
  %v6702 = vunpack.c.l.b16 %v6631
  %v6703 = vunpack.c.h.b16 %v6631
  %v6704 = vunpack.c.l.b16 %v6632
  %v6705 = vunpack.c.h.b16 %v6632
  %v6706 = vunpack.c.l.b16 %v6633
  %v6707 = vunpack.c.h.b16 %v6633
  %v6708 = vunpack.c.l.b16 %v6634
  %v6709 = vunpack.c.h.b16 %v6634
  %v6710 = vunpack.c.l.b16 %v6635
  %v6711 = vunpack.c.h.b16 %v6635
  %v6712 = vunpack.c.l.b16 %v6636
  %v6713 = vunpack.c.h.b16 %v6636
  %v6714 = vunpack.c.l.b16 %v6637
  %v6715 = vunpack.c.h.b16 %v6637
  %v6716 = vunpack.c.l.b16 %v6638
  %v6717 = vunpack.c.h.b16 %v6638
  %v6718 = vunpack.c.l.b16 %v6639
  %v6719 = vunpack.c.h.b16 %v6639
  %v6720 = vunpack.c.l.b16 %v6640
  %v6721 = vunpack.c.h.b16 %v6640
  %v6722 = vunpack.c.l.b16 %v6641
  %v6723 = vunpack.c.h.b16 %v6641
  %v6724 = vunpack.c.l.b16 %v6642
  %v6725 = vunpack.c.h.b16 %v6642
  %v6726 = vunpack.c.l.b16 %v6643
  %v6727 = vunpack.c.h.b16 %v6643
  %v6728 = vunpack.c.l.b16 %v6644
  %v6729 = vunpack.c.h.b16 %v6644
  %v6730 = vunpack.c.l.b16 %v6645
  %v6731 = vunpack.c.h.b16 %v6645
  %v6732 = vunpack.c.l.b16 %v6646
  %v6733 = vunpack.c.h.b16 %v6646
  %v6734 = vunpack.c.l.b16 %v6647
  %v6735 = vunpack.c.h.b16 %v6647
  %v6736 = vunpack.c.l.b16 %v6648
  %v6737 = vunpack.c.h.b16 %v6648
  %v6738 = vunpack.c.l.b16 %v6649
  %v6739 = vunpack.c.h.b16 %v6649
  %v6740 = vunpack.c.l.b16 %v6650
  %v6741 = vunpack.c.h.b16 %v6650
  %v6742 = vunpack.c.l.b16 %v6651
  %v6743 = vunpack.c.h.b16 %v6651
  %v6744 = vunpack.c.l.b16 %v6652
  %v6745 = vunpack.c.h.b16 %v6652
  %v6746 = vunpack.c.l.b16 %v6653
  %v6747 = vunpack.c.h.b16 %v6653
  %v6748 = vunpack.c.l.b16 %v6654
  %v6749 = vunpack.c.h.b16 %v6654
  %v6750 = vunpack.c.l.b16 %v6655
  %v6751 = vunpack.c.h.b16 %v6655
  %v6752 = vunpack.c.l.b16 %v6656
  %v6753 = vunpack.c.h.b16 %v6656
  %v6754 = vunpack.c.l.b16 %v6657
  %v6755 = vunpack.c.h.b16 %v6657
  %v6756 = vunpack.c.l.b16 %v6658
  %v6757 = vunpack.c.h.b16 %v6658
  %v6758 = vunpack.c.l.b16 %v6659
  %v6759 = vunpack.c.h.b16 %v6659
  %v6760 = vunpack.c.l.b16 %v6660
  %v6761 = vunpack.c.h.b16 %v6660
  %v6762 = vunpack.c.l.b16 %v6661
  %v6763 = vunpack.c.h.b16 %v6661
  %v6764 = vpack.c.b16 %v6704, %v6700
  %v6765 = vpack.c.b16 %v6705, %v6701
  %v6766 = vpack.c.b16 %v6706, %v6702
  %v6767 = vpack.c.b16 %v6707, %v6703
  %v6768 = vpack.c.b16 %v6712, %v6708
  %v6769 = vpack.c.b16 %v6713, %v6709
  %v6770 = vpack.c.b16 %v6714, %v6710
  %v6771 = vpack.c.b16 %v6715, %v6711
  %v6772 = vpack.c.b16 %v6720, %v6716
  %v6773 = vpack.c.b16 %v6721, %v6717
  %v6774 = vpack.c.b16 %v6722, %v6718
  %v6775 = vpack.c.b16 %v6723, %v6719
  %v6776 = vpack.c.b16 %v6728, %v6724
  %v6777 = vpack.c.b16 %v6729, %v6725
  %v6778 = vpack.c.b16 %v6730, %v6726
  %v6779 = vpack.c.b16 %v6731, %v6727
  %v6780 = vpack.c.b16 %v6736, %v6732
  %v6781 = vpack.c.b16 %v6737, %v6733
  %v6782 = vpack.c.b16 %v6738, %v6734
  %v6783 = vpack.c.b16 %v6739, %v6735
  %v6784 = vpack.c.b16 %v6744, %v6740
  %v6785 = vpack.c.b16 %v6745, %v6741
  %v6786 = vpack.c.b16 %v6746, %v6742
  %v6787 = vpack.c.b16 %v6747, %v6743
  %v6788 = vpack.c.b16 %v6752, %v6748
  %v6789 = vpack.c.b16 %v6753, %v6749
  %v6790 = vpack.c.b16 %v6754, %v6750
  %v6791 = vpack.c.b16 %v6755, %v6751
  %v6792 = vpack.c.b16 %v6760, %v6756
  %v6793 = vpack.c.b16 %v6761, %v6757
  %v6794 = vpack.c.b16 %v6762, %v6758
  %v6795 = vpack.c.b16 %v6763, %v6759
  %6828 = vmatpush.bf16.msra.mxu0 %v6792
  %6829 = vmatpush.bf16.msra.mxu0 %v6788
  %6830 = vmatpush.bf16.msra.mxu0 %v6784
  %6831 = vmatpush.bf16.msra.mxu0 %v6780
  %6832 = vmatpush.bf16.msra.mxu0 %v6776
  %6833 = vmatpush.bf16.msra.mxu0 %v6772
  %6834 = vmatpush.bf16.msra.mxu0 %v6768
  %6835 = vmatpush.bf16.msra.mxu0 %v6764
  %6836 = vmatmul.bf16.gmra.mxu0 %v6666
  %v6837 = vpop.f32.mrf.mxu0
  %v6838 = vadd.f32 0.0, %v6837
  %v6839 = vpop.f32.mrf.mxu0
  %v6840 = vadd.f32 0.0, %v6839
  %6841 = vdwg.mxu0
  %6842 = vmatpush.bf16.msra.mxu0 %v6793
  %6843 = vmatpush.bf16.msra.mxu0 %v6789
  %6844 = vmatpush.bf16.msra.mxu0 %v6785
  %6845 = vmatpush.bf16.msra.mxu0 %v6781
  %6846 = vmatpush.bf16.msra.mxu0 %v6777
  %6847 = vmatpush.bf16.msra.mxu0 %v6773
  %6848 = vmatpush.bf16.msra.mxu0 %v6769
  %6849 = vmatpush.bf16.msra.mxu0 %v6765
  %6850 = vmatmul.bf16.gmra.mxu0 %v6666
  %v6851 = vpop.f32.mrf.mxu0
  %v6852 = vadd.f32 0.0, %v6851
  %v6853 = vpop.f32.mrf.mxu0
  %v6854 = vadd.f32 0.0, %v6853
  %6855 = vdwg.mxu0
  %6856 = vmatpush.bf16.msra.mxu0 %v6794
  %6857 = vmatpush.bf16.msra.mxu0 %v6790
  %6858 = vmatpush.bf16.msra.mxu0 %v6786
  %6859 = vmatpush.bf16.msra.mxu0 %v6782
  %6860 = vmatpush.bf16.msra.mxu0 %v6778
  %6861 = vmatpush.bf16.msra.mxu0 %v6774
  %6862 = vmatpush.bf16.msra.mxu0 %v6770
  %6863 = vmatpush.bf16.msra.mxu0 %v6766
  %6864 = vmatmul.bf16.gmra.mxu0 %v6666
  %v6865 = vpop.f32.mrf.mxu0
  %v6866 = vadd.f32 0.0, %v6865
  %v6867 = vpop.f32.mrf.mxu0
  %v6868 = vadd.f32 0.0, %v6867
  %6869 = vdwg.mxu0
  %6870 = vmatpush.bf16.msra.mxu0 %v6795
  %6871 = vmatpush.bf16.msra.mxu0 %v6791
  %6872 = vmatpush.bf16.msra.mxu0 %v6787
  %6873 = vmatpush.bf16.msra.mxu0 %v6783
  %6874 = vmatpush.bf16.msra.mxu0 %v6779
  %6875 = vmatpush.bf16.msra.mxu0 %v6775
  %6876 = vmatpush.bf16.msra.mxu0 %v6771
  %6877 = vmatpush.bf16.msra.mxu0 %v6767
  %6878 = vmatmul.bf16.gmra.mxu0 %v6666
  %v6879 = vpop.f32.mrf.mxu0
  %v6880 = vadd.f32 0.0, %v6879
  %v6881 = vpop.f32.mrf.mxu0
  %v6882 = vadd.f32 0.0, %v6881
  %6883 = vdwg.mxu0
  %v6884 = vld [vmem:[%s3126] sm:$0xff]
  %v6885 = vld [vmem:[%s3126 + $0x8] sm:$0xff]
  %v6886 = vld [vmem:[%s3126 + $0x10] sm:$0xff]
  %v6887 = vld [vmem:[%s3126 + $0x18] sm:$0xff]
  %v6888 = vunpack.c.l.bf16 %v6884
  %v6889 = vunpack.c.h.bf16 %v6884
  %v6890 = vunpack.c.l.bf16 %v6885
  %v6891 = vunpack.c.h.bf16 %v6885
  %v6892 = vunpack.c.l.bf16 %v6886
  %v6893 = vunpack.c.h.bf16 %v6886
  %v6894 = vunpack.c.l.bf16 %v6887
  %v6895 = vunpack.c.h.bf16 %v6887
  %v6896 = vadd.f32 %v6888, %v6838
  %v6897 = vadd.f32 %v6889, %v6852
  %v6898 = vadd.f32 %v6890, %v6866
  %v6899 = vadd.f32 %v6891, %v6880
  %v6900 = vadd.f32 %v6892, %v6840
  %v6901 = vadd.f32 %v6893, %v6854
  %v6902 = vadd.f32 %v6894, %v6868
  %v6903 = vadd.f32 %v6895, %v6882
  %v6904 = vxor.u32 %v6896, 2147483648
  %v6905 = vxor.u32 %v6900, 2147483648
  %v6906 = vmul.f32 %v6904, 1.442695
  %v6907 = vpow.pop %v6906
  %v6908 = vmul.f32 %v6905, 1.442695
  %v6909 = vpow.pop %v6908
  %v6910 = vadd.f32 %v6907, 1.0
  %v6911 = vadd.f32 %v6909, 1.0
  %v6912 = vrcp.pop %v6910
  %v6913 = vmul.f32 %v6910, %v6912
  %v6914 = vsub.f32 1.0, %v6913
  %v6915 = vmul.f32 %v6912, %v6914
  %v6916 = vadd.f32 %v6912, %v6915
  %vm6917 = vweird.f32 %v6910
  %vm6918 = vweird.f32 %v6912
  %vm6919 = vmor %vm6917, %vm6918
  %v6920 = vsel %vm6919, %v6912, %v6916
  %v6921 = vand.u32 2147483647, %v6910
  %vm6922 = vcmp.eq.f32.partialorder %v6921, 8.507059e+37
  %v6923 = vand.u32 %v6910, 2147483648
  %v6924 = vor.u32 1.1754944e-38, %v6923
  %v6925 = vsel %vm6922, %v6924, %v6920
  %v6926 = vmul.f32 1.0, %v6925
  %v6927 = vrcp.pop %v6911
  %v6928 = vmul.f32 %v6911, %v6927
  %v6929 = vsub.f32 1.0, %v6928
  %v6930 = vmul.f32 %v6927, %v6929
  %v6931 = vadd.f32 %v6927, %v6930
  %vm6932 = vweird.f32 %v6911
  %vm6933 = vweird.f32 %v6927
  %vm6934 = vmor %vm6932, %vm6933
  %v6935 = vsel %vm6934, %v6927, %v6931
  %v6936 = vand.u32 2147483647, %v6911
  %vm6937 = vcmp.eq.f32.partialorder %v6936, 8.507059e+37
  %v6938 = vand.u32 %v6911, 2147483648
  %v6939 = vor.u32 1.1754944e-38, %v6938
  %v6940 = vsel %vm6937, %v6939, %v6935
  %v6941 = vmul.f32 1.0, %v6940
  %v6942 = vxor.u32 %v6897, 2147483648
  %v6943 = vxor.u32 %v6901, 2147483648
  %v6944 = vmul.f32 %v6942, 1.442695
  %v6945 = vpow.pop %v6944
  %v6946 = vmul.f32 %v6943, 1.442695
  %v6947 = vpow.pop %v6946
  %v6948 = vadd.f32 %v6945, 1.0
  %v6949 = vadd.f32 %v6947, 1.0
  %v6950 = vrcp.pop %v6948
  %v6951 = vmul.f32 %v6948, %v6950
  %v6952 = vsub.f32 1.0, %v6951
  %v6953 = vmul.f32 %v6950, %v6952
  %v6954 = vadd.f32 %v6950, %v6953
  %vm6955 = vweird.f32 %v6948
  %vm6956 = vweird.f32 %v6950
  %vm6957 = vmor %vm6955, %vm6956
  %v6958 = vsel %vm6957, %v6950, %v6954
  %v6959 = vand.u32 2147483647, %v6948
  %vm6960 = vcmp.eq.f32.partialorder %v6959, 8.507059e+37
  %v6961 = vand.u32 %v6948, 2147483648
  %v6962 = vor.u32 1.1754944e-38, %v6961
  %v6963 = vsel %vm6960, %v6962, %v6958
  %v6964 = vmul.f32 1.0, %v6963
  %v6965 = vrcp.pop %v6949
  %v6966 = vmul.f32 %v6949, %v6965
  %v6967 = vsub.f32 1.0, %v6966
  %v6968 = vmul.f32 %v6965, %v6967
  %v6969 = vadd.f32 %v6965, %v6968
  %vm6970 = vweird.f32 %v6949
  %vm6971 = vweird.f32 %v6965
  %vm6972 = vmor %vm6970, %vm6971
  %v6973 = vsel %vm6972, %v6965, %v6969
  %v6974 = vand.u32 2147483647, %v6949
  %vm6975 = vcmp.eq.f32.partialorder %v6974, 8.507059e+37
  %v6976 = vand.u32 %v6949, 2147483648
  %v6977 = vor.u32 1.1754944e-38, %v6976
  %v6978 = vsel %vm6975, %v6977, %v6973
  %v6979 = vmul.f32 1.0, %v6978
  %v6980 = vtanh.pop %v6898
  %v6981 = vtanh.pop %v6902
  %v6982 = vxor.u32 %v6899, 2147483648
  %v6983 = vxor.u32 %v6903, 2147483648
  %v6984 = vmul.f32 %v6982, 1.442695
  %v6985 = vpow.pop %v6984
  %v6986 = vmul.f32 %v6983, 1.442695
  %v6987 = vpow.pop %v6986
  %v6988 = vadd.f32 %v6985, 1.0
  %v6989 = vadd.f32 %v6987, 1.0
  %v6990 = vrcp.pop %v6988
  %v6991 = vmul.f32 %v6988, %v6990
  %v6992 = vsub.f32 1.0, %v6991
  %v6993 = vmul.f32 %v6990, %v6992
  %v6994 = vadd.f32 %v6990, %v6993
  %vm6995 = vweird.f32 %v6988
  %vm6996 = vweird.f32 %v6990
  %vm6997 = vmor %vm6995, %vm6996
  %v6998 = vsel %vm6997, %v6990, %v6994
  %v6999 = vand.u32 2147483647, %v6988
  %vm7000 = vcmp.eq.f32.partialorder %v6999, 8.507059e+37
  %v7001 = vand.u32 %v6988, 2147483648
  %v7002 = vor.u32 1.1754944e-38, %v7001
  %v7003 = vsel %vm7000, %v7002, %v6998
  %v7004 = vmul.f32 1.0, %v7003
  %v7005 = vrcp.pop %v6989
  %v7006 = vmul.f32 %v6989, %v7005
  %v7007 = vsub.f32 1.0, %v7006
  %v7008 = vmul.f32 %v7005, %v7007
  %v7009 = vadd.f32 %v7005, %v7008
  %vm7010 = vweird.f32 %v6989
  %vm7011 = vweird.f32 %v7005
  %vm7012 = vmor %vm7010, %vm7011
  %v7013 = vsel %vm7012, %v7005, %v7009
  %v7014 = vand.u32 2147483647, %v6989
  %vm7015 = vcmp.eq.f32.partialorder %v7014, 8.507059e+37
  %v7016 = vand.u32 %v6989, 2147483648
  %v7017 = vor.u32 1.1754944e-38, %v7016
  %v7018 = vsel %vm7015, %v7017, %v7013
  %v7019 = vmul.f32 1.0, %v7018
  %v7020 = vmul.f32 %v6964, %v6620
  %v7021 = vmul.f32 %v6979, %v6621
  %v7022 = vmul.f32 %v6926, %v6980
  %v7023 = vmul.f32 %v6941, %v6981
  %v7024 = vadd.f32 %v7020, %v7022
  %v7025 = vadd.f32 %v7021, %v7023
  %v7026 = vtanh.pop %v7024
  %v7027 = vtanh.pop %v7025
  %v7028 = vmul.f32 %v7004, %v7026
  %v7029 = vmul.f32 %v7019, %v7027
  %v7030 = vpack.c.bf16 %v7028, %v7028
  %v7031 = vpack.c.bf16 %v7029, %v7029
  %7032 = vst [vmem:[%s3275] sm:$0xf] %v7030
  %7033 = vst [vmem:[%s3275 + $0x4] sm:$0xf] %v7031
  %v7034 = vld [vmem:[%s5] sm:$0xff]
  %v7035 = vld [vmem:[%s5 + $0x8] sm:$0xff]
  %v7036 = vld [vmem:[%s5 + $0x10] sm:$0xff]
  %v7037 = vld [vmem:[%s5 + $0x18] sm:$0xff]
  %v7038 = vld [vmem:[%s5 + $0x20] sm:$0xff]
  %v7039 = vld [vmem:[%s5 + $0x28] sm:$0xff]
  %v7040 = vld [vmem:[%s5 + $0x30] sm:$0xff]
  %v7041 = vld [vmem:[%s5 + $0x38] sm:$0xff]
  %v7042 = vld [vmem:[%s5 + $0x40] sm:$0xff]
  %v7043 = vld [vmem:[%s5 + $0x48] sm:$0xff]
  %v7044 = vld [vmem:[%s5 + $0x50] sm:$0xff]
  %v7045 = vld [vmem:[%s5 + $0x58] sm:$0xff]
  %v7046 = vld [vmem:[%s5 + $0x60] sm:$0xff]
  %v7047 = vld [vmem:[%s5 + $0x68] sm:$0xff]
  %v7048 = vld [vmem:[%s5 + $0x70] sm:$0xff]
  %v7049 = vld [vmem:[%s5 + $0x78] sm:$0xff]
  %v7050 = vld [vmem:[%s5 + $0x80] sm:$0xff]
  %v7051 = vld [vmem:[%s5 + $0x88] sm:$0xff]
  %v7052 = vld [vmem:[%s5 + $0x90] sm:$0xff]
  %v7053 = vld [vmem:[%s5 + $0x98] sm:$0xff]
  %v7054 = vld [vmem:[%s5 + $0xa0] sm:$0xff]
  %v7055 = vld [vmem:[%s5 + $0xa8] sm:$0xff]
  %v7056 = vld [vmem:[%s5 + $0xb0] sm:$0xff]
  %v7057 = vld [vmem:[%s5 + $0xb8] sm:$0xff]
  %v7058 = vld [vmem:[%s5 + $0xc0] sm:$0xff]
  %v7059 = vld [vmem:[%s5 + $0xc8] sm:$0xff]
  %v7060 = vld [vmem:[%s5 + $0xd0] sm:$0xff]
  %v7061 = vld [vmem:[%s5 + $0xd8] sm:$0xff]
  %v7062 = vld [vmem:[%s5 + $0xe0] sm:$0xff]
  %v7063 = vld [vmem:[%s5 + $0xe8] sm:$0xff]
  %v7064 = vld [vmem:[%s5 + $0xf0] sm:$0xff]
  %v7065 = vld [vmem:[%s5 + $0xf8] sm:$0xff]
  %v7068 = vunpack.c.l.b16 %v7030
  %v7069 = vunpack.c.l.b16 %v7031
  %v7070 = vpack.c.b16 %v7069, %v7068
  %v7104 = vunpack.c.l.b16 %v7034
  %v7105 = vunpack.c.h.b16 %v7034
  %v7106 = vunpack.c.l.b16 %v7035
  %v7107 = vunpack.c.h.b16 %v7035
  %v7108 = vunpack.c.l.b16 %v7036
  %v7109 = vunpack.c.h.b16 %v7036
  %v7110 = vunpack.c.l.b16 %v7037
  %v7111 = vunpack.c.h.b16 %v7037
  %v7112 = vunpack.c.l.b16 %v7038
  %v7113 = vunpack.c.h.b16 %v7038
  %v7114 = vunpack.c.l.b16 %v7039
  %v7115 = vunpack.c.h.b16 %v7039
  %v7116 = vunpack.c.l.b16 %v7040
  %v7117 = vunpack.c.h.b16 %v7040
  %v7118 = vunpack.c.l.b16 %v7041
  %v7119 = vunpack.c.h.b16 %v7041
  %v7120 = vunpack.c.l.b16 %v7042
  %v7121 = vunpack.c.h.b16 %v7042
  %v7122 = vunpack.c.l.b16 %v7043
  %v7123 = vunpack.c.h.b16 %v7043
  %v7124 = vunpack.c.l.b16 %v7044
  %v7125 = vunpack.c.h.b16 %v7044
  %v7126 = vunpack.c.l.b16 %v7045
  %v7127 = vunpack.c.h.b16 %v7045
  %v7128 = vunpack.c.l.b16 %v7046
  %v7129 = vunpack.c.h.b16 %v7046
  %v7130 = vunpack.c.l.b16 %v7047
  %v7131 = vunpack.c.h.b16 %v7047
  %v7132 = vunpack.c.l.b16 %v7048
  %v7133 = vunpack.c.h.b16 %v7048
  %v7134 = vunpack.c.l.b16 %v7049
  %v7135 = vunpack.c.h.b16 %v7049
  %v7136 = vunpack.c.l.b16 %v7050
  %v7137 = vunpack.c.h.b16 %v7050
  %v7138 = vunpack.c.l.b16 %v7051
  %v7139 = vunpack.c.h.b16 %v7051
  %v7140 = vunpack.c.l.b16 %v7052
  %v7141 = vunpack.c.h.b16 %v7052
  %v7142 = vunpack.c.l.b16 %v7053
  %v7143 = vunpack.c.h.b16 %v7053
  %v7144 = vunpack.c.l.b16 %v7054
  %v7145 = vunpack.c.h.b16 %v7054
  %v7146 = vunpack.c.l.b16 %v7055
  %v7147 = vunpack.c.h.b16 %v7055
  %v7148 = vunpack.c.l.b16 %v7056
  %v7149 = vunpack.c.h.b16 %v7056
  %v7150 = vunpack.c.l.b16 %v7057
  %v7151 = vunpack.c.h.b16 %v7057
  %v7152 = vunpack.c.l.b16 %v7058
  %v7153 = vunpack.c.h.b16 %v7058
  %v7154 = vunpack.c.l.b16 %v7059
  %v7155 = vunpack.c.h.b16 %v7059
  %v7156 = vunpack.c.l.b16 %v7060
  %v7157 = vunpack.c.h.b16 %v7060
  %v7158 = vunpack.c.l.b16 %v7061
  %v7159 = vunpack.c.h.b16 %v7061
  %v7160 = vunpack.c.l.b16 %v7062
  %v7161 = vunpack.c.h.b16 %v7062
  %v7162 = vunpack.c.l.b16 %v7063
  %v7163 = vunpack.c.h.b16 %v7063
  %v7164 = vunpack.c.l.b16 %v7064
  %v7165 = vunpack.c.h.b16 %v7064
  %v7166 = vunpack.c.l.b16 %v7065
  %v7167 = vunpack.c.h.b16 %v7065
  %v7168 = vpack.c.b16 %v7108, %v7104
  %v7169 = vpack.c.b16 %v7109, %v7105
  %v7170 = vpack.c.b16 %v7110, %v7106
  %v7171 = vpack.c.b16 %v7111, %v7107
  %v7172 = vpack.c.b16 %v7116, %v7112
  %v7173 = vpack.c.b16 %v7117, %v7113
  %v7174 = vpack.c.b16 %v7118, %v7114
  %v7175 = vpack.c.b16 %v7119, %v7115
  %v7176 = vpack.c.b16 %v7124, %v7120
  %v7177 = vpack.c.b16 %v7125, %v7121
  %v7178 = vpack.c.b16 %v7126, %v7122
  %v7179 = vpack.c.b16 %v7127, %v7123
  %v7180 = vpack.c.b16 %v7132, %v7128
  %v7181 = vpack.c.b16 %v7133, %v7129
  %v7182 = vpack.c.b16 %v7134, %v7130
  %v7183 = vpack.c.b16 %v7135, %v7131
  %v7184 = vpack.c.b16 %v7140, %v7136
  %v7185 = vpack.c.b16 %v7141, %v7137
  %v7186 = vpack.c.b16 %v7142, %v7138
  %v7187 = vpack.c.b16 %v7143, %v7139
  %v7188 = vpack.c.b16 %v7148, %v7144
  %v7189 = vpack.c.b16 %v7149, %v7145
  %v7190 = vpack.c.b16 %v7150, %v7146
  %v7191 = vpack.c.b16 %v7151, %v7147
  %v7192 = vpack.c.b16 %v7156, %v7152
  %v7193 = vpack.c.b16 %v7157, %v7153
  %v7194 = vpack.c.b16 %v7158, %v7154
  %v7195 = vpack.c.b16 %v7159, %v7155
  %v7196 = vpack.c.b16 %v7164, %v7160
  %v7197 = vpack.c.b16 %v7165, %v7161
  %v7198 = vpack.c.b16 %v7166, %v7162
  %v7199 = vpack.c.b16 %v7167, %v7163
  %7232 = vmatpush.bf16.msra.mxu0 %v7196
  %7233 = vmatpush.bf16.msra.mxu0 %v7192
  %7234 = vmatpush.bf16.msra.mxu0 %v7188
  %7235 = vmatpush.bf16.msra.mxu0 %v7184
  %7236 = vmatpush.bf16.msra.mxu0 %v7180
  %7237 = vmatpush.bf16.msra.mxu0 %v7176
  %7238 = vmatpush.bf16.msra.mxu0 %v7172
  %7239 = vmatpush.bf16.msra.mxu0 %v7168
  %7240 = vmatmul.bf16.gmra.mxu0 %v7070
  %v7241 = vpop.f32.mrf.mxu0
  %v7242 = vadd.f32 0.0, %v7241
  %v7243 = vpop.f32.mrf.mxu0
  %v7244 = vadd.f32 0.0, %v7243
  %7245 = vdwg.mxu0
  %7246 = vmatpush.bf16.msra.mxu0 %v7197
  %7247 = vmatpush.bf16.msra.mxu0 %v7193
  %7248 = vmatpush.bf16.msra.mxu0 %v7189
  %7249 = vmatpush.bf16.msra.mxu0 %v7185
  %7250 = vmatpush.bf16.msra.mxu0 %v7181
  %7251 = vmatpush.bf16.msra.mxu0 %v7177
  %7252 = vmatpush.bf16.msra.mxu0 %v7173
  %7253 = vmatpush.bf16.msra.mxu0 %v7169
  %7254 = vmatmul.bf16.gmra.mxu0 %v7070
  %v7255 = vpop.f32.mrf.mxu0
  %v7256 = vadd.f32 0.0, %v7255
  %v7257 = vpop.f32.mrf.mxu0
  %v7258 = vadd.f32 0.0, %v7257
  %7259 = vdwg.mxu0
  %7260 = vmatpush.bf16.msra.mxu0 %v7198
  %7261 = vmatpush.bf16.msra.mxu0 %v7194
  %7262 = vmatpush.bf16.msra.mxu0 %v7190
  %7263 = vmatpush.bf16.msra.mxu0 %v7186
  %7264 = vmatpush.bf16.msra.mxu0 %v7182
  %7265 = vmatpush.bf16.msra.mxu0 %v7178
  %7266 = vmatpush.bf16.msra.mxu0 %v7174
  %7267 = vmatpush.bf16.msra.mxu0 %v7170
  %7268 = vmatmul.bf16.gmra.mxu0 %v7070
  %v7269 = vpop.f32.mrf.mxu0
  %v7270 = vadd.f32 0.0, %v7269
  %v7271 = vpop.f32.mrf.mxu0
  %v7272 = vadd.f32 0.0, %v7271
  %7273 = vdwg.mxu0
  %7274 = vmatpush.bf16.msra.mxu0 %v7199
  %7275 = vmatpush.bf16.msra.mxu0 %v7195
  %7276 = vmatpush.bf16.msra.mxu0 %v7191
  %7277 = vmatpush.bf16.msra.mxu0 %v7187
  %7278 = vmatpush.bf16.msra.mxu0 %v7183
  %7279 = vmatpush.bf16.msra.mxu0 %v7179
  %7280 = vmatpush.bf16.msra.mxu0 %v7175
  %7281 = vmatpush.bf16.msra.mxu0 %v7171
  %7282 = vmatmul.bf16.gmra.mxu0 %v7070
  %v7283 = vpop.f32.mrf.mxu0
  %v7284 = vadd.f32 0.0, %v7283
  %v7285 = vpop.f32.mrf.mxu0
  %v7286 = vadd.f32 0.0, %v7285
  %7287 = vdwg.mxu0
  %v7288 = vld [vmem:[%s3534] sm:$0xff]
  %v7289 = vld [vmem:[%s3534 + $0x8] sm:$0xff]
  %v7290 = vld [vmem:[%s3534 + $0x10] sm:$0xff]
  %v7291 = vld [vmem:[%s3534 + $0x18] sm:$0xff]
  %v7292 = vunpack.c.l.bf16 %v7288
  %v7293 = vunpack.c.h.bf16 %v7288
  %v7294 = vunpack.c.l.bf16 %v7289
  %v7295 = vunpack.c.h.bf16 %v7289
  %v7296 = vunpack.c.l.bf16 %v7290
  %v7297 = vunpack.c.h.bf16 %v7290
  %v7298 = vunpack.c.l.bf16 %v7291
  %v7299 = vunpack.c.h.bf16 %v7291
  %v7300 = vadd.f32 %v7292, %v7242
  %v7301 = vadd.f32 %v7293, %v7256
  %v7302 = vadd.f32 %v7294, %v7270
  %v7303 = vadd.f32 %v7295, %v7284
  %v7304 = vadd.f32 %v7296, %v7244
  %v7305 = vadd.f32 %v7297, %v7258
  %v7306 = vadd.f32 %v7298, %v7272
  %v7307 = vadd.f32 %v7299, %v7286
  %v7308 = vxor.u32 %v7300, 2147483648
  %v7309 = vxor.u32 %v7304, 2147483648
  %v7310 = vmul.f32 %v7308, 1.442695
  %v7311 = vpow.pop %v7310
  %v7312 = vmul.f32 %v7309, 1.442695
  %v7313 = vpow.pop %v7312
  %v7314 = vadd.f32 %v7311, 1.0
  %v7315 = vadd.f32 %v7313, 1.0
  %v7316 = vrcp.pop %v7314
  %v7317 = vmul.f32 %v7314, %v7316
  %v7318 = vsub.f32 1.0, %v7317
  %v7319 = vmul.f32 %v7316, %v7318
  %v7320 = vadd.f32 %v7316, %v7319
  %vm7321 = vweird.f32 %v7314
  %vm7322 = vweird.f32 %v7316
  %vm7323 = vmor %vm7321, %vm7322
  %v7324 = vsel %vm7323, %v7316, %v7320
  %v7325 = vand.u32 2147483647, %v7314
  %vm7326 = vcmp.eq.f32.partialorder %v7325, 8.507059e+37
  %v7327 = vand.u32 %v7314, 2147483648
  %v7328 = vor.u32 1.1754944e-38, %v7327
  %v7329 = vsel %vm7326, %v7328, %v7324
  %v7330 = vmul.f32 1.0, %v7329
  %v7331 = vrcp.pop %v7315
  %v7332 = vmul.f32 %v7315, %v7331
  %v7333 = vsub.f32 1.0, %v7332
  %v7334 = vmul.f32 %v7331, %v7333
  %v7335 = vadd.f32 %v7331, %v7334
  %vm7336 = vweird.f32 %v7315
  %vm7337 = vweird.f32 %v7331
  %vm7338 = vmor %vm7336, %vm7337
  %v7339 = vsel %vm7338, %v7331, %v7335
  %v7340 = vand.u32 2147483647, %v7315
  %vm7341 = vcmp.eq.f32.partialorder %v7340, 8.507059e+37
  %v7342 = vand.u32 %v7315, 2147483648
  %v7343 = vor.u32 1.1754944e-38, %v7342
  %v7344 = vsel %vm7341, %v7343, %v7339
  %v7345 = vmul.f32 1.0, %v7344
  %v7346 = vxor.u32 %v7301, 2147483648
  %v7347 = vxor.u32 %v7305, 2147483648
  %v7348 = vmul.f32 %v7346, 1.442695
  %v7349 = vpow.pop %v7348
  %v7350 = vmul.f32 %v7347, 1.442695
  %v7351 = vpow.pop %v7350
  %v7352 = vadd.f32 %v7349, 1.0
  %v7353 = vadd.f32 %v7351, 1.0
  %v7354 = vrcp.pop %v7352
  %v7355 = vmul.f32 %v7352, %v7354
  %v7356 = vsub.f32 1.0, %v7355
  %v7357 = vmul.f32 %v7354, %v7356
  %v7358 = vadd.f32 %v7354, %v7357
  %vm7359 = vweird.f32 %v7352
  %vm7360 = vweird.f32 %v7354
  %vm7361 = vmor %vm7359, %vm7360
  %v7362 = vsel %vm7361, %v7354, %v7358
  %v7363 = vand.u32 2147483647, %v7352
  %vm7364 = vcmp.eq.f32.partialorder %v7363, 8.507059e+37
  %v7365 = vand.u32 %v7352, 2147483648
  %v7366 = vor.u32 1.1754944e-38, %v7365
  %v7367 = vsel %vm7364, %v7366, %v7362
  %v7368 = vmul.f32 1.0, %v7367
  %v7369 = vrcp.pop %v7353
  %v7370 = vmul.f32 %v7353, %v7369
  %v7371 = vsub.f32 1.0, %v7370
  %v7372 = vmul.f32 %v7369, %v7371
  %v7373 = vadd.f32 %v7369, %v7372
  %vm7374 = vweird.f32 %v7353
  %vm7375 = vweird.f32 %v7369
  %vm7376 = vmor %vm7374, %vm7375
  %v7377 = vsel %vm7376, %v7369, %v7373
  %v7378 = vand.u32 2147483647, %v7353
  %vm7379 = vcmp.eq.f32.partialorder %v7378, 8.507059e+37
  %v7380 = vand.u32 %v7353, 2147483648
  %v7381 = vor.u32 1.1754944e-38, %v7380
  %v7382 = vsel %vm7379, %v7381, %v7377
  %v7383 = vmul.f32 1.0, %v7382
  %v7384 = vtanh.pop %v7302
  %v7385 = vtanh.pop %v7306
  %v7386 = vxor.u32 %v7303, 2147483648
  %v7387 = vxor.u32 %v7307, 2147483648
  %v7388 = vmul.f32 %v7386, 1.442695
  %v7389 = vpow.pop %v7388
  %v7390 = vmul.f32 %v7387, 1.442695
  %v7391 = vpow.pop %v7390
  %v7392 = vadd.f32 %v7389, 1.0
  %v7393 = vadd.f32 %v7391, 1.0
  %v7394 = vrcp.pop %v7392
  %v7395 = vmul.f32 %v7392, %v7394
  %v7396 = vsub.f32 1.0, %v7395
  %v7397 = vmul.f32 %v7394, %v7396
  %v7398 = vadd.f32 %v7394, %v7397
  %vm7399 = vweird.f32 %v7392
  %vm7400 = vweird.f32 %v7394
  %vm7401 = vmor %vm7399, %vm7400
  %v7402 = vsel %vm7401, %v7394, %v7398
  %v7403 = vand.u32 2147483647, %v7392
  %vm7404 = vcmp.eq.f32.partialorder %v7403, 8.507059e+37
  %v7405 = vand.u32 %v7392, 2147483648
  %v7406 = vor.u32 1.1754944e-38, %v7405
  %v7407 = vsel %vm7404, %v7406, %v7402
  %v7408 = vmul.f32 1.0, %v7407
  %v7409 = vrcp.pop %v7393
  %v7410 = vmul.f32 %v7393, %v7409
  %v7411 = vsub.f32 1.0, %v7410
  %v7412 = vmul.f32 %v7409, %v7411
  %v7413 = vadd.f32 %v7409, %v7412
  %vm7414 = vweird.f32 %v7393
  %vm7415 = vweird.f32 %v7409
  %vm7416 = vmor %vm7414, %vm7415
  %v7417 = vsel %vm7416, %v7409, %v7413
  %v7418 = vand.u32 2147483647, %v7393
  %vm7419 = vcmp.eq.f32.partialorder %v7418, 8.507059e+37
  %v7420 = vand.u32 %v7393, 2147483648
  %v7421 = vor.u32 1.1754944e-38, %v7420
  %v7422 = vsel %vm7419, %v7421, %v7417
  %v7423 = vmul.f32 1.0, %v7422
  %v7424 = vmul.f32 %v7368, %v7024
  %v7425 = vmul.f32 %v7383, %v7025
  %v7426 = vmul.f32 %v7330, %v7384
  %v7427 = vmul.f32 %v7345, %v7385
  %v7428 = vadd.f32 %v7424, %v7426
  %v7429 = vadd.f32 %v7425, %v7427
  %v7430 = vtanh.pop %v7428
  %v7431 = vtanh.pop %v7429
  %v7432 = vmul.f32 %v7408, %v7430
  %v7433 = vmul.f32 %v7423, %v7431
  %v7434 = vpack.c.bf16 %v7432, %v7432
  %v7435 = vpack.c.bf16 %v7433, %v7433
  %7436 = vst [vmem:[%s3683] sm:$0xf] %v7434
  %7437 = vst [vmem:[%s3683 + $0x4] sm:$0xf] %v7435
  %v7438 = vld [vmem:[#allocation2] sm:$0xf]
  %v7439 = vld [vmem:[#allocation2 + $0x4] sm:$0xf]
  %v7440 = vld [vmem:[#allocation2 + $0x8] sm:$0xf]
  %v7441 = vld [vmem:[#allocation2 + $0xc] sm:$0xf]
  %v7442 = vld [vmem:[#allocation2 + $0x10] sm:$0xf]
  %v7443 = vld [vmem:[#allocation2 + $0x14] sm:$0xf]
  %v7444 = vld [vmem:[#allocation2 + $0x18] sm:$0xf]
  %v7445 = vld [vmem:[#allocation2 + $0x1c] sm:$0xf]
  %v7446 = vld [vmem:[#allocation2 + $0x20] sm:$0xf]
  %v7447 = vld [vmem:[#allocation2 + $0x24] sm:$0xf]
  %v7448 = vld [vmem:[#allocation2 + $0x28] sm:$0xf]
  %v7449 = vld [vmem:[#allocation2 + $0x2c] sm:$0xf]
  %v7450 = vld [vmem:[#allocation2 + $0x30] sm:$0xf]
  %v7451 = vld [vmem:[#allocation2 + $0x34] sm:$0xf]
  %v7452 = vld [vmem:[#allocation2 + $0x38] sm:$0xf]
  %v7453 = vld [vmem:[#allocation2 + $0x3c] sm:$0xf]
  %v7454 = vld [vmem:[%s7] sm:$0xf]
  %v7455 = vld [vmem:[%s7 + $0x4] sm:$0xf]
  %v7456 = vld [vmem:[%s7 + $0x8] sm:$0xf]
  %v7457 = vld [vmem:[%s7 + $0xc] sm:$0xf]
  %v7458 = vld [vmem:[%s7 + $0x10] sm:$0xf]
  %v7459 = vld [vmem:[%s7 + $0x14] sm:$0xf]
  %v7460 = vld [vmem:[%s7 + $0x18] sm:$0xf]
  %v7461 = vld [vmem:[%s7 + $0x1c] sm:$0xf]
  %v7462 = vld [vmem:[%s7 + $0x20] sm:$0xf]
  %v7463 = vld [vmem:[%s7 + $0x24] sm:$0xf]
  %v7464 = vld [vmem:[%s7 + $0x28] sm:$0xf]
  %v7465 = vld [vmem:[%s7 + $0x2c] sm:$0xf]
  %v7466 = vld [vmem:[%s7 + $0x30] sm:$0xf]
  %v7467 = vld [vmem:[%s7 + $0x34] sm:$0xf]
  %v7468 = vld [vmem:[%s7 + $0x38] sm:$0xf]
  %v7469 = vld [vmem:[%s7 + $0x3c] sm:$0xf]
  %v7470 = vld [vmem:[%s8] sm:$0x1]
  %v7472 = vperm.slane %v7470, 0
  %v7490 = vunpack.c.l.b16 %v7438
  %v7491 = vunpack.c.l.b16 %v7439
  %v7492 = vunpack.c.l.b16 %v7440
  %v7493 = vunpack.c.l.b16 %v7441
  %v7494 = vunpack.c.l.b16 %v7442
  %v7495 = vunpack.c.l.b16 %v7443
  %v7496 = vunpack.c.l.b16 %v7444
  %v7497 = vunpack.c.l.b16 %v7445
  %v7498 = vunpack.c.l.b16 %v7446
  %v7499 = vunpack.c.l.b16 %v7447
  %v7500 = vunpack.c.l.b16 %v7448
  %v7501 = vunpack.c.l.b16 %v7449
  %v7502 = vunpack.c.l.b16 %v7450
  %v7503 = vunpack.c.l.b16 %v7451
  %v7504 = vunpack.c.l.b16 %v7452
  %v7505 = vunpack.c.l.b16 %v7453
  %v7506 = vpack.c.b16 %v7491, %v7490
  %v7507 = vpack.c.b16 %v7493, %v7492
  %v7508 = vpack.c.b16 %v7495, %v7494
  %v7509 = vpack.c.b16 %v7497, %v7496
  %v7510 = vpack.c.b16 %v7499, %v7498
  %v7511 = vpack.c.b16 %v7501, %v7500
  %v7512 = vpack.c.b16 %v7503, %v7502
  %v7513 = vpack.c.b16 %v7505, %v7504
  %v7538 = vunpack.c.l.b16 %v7454
  %v7539 = vunpack.c.l.b16 %v7455
  %v7540 = vunpack.c.l.b16 %v7456
  %v7541 = vunpack.c.l.b16 %v7457
  %v7542 = vunpack.c.l.b16 %v7458
  %v7543 = vunpack.c.l.b16 %v7459
  %v7544 = vunpack.c.l.b16 %v7460
  %v7545 = vunpack.c.l.b16 %v7461
  %v7546 = vunpack.c.l.b16 %v7462
  %v7547 = vunpack.c.l.b16 %v7463
  %v7548 = vunpack.c.l.b16 %v7464
  %v7549 = vunpack.c.l.b16 %v7465
  %v7550 = vunpack.c.l.b16 %v7466
  %v7551 = vunpack.c.l.b16 %v7467
  %v7552 = vunpack.c.l.b16 %v7468
  %v7553 = vunpack.c.l.b16 %v7469
  %v7554 = vpack.c.b16 %v7539, %v7538
  %v7555 = vpack.c.b16 %v7541, %v7540
  %v7556 = vpack.c.b16 %v7543, %v7542
  %v7557 = vpack.c.b16 %v7545, %v7544
  %v7558 = vpack.c.b16 %v7547, %v7546
  %v7559 = vpack.c.b16 %v7549, %v7548
  %v7560 = vpack.c.b16 %v7551, %v7550
  %v7561 = vpack.c.b16 %v7553, %v7552
  %7570 = vmatpush.bf16.msra.mxu0 %v7561
  %7571 = vmatpush.bf16.msra.mxu0 %v7560
  %7572 = vmatpush.bf16.msra.mxu0 %v7559
  %7573 = vmatpush.bf16.msra.mxu0 %v7558
  %7574 = vmatpush.bf16.msra.mxu0 %v7557
  %7575 = vmatpush.bf16.msra.mxu0 %v7556
  %7576 = vmatpush.bf16.msra.mxu0 %v7555
  %7577 = vmatpush.bf16.msra.mxu0 %v7554
  %7578 = vmatmul.bf16.gmra.mxu0 %v7506
  %v7579 = vpop.f32.mrf.mxu0
  %v7580 = vadd.f32 %v7472, %v7579
  %v7581 = vpop.f32.mrf.mxu0
  %v7582 = vadd.f32 %v7472, %v7581
  %7583 = vmatmul.bf16.gmra.mxu0 %v7507
  %v7584 = vpop.f32.mrf.mxu0
  %v7585 = vadd.f32 %v7472, %v7584
  %v7586 = vpop.f32.mrf.mxu0
  %v7587 = vadd.f32 %v7472, %v7586
  %7588 = vmatmul.bf16.gmra.mxu0 %v7508
  %v7589 = vpop.f32.mrf.mxu0
  %v7590 = vadd.f32 %v7472, %v7589
  %v7591 = vpop.f32.mrf.mxu0
  %v7592 = vadd.f32 %v7472, %v7591
  %7593 = vmatmul.bf16.gmra.mxu0 %v7509
  %v7594 = vpop.f32.mrf.mxu0
  %v7595 = vadd.f32 %v7472, %v7594
  %v7596 = vpop.f32.mrf.mxu0
  %v7597 = vadd.f32 %v7472, %v7596
  %7598 = vmatmul.bf16.gmra.mxu0 %v7510
  %v7599 = vpop.f32.mrf.mxu0
  %v7600 = vadd.f32 %v7472, %v7599
  %v7601 = vpop.f32.mrf.mxu0
  %v7602 = vadd.f32 %v7472, %v7601
  %7603 = vmatmul.bf16.gmra.mxu0 %v7511
  %v7604 = vpop.f32.mrf.mxu0
  %v7605 = vadd.f32 %v7472, %v7604
  %v7606 = vpop.f32.mrf.mxu0
  %v7607 = vadd.f32 %v7472, %v7606
  %7608 = vmatmul.bf16.gmra.mxu0 %v7512
  %v7609 = vpop.f32.mrf.mxu0
  %v7610 = vadd.f32 %v7472, %v7609
  %v7611 = vpop.f32.mrf.mxu0
  %v7612 = vadd.f32 %v7472, %v7611
  %7613 = vmatmul.bf16.gmra.mxu0 %v7513
  %v7614 = vpop.f32.mrf.mxu0
  %v7615 = vadd.f32 %v7472, %v7614
  %v7616 = vpop.f32.mrf.mxu0
  %v7617 = vadd.f32 %v7472, %v7616
  %7618 = vdwg.mxu0
  %v7619 = vtanh.pop %v7580
  %v7620 = vtanh.pop %v7582
  %v7621 = vtanh.pop %v7585
  %v7622 = vtanh.pop %v7587
  %v7623 = vtanh.pop %v7590
  %v7624 = vtanh.pop %v7592
  %v7625 = vtanh.pop %v7595
  %v7626 = vtanh.pop %v7597
  %v7627 = vtanh.pop %v7600
  %v7628 = vtanh.pop %v7602
  %v7629 = vtanh.pop %v7605
  %v7630 = vtanh.pop %v7607
  %v7631 = vtanh.pop %v7610
  %v7632 = vtanh.pop %v7612
  %v7633 = vtanh.pop %v7615
  %v7634 = vtanh.pop %v7617
  %v7635 = vld [vmem:[%s9] sm:$0x1]
  %v7637 = vperm.slane %v7635, 0
  %v7639 = vmul.f32 %v7619, %v7637
  %v7640 = vmul.f32 %v7620, %v7637
  %v7641 = vmul.f32 %v7621, %v7637
  %v7642 = vmul.f32 %v7622, %v7637
  %v7643 = vmul.f32 %v7623, %v7637
  %v7644 = vmul.f32 %v7624, %v7637
  %v7645 = vmul.f32 %v7625, %v7637
  %v7646 = vmul.f32 %v7626, %v7637
  %v7647 = vmul.f32 %v7627, %v7637
  %v7648 = vmul.f32 %v7628, %v7637
  %v7649 = vmul.f32 %v7629, %v7637
  %v7650 = vmul.f32 %v7630, %v7637
  %v7651 = vmul.f32 %v7631, %v7637
  %v7652 = vmul.f32 %v7632, %v7637
  %v7653 = vmul.f32 %v7633, %v7637
  %v7654 = vmul.f32 %v7634, %v7637
  %7655 = vadd.xlane.f32.xlu0 %v7639
  %v7656 = vpop.xlane.xlu0 %7655
  %7657 = vadd.xlane.f32.xlu0 %v7640
  %v7658 = vpop.xlane.xlu0 %7657
  %7659 = vadd.xlane.f32.xlu0 %v7641
  %v7660 = vpop.xlane.xlu0 %7659
  %7661 = vadd.xlane.f32.xlu0 %v7642
  %v7662 = vpop.xlane.xlu0 %7661
  %7663 = vadd.xlane.f32.xlu0 %v7643
  %v7664 = vpop.xlane.xlu0 %7663
  %7665 = vadd.xlane.f32.xlu0 %v7644
  %v7666 = vpop.xlane.xlu0 %7665
  %7667 = vadd.xlane.f32.xlu0 %v7645
  %v7668 = vpop.xlane.xlu0 %7667
  %7669 = vadd.xlane.f32.xlu0 %v7646
  %v7670 = vpop.xlane.xlu0 %7669
  %7671 = vadd.xlane.f32.xlu0 %v7647
  %v7672 = vpop.xlane.xlu0 %7671
  %7673 = vadd.xlane.f32.xlu0 %v7648
  %v7674 = vpop.xlane.xlu0 %7673
  %7675 = vadd.xlane.f32.xlu0 %v7649
  %v7676 = vpop.xlane.xlu0 %7675
  %7677 = vadd.xlane.f32.xlu0 %v7650
  %v7678 = vpop.xlane.xlu0 %7677
  %7679 = vadd.xlane.f32.xlu0 %v7651
  %v7680 = vpop.xlane.xlu0 %7679
  %7681 = vadd.xlane.f32.xlu0 %v7652
  %v7682 = vpop.xlane.xlu0 %7681
  %7683 = vadd.xlane.f32.xlu0 %v7653
  %v7684 = vpop.xlane.xlu0 %7683
  %7685 = vadd.xlane.f32.xlu0 %v7654
  %v7686 = vpop.xlane.xlu0 %7685
  %v7687 = vld [vmem:[#allocation4] sm:$0x1]
  %v7689 = vperm.slane %v7687, 0
  %v7691 = vadd.f32 %v7656, %v7689
  %v7692 = vadd.f32 %v7658, %v7689
  %v7693 = vadd.f32 %v7660, %v7689
  %v7694 = vadd.f32 %v7662, %v7689
  %v7695 = vadd.f32 %v7664, %v7689
  %v7696 = vadd.f32 %v7666, %v7689
  %v7697 = vadd.f32 %v7668, %v7689
  %v7698 = vadd.f32 %v7670, %v7689
  %v7699 = vadd.f32 %v7672, %v7689
  %v7700 = vadd.f32 %v7674, %v7689
  %v7701 = vadd.f32 %v7676, %v7689
  %v7702 = vadd.f32 %v7678, %v7689
  %v7703 = vadd.f32 %v7680, %v7689
  %v7704 = vadd.f32 %v7682, %v7689
  %v7705 = vadd.f32 %v7684, %v7689
  %v7706 = vadd.f32 %v7686, %v7689
  %vm7707 = vcmask 7168
  %v7708 = vsel %vm7707, %v7691, -inf
  %v7709 = vsel %vm7707, %v7693, -inf
  %v7710 = vsel %vm7707, %v7695, -inf
  %v7711 = vmax.f32 %v7708, %v7710
  %v7712 = vsel %vm7707, %v7697, -inf
  %v7713 = vmax.f32 %v7709, %v7712
  %v7714 = vsel %vm7707, %v7699, -inf
  %v7715 = vmax.f32 %v7711, %v7714
  %v7716 = vsel %vm7707, %v7701, -inf
  %v7717 = vmax.f32 %v7713, %v7716
  %v7718 = vsel %vm7707, %v7703, -inf
  %v7719 = vmax.f32 %v7715, %v7718
  %v7720 = vsel %vm7707, %v7705, -inf
  %v7721 = vmax.f32 %v7717, %v7720
  %v7722 = vmax.f32 %v7719, %v7721
  %v7723 = vsel %vm7707, %v7692, -inf
  %v7724 = vsel %vm7707, %v7694, -inf
  %v7725 = vsel %vm7707, %v7696, -inf
  %v7726 = vmax.f32 %v7723, %v7725
  %v7727 = vsel %vm7707, %v7698, -inf
  %v7728 = vmax.f32 %v7724, %v7727
  %v7729 = vsel %vm7707, %v7700, -inf
  %v7730 = vmax.f32 %v7726, %v7729
  %v7731 = vsel %vm7707, %v7702, -inf
  %v7732 = vmax.f32 %v7728, %v7731
  %v7733 = vsel %vm7707, %v7704, -inf
  %v7734 = vmax.f32 %v7730, %v7733
  %v7735 = vsel %vm7707, %v7706, -inf
  %v7736 = vmax.f32 %v7732, %v7735
  %v7737 = vmax.f32 %v7734, %v7736
  %v7738 = vsub.f32 %v7691, %v7722
  %v7739 = vsub.f32 %v7692, %v7737
  %v7740 = vsub.f32 %v7693, %v7722
  %v7741 = vsub.f32 %v7694, %v7737
  %v7742 = vsub.f32 %v7695, %v7722
  %v7743 = vsub.f32 %v7696, %v7737
  %v7744 = vsub.f32 %v7697, %v7722
  %v7745 = vsub.f32 %v7698, %v7737
  %v7746 = vsub.f32 %v7699, %v7722
  %v7747 = vsub.f32 %v7700, %v7737
  %v7748 = vsub.f32 %v7701, %v7722
  %v7749 = vsub.f32 %v7702, %v7737
  %v7750 = vsub.f32 %v7703, %v7722
  %v7751 = vsub.f32 %v7704, %v7737
  %v7752 = vsub.f32 %v7705, %v7722
  %v7753 = vsub.f32 %v7706, %v7737
  %v7754 = vmul.f32 %v7738, 1.442695
  %v7755 = vpow.pop %v7754
  %v7756 = vmul.f32 %v7739, 1.442695
  %v7757 = vpow.pop %v7756
  %v7758 = vmul.f32 %v7740, 1.442695
  %v7759 = vpow.pop %v7758
  %v7760 = vmul.f32 %v7741, 1.442695
  %v7761 = vpow.pop %v7760
  %v7762 = vmul.f32 %v7742, 1.442695
  %v7763 = vpow.pop %v7762
  %v7764 = vmul.f32 %v7743, 1.442695
  %v7765 = vpow.pop %v7764
  %v7766 = vmul.f32 %v7744, 1.442695
  %v7767 = vpow.pop %v7766
  %v7768 = vmul.f32 %v7745, 1.442695
  %v7769 = vpow.pop %v7768
  %v7770 = vmul.f32 %v7746, 1.442695
  %v7771 = vpow.pop %v7770
  %v7772 = vmul.f32 %v7747, 1.442695
  %v7773 = vpow.pop %v7772
  %v7774 = vmul.f32 %v7748, 1.442695
  %v7775 = vpow.pop %v7774
  %v7776 = vmul.f32 %v7749, 1.442695
  %v7777 = vpow.pop %v7776
  %v7778 = vmul.f32 %v7750, 1.442695
  %v7779 = vpow.pop %v7778
  %v7780 = vmul.f32 %v7751, 1.442695
  %v7781 = vpow.pop %v7780
  %v7782 = vmul.f32 %v7752, 1.442695
  %v7783 = vpow.pop %v7782
  %v7784 = vmul.f32 %v7753, 1.442695
  %v7785 = vpow.pop %v7784
  %v7786 = vsel %vm7707, %v7755, 0.0
  %v7787 = vsel %vm7707, %v7759, 0.0
  %v7788 = vadd.f32 %v7786, %v7787
  %v7789 = vsel %vm7707, %v7763, 0.0
  %v7790 = vadd.f32 %v7788, %v7789
  %v7791 = vsel %vm7707, %v7767, 0.0
  %v7792 = vadd.f32 %v7790, %v7791
  %v7793 = vsel %vm7707, %v7771, 0.0
  %v7794 = vadd.f32 %v7792, %v7793
  %v7795 = vsel %vm7707, %v7775, 0.0
  %v7796 = vadd.f32 %v7794, %v7795
  %v7797 = vsel %vm7707, %v7779, 0.0
  %v7798 = vadd.f32 %v7796, %v7797
  %v7799 = vsel %vm7707, %v7783, 0.0
  %v7800 = vadd.f32 %v7798, %v7799
  %v7801 = vsel %vm7707, %v7757, 0.0
  %v7802 = vsel %vm7707, %v7761, 0.0
  %v7803 = vadd.f32 %v7801, %v7802
  %v7804 = vsel %vm7707, %v7765, 0.0
  %v7805 = vadd.f32 %v7803, %v7804
  %v7806 = vsel %vm7707, %v7769, 0.0
  %v7807 = vadd.f32 %v7805, %v7806
  %v7808 = vsel %vm7707, %v7773, 0.0
  %v7809 = vadd.f32 %v7807, %v7808
  %v7810 = vsel %vm7707, %v7777, 0.0
  %v7811 = vadd.f32 %v7809, %v7810
  %v7812 = vsel %vm7707, %v7781, 0.0
  %v7813 = vadd.f32 %v7811, %v7812
  %v7814 = vsel %vm7707, %v7785, 0.0
  %v7815 = vadd.f32 %v7813, %v7814
  %v7816 = vunpack.c.l.bf16 %v7438
  %v7817 = vunpack.c.l.bf16 %v7439
  %v7818 = vunpack.c.l.bf16 %v7440
  %v7819 = vunpack.c.l.bf16 %v7441
  %v7820 = vunpack.c.l.bf16 %v7442
  %v7821 = vunpack.c.l.bf16 %v7443
  %v7822 = vunpack.c.l.bf16 %v7444
  %v7823 = vunpack.c.l.bf16 %v7445
  %v7824 = vunpack.c.l.bf16 %v7446
  %v7825 = vunpack.c.l.bf16 %v7447
  %v7826 = vunpack.c.l.bf16 %v7448
  %v7827 = vunpack.c.l.bf16 %v7449
  %v7828 = vunpack.c.l.bf16 %v7450
  %v7829 = vunpack.c.l.bf16 %v7451
  %v7830 = vunpack.c.l.bf16 %v7452
  %v7831 = vunpack.c.l.bf16 %v7453
  %7833 = vset.pattern.permute.xlu0 0
  %7834 = vperm.xlu0 %7833, %v7755
  %v7835 = vpop.permute.xlu0 %7834
  %7838 = vset.pattern.permute.xlu0 0
  %7839 = vperm.xlu0 %7838, %v7757
  %v7840 = vpop.permute.xlu0 %7839
  %7843 = vset.pattern.permute.xlu0 0
  %7844 = vperm.xlu0 %7843, %v7759
  %v7845 = vpop.permute.xlu0 %7844
  %7848 = vset.pattern.permute.xlu0 0
  %7849 = vperm.xlu0 %7848, %v7761
  %v7850 = vpop.permute.xlu0 %7849
  %7853 = vset.pattern.permute.xlu0 0
  %7854 = vperm.xlu0 %7853, %v7763
  %v7855 = vpop.permute.xlu0 %7854
  %7858 = vset.pattern.permute.xlu0 0
  %7859 = vperm.xlu0 %7858, %v7765
  %v7860 = vpop.permute.xlu0 %7859
  %7863 = vset.pattern.permute.xlu0 0
  %7864 = vperm.xlu0 %7863, %v7767
  %v7865 = vpop.permute.xlu0 %7864
  %7868 = vset.pattern.permute.xlu0 0
  %7869 = vperm.xlu0 %7868, %v7769
  %v7870 = vpop.permute.xlu0 %7869
  %7873 = vset.pattern.permute.xlu0 0
  %7874 = vperm.xlu0 %7873, %v7771
  %v7875 = vpop.permute.xlu0 %7874
  %7878 = vset.pattern.permute.xlu0 0
  %7879 = vperm.xlu0 %7878, %v7773
  %v7880 = vpop.permute.xlu0 %7879
  %7883 = vset.pattern.permute.xlu0 0
  %7884 = vperm.xlu0 %7883, %v7775
  %v7885 = vpop.permute.xlu0 %7884
  %7888 = vset.pattern.permute.xlu0 0
  %7889 = vperm.xlu0 %7888, %v7777
  %v7890 = vpop.permute.xlu0 %7889
  %7893 = vset.pattern.permute.xlu0 0
  %7894 = vperm.xlu0 %7893, %v7779
  %v7895 = vpop.permute.xlu0 %7894
  %7898 = vset.pattern.permute.xlu0 0
  %7899 = vperm.xlu0 %7898, %v7781
  %v7900 = vpop.permute.xlu0 %7899
  %7903 = vset.pattern.permute.xlu0 0
  %7904 = vperm.xlu0 %7903, %v7783
  %v7905 = vpop.permute.xlu0 %7904
  %7908 = vset.pattern.permute.xlu0 0
  %7909 = vperm.xlu0 %7908, %v7785
  %v7910 = vpop.permute.xlu0 %7909
  %v7912 = vmul.f32 %v7835, %v7816
  %v7913 = vmul.f32 %v7840, %v7817
  %v7914 = vmul.f32 %v7845, %v7818
  %v7915 = vmul.f32 %v7850, %v7819
  %v7916 = vmul.f32 %v7855, %v7820
  %v7917 = vmul.f32 %v7860, %v7821
  %v7918 = vmul.f32 %v7865, %v7822
  %v7919 = vmul.f32 %v7870, %v7823
  %v7920 = vmul.f32 %v7875, %v7824
  %v7921 = vmul.f32 %v7880, %v7825
  %v7922 = vmul.f32 %v7885, %v7826
  %v7923 = vmul.f32 %v7890, %v7827
  %v7924 = vmul.f32 %v7895, %v7828
  %v7925 = vmul.f32 %v7900, %v7829
  %v7926 = vmul.f32 %v7905, %v7830
  %v7927 = vmul.f32 %v7910, %v7831
  %v7928 = vadd.f32 %v7912, %v7914
  %v7929 = vadd.f32 %v7928, %v7916
  %v7930 = vadd.f32 %v7929, %v7918
  %v7931 = vadd.f32 %v7930, %v7920
  %v7932 = vadd.f32 %v7931, %v7922
  %v7933 = vadd.f32 %v7932, %v7924
  %v7934 = vadd.f32 %v7933, %v7926
  %v7935 = vadd.f32 %v7913, %v7915
  %v7936 = vadd.f32 %v7935, %v7917
  %v7937 = vadd.f32 %v7936, %v7919
  %v7938 = vadd.f32 %v7937, %v7921
  %v7939 = vadd.f32 %v7938, %v7923
  %v7940 = vadd.f32 %v7939, %v7925
  %v7941 = vadd.f32 %v7940, %v7927
  %v7942 = vrcp.pop %v7800
  %v7943 = vrcp.pop %v7815
  %7945 = vset.pattern.permute.xlu0 0
  %7946 = vperm.xlu0 %7945, %v7942
  %v7947 = vpop.permute.xlu0 %7946
  %7950 = vset.pattern.permute.xlu0 0
  %7951 = vperm.xlu0 %7950, %v7943
  %v7952 = vpop.permute.xlu0 %7951
  %v7954 = vmul.f32 %v7934, %v7947
  %v7955 = vmul.f32 %v7941, %v7952
  %v7956 = vpack.c.bf16 %v7955, %v7954
  %v7957 = vld [vmem:[%s11] sm:$0xf]
  %v7958 = vld [vmem:[%s11 + $0x4] sm:$0xf]
  %v7959 = vld [vmem:[%s11 + $0x8] sm:$0xf]
  %v7960 = vld [vmem:[%s11 + $0xc] sm:$0xf]
  %v7961 = vld [vmem:[%s11 + $0x10] sm:$0xf]
  %v7962 = vld [vmem:[%s11 + $0x14] sm:$0xf]
  %v7963 = vld [vmem:[%s11 + $0x18] sm:$0xf]
  %v7964 = vld [vmem:[%s11 + $0x1c] sm:$0xf]
  %v7965 = vld [vmem:[%s11 + $0x20] sm:$0xf]
  %v7966 = vld [vmem:[%s11 + $0x24] sm:$0xf]
  %v7967 = vld [vmem:[%s11 + $0x28] sm:$0xf]
  %v7968 = vld [vmem:[%s11 + $0x2c] sm:$0xf]
  %v7969 = vld [vmem:[%s11 + $0x30] sm:$0xf]
  %v7970 = vld [vmem:[%s11 + $0x34] sm:$0xf]
  %v7971 = vld [vmem:[%s11 + $0x38] sm:$0xf]
  %v7972 = vld [vmem:[%s11 + $0x3c] sm:$0xf]
  %v7973 = vld [vmem:[%s12] sm:$0x1]
  %v7975 = vperm.slane %v7973, 0
  %v7993 = vunpack.c.l.b16 %v7957
  %v7994 = vunpack.c.l.b16 %v7958
  %v7995 = vunpack.c.l.b16 %v7959
  %v7996 = vunpack.c.l.b16 %v7960
  %v7997 = vunpack.c.l.b16 %v7961
  %v7998 = vunpack.c.l.b16 %v7962
  %v7999 = vunpack.c.l.b16 %v7963
  %v8000 = vunpack.c.l.b16 %v7964
  %v8001 = vunpack.c.l.b16 %v7965
  %v8002 = vunpack.c.l.b16 %v7966
  %v8003 = vunpack.c.l.b16 %v7967
  %v8004 = vunpack.c.l.b16 %v7968
  %v8005 = vunpack.c.l.b16 %v7969
  %v8006 = vunpack.c.l.b16 %v7970
  %v8007 = vunpack.c.l.b16 %v7971
  %v8008 = vunpack.c.l.b16 %v7972
  %v8009 = vpack.c.b16 %v7994, %v7993
  %v8010 = vpack.c.b16 %v7996, %v7995
  %v8011 = vpack.c.b16 %v7998, %v7997
  %v8012 = vpack.c.b16 %v8000, %v7999
  %v8013 = vpack.c.b16 %v8002, %v8001
  %v8014 = vpack.c.b16 %v8004, %v8003
  %v8015 = vpack.c.b16 %v8006, %v8005
  %v8016 = vpack.c.b16 %v8008, %v8007
  %8025 = vmatpush.bf16.msra.mxu0 %v8016
  %8026 = vmatpush.bf16.msra.mxu0 %v8015
  %8027 = vmatpush.bf16.msra.mxu0 %v8014
  %8028 = vmatpush.bf16.msra.mxu0 %v8013
  %8029 = vmatpush.bf16.msra.mxu0 %v8012
  %8030 = vmatpush.bf16.msra.mxu0 %v8011
  %8031 = vmatpush.bf16.msra.mxu0 %v8010
  %8032 = vmatpush.bf16.msra.mxu0 %v8009
  %8033 = vmatmul.bf16.gmra.mxu0 %v7956
  %v8034 = vpop.f32.mrf.mxu0
  %v8035 = vadd.f32 %v7975, %v8034
  %v8036 = vpop.f32.mrf.mxu0
  %v8037 = vadd.f32 %v7975, %v8036
  %8038 = vdwg.mxu0
  %v8039 = vmax.f32 %v8035, 0.0
  %v8040 = vmax.f32 %v8037, 0.0
  %v8041 = vpack.c.bf16 %v8040, %v8039
  %v8042 = vld [vmem:[%s13] sm:$0xf]
  %v8043 = vld [vmem:[%s13 + $0x4] sm:$0xf]
  %v8044 = vld [vmem:[%s13 + $0x8] sm:$0xf]
  %v8045 = vld [vmem:[%s13 + $0xc] sm:$0xf]
  %v8046 = vld [vmem:[%s13 + $0x10] sm:$0xf]
  %v8047 = vld [vmem:[%s13 + $0x14] sm:$0xf]
  %v8048 = vld [vmem:[%s13 + $0x18] sm:$0xf]
  %v8049 = vld [vmem:[%s13 + $0x1c] sm:$0xf]
  %v8050 = vld [vmem:[%s13 + $0x20] sm:$0xf]
  %v8051 = vld [vmem:[%s13 + $0x24] sm:$0xf]
  %v8052 = vld [vmem:[%s13 + $0x28] sm:$0xf]
  %v8053 = vld [vmem:[%s13 + $0x2c] sm:$0xf]
  %v8054 = vld [vmem:[%s13 + $0x30] sm:$0xf]
  %v8055 = vld [vmem:[%s13 + $0x34] sm:$0xf]
  %v8056 = vld [vmem:[%s13 + $0x38] sm:$0xf]
  %v8057 = vld [vmem:[%s13 + $0x3c] sm:$0xf]
  %v8058 = vld [vmem:[%s14] sm:$0x1]
  %v8060 = vperm.slane %v8058, 0
  %v8078 = vunpack.c.l.b16 %v8042
  %v8079 = vunpack.c.l.b16 %v8043
  %v8080 = vunpack.c.l.b16 %v8044
  %v8081 = vunpack.c.l.b16 %v8045
  %v8082 = vunpack.c.l.b16 %v8046
  %v8083 = vunpack.c.l.b16 %v8047
  %v8084 = vunpack.c.l.b16 %v8048
  %v8085 = vunpack.c.l.b16 %v8049
  %v8086 = vunpack.c.l.b16 %v8050
  %v8087 = vunpack.c.l.b16 %v8051
  %v8088 = vunpack.c.l.b16 %v8052
  %v8089 = vunpack.c.l.b16 %v8053
  %v8090 = vunpack.c.l.b16 %v8054
  %v8091 = vunpack.c.l.b16 %v8055
  %v8092 = vunpack.c.l.b16 %v8056
  %v8093 = vunpack.c.l.b16 %v8057
  %v8094 = vpack.c.b16 %v8079, %v8078
  %v8095 = vpack.c.b16 %v8081, %v8080
  %v8096 = vpack.c.b16 %v8083, %v8082
  %v8097 = vpack.c.b16 %v8085, %v8084
  %v8098 = vpack.c.b16 %v8087, %v8086
  %v8099 = vpack.c.b16 %v8089, %v8088
  %v8100 = vpack.c.b16 %v8091, %v8090
  %v8101 = vpack.c.b16 %v8093, %v8092
  %8110 = vmatpush.bf16.msra.mxu0 %v8101
  %8111 = vmatpush.bf16.msra.mxu0 %v8100
  %8112 = vmatpush.bf16.msra.mxu0 %v8099
  %8113 = vmatpush.bf16.msra.mxu0 %v8098
  %8114 = vmatpush.bf16.msra.mxu0 %v8097
  %8115 = vmatpush.bf16.msra.mxu0 %v8096
  %8116 = vmatpush.bf16.msra.mxu0 %v8095
  %8117 = vmatpush.bf16.msra.mxu0 %v8094
  %8118 = vmatmul.bf16.gmra.mxu0 %v8041
  %v8119 = vpop.f32.mrf.mxu0
  %v8120 = vadd.f32 %v8060, %v8119
  %v8121 = vpop.f32.mrf.mxu0
  %v8122 = vadd.f32 %v8060, %v8121
  %8123 = vdwg.mxu0
  %vm8124 = vcmask 23552
  %8125 = vst.msk [vmem:[%s15] sm:$0xff] %vm8124, %v8120
  %8126 = vst.msk [vmem:[%s15 + $0x8] sm:$0xff] %vm8124, %v8122
  // Predicated region
  $region62: #{lstm_trader_forward.1} parent=0 // pred_check
    _
  $region63: #{lstm_trader_forward.1} parent=0 // pred_check_branch
    %8128 = sbr.rel (0) target = $region65
  $region64: #{lstm_trader_forward.1} parent=0 // pred_region
    _
  $region65: #{lstm_trader_forward.1} parent=0 // pred_fallthru
    _
  // Predicated region
  $region66: #{lstm_trader_forward.1} parent=0 // pred_check
    _
  $region67: #{lstm_trader_forward.1} parent=0 // pred_check_branch
    %8130 = sbr.rel (0) target = $region69
  $region68: #{lstm_trader_forward.1} parent=0 // pred_region
    _
  $region69: #{lstm_trader_forward.1} parent=0 // pred_fallthru
    _

</llo_original>
